<compile_context>
chip_gen: v5e
topology: v5e:2x2
jax: 0.10.0
libtpu: 0.0.40
codegen_flags: <defaults>
</compile_context>

<pallas_src>
import numpy as np

import jax
import jax.numpy as jnp
from jax import lax
from jax.experimental import pallas as pl
from jax.experimental.pallas import tpu as pltpu


# Fixed architecture constants (Linear(50*4*4, 500) pins the input at 1x28x28).
IMG = 28                 # input spatial size
K = 5                    # conv kernel size
C1 = 20                  # conv1 out channels
C2 = 50                  # conv2 out channels
S1 = IMG - K + 1         # 24 : conv1 output size
P1 = S1 // 2             # 12 : pooled size after stage 1
S2 = P1 - K + 1          # 8  : conv2 output size
P2 = S2 // 2             # 4  : pooled size after stage 2
HALF = 256               # lane offset of the "odd x" half of each conv output
N1 = 2 * HALF            # 512: padded N of the stage-1 Toeplitz matmul
N2 = 2 * HALF            # 512: padded N of the stage-2 Toeplitz matmul
XW1 = P1 * C1            # 240: pooled stage-1 row width (x-major, channel-minor)
XW2 = P2 * C2            # 200: pooled stage-2 row width
HID = 500
HID_PAD = 512            # FC hidden dim padded to a lane multiple


# ----------------------------------------------------------------------------
# Fused Pallas kernel: conv1+pool+relu -> conv2+pool+relu -> fc1+relu -> fc2
# Activations live as (rows, batch, width) values; batch sits on sublanes.
# ----------------------------------------------------------------------------
def _embedding_net_kernel(x_ref, wt1_ref, b1t_ref, wt2_ref, b2t_ref,
                          fw1_ref, fb1_ref, fw2_ref, fb2_ref, o_ref):
    BB = x_ref.shape[1]
    img = x_ref[...]                                     # (28, BB, 28) bf16

    # ---- Stage 1: conv1 as 5 accumulated width-Toeplitz MXU matmuls --------
    acc1 = None
    for kh in range(K):
        rows = img[kh:kh + S1].reshape(S1 * BB, IMG)     # (24*BB, 28) bf16
        part = jnp.dot(rows, wt1_ref[kh], preferred_element_type=jnp.float32)
        acc1 = part if acc1 is None else acc1 + part     # (24*BB, 512) f32

    # 2x2 max-pool: adjacent row pairs (y) + the two lane-aligned column
    # halves (even/odd x), then per-channel bias (exact after max) and ReLU.
    r1 = acc1.reshape(P1, 2, BB, N1)
    ym1 = jnp.maximum(r1[:, 0], r1[:, 1])                # (12, BB, 512)
    h1 = jnp.maximum(ym1[..., :XW1], ym1[..., HALF:HALF + XW1])
    h1 = jnp.maximum(h1 + b1t_ref[...], 0.0).astype(jnp.bfloat16)   # (12, BB, 240)

    # ---- Stage 2: conv2 as 5 accumulated width-Toeplitz MXU matmuls --------
    acc2 = None
    for kh in range(K):
        rows = h1[kh:kh + S2].reshape(S2 * BB, XW1)      # (8*BB, 240) bf16
        part = jnp.dot(rows, wt2_ref[kh], preferred_element_type=jnp.float32)
        acc2 = part if acc2 is None else acc2 + part     # (8*BB, 512) f32

    r2 = acc2.reshape(P2, 2, BB, N2)
    ym2 = jnp.maximum(r2[:, 0], r2[:, 1])                # (4, BB, 512)
    feat = jnp.maximum(ym2[..., :XW2], ym2[..., HALF:HALF + XW2])
    feat = jnp.maximum(feat + b2t_ref[...], 0.0).astype(jnp.bfloat16)  # (4, BB, 200)

    # ---- FC1 (+ReLU): 4 accumulated (BB,200)@(200,512) matmuls -------------
    # fw1 blocks are pre-permuted so the PyTorch (C,H,W) flatten order is
    # folded into the weights; the flattened feature vector never exists.
    accf = None
    for i in range(P2):
        part = jnp.dot(feat[i], fw1_ref[i], preferred_element_type=jnp.float32)
        accf = part if accf is None else accf + part     # (BB, 512) f32
    hid = jnp.maximum(accf + fb1_ref[...], 0.0).astype(jnp.bfloat16)

    # ---- FC2 ----------------------------------------------------------------
    o_ref[...] = (jnp.dot(hid, fw2_ref[...], preferred_element_type=jnp.float32)
                  + fb2_ref[...])


# ----------------------------------------------------------------------------
# One-time weight layout prep (Toeplitz conv matrices, permuted/padded FC).
# ----------------------------------------------------------------------------
def prepare_params(params):
    W1 = np.asarray(params["W1"], np.float32)        # (20, 1, 5, 5)
    b1 = np.asarray(params["b1"], np.float32)        # (20,)
    W2 = np.asarray(params["W2"], np.float32)        # (50, 20, 5, 5)
    b2 = np.asarray(params["b2"], np.float32)        # (50,)
    FW1 = np.asarray(params["FW1"], np.float32)      # (500, 800)
    Fb1 = np.asarray(params["Fb1"], np.float32)      # (500,)
    FW2 = np.asarray(params["FW2"], np.float32)      # (n_out, 500)
    Fb2 = np.asarray(params["Fb2"], np.float32)      # (n_out,)
    n_out = FW2.shape[0]

    # Stage-1 width-Toeplitz weights (5, 28, 512):
    #   column for conv output (x, c) = (x % 2) * 256 + (x // 2) * 20 + c.
    wt1 = np.zeros((K, IMG, N1), np.float32)
    for kh in range(K):
        for x in range(S1):
            col0 = (x % 2) * HALF + (x // 2) * C1
            for kw in range(K):
                wt1[kh, x + kw, col0:col0 + C1] = W1[:, 0, kh, kw]
    b1t = np.tile(b1, P1).reshape(1, XW1)            # (1, 240)

    # Stage-2 width-Toeplitz weights (5, 240, 512):
    #   row for h1 element (x1, c) = x1 * 20 + c,
    #   column for conv output (x2, c2) = (x2 % 2) * 256 + (x2 // 2) * 50 + c2.
    wt2 = np.zeros((K, XW1, N2), np.float32)
    for kh in range(K):
        for x2 in range(S2):
            col0 = (x2 % 2) * HALF + (x2 // 2) * C2
            for kw in range(K):
                x1 = x2 + kw
                wt2[kh, x1 * C1:(x1 + 1) * C1, col0:col0 + C2] = W2[:, :, kh, kw].T
    b2t = np.tile(b2, P2).reshape(1, XW2)            # (1, 200)

    # FC1: fold the PyTorch flatten order f = c*16 + i*4 + j into per-row blocks
    # fw1[i][j*50 + c, h] = FW1[h, c*16 + i*4 + j]; hidden dim padded 500 -> 512.
    fw1 = FW1.reshape(HID, C2, P2, P2).transpose(2, 3, 1, 0)   # (i, j, c, h)
    fw1 = fw1.reshape(P2, P2 * C2, HID)
    fw1 = np.pad(fw1, ((0, 0), (0, 0), (0, HID_PAD - HID)))    # (4, 200, 512)
    fb1 = np.pad(Fb1, (0, HID_PAD - HID)).reshape(1, HID_PAD)
    fw2 = np.pad(FW2.T, ((0, HID_PAD - HID), (0, 0)))          # (512, n_out)
    fb2 = Fb2.reshape(1, n_out)

    return dict(
        wt1=jnp.asarray(wt1, jnp.bfloat16), b1t=jnp.asarray(b1t),
        wt2=jnp.asarray(wt2, jnp.bfloat16), b2t=jnp.asarray(b2t),
        fw1=jnp.asarray(fw1, jnp.bfloat16), fb1=jnp.asarray(fb1),
        fw2=jnp.asarray(fw2, jnp.bfloat16), fb2=jnp.asarray(fb2),
    )


# ----------------------------------------------------------------------------
# Wrapper glue
# ----------------------------------------------------------------------------
def _vmem_limit_bytes():
    """3/4 of physical VMEM (v7x: 64 MiB/TC, v5e/v6e: 128 MiB), capped at 96 MiB."""
    try:
        cap = int(pltpu.get_tpu_info().vmem_capacity_bytes)
    except Exception:
        cap = 64 * 1024 * 1024
    return int(min(96 * 1024 * 1024, cap * 3 // 4))


def _pick_batch_block(batch, block_b):
    """16-aligned batch block; keep >= 2 grid steps (v7x megacore) when possible."""
    b16 = ((batch + 15) // 16) * 16
    bb = max(16, min((block_b // 16) * 16, b16))
    if b16 // bb < 2 and bb > 16:
        bb = max(16, (bb // 2 // 16) * 16)
    bp = ((b16 + bb - 1) // bb) * bb
    return bb, bp


def embedding_net_forward(prepped, x_nchw, block_b=128):
    """Forward pass of EmbeddingNet.  x_nchw: (B, 1, 28, 28)."""
    B = x_nchw.shape[0]
    n_out = prepped["fw2"].shape[1]
    BB, Bp = _pick_batch_block(B, block_b)

    x = x_nchw[:, 0].astype(jnp.bfloat16)                 # (B, 28, 28)
    if Bp != B:
        x = jnp.pad(x, ((0, Bp - B), (0, 0), (0, 0)))
    xt = jnp.transpose(x, (1, 0, 2))                      # (28, Bp, 28) rows-leading

    out = pl.pallas_call(
        _embedding_net_kernel,
        out_shape=jax.ShapeDtypeStruct((Bp, n_out), jnp.float32),
        grid=(Bp // BB,),
        in_specs=[
            pl.BlockSpec((IMG, BB, IMG), lambda i: (0, i, 0)),      # raw images
            pl.BlockSpec((K, IMG, N1), lambda i: (0, 0, 0)),        # conv1 Toeplitz
            pl.BlockSpec((1, XW1), lambda i: (0, 0)),               # conv1 bias (tiled)
            pl.BlockSpec((K, XW1, N2), lambda i: (0, 0, 0)),        # conv2 Toeplitz
            pl.BlockSpec((1, XW2), lambda i: (0, 0)),               # conv2 bias (tiled)
            pl.BlockSpec((P2, XW2, HID_PAD), lambda i: (0, 0, 0)),  # fc1 weight blocks
            pl.BlockSpec((1, HID_PAD), lambda i: (0, 0)),           # fc1 bias
            pl.BlockSpec((HID_PAD, n_out), lambda i: (0, 0)),       # fc2 weight
            pl.BlockSpec((1, n_out), lambda i: (0, 0)),             # fc2 bias
        ],
        out_specs=pl.BlockSpec((BB, n_out), lambda i: (i, 0)),
        compiler_params=pltpu.CompilerParams(
            dimension_semantics=("parallel",),
            vmem_limit_bytes=_vmem_limit_bytes(),
        ),
    )(xt, prepped["wt1"], prepped["b1t"], prepped["wt2"], prepped["b2t"],
      prepped["fw1"], prepped["fb1"], prepped["fw2"], prepped["fb2"])

    return out[:B]


# ----------------------------------------------------------------------------
# Parameters (PyTorch-equivalent shapes, deterministic init)
# ----------------------------------------------------------------------------
def init_params(key, n_outputs=128):
    ks = jax.random.split(key, 8)

    def u(k, shape, fan_in):
        bound = float(fan_in) ** -0.5
        return jax.random.uniform(k, shape, jnp.float32, -bound, bound)

    return dict(
        W1=u(ks[0], (C1, 1, K, K), 25),            b1=u(ks[1], (C1,), 25),
        W2=u(ks[2], (C2, C1, K, K), 500),          b2=u(ks[3], (C2,), 500),
        FW1=u(ks[4], (HID, C2 * P2 * P2), 800),    Fb1=u(ks[5], (HID,), 800),
        FW2=u(ks[6], (n_outputs, HID), 500),       Fb2=u(ks[7], (n_outputs,), 500),
    )


# ----------------------------------------------------------------------------
# Pure-JAX reference (mirrors the PyTorch module exactly, NCHW)
# ----------------------------------------------------------------------------
def reference_forward(params, x_nchw):
    dn = ("NCHW", "OIHW", "NCHW")
    y = lax.conv_general_dilated(x_nchw, params["W1"], (1, 1), "VALID",
                                 dimension_numbers=dn)
    y = y + params["b1"][None, :, None, None]
    y = lax.reduce_window(y, -jnp.inf, lax.max, (1, 1, 2, 2), (1, 1, 2, 2), "VALID")
    y = jnp.maximum(y, 0.0)
    y = lax.conv_general_dilated(y, params["W2"], (1, 1), "VALID",
                                 dimension_numbers=dn)
    y = y + params["b2"][None, :, None, None]
    y = lax.reduce_window(y, -jnp.inf, lax.max, (1, 1, 2, 2), (1, 1, 2, 2), "VALID")
    y = jnp.maximum(y, 0.0)
    y = y.reshape(y.shape[0], -1)
    y = jnp.maximum(y @ params["FW1"].T + params["Fb1"], 0.0)
    return y @ params["FW2"].T + params["Fb2"]


if __name__ == "__main__":
    key = jax.random.PRNGKey(0)
    k_param, k_x = jax.random.split(key)

    params = init_params(k_param, n_outputs=128)
    prepped = prepare_params(params)

    # The module's Linear(50*4*4, 500) fixes the input at 1x28x28 (MNIST).
    x = jax.random.normal(k_x, (2, 1, 28, 28), dtype=jnp.float32)

    fwd = jax.jit(embedding_net_forward)
    out = jax.block_until_ready(fwd(prepped, x))
    assert out.shape == (2, 128), out.shape

    ref = jax.block_until_ready(reference_forward(params, x))
    max_diff = float(jnp.max(jnp.abs(out - ref)))
    assert jnp.allclose(out, ref, atol=5e-2, rtol=5e-2), f"max diff {max_diff}"

    print("KERNEL_OK")
</pallas_src>

<mosaic_0001>
module attributes {stable_mosaic.version = 11 : i64} {
  func.func @_embedding_net_kernel(%arg0: i32, %arg1: memref<28x16x28xbf16, #tpu.memory_space<vmem>>, %arg2: memref<5x28x512xbf16, #tpu.memory_space<vmem>>, %arg3: memref<1x240xf32, #tpu.memory_space<vmem>>, %arg4: memref<5x240x512xbf16, #tpu.memory_space<vmem>>, %arg5: memref<1x200xf32, #tpu.memory_space<vmem>>, %arg6: memref<4x200x512xbf16, #tpu.memory_space<vmem>>, %arg7: memref<1x512xf32, #tpu.memory_space<vmem>>, %arg8: memref<512x128xbf16, #tpu.memory_space<vmem>>, %arg9: memref<1x128xf32, #tpu.memory_space<vmem>>, %arg10: memref<16x128xf32, #tpu.memory_space<vmem>>) attributes {dimension_semantics = [#tpu.dimension_semantics<parallel>], iteration_bounds = array<i64: 1>, scalar_prefetch = 0 : i64, scratch_operands = 0 : i64, tpu.core_type = #tpu.core_type<tc>, window_params = [{transform_indices = @transform_0, window_bounds = array<i64: 28, 16, 28>}, {pipeline_mode = #tpu.pipeline_mode<synchronous>, transform_indices = @transform_1, window_bounds = array<i64: 5, 28, 512>}, {pipeline_mode = #tpu.pipeline_mode<synchronous>, transform_indices = @transform_2, window_bounds = array<i64: 1, 240>}, {pipeline_mode = #tpu.pipeline_mode<synchronous>, transform_indices = @transform_3, window_bounds = array<i64: 5, 240, 512>}, {pipeline_mode = #tpu.pipeline_mode<synchronous>, transform_indices = @transform_4, window_bounds = array<i64: 1, 200>}, {pipeline_mode = #tpu.pipeline_mode<synchronous>, transform_indices = @transform_5, window_bounds = array<i64: 4, 200, 512>}, {pipeline_mode = #tpu.pipeline_mode<synchronous>, transform_indices = @transform_6, window_bounds = array<i64: 1, 512>}, {pipeline_mode = #tpu.pipeline_mode<synchronous>, transform_indices = @transform_7, window_bounds = array<i64: 512, 128>}, {pipeline_mode = #tpu.pipeline_mode<synchronous>, transform_indices = @transform_8, window_bounds = array<i64: 1, 128>}, {transform_indices = @transform_9, window_bounds = array<i64: 16, 128>}]} {
    %c0 = arith.constant 0 : index
    %c0_0 = arith.constant 0 : index
    %c0_1 = arith.constant 0 : index
    %0 = vector.load %arg1[%c0, %c0_0, %c0_1] : memref<28x16x28xbf16, #tpu.memory_space<vmem>>, vector<28x16x28xbf16>
    %1 = vector.extract_strided_slice %0 {offsets = [0, 0, 0], sizes = [24, 16, 28], strides = [1, 1, 1]} : vector<28x16x28xbf16> to vector<24x16x28xbf16>
    %2 = vector.shape_cast %1 : vector<24x16x28xbf16> to vector<384x28xbf16>
    %c0_2 = arith.constant 0 : index
    %c0_3 = arith.constant 0 : index
    %c0_4 = arith.constant 0 : index
    %3 = vector.load %arg2[%c0_2, %c0_3, %c0_4] : memref<5x28x512xbf16, #tpu.memory_space<vmem>>, vector<1x28x512xbf16>
    %4 = vector.shape_cast %3 : vector<1x28x512xbf16> to vector<28x512xbf16>
    %cst = arith.constant dense<0.000000e+00> : vector<384x512xf32>
    %5 = tpu.matmul %2, %4, %cst {dimension_numbers = #tpu.dot_dimension_numbers<[1], [0], [0], [1], [0, 0, 1, 1], [], []>} : vector<384x28xbf16>, vector<28x512xbf16>, vector<384x512xf32> -> vector<384x512xf32>
    %6 = vector.extract_strided_slice %0 {offsets = [1, 0, 0], sizes = [24, 16, 28], strides = [1, 1, 1]} : vector<28x16x28xbf16> to vector<24x16x28xbf16>
    %7 = vector.shape_cast %6 : vector<24x16x28xbf16> to vector<384x28xbf16>
    %c1 = arith.constant 1 : index
    %c0_5 = arith.constant 0 : index
    %c0_6 = arith.constant 0 : index
    %8 = vector.load %arg2[%c1, %c0_5, %c0_6] : memref<5x28x512xbf16, #tpu.memory_space<vmem>>, vector<1x28x512xbf16>
    %9 = vector.shape_cast %8 : vector<1x28x512xbf16> to vector<28x512xbf16>
    %cst_7 = arith.constant dense<0.000000e+00> : vector<384x512xf32>
    %10 = tpu.matmul %7, %9, %cst_7 {dimension_numbers = #tpu.dot_dimension_numbers<[1], [0], [0], [1], [0, 0, 1, 1], [], []>} : vector<384x28xbf16>, vector<28x512xbf16>, vector<384x512xf32> -> vector<384x512xf32>
    %11 = arith.addf %5, %10 : vector<384x512xf32>
    %12 = vector.extract_strided_slice %0 {offsets = [2, 0, 0], sizes = [24, 16, 28], strides = [1, 1, 1]} : vector<28x16x28xbf16> to vector<24x16x28xbf16>
    %13 = vector.shape_cast %12 : vector<24x16x28xbf16> to vector<384x28xbf16>
    %c2 = arith.constant 2 : index
    %c0_8 = arith.constant 0 : index
    %c0_9 = arith.constant 0 : index
    %14 = vector.load %arg2[%c2, %c0_8, %c0_9] : memref<5x28x512xbf16, #tpu.memory_space<vmem>>, vector<1x28x512xbf16>
    %15 = vector.shape_cast %14 : vector<1x28x512xbf16> to vector<28x512xbf16>
    %cst_10 = arith.constant dense<0.000000e+00> : vector<384x512xf32>
    %16 = tpu.matmul %13, %15, %cst_10 {dimension_numbers = #tpu.dot_dimension_numbers<[1], [0], [0], [1], [0, 0, 1, 1], [], []>} : vector<384x28xbf16>, vector<28x512xbf16>, vector<384x512xf32> -> vector<384x512xf32>
    %17 = arith.addf %11, %16 : vector<384x512xf32>
    %18 = vector.extract_strided_slice %0 {offsets = [3, 0, 0], sizes = [24, 16, 28], strides = [1, 1, 1]} : vector<28x16x28xbf16> to vector<24x16x28xbf16>
    %19 = vector.shape_cast %18 : vector<24x16x28xbf16> to vector<384x28xbf16>
    %c3 = arith.constant 3 : index
    %c0_11 = arith.constant 0 : index
    %c0_12 = arith.constant 0 : index
    %20 = vector.load %arg2[%c3, %c0_11, %c0_12] : memref<5x28x512xbf16, #tpu.memory_space<vmem>>, vector<1x28x512xbf16>
    %21 = vector.shape_cast %20 : vector<1x28x512xbf16> to vector<28x512xbf16>
    %cst_13 = arith.constant dense<0.000000e+00> : vector<384x512xf32>
    %22 = tpu.matmul %19, %21, %cst_13 {dimension_numbers = #tpu.dot_dimension_numbers<[1], [0], [0], [1], [0, 0, 1, 1], [], []>} : vector<384x28xbf16>, vector<28x512xbf16>, vector<384x512xf32> -> vector<384x512xf32>
    %23 = arith.addf %17, %22 : vector<384x512xf32>
    %24 = vector.extract_strided_slice %0 {offsets = [4, 0, 0], sizes = [24, 16, 28], strides = [1, 1, 1]} : vector<28x16x28xbf16> to vector<24x16x28xbf16>
    %25 = vector.shape_cast %24 : vector<24x16x28xbf16> to vector<384x28xbf16>
    %c4 = arith.constant 4 : index
    %c0_14 = arith.constant 0 : index
    %c0_15 = arith.constant 0 : index
    %26 = vector.load %arg2[%c4, %c0_14, %c0_15] : memref<5x28x512xbf16, #tpu.memory_space<vmem>>, vector<1x28x512xbf16>
    %27 = vector.shape_cast %26 : vector<1x28x512xbf16> to vector<28x512xbf16>
    %cst_16 = arith.constant dense<0.000000e+00> : vector<384x512xf32>
    %28 = tpu.matmul %25, %27, %cst_16 {dimension_numbers = #tpu.dot_dimension_numbers<[1], [0], [0], [1], [0, 0, 1, 1], [], []>} : vector<384x28xbf16>, vector<28x512xbf16>, vector<384x512xf32> -> vector<384x512xf32>
    %29 = arith.addf %23, %28 : vector<384x512xf32>
    %30 = vector.shape_cast %29 : vector<384x512xf32> to vector<12x2x16x512xf32>
    %31 = vector.extract_strided_slice %30 {offsets = [0, 0, 0, 0], sizes = [12, 1, 16, 512], strides = [1, 1, 1, 1]} : vector<12x2x16x512xf32> to vector<12x1x16x512xf32>
    %32 = vector.shape_cast %31 : vector<12x1x16x512xf32> to vector<12x16x512xf32>
    %33 = vector.extract_strided_slice %30 {offsets = [0, 1, 0, 0], sizes = [12, 1, 16, 512], strides = [1, 1, 1, 1]} : vector<12x2x16x512xf32> to vector<12x1x16x512xf32>
    %34 = vector.shape_cast %33 : vector<12x1x16x512xf32> to vector<12x16x512xf32>
    %35 = arith.maximumf %32, %34 : vector<12x16x512xf32>
    %36 = vector.extract_strided_slice %35 {offsets = [0, 0, 0], sizes = [12, 16, 240], strides = [1, 1, 1]} : vector<12x16x512xf32> to vector<12x16x240xf32>
    %37 = vector.extract_strided_slice %35 {offsets = [0, 0, 256], sizes = [12, 16, 240], strides = [1, 1, 1]} : vector<12x16x512xf32> to vector<12x16x240xf32>
    %38 = arith.maximumf %36, %37 : vector<12x16x240xf32>
    %c0_17 = arith.constant 0 : index
    %c0_18 = arith.constant 0 : index
    %39 = vector.load %arg3[%c0_17, %c0_18] : memref<1x240xf32, #tpu.memory_space<vmem>>, vector<1x240xf32>
    %40 = vector.shape_cast %39 : vector<1x240xf32> to vector<1x1x240xf32>
    %41 = vector.broadcast %40 : vector<1x1x240xf32> to vector<12x16x240xf32>
    %42 = arith.addf %38, %41 : vector<12x16x240xf32>
    %cst_19 = arith.constant 0.000000e+00 : f32
    %43 = vector.broadcast %cst_19 : f32 to vector<12x16x240xf32>
    %44 = arith.maximumf %42, %43 : vector<12x16x240xf32>
    %45 = arith.truncf %44 : vector<12x16x240xf32> to vector<12x16x240xbf16>
    %46 = vector.extract_strided_slice %45 {offsets = [0, 0, 0], sizes = [8, 16, 240], strides = [1, 1, 1]} : vector<12x16x240xbf16> to vector<8x16x240xbf16>
    %47 = vector.shape_cast %46 : vector<8x16x240xbf16> to vector<128x240xbf16>
    %c0_20 = arith.constant 0 : index
    %c0_21 = arith.constant 0 : index
    %c0_22 = arith.constant 0 : index
    %48 = vector.load %arg4[%c0_20, %c0_21, %c0_22] : memref<5x240x512xbf16, #tpu.memory_space<vmem>>, vector<1x240x512xbf16>
    %49 = vector.shape_cast %48 : vector<1x240x512xbf16> to vector<240x512xbf16>
    %cst_23 = arith.constant dense<0.000000e+00> : vector<128x512xf32>
    %50 = tpu.matmul %47, %49, %cst_23 {dimension_numbers = #tpu.dot_dimension_numbers<[1], [0], [0], [1], [0, 0, 1, 1], [], []>} : vector<128x240xbf16>, vector<240x512xbf16>, vector<128x512xf32> -> vector<128x512xf32>
    %51 = vector.extract_strided_slice %45 {offsets = [1, 0, 0], sizes = [8, 16, 240], strides = [1, 1, 1]} : vector<12x16x240xbf16> to vector<8x16x240xbf16>
    %52 = vector.shape_cast %51 : vector<8x16x240xbf16> to vector<128x240xbf16>
    %c1_24 = arith.constant 1 : index
    %c0_25 = arith.constant 0 : index
    %c0_26 = arith.constant 0 : index
    %53 = vector.load %arg4[%c1_24, %c0_25, %c0_26] : memref<5x240x512xbf16, #tpu.memory_space<vmem>>, vector<1x240x512xbf16>
    %54 = vector.shape_cast %53 : vector<1x240x512xbf16> to vector<240x512xbf16>
    %cst_27 = arith.constant dense<0.000000e+00> : vector<128x512xf32>
    %55 = tpu.matmul %52, %54, %cst_27 {dimension_numbers = #tpu.dot_dimension_numbers<[1], [0], [0], [1], [0, 0, 1, 1], [], []>} : vector<128x240xbf16>, vector<240x512xbf16>, vector<128x512xf32> -> vector<128x512xf32>
    %56 = arith.addf %50, %55 : vector<128x512xf32>
    %57 = vector.extract_strided_slice %45 {offsets = [2, 0, 0], sizes = [8, 16, 240], strides = [1, 1, 1]} : vector<12x16x240xbf16> to vector<8x16x240xbf16>
    %58 = vector.shape_cast %57 : vector<8x16x240xbf16> to vector<128x240xbf16>
    %c2_28 = arith.constant 2 : index
    %c0_29 = arith.constant 0 : index
    %c0_30 = arith.constant 0 : index
    %59 = vector.load %arg4[%c2_28, %c0_29, %c0_30] : memref<5x240x512xbf16, #tpu.memory_space<vmem>>, vector<1x240x512xbf16>
    %60 = vector.shape_cast %59 : vector<1x240x512xbf16> to vector<240x512xbf16>
    %cst_31 = arith.constant dense<0.000000e+00> : vector<128x512xf32>
    %61 = tpu.matmul %58, %60, %cst_31 {dimension_numbers = #tpu.dot_dimension_numbers<[1], [0], [0], [1], [0, 0, 1, 1], [], []>} : vector<128x240xbf16>, vector<240x512xbf16>, vector<128x512xf32> -> vector<128x512xf32>
    %62 = arith.addf %56, %61 : vector<128x512xf32>
    %63 = vector.extract_strided_slice %45 {offsets = [3, 0, 0], sizes = [8, 16, 240], strides = [1, 1, 1]} : vector<12x16x240xbf16> to vector<8x16x240xbf16>
    %64 = vector.shape_cast %63 : vector<8x16x240xbf16> to vector<128x240xbf16>
    %c3_32 = arith.constant 3 : index
    %c0_33 = arith.constant 0 : index
    %c0_34 = arith.constant 0 : index
    %65 = vector.load %arg4[%c3_32, %c0_33, %c0_34] : memref<5x240x512xbf16, #tpu.memory_space<vmem>>, vector<1x240x512xbf16>
    %66 = vector.shape_cast %65 : vector<1x240x512xbf16> to vector<240x512xbf16>
    %cst_35 = arith.constant dense<0.000000e+00> : vector<128x512xf32>
    %67 = tpu.matmul %64, %66, %cst_35 {dimension_numbers = #tpu.dot_dimension_numbers<[1], [0], [0], [1], [0, 0, 1, 1], [], []>} : vector<128x240xbf16>, vector<240x512xbf16>, vector<128x512xf32> -> vector<128x512xf32>
    %68 = arith.addf %62, %67 : vector<128x512xf32>
    %69 = vector.extract_strided_slice %45 {offsets = [4, 0, 0], sizes = [8, 16, 240], strides = [1, 1, 1]} : vector<12x16x240xbf16> to vector<8x16x240xbf16>
    %70 = vector.shape_cast %69 : vector<8x16x240xbf16> to vector<128x240xbf16>
    %c4_36 = arith.constant 4 : index
    %c0_37 = arith.constant 0 : index
    %c0_38 = arith.constant 0 : index
    %71 = vector.load %arg4[%c4_36, %c0_37, %c0_38] : memref<5x240x512xbf16, #tpu.memory_space<vmem>>, vector<1x240x512xbf16>
    %72 = vector.shape_cast %71 : vector<1x240x512xbf16> to vector<240x512xbf16>
    %cst_39 = arith.constant dense<0.000000e+00> : vector<128x512xf32>
    %73 = tpu.matmul %70, %72, %cst_39 {dimension_numbers = #tpu.dot_dimension_numbers<[1], [0], [0], [1], [0, 0, 1, 1], [], []>} : vector<128x240xbf16>, vector<240x512xbf16>, vector<128x512xf32> -> vector<128x512xf32>
    %74 = arith.addf %68, %73 : vector<128x512xf32>
    %75 = vector.shape_cast %74 : vector<128x512xf32> to vector<4x2x16x512xf32>
    %76 = vector.extract_strided_slice %75 {offsets = [0, 0, 0, 0], sizes = [4, 1, 16, 512], strides = [1, 1, 1, 1]} : vector<4x2x16x512xf32> to vector<4x1x16x512xf32>
    %77 = vector.shape_cast %76 : vector<4x1x16x512xf32> to vector<4x16x512xf32>
    %78 = vector.extract_strided_slice %75 {offsets = [0, 1, 0, 0], sizes = [4, 1, 16, 512], strides = [1, 1, 1, 1]} : vector<4x2x16x512xf32> to vector<4x1x16x512xf32>
    %79 = vector.shape_cast %78 : vector<4x1x16x512xf32> to vector<4x16x512xf32>
    %80 = arith.maximumf %77, %79 : vector<4x16x512xf32>
    %81 = vector.extract_strided_slice %80 {offsets = [0, 0, 0], sizes = [4, 16, 200], strides = [1, 1, 1]} : vector<4x16x512xf32> to vector<4x16x200xf32>
    %82 = vector.extract_strided_slice %80 {offsets = [0, 0, 256], sizes = [4, 16, 200], strides = [1, 1, 1]} : vector<4x16x512xf32> to vector<4x16x200xf32>
    %83 = arith.maximumf %81, %82 : vector<4x16x200xf32>
    %c0_40 = arith.constant 0 : index
    %c0_41 = arith.constant 0 : index
    %84 = vector.load %arg5[%c0_40, %c0_41] : memref<1x200xf32, #tpu.memory_space<vmem>>, vector<1x200xf32>
    %85 = vector.shape_cast %84 : vector<1x200xf32> to vector<1x1x200xf32>
    %86 = vector.broadcast %85 : vector<1x1x200xf32> to vector<4x16x200xf32>
    %87 = arith.addf %83, %86 : vector<4x16x200xf32>
    %cst_42 = arith.constant 0.000000e+00 : f32
    %88 = vector.broadcast %cst_42 : f32 to vector<4x16x200xf32>
    %89 = arith.maximumf %87, %88 : vector<4x16x200xf32>
    %90 = arith.truncf %89 : vector<4x16x200xf32> to vector<4x16x200xbf16>
    %91 = vector.extract_strided_slice %90 {offsets = [0, 0, 0], sizes = [1, 16, 200], strides = [1, 1, 1]} : vector<4x16x200xbf16> to vector<1x16x200xbf16>
    %92 = vector.shape_cast %91 : vector<1x16x200xbf16> to vector<16x200xbf16>
    %c0_43 = arith.constant 0 : index
    %c0_44 = arith.constant 0 : index
    %c0_45 = arith.constant 0 : index
    %93 = vector.load %arg6[%c0_43, %c0_44, %c0_45] : memref<4x200x512xbf16, #tpu.memory_space<vmem>>, vector<1x200x512xbf16>
    %94 = vector.shape_cast %93 : vector<1x200x512xbf16> to vector<200x512xbf16>
    %cst_46 = arith.constant dense<0.000000e+00> : vector<16x512xf32>
    %95 = tpu.matmul %92, %94, %cst_46 {dimension_numbers = #tpu.dot_dimension_numbers<[1], [0], [0], [1], [0, 0, 1, 1], [], []>} : vector<16x200xbf16>, vector<200x512xbf16>, vector<16x512xf32> -> vector<16x512xf32>
    %96 = vector.extract_strided_slice %90 {offsets = [1, 0, 0], sizes = [1, 16, 200], strides = [1, 1, 1]} : vector<4x16x200xbf16> to vector<1x16x200xbf16>
    %97 = vector.shape_cast %96 : vector<1x16x200xbf16> to vector<16x200xbf16>
    %c1_47 = arith.constant 1 : index
    %c0_48 = arith.constant 0 : index
    %c0_49 = arith.constant 0 : index
    %98 = vector.load %arg6[%c1_47, %c0_48, %c0_49] : memref<4x200x512xbf16, #tpu.memory_space<vmem>>, vector<1x200x512xbf16>
    %99 = vector.shape_cast %98 : vector<1x200x512xbf16> to vector<200x512xbf16>
    %cst_50 = arith.constant dense<0.000000e+00> : vector<16x512xf32>
    %100 = tpu.matmul %97, %99, %cst_50 {dimension_numbers = #tpu.dot_dimension_numbers<[1], [0], [0], [1], [0, 0, 1, 1], [], []>} : vector<16x200xbf16>, vector<200x512xbf16>, vector<16x512xf32> -> vector<16x512xf32>
    %101 = arith.addf %95, %100 : vector<16x512xf32>
    %102 = vector.extract_strided_slice %90 {offsets = [2, 0, 0], sizes = [1, 16, 200], strides = [1, 1, 1]} : vector<4x16x200xbf16> to vector<1x16x200xbf16>
    %103 = vector.shape_cast %102 : vector<1x16x200xbf16> to vector<16x200xbf16>
    %c2_51 = arith.constant 2 : index
    %c0_52 = arith.constant 0 : index
    %c0_53 = arith.constant 0 : index
    %104 = vector.load %arg6[%c2_51, %c0_52, %c0_53] : memref<4x200x512xbf16, #tpu.memory_space<vmem>>, vector<1x200x512xbf16>
    %105 = vector.shape_cast %104 : vector<1x200x512xbf16> to vector<200x512xbf16>
    %cst_54 = arith.constant dense<0.000000e+00> : vector<16x512xf32>
    %106 = tpu.matmul %103, %105, %cst_54 {dimension_numbers = #tpu.dot_dimension_numbers<[1], [0], [0], [1], [0, 0, 1, 1], [], []>} : vector<16x200xbf16>, vector<200x512xbf16>, vector<16x512xf32> -> vector<16x512xf32>
    %107 = arith.addf %101, %106 : vector<16x512xf32>
    %108 = vector.extract_strided_slice %90 {offsets = [3, 0, 0], sizes = [1, 16, 200], strides = [1, 1, 1]} : vector<4x16x200xbf16> to vector<1x16x200xbf16>
    %109 = vector.shape_cast %108 : vector<1x16x200xbf16> to vector<16x200xbf16>
    %c3_55 = arith.constant 3 : index
    %c0_56 = arith.constant 0 : index
    %c0_57 = arith.constant 0 : index
    %110 = vector.load %arg6[%c3_55, %c0_56, %c0_57] : memref<4x200x512xbf16, #tpu.memory_space<vmem>>, vector<1x200x512xbf16>
    %111 = vector.shape_cast %110 : vector<1x200x512xbf16> to vector<200x512xbf16>
    %cst_58 = arith.constant dense<0.000000e+00> : vector<16x512xf32>
    %112 = tpu.matmul %109, %111, %cst_58 {dimension_numbers = #tpu.dot_dimension_numbers<[1], [0], [0], [1], [0, 0, 1, 1], [], []>} : vector<16x200xbf16>, vector<200x512xbf16>, vector<16x512xf32> -> vector<16x512xf32>
    %113 = arith.addf %107, %112 : vector<16x512xf32>
    %c0_59 = arith.constant 0 : index
    %c0_60 = arith.constant 0 : index
    %114 = vector.load %arg7[%c0_59, %c0_60] : memref<1x512xf32, #tpu.memory_space<vmem>>, vector<1x512xf32>
    %115 = vector.broadcast %114 : vector<1x512xf32> to vector<16x512xf32>
    %116 = arith.addf %113, %115 : vector<16x512xf32>
    %cst_61 = arith.constant 0.000000e+00 : f32
    %117 = vector.broadcast %cst_61 : f32 to vector<16x512xf32>
    %118 = arith.maximumf %116, %117 : vector<16x512xf32>
    %119 = arith.truncf %118 : vector<16x512xf32> to vector<16x512xbf16>
    %c0_62 = arith.constant 0 : index
    %c0_63 = arith.constant 0 : index
    %120 = vector.load %arg8[%c0_62, %c0_63] : memref<512x128xbf16, #tpu.memory_space<vmem>>, vector<512x128xbf16>
    %cst_64 = arith.constant dense<0.000000e+00> : vector<16x128xf32>
    %121 = tpu.matmul %119, %120, %cst_64 {dimension_numbers = #tpu.dot_dimension_numbers<[1], [0], [0], [1], [0, 0, 1, 1], [], []>} : vector<16x512xbf16>, vector<512x128xbf16>, vector<16x128xf32> -> vector<16x128xf32>
    %c0_65 = arith.constant 0 : index
    %c0_66 = arith.constant 0 : index
    %122 = vector.load %arg9[%c0_65, %c0_66] : memref<1x128xf32, #tpu.memory_space<vmem>>, vector<1x128xf32>
    %123 = vector.broadcast %122 : vector<1x128xf32> to vector<16x128xf32>
    %124 = arith.addf %121, %123 : vector<16x128xf32>
    %c0_67 = arith.constant 0 : index
    %c0_68 = arith.constant 0 : index
    %125 = vector.load %arg10[%c0_67, %c0_68] : memref<16x128xf32, #tpu.memory_space<vmem>>, vector<16x128xf32>
    tpu.vector_store %arg10[%c0_67, %c0_68], %124 {strides = array<i32>} : memref<16x128xf32, #tpu.memory_space<vmem>>, vector<16x128xf32>,
    return
  }
  func.func @transform_0(%arg0: i32) -> (i32, i32, i32) {
    %c0_i32 = arith.constant 0 : i32
    %c0_i32_0 = arith.constant 0 : i32
    %c0_i32_1 = arith.constant 0 : i32
    return %c0_i32, %arg0, %c0_i32_0 : i32, i32, i32
  }
  func.func @transform_1(%arg0: i32) -> (i32, i32, i32) {
    %c0_i32 = arith.constant 0 : i32
    %c0_i32_0 = arith.constant 0 : i32
    %c0_i32_1 = arith.constant 0 : i32
    %c0_i32_2 = arith.constant 0 : i32
    return %c0_i32, %c0_i32_0, %c0_i32_1 : i32, i32, i32
  }
  func.func @transform_2(%arg0: i32) -> (i32, i32) {
    %c0_i32 = arith.constant 0 : i32
    %c0_i32_0 = arith.constant 0 : i32
    %c0_i32_1 = arith.constant 0 : i32
    return %c0_i32, %c0_i32_0 : i32, i32
  }
  func.func @transform_3(%arg0: i32) -> (i32, i32, i32) {
    %c0_i32 = arith.constant 0 : i32
    %c0_i32_0 = arith.constant 0 : i32
    %c0_i32_1 = arith.constant 0 : i32
    %c0_i32_2 = arith.constant 0 : i32
    return %c0_i32, %c0_i32_0, %c0_i32_1 : i32, i32, i32
  }
  func.func @transform_4(%arg0: i32) -> (i32, i32) {
    %c0_i32 = arith.constant 0 : i32
    %c0_i32_0 = arith.constant 0 : i32
    %c0_i32_1 = arith.constant 0 : i32
    return %c0_i32, %c0_i32_0 : i32, i32
  }
  func.func @transform_5(%arg0: i32) -> (i32, i32, i32) {
    %c0_i32 = arith.constant 0 : i32
    %c0_i32_0 = arith.constant 0 : i32
    %c0_i32_1 = arith.constant 0 : i32
    %c0_i32_2 = arith.constant 0 : i32
    return %c0_i32, %c0_i32_0, %c0_i32_1 : i32, i32, i32
  }
  func.func @transform_6(%arg0: i32) -> (i32, i32) {
    %c0_i32 = arith.constant 0 : i32
    %c0_i32_0 = arith.constant 0 : i32
    %c0_i32_1 = arith.constant 0 : i32
    return %c0_i32, %c0_i32_0 : i32, i32
  }
  func.func @transform_7(%arg0: i32) -> (i32, i32) {
    %c0_i32 = arith.constant 0 : i32
    %c0_i32_0 = arith.constant 0 : i32
    %c0_i32_1 = arith.constant 0 : i32
    return %c0_i32, %c0_i32_0 : i32, i32
  }
  func.func @transform_8(%arg0: i32) -> (i32, i32) {
    %c0_i32 = arith.constant 0 : i32
    %c0_i32_0 = arith.constant 0 : i32
    %c0_i32_1 = arith.constant 0 : i32
    return %c0_i32, %c0_i32_0 : i32, i32
  }
  func.func @transform_9(%arg0: i32) -> (i32, i32) {
    %c0_i32 = arith.constant 0 : i32
    %c0_i32_0 = arith.constant 0 : i32
    return %arg0, %c0_i32 : i32, i32
  }
}

</mosaic_0001>

<llo_original>
// kernel: embedding_net_forward.1
$region0: #{embedding_net_forward.1}
  #allocation0 [shape = 'u32[]', space=smem, size = 0x4, offset = 0x4, fixed_abs, tag = 'smem constant byte address 0x4 - core index']
  #allocation1 [shape = 'u32[72,128]{1,0:T(1,128)}', space=vmem, size = 0x9000, scoped, tag = 'internal scratch']
  %s0 = inlined_call_operand.vmem [shape: bf16[28,16,28], index: 0, kind: input, shape index: {}]
  %s1 = inlined_call_operand.hbm [shape: bf16[5,28,512], index: 1, kind: input, shape index: {}]
  %s2 = inlined_call_operand.hbm [shape: f32[1,240], index: 2, kind: input, shape index: {}]
  %s3 = inlined_call_operand.hbm [shape: bf16[5,240,512], index: 3, kind: input, shape index: {}]
  %s4 = inlined_call_operand.hbm [shape: f32[1,200], index: 4, kind: input, shape index: {}]
  %s5 = inlined_call_operand.hbm [shape: bf16[4,200,512], index: 5, kind: input, shape index: {}]
  %s6 = inlined_call_operand.hbm [shape: f32[1,512], index: 6, kind: input, shape index: {}]
  %s7 = inlined_call_operand.hbm [shape: bf16[512,128], index: 7, kind: input, shape index: {}]
  %s8 = inlined_call_operand.hbm [shape: f32[1,128], index: 8, kind: input, shape index: {}]
  %s9 = inlined_call_operand.vmem [shape: f32[16,128], index: 9, kind: output, shape index: {}]
  %s10 = sld [smem:[#allocation0]]
  $region78: #{embedding_net_forward.1} parent=0
    _
  %s12 = ssub.s32 1, %s10
  %s13 = scalar_select 0, %s12, %s10
  $region1: #{embedding_net_forward.1} parent=0
    #allocation2 [shape = 'u8[163840]{0}', space=vmem, size = 0x28000, scoped, tag = 'input window, operand 1, single buffered']
    #allocation3 [shape = 's32[1]{0}', space=sflag, size = 0x4, scoped, tag = 'scoped memory for embedding_net_forward.1']
    #allocation4 [shape = 'u8[1024]{0}', space=vmem, size = 0x400, scoped, tag = 'input window, operand 2, single buffered']
    #allocation5 [shape = 's32[1]{0}', space=sflag, size = 0x4, scoped, tag = 'scoped memory for embedding_net_forward.1']
    #allocation6 [shape = 'u8[1228800]{0}', space=vmem, size = 0x12c000, scoped, tag = 'input window, operand 3, single buffered']
    #allocation7 [shape = 'u8[1024]{0}', space=vmem, size = 0x400, scoped, tag = 'input window, operand 4, single buffered']
    #allocation8 [shape = 's32[1]{0}', space=sflag, size = 0x4, scoped, tag = 'scoped memory for embedding_net_forward.1']
    #allocation9 [shape = 'u8[819200]{0}', space=vmem, size = 0xc8000, scoped, tag = 'input window, operand 5, single buffered']
    #allocation10 [shape = 'u8[2048]{0}', space=vmem, size = 0x800, scoped, tag = 'input window, operand 6, single buffered']
    #allocation11 [shape = 's32[1]{0}', space=sflag, size = 0x4, scoped, tag = 'scoped memory for embedding_net_forward.1']
    #allocation12 [shape = 'u8[131072]{0}', space=vmem, size = 0x20000, scoped, tag = 'input window, operand 7, single buffered']
    #allocation13 [shape = 'u8[512]{0}', space=vmem, size = 0x400, scoped, tag = 'input window, operand 8, single buffered']
    #allocation14 [shape = 's32[1]{0}', space=sflag, size = 0x4, scoped, tag = 'scoped memory for embedding_net_forward.1']
    %14 = vsyncpa [#allocation3], 0
    %15 = vsyncpa [#allocation5], 0
    %16 = vsyncpa [#allocation8], 0
    %17 = vsyncpa [#allocation11], 0
    %18 = vsyncpa [#allocation14], 0
    // Predicated region
    $region2: #{embedding_net_forward.1} parent=1 // pred_check
      _
    $region3: #{embedding_net_forward.1} parent=1 // pred_check_branch
      %20 = sbr.rel (0) target = $region5
    $region4: #{embedding_net_forward.1} parent=1 // pred_region
      _
    $region5: #{embedding_net_forward.1} parent=1 // pred_fallthru
      _
    // Predicated region
    $region6: #{embedding_net_forward.1} parent=1 // pred_check
      _
    $region7: #{embedding_net_forward.1} parent=1 // pred_check_branch
      %22 = sbr.rel (0) target = $region9
    $region8: #{embedding_net_forward.1} parent=1 // pred_region
      %24 = vsyncadd [#allocation3], 0
      %s25 = sshll.u32 %s1, 4
      %s26 = int_to_ptr.hbm [resolvable:$true] %s25
      %s27 = sshll.u32 [#allocation2], 4
      %s28 = int_to_ptr.vmem [resolvable:$true] %s27
      %33 = dma.hbm_to_vmem [thread:$0]  %s26, 5120, %s28, [#allocation3], 256, 256, 16
    $region9: #{embedding_net_forward.1} parent=1 // pred_fallthru
      _
    // Predicated region
    $region10: #{embedding_net_forward.1} parent=1 // pred_check
      _
    $region11: #{embedding_net_forward.1} parent=1 // pred_check_branch
      %35 = sbr.rel (0) target = $region13
    $region12: #{embedding_net_forward.1} parent=1 // pred_region
      %37 = vsyncadd [#allocation5], 0
      %s39 = sshll.u32 %s2, 4
      %s40 = int_to_ptr.hbm [resolvable:$true] %s39
      %s41 = sshll.u32 [#allocation4], 4
      %s42 = int_to_ptr.vmem [resolvable:$true] %s41
      %44 = dma.hbm_to_vmem [thread:$0]  %s40, 32, %s42, [#allocation5]
    $region13: #{embedding_net_forward.1} parent=1 // pred_fallthru
      _
    // Predicated region
    $region14: #{embedding_net_forward.1} parent=1 // pred_check
      _
    $region15: #{embedding_net_forward.1} parent=1 // pred_check_branch
      %46 = sbr.rel (0) target = $region17
    $region16: #{embedding_net_forward.1} parent=1 // pred_region
      %48 = vsyncadd [#allocation5], 0
      %s49 = sshll.u32 %s3, 4
      %s50 = int_to_ptr.hbm [resolvable:$true] %s49
      %s51 = sshll.u32 [#allocation6], 4
      %s52 = int_to_ptr.vmem [resolvable:$true] %s51
      %57 = dma.hbm_to_vmem [thread:$0]  %s50, 38400, %s52, [#allocation5], 256, 256, 16
    $region17: #{embedding_net_forward.1} parent=1 // pred_fallthru
      _
    // Predicated region
    $region18: #{embedding_net_forward.1} parent=1 // pred_check
      _
    $region19: #{embedding_net_forward.1} parent=1 // pred_check_branch
      %59 = sbr.rel (0) target = $region21
    $region20: #{embedding_net_forward.1} parent=1 // pred_region
      %61 = vsyncadd [#allocation8], 0
      %s63 = sshll.u32 %s4, 4
      %s64 = int_to_ptr.hbm [resolvable:$true] %s63
      %s65 = sshll.u32 [#allocation7], 4
      %s66 = int_to_ptr.vmem [resolvable:$true] %s65
      %68 = dma.hbm_to_vmem [thread:$0]  %s64, 32, %s66, [#allocation8]
    $region21: #{embedding_net_forward.1} parent=1 // pred_fallthru
      _
    // Predicated region
    $region22: #{embedding_net_forward.1} parent=1 // pred_check
      _
    $region23: #{embedding_net_forward.1} parent=1 // pred_check_branch
      %70 = sbr.rel (0) target = $region25
    $region24: #{embedding_net_forward.1} parent=1 // pred_region
      %72 = vsyncadd [#allocation8], 0
      %s73 = sshll.u32 %s5, 4
      %s74 = int_to_ptr.hbm [resolvable:$true] %s73
      %s75 = sshll.u32 [#allocation9], 4
      %s76 = int_to_ptr.vmem [resolvable:$true] %s75
      %81 = dma.hbm_to_vmem [thread:$0]  %s74, 25600, %s76, [#allocation8], 256, 256, 16
    $region25: #{embedding_net_forward.1} parent=1 // pred_fallthru
      _
    // Predicated region
    $region26: #{embedding_net_forward.1} parent=1 // pred_check
      _
    $region27: #{embedding_net_forward.1} parent=1 // pred_check_branch
      %83 = sbr.rel (0) target = $region29
    $region28: #{embedding_net_forward.1} parent=1 // pred_region
      %85 = vsyncadd [#allocation11], 0
      %s87 = sshll.u32 %s6, 4
      %s88 = int_to_ptr.hbm [resolvable:$true] %s87
      %s89 = sshll.u32 [#allocation10], 4
      %s90 = int_to_ptr.vmem [resolvable:$true] %s89
      %92 = dma.hbm_to_vmem [thread:$0]  %s88, 64, %s90, [#allocation11]
    $region29: #{embedding_net_forward.1} parent=1 // pred_fallthru
      _
    // Predicated region
    $region30: #{embedding_net_forward.1} parent=1 // pred_check
      _
    $region31: #{embedding_net_forward.1} parent=1 // pred_check_branch
      %94 = sbr.rel (0) target = $region33
    $region32: #{embedding_net_forward.1} parent=1 // pred_region
      %96 = vsyncadd [#allocation11], 0
      %s97 = sshll.u32 %s7, 4
      %s98 = int_to_ptr.hbm [resolvable:$true] %s97
      %s99 = sshll.u32 [#allocation12], 4
      %s100 = int_to_ptr.vmem [resolvable:$true] %s99
      %105 = dma.hbm_to_vmem [thread:$0]  %s98, 4096, %s100, [#allocation11], 64, 64, 4
    $region33: #{embedding_net_forward.1} parent=1 // pred_fallthru
      _
    // Predicated region
    $region34: #{embedding_net_forward.1} parent=1 // pred_check
      _
    $region35: #{embedding_net_forward.1} parent=1 // pred_check_branch
      %107 = sbr.rel (0) target = $region37
    $region36: #{embedding_net_forward.1} parent=1 // pred_region
      %109 = vsyncadd [#allocation14], 0
      %s111 = sshll.u32 %s8, 4
      %s112 = int_to_ptr.hbm [resolvable:$true] %s111
      %s113 = sshll.u32 [#allocation13], 4
      %s114 = int_to_ptr.vmem [resolvable:$true] %s113
      %116 = dma.hbm_to_vmem [thread:$0]  %s112, 16, %s114, [#allocation14]
    $region37: #{embedding_net_forward.1} parent=1 // pred_fallthru
      _
    // Predicated region
    $region38: #{embedding_net_forward.1} parent=1 // pred_check
      _
    $region39: #{embedding_net_forward.1} parent=1 // pred_check_branch
      %118 = sbr.rel (0) target = $region41
    $region40: #{embedding_net_forward.1} parent=1 // pred_region
      %120 = dma.done [#allocation3], 5120
    $region41: #{embedding_net_forward.1} parent=1 // pred_fallthru
      _
    // Predicated region
    $region42: #{embedding_net_forward.1} parent=1 // pred_check
      _
    $region43: #{embedding_net_forward.1} parent=1 // pred_check_branch
      %122 = sbr.rel (0) target = $region45
    $region44: #{embedding_net_forward.1} parent=1 // pred_region
      %124 = dma.done [#allocation5], 32
    $region45: #{embedding_net_forward.1} parent=1 // pred_fallthru
      _
    // Predicated region
    $region46: #{embedding_net_forward.1} parent=1 // pred_check
      _
    $region47: #{embedding_net_forward.1} parent=1 // pred_check_branch
      %126 = sbr.rel (0) target = $region49
    $region48: #{embedding_net_forward.1} parent=1 // pred_region
      %128 = dma.done [#allocation5], 38400
    $region49: #{embedding_net_forward.1} parent=1 // pred_fallthru
      _
    // Predicated region
    $region50: #{embedding_net_forward.1} parent=1 // pred_check
      _
    $region51: #{embedding_net_forward.1} parent=1 // pred_check_branch
      %130 = sbr.rel (0) target = $region53
    $region52: #{embedding_net_forward.1} parent=1 // pred_region
      %132 = dma.done [#allocation8], 32
    $region53: #{embedding_net_forward.1} parent=1 // pred_fallthru
      _
    // Predicated region
    $region54: #{embedding_net_forward.1} parent=1 // pred_check
      _
    $region55: #{embedding_net_forward.1} parent=1 // pred_check_branch
      %134 = sbr.rel (0) target = $region57
    $region56: #{embedding_net_forward.1} parent=1 // pred_region
      %136 = dma.done [#allocation8], 25600
    $region57: #{embedding_net_forward.1} parent=1 // pred_fallthru
      _
    // Predicated region
    $region58: #{embedding_net_forward.1} parent=1 // pred_check
      _
    $region59: #{embedding_net_forward.1} parent=1 // pred_check_branch
      %138 = sbr.rel (0) target = $region61
    $region60: #{embedding_net_forward.1} parent=1 // pred_region
      %140 = dma.done [#allocation11], 64
    $region61: #{embedding_net_forward.1} parent=1 // pred_fallthru
      _
    // Predicated region
    $region62: #{embedding_net_forward.1} parent=1 // pred_check
      _
    $region63: #{embedding_net_forward.1} parent=1 // pred_check_branch
      %142 = sbr.rel (0) target = $region65
    $region64: #{embedding_net_forward.1} parent=1 // pred_region
      %144 = dma.done [#allocation11], 4096
    $region65: #{embedding_net_forward.1} parent=1 // pred_fallthru
      _
    // Predicated region
    $region66: #{embedding_net_forward.1} parent=1 // pred_check
      _
    $region67: #{embedding_net_forward.1} parent=1 // pred_check_branch
      %146 = sbr.rel (0) target = $region69
    $region68: #{embedding_net_forward.1} parent=1 // pred_region
      %148 = dma.done [#allocation14], 16
    $region69: #{embedding_net_forward.1} parent=1 // pred_fallthru
      _
    %v150 = vld [vmem:[%s0] sm:$0xf]
    %v151 = vld [vmem:[%s0 + $0x4] sm:$0xf]
    %v152 = vld [vmem:[%s0 + $0x8] sm:$0xf]
    %v153 = vld [vmem:[%s0 + $0xc] sm:$0xf]
    %v154 = vld [vmem:[%s0 + $0x10] sm:$0xf]
    %v155 = vld [vmem:[%s0 + $0x14] sm:$0xf]
    %v156 = vld [vmem:[%s0 + $0x18] sm:$0xf]
    %v157 = vld [vmem:[%s0 + $0x1c] sm:$0xf]
    %v158 = vld [vmem:[%s0 + $0x20] sm:$0xf]
    %v159 = vld [vmem:[%s0 + $0x24] sm:$0xf]
    %v160 = vld [vmem:[%s0 + $0x28] sm:$0xf]
    %v161 = vld [vmem:[%s0 + $0x2c] sm:$0xf]
    %v162 = vld [vmem:[%s0 + $0x30] sm:$0xf]
    %v163 = vld [vmem:[%s0 + $0x34] sm:$0xf]
    %v164 = vld [vmem:[%s0 + $0x38] sm:$0xf]
    %v165 = vld [vmem:[%s0 + $0x3c] sm:$0xf]
    %v166 = vld [vmem:[%s0 + $0x40] sm:$0xf]
    %v167 = vld [vmem:[%s0 + $0x44] sm:$0xf]
    %v168 = vld [vmem:[%s0 + $0x48] sm:$0xf]
    %v169 = vld [vmem:[%s0 + $0x4c] sm:$0xf]
    %v170 = vld [vmem:[%s0 + $0x50] sm:$0xf]
    %v171 = vld [vmem:[%s0 + $0x54] sm:$0xf]
    %v172 = vld [vmem:[%s0 + $0x58] sm:$0xf]
    %v173 = vld [vmem:[%s0 + $0x5c] sm:$0xf]
    %v174 = vld [vmem:[%s0 + $0x60] sm:$0xf]
    %v175 = vld [vmem:[%s0 + $0x64] sm:$0xf]
    %v176 = vld [vmem:[%s0 + $0x68] sm:$0xf]
    %v177 = vld [vmem:[%s0 + $0x6c] sm:$0xf]
    %v178 = vld [vmem:[%s0 + $0x70] sm:$0xf]
    %v179 = vld [vmem:[%s0 + $0x74] sm:$0xf]
    %v180 = vld [vmem:[%s0 + $0x78] sm:$0xf]
    %v181 = vld [vmem:[%s0 + $0x7c] sm:$0xf]
    %v182 = vld [vmem:[%s0 + $0x80] sm:$0xf]
    %v183 = vld [vmem:[%s0 + $0x84] sm:$0xf]
    %v184 = vld [vmem:[%s0 + $0x88] sm:$0xf]
    %v185 = vld [vmem:[%s0 + $0x8c] sm:$0xf]
    %v186 = vld [vmem:[%s0 + $0x90] sm:$0xf]
    %v187 = vld [vmem:[%s0 + $0x94] sm:$0xf]
    %v188 = vld [vmem:[%s0 + $0x98] sm:$0xf]
    %v189 = vld [vmem:[%s0 + $0x9c] sm:$0xf]
    %v190 = vld [vmem:[%s0 + $0xa0] sm:$0xf]
    %v191 = vld [vmem:[%s0 + $0xa4] sm:$0xf]
    %v192 = vld [vmem:[%s0 + $0xa8] sm:$0xf]
    %v193 = vld [vmem:[%s0 + $0xac] sm:$0xf]
    %v194 = vld [vmem:[%s0 + $0xb0] sm:$0xf]
    %v195 = vld [vmem:[%s0 + $0xb4] sm:$0xf]
    %v196 = vld [vmem:[%s0 + $0xb8] sm:$0xf]
    %v197 = vld [vmem:[%s0 + $0xbc] sm:$0xf]
    %v198 = vld [vmem:[%s0 + $0xc0] sm:$0xf]
    %v199 = vld [vmem:[%s0 + $0xc4] sm:$0xf]
    %v200 = vld [vmem:[%s0 + $0xc8] sm:$0xf]
    %v201 = vld [vmem:[%s0 + $0xcc] sm:$0xf]
    %v202 = vld [vmem:[%s0 + $0xd0] sm:$0xf]
    %v203 = vld [vmem:[%s0 + $0xd4] sm:$0xf]
    %v204 = vld [vmem:[%s0 + $0xd8] sm:$0xf]
    %v205 = vld [vmem:[%s0 + $0xdc] sm:$0xf]
    %v206 = vld [vmem:[#allocation2] sm:$0xff]
    %v207 = vld [vmem:[#allocation2 + $0x8] sm:$0xff]
    %v208 = vld [vmem:[#allocation2 + $0x10] sm:$0xff]
    %v209 = vld [vmem:[#allocation2 + $0x18] sm:$0xff]
    %v210 = vld [vmem:[#allocation2 + $0x20] sm:$0xff]
    %v211 = vld [vmem:[#allocation2 + $0x28] sm:$0xff]
    %v212 = vld [vmem:[#allocation2 + $0x30] sm:$0x33]
    %v213 = vld [vmem:[#allocation2 + $0x38] sm:$0x33]
    %s214 = scalar_lea.vmem [#allocation2], 64
    %v215 = vld [vmem:[%s214] sm:$0xff]
    %v216 = vld [vmem:[%s214 + $0x8] sm:$0xff]
    %v217 = vld [vmem:[%s214 + $0x10] sm:$0xff]
    %v218 = vld [vmem:[%s214 + $0x18] sm:$0xff]
    %v219 = vld [vmem:[%s214 + $0x20] sm:$0xff]
    %v220 = vld [vmem:[%s214 + $0x28] sm:$0xff]
    %v221 = vld [vmem:[%s214 + $0x30] sm:$0x33]
    %v222 = vld [vmem:[%s214 + $0x38] sm:$0x33]
    %v271 = vunpack.c.l.b16 %v152
    %v272 = vunpack.c.l.b16 %v153
    %v273 = vunpack.c.l.b16 %v154
    %v274 = vunpack.c.l.b16 %v155
    %v275 = vunpack.c.l.b16 %v156
    %v276 = vunpack.c.l.b16 %v157
    %v277 = vunpack.c.l.b16 %v158
    %v278 = vunpack.c.l.b16 %v159
    %v279 = vunpack.c.l.b16 %v160
    %v280 = vunpack.c.l.b16 %v161
    %v281 = vunpack.c.l.b16 %v162
    %v282 = vunpack.c.l.b16 %v163
    %v283 = vunpack.c.l.b16 %v164
    %v284 = vunpack.c.l.b16 %v165
    %v285 = vunpack.c.l.b16 %v166
    %v286 = vunpack.c.l.b16 %v167
    %v287 = vunpack.c.l.b16 %v168
    %v288 = vunpack.c.l.b16 %v169
    %v289 = vunpack.c.l.b16 %v170
    %v290 = vunpack.c.l.b16 %v171
    %v291 = vunpack.c.l.b16 %v172
    %v292 = vunpack.c.l.b16 %v173
    %v293 = vunpack.c.l.b16 %v174
    %v294 = vunpack.c.l.b16 %v175
    %v295 = vunpack.c.l.b16 %v176
    %v296 = vunpack.c.l.b16 %v177
    %v297 = vunpack.c.l.b16 %v178
    %v298 = vunpack.c.l.b16 %v179
    %v299 = vunpack.c.l.b16 %v180
    %v300 = vunpack.c.l.b16 %v181
    %v301 = vunpack.c.l.b16 %v182
    %v302 = vunpack.c.l.b16 %v183
    %v303 = vunpack.c.l.b16 %v184
    %v304 = vunpack.c.l.b16 %v185
    %v305 = vunpack.c.l.b16 %v186
    %v306 = vunpack.c.l.b16 %v187
    %v307 = vunpack.c.l.b16 %v188
    %v308 = vunpack.c.l.b16 %v189
    %v309 = vunpack.c.l.b16 %v190
    %v310 = vunpack.c.l.b16 %v191
    %v311 = vunpack.c.l.b16 %v192
    %v312 = vunpack.c.l.b16 %v193
    %v313 = vunpack.c.l.b16 %v194
    %v314 = vunpack.c.l.b16 %v195
    %v315 = vunpack.c.l.b16 %v196
    %v316 = vunpack.c.l.b16 %v197
    %v317 = vunpack.c.l.b16 %v198
    %v318 = vunpack.c.l.b16 %v199
    %v319 = vpack.c.b16 %v272, %v271
    %v320 = vpack.c.b16 %v274, %v273
    %v321 = vpack.c.b16 %v276, %v275
    %v322 = vpack.c.b16 %v278, %v277
    %v323 = vpack.c.b16 %v280, %v279
    %v324 = vpack.c.b16 %v282, %v281
    %v325 = vpack.c.b16 %v284, %v283
    %v326 = vpack.c.b16 %v286, %v285
    %v327 = vpack.c.b16 %v288, %v287
    %v328 = vpack.c.b16 %v290, %v289
    %v329 = vpack.c.b16 %v292, %v291
    %v330 = vpack.c.b16 %v294, %v293
    %v331 = vpack.c.b16 %v296, %v295
    %v332 = vpack.c.b16 %v298, %v297
    %v333 = vpack.c.b16 %v300, %v299
    %v334 = vpack.c.b16 %v302, %v301
    %v335 = vpack.c.b16 %v304, %v303
    %v336 = vpack.c.b16 %v306, %v305
    %v337 = vpack.c.b16 %v308, %v307
    %v338 = vpack.c.b16 %v310, %v309
    %v339 = vpack.c.b16 %v312, %v311
    %v340 = vpack.c.b16 %v314, %v313
    %v341 = vpack.c.b16 %v316, %v315
    %v342 = vpack.c.b16 %v318, %v317
    %v351 = vunpack.c.l.b16 %v215
    %v352 = vunpack.c.h.b16 %v215
    %v353 = vunpack.c.l.b16 %v216
    %v354 = vunpack.c.h.b16 %v216
    %v355 = vunpack.c.l.b16 %v217
    %v356 = vunpack.c.h.b16 %v217
    %v357 = vunpack.c.l.b16 %v218
    %v358 = vunpack.c.h.b16 %v218
    %v359 = vunpack.c.l.b16 %v219
    %v360 = vunpack.c.h.b16 %v219
    %v361 = vunpack.c.l.b16 %v220
    %v362 = vunpack.c.h.b16 %v220
    %v363 = vunpack.c.l.b16 %v221
    %v364 = vunpack.c.h.b16 %v221
    %v365 = vunpack.c.l.b16 %v222
    %v366 = vunpack.c.h.b16 %v222
    %v367 = vpack.c.b16 %v355, %v351
    %v368 = vpack.c.b16 %v356, %v352
    %v369 = vpack.c.b16 %v357, %v353
    %v370 = vpack.c.b16 %v358, %v354
    %v371 = vpack.c.b16 %v363, %v359
    %v372 = vpack.c.b16 %v364, %v360
    %v373 = vpack.c.b16 %v365, %v361
    %v374 = vpack.c.b16 %v366, %v362
    %vm379 = vcmask 228352
    %v381 = vsel %vm379, %v319, 0
    %v384 = vsel %vm379, %v320, 0
    %v387 = vsel %vm379, %v321, 0
    %v390 = vsel %vm379, %v322, 0
    %v393 = vsel %vm379, %v323, 0
    %v396 = vsel %vm379, %v324, 0
    %v399 = vsel %vm379, %v325, 0
    %v402 = vsel %vm379, %v326, 0
    %v405 = vsel %vm379, %v327, 0
    %v408 = vsel %vm379, %v328, 0
    %v411 = vsel %vm379, %v329, 0
    %v414 = vsel %vm379, %v330, 0
    %v417 = vsel %vm379, %v331, 0
    %v420 = vsel %vm379, %v332, 0
    %v423 = vsel %vm379, %v333, 0
    %v426 = vsel %vm379, %v334, 0
    %v429 = vsel %vm379, %v335, 0
    %v432 = vsel %vm379, %v336, 0
    %v435 = vsel %vm379, %v337, 0
    %v438 = vsel %vm379, %v338, 0
    %v441 = vsel %vm379, %v339, 0
    %v444 = vsel %vm379, %v340, 0
    %v447 = vsel %vm379, %v341, 0
    %v450 = vsel %vm379, %v342, 0
    %vm452 = vcmask 1045504
    %v454 = vsel %vm452, %v371, 0
    %v457 = vsel %vm452, %v372, 0
    %v460 = vsel %vm452, %v373, 0
    %v463 = vsel %vm452, %v374, 0
    %465 = vmatpush.bf16.msra.mxu0 0
    %466 = vmatpush.bf16.msra.mxu0 0
    %467 = vmatpush.bf16.msra.mxu0 0
    %468 = vmatpush.bf16.msra.mxu0 0
    %469 = vmatpush.bf16.msra.mxu0 0
    %470 = vmatpush.bf16.msra.mxu0 0
    %471 = vmatpush.bf16.msra.mxu0 %v454
    %472 = vmatpush.bf16.msra.mxu0 %v367
    %473 = vmatmul.bf16.gmra.mxu0 %v381
    %v474 = vpop.f32.mrf.mxu0
    %v475 = vadd.f32 0.0, %v474
    %v476 = vpop.f32.mrf.mxu0
    %v477 = vadd.f32 0.0, %v476
    %478 = vmatmul.bf16.gmra.mxu0 %v384
    %v479 = vpop.f32.mrf.mxu0
    %v480 = vadd.f32 0.0, %v479
    %v481 = vpop.f32.mrf.mxu0
    %v482 = vadd.f32 0.0, %v481
    %483 = vmatmul.bf16.gmra.mxu0 %v387
    %v484 = vpop.f32.mrf.mxu0
    %v485 = vadd.f32 0.0, %v484
    %v486 = vpop.f32.mrf.mxu0
    %v487 = vadd.f32 0.0, %v486
    %488 = vmatmul.bf16.gmra.mxu0 %v390
    %v489 = vpop.f32.mrf.mxu0
    %v490 = vadd.f32 0.0, %v489
    %v491 = vpop.f32.mrf.mxu0
    %v492 = vadd.f32 0.0, %v491
    %493 = vmatmul.bf16.gmra.mxu0 %v393
    %v494 = vpop.f32.mrf.mxu0
    %v495 = vadd.f32 0.0, %v494
    %v496 = vpop.f32.mrf.mxu0
    %v497 = vadd.f32 0.0, %v496
    %498 = vmatmul.bf16.gmra.mxu0 %v396
    %v499 = vpop.f32.mrf.mxu0
    %v500 = vadd.f32 0.0, %v499
    %v501 = vpop.f32.mrf.mxu0
    %v502 = vadd.f32 0.0, %v501
    %503 = vmatmul.bf16.gmra.mxu0 %v399
    %v504 = vpop.f32.mrf.mxu0
    %v505 = vadd.f32 0.0, %v504
    %v506 = vpop.f32.mrf.mxu0
    %v507 = vadd.f32 0.0, %v506
    %508 = vmatmul.bf16.gmra.mxu0 %v402
    %v509 = vpop.f32.mrf.mxu0
    %v510 = vadd.f32 0.0, %v509
    %v511 = vpop.f32.mrf.mxu0
    %v512 = vadd.f32 0.0, %v511
    %513 = vmatmul.bf16.gmra.mxu0 %v405
    %v514 = vpop.f32.mrf.mxu0
    %v515 = vadd.f32 0.0, %v514
    %v516 = vpop.f32.mrf.mxu0
    %v517 = vadd.f32 0.0, %v516
    %518 = vmatmul.bf16.gmra.mxu0 %v408
    %v519 = vpop.f32.mrf.mxu0
    %v520 = vadd.f32 0.0, %v519
    %v521 = vpop.f32.mrf.mxu0
    %v522 = vadd.f32 0.0, %v521
    %523 = vmatmul.bf16.gmra.mxu0 %v411
    %v524 = vpop.f32.mrf.mxu0
    %v525 = vadd.f32 0.0, %v524
    %v526 = vpop.f32.mrf.mxu0
    %v527 = vadd.f32 0.0, %v526
    %528 = vmatmul.bf16.gmra.mxu0 %v414
    %v529 = vpop.f32.mrf.mxu0
    %v530 = vadd.f32 0.0, %v529
    %v531 = vpop.f32.mrf.mxu0
    %v532 = vadd.f32 0.0, %v531
    %533 = vmatmul.bf16.gmra.mxu0 %v417
    %v534 = vpop.f32.mrf.mxu0
    %v535 = vadd.f32 0.0, %v534
    %v536 = vpop.f32.mrf.mxu0
    %v537 = vadd.f32 0.0, %v536
    %538 = vmatmul.bf16.gmra.mxu0 %v420
    %v539 = vpop.f32.mrf.mxu0
    %v540 = vadd.f32 0.0, %v539
    %v541 = vpop.f32.mrf.mxu0
    %v542 = vadd.f32 0.0, %v541
    %543 = vmatmul.bf16.gmra.mxu0 %v423
    %v544 = vpop.f32.mrf.mxu0
    %v545 = vadd.f32 0.0, %v544
    %v546 = vpop.f32.mrf.mxu0
    %v547 = vadd.f32 0.0, %v546
    %548 = vmatmul.bf16.gmra.mxu0 %v426
    %v549 = vpop.f32.mrf.mxu0
    %v550 = vadd.f32 0.0, %v549
    %v551 = vpop.f32.mrf.mxu0
    %v552 = vadd.f32 0.0, %v551
    %553 = vmatmul.bf16.gmra.mxu0 %v429
    %v554 = vpop.f32.mrf.mxu0
    %v555 = vadd.f32 0.0, %v554
    %v556 = vpop.f32.mrf.mxu0
    %v557 = vadd.f32 0.0, %v556
    %558 = vmatmul.bf16.gmra.mxu0 %v432
    %v559 = vpop.f32.mrf.mxu0
    %v560 = vadd.f32 0.0, %v559
    %v561 = vpop.f32.mrf.mxu0
    %v562 = vadd.f32 0.0, %v561
    %563 = vmatmul.bf16.gmra.mxu0 %v435
    %v564 = vpop.f32.mrf.mxu0
    %v565 = vadd.f32 0.0, %v564
    %v566 = vpop.f32.mrf.mxu0
    %v567 = vadd.f32 0.0, %v566
    %568 = vmatmul.bf16.gmra.mxu0 %v438
    %v569 = vpop.f32.mrf.mxu0
    %v570 = vadd.f32 0.0, %v569
    %v571 = vpop.f32.mrf.mxu0
    %v572 = vadd.f32 0.0, %v571
    %573 = vmatmul.bf16.gmra.mxu0 %v441
    %v574 = vpop.f32.mrf.mxu0
    %v575 = vadd.f32 0.0, %v574
    %v576 = vpop.f32.mrf.mxu0
    %v577 = vadd.f32 0.0, %v576
    %578 = vmatmul.bf16.gmra.mxu0 %v444
    %v579 = vpop.f32.mrf.mxu0
    %v580 = vadd.f32 0.0, %v579
    %v581 = vpop.f32.mrf.mxu0
    %v582 = vadd.f32 0.0, %v581
    %583 = vmatmul.bf16.gmra.mxu0 %v447
    %v584 = vpop.f32.mrf.mxu0
    %v585 = vadd.f32 0.0, %v584
    %v586 = vpop.f32.mrf.mxu0
    %v587 = vadd.f32 0.0, %v586
    %588 = vmatmul.bf16.gmra.mxu0 %v450
    %v589 = vpop.f32.mrf.mxu0
    %v590 = vadd.f32 0.0, %v589
    %v591 = vpop.f32.mrf.mxu0
    %v592 = vadd.f32 0.0, %v591
    %593 = vdwg.mxu0
    %594 = vmatpush.bf16.msra.mxu0 0
    %595 = vmatpush.bf16.msra.mxu0 0
    %596 = vmatpush.bf16.msra.mxu0 0
    %597 = vmatpush.bf16.msra.mxu0 0
    %598 = vmatpush.bf16.msra.mxu0 0
    %599 = vmatpush.bf16.msra.mxu0 0
    %600 = vmatpush.bf16.msra.mxu0 %v457
    %601 = vmatpush.bf16.msra.mxu0 %v368
    %602 = vmatmul.bf16.gmra.mxu0 %v381
    %v603 = vpop.f32.mrf.mxu0
    %v604 = vadd.f32 0.0, %v603
    %v605 = vpop.f32.mrf.mxu0
    %v606 = vadd.f32 0.0, %v605
    %607 = vmatmul.bf16.gmra.mxu0 %v384
    %v608 = vpop.f32.mrf.mxu0
    %v609 = vadd.f32 0.0, %v608
    %v610 = vpop.f32.mrf.mxu0
    %v611 = vadd.f32 0.0, %v610
    %612 = vmatmul.bf16.gmra.mxu0 %v387
    %v613 = vpop.f32.mrf.mxu0
    %v614 = vadd.f32 0.0, %v613
    %v615 = vpop.f32.mrf.mxu0
    %v616 = vadd.f32 0.0, %v615
    %617 = vmatmul.bf16.gmra.mxu0 %v390
    %v618 = vpop.f32.mrf.mxu0
    %v619 = vadd.f32 0.0, %v618
    %v620 = vpop.f32.mrf.mxu0
    %v621 = vadd.f32 0.0, %v620
    %622 = vmatmul.bf16.gmra.mxu0 %v393
    %v623 = vpop.f32.mrf.mxu0
    %v624 = vadd.f32 0.0, %v623
    %v625 = vpop.f32.mrf.mxu0
    %v626 = vadd.f32 0.0, %v625
    %627 = vmatmul.bf16.gmra.mxu0 %v396
    %v628 = vpop.f32.mrf.mxu0
    %v629 = vadd.f32 0.0, %v628
    %v630 = vpop.f32.mrf.mxu0
    %v631 = vadd.f32 0.0, %v630
    %632 = vmatmul.bf16.gmra.mxu0 %v399
    %v633 = vpop.f32.mrf.mxu0
    %v634 = vadd.f32 0.0, %v633
    %v635 = vpop.f32.mrf.mxu0
    %v636 = vadd.f32 0.0, %v635
    %637 = vmatmul.bf16.gmra.mxu0 %v402
    %v638 = vpop.f32.mrf.mxu0
    %v639 = vadd.f32 0.0, %v638
    %v640 = vpop.f32.mrf.mxu0
    %v641 = vadd.f32 0.0, %v640
    %642 = vmatmul.bf16.gmra.mxu0 %v405
    %v643 = vpop.f32.mrf.mxu0
    %v644 = vadd.f32 0.0, %v643
    %v645 = vpop.f32.mrf.mxu0
    %v646 = vadd.f32 0.0, %v645
    %647 = vmatmul.bf16.gmra.mxu0 %v408
    %v648 = vpop.f32.mrf.mxu0
    %v649 = vadd.f32 0.0, %v648
    %v650 = vpop.f32.mrf.mxu0
    %v651 = vadd.f32 0.0, %v650
    %652 = vmatmul.bf16.gmra.mxu0 %v411
    %v653 = vpop.f32.mrf.mxu0
    %v654 = vadd.f32 0.0, %v653
    %v655 = vpop.f32.mrf.mxu0
    %v656 = vadd.f32 0.0, %v655
    %657 = vmatmul.bf16.gmra.mxu0 %v414
    %v658 = vpop.f32.mrf.mxu0
    %v659 = vadd.f32 0.0, %v658
    %v660 = vpop.f32.mrf.mxu0
    %v661 = vadd.f32 0.0, %v660
    %662 = vmatmul.bf16.gmra.mxu0 %v417
    %v663 = vpop.f32.mrf.mxu0
    %v664 = vadd.f32 0.0, %v663
    %v665 = vpop.f32.mrf.mxu0
    %v666 = vadd.f32 0.0, %v665
    %667 = vmatmul.bf16.gmra.mxu0 %v420
    %v668 = vpop.f32.mrf.mxu0
    %v669 = vadd.f32 0.0, %v668
    %v670 = vpop.f32.mrf.mxu0
    %v671 = vadd.f32 0.0, %v670
    %672 = vmatmul.bf16.gmra.mxu0 %v423
    %v673 = vpop.f32.mrf.mxu0
    %v674 = vadd.f32 0.0, %v673
    %v675 = vpop.f32.mrf.mxu0
    %v676 = vadd.f32 0.0, %v675
    %677 = vmatmul.bf16.gmra.mxu0 %v426
    %v678 = vpop.f32.mrf.mxu0
    %v679 = vadd.f32 0.0, %v678
    %v680 = vpop.f32.mrf.mxu0
    %v681 = vadd.f32 0.0, %v680
    %682 = vmatmul.bf16.gmra.mxu0 %v429
    %v683 = vpop.f32.mrf.mxu0
    %v684 = vadd.f32 0.0, %v683
    %v685 = vpop.f32.mrf.mxu0
    %v686 = vadd.f32 0.0, %v685
    %687 = vmatmul.bf16.gmra.mxu0 %v432
    %v688 = vpop.f32.mrf.mxu0
    %v689 = vadd.f32 0.0, %v688
    %v690 = vpop.f32.mrf.mxu0
    %v691 = vadd.f32 0.0, %v690
    %692 = vmatmul.bf16.gmra.mxu0 %v435
    %v693 = vpop.f32.mrf.mxu0
    %v694 = vadd.f32 0.0, %v693
    %v695 = vpop.f32.mrf.mxu0
    %v696 = vadd.f32 0.0, %v695
    %697 = vmatmul.bf16.gmra.mxu0 %v438
    %v698 = vpop.f32.mrf.mxu0
    %v699 = vadd.f32 0.0, %v698
    %v700 = vpop.f32.mrf.mxu0
    %v701 = vadd.f32 0.0, %v700
    %702 = vmatmul.bf16.gmra.mxu0 %v441
    %v703 = vpop.f32.mrf.mxu0
    %v704 = vadd.f32 0.0, %v703
    %v705 = vpop.f32.mrf.mxu0
    %v706 = vadd.f32 0.0, %v705
    %707 = vmatmul.bf16.gmra.mxu0 %v444
    %v708 = vpop.f32.mrf.mxu0
    %v709 = vadd.f32 0.0, %v708
    %v710 = vpop.f32.mrf.mxu0
    %v711 = vadd.f32 0.0, %v710
    %712 = vmatmul.bf16.gmra.mxu0 %v447
    %v713 = vpop.f32.mrf.mxu0
    %v714 = vadd.f32 0.0, %v713
    %v715 = vpop.f32.mrf.mxu0
    %v716 = vadd.f32 0.0, %v715
    %717 = vmatmul.bf16.gmra.mxu0 %v450
    %v718 = vpop.f32.mrf.mxu0
    %v719 = vadd.f32 0.0, %v718
    %v720 = vpop.f32.mrf.mxu0
    %v721 = vadd.f32 0.0, %v720
    %722 = vdwg.mxu0
    %723 = vmatpush.bf16.msra.mxu0 0
    %724 = vmatpush.bf16.msra.mxu0 0
    %725 = vmatpush.bf16.msra.mxu0 0
    %726 = vmatpush.bf16.msra.mxu0 0
    %727 = vmatpush.bf16.msra.mxu0 0
    %728 = vmatpush.bf16.msra.mxu0 0
    %729 = vmatpush.bf16.msra.mxu0 %v460
    %730 = vmatpush.bf16.msra.mxu0 %v369
    %731 = vmatmul.bf16.gmra.mxu0 %v381
    %v732 = vpop.f32.mrf.mxu0
    %v733 = vadd.f32 0.0, %v732
    %v734 = vpop.f32.mrf.mxu0
    %v735 = vadd.f32 0.0, %v734
    %736 = vmatmul.bf16.gmra.mxu0 %v384
    %v737 = vpop.f32.mrf.mxu0
    %v738 = vadd.f32 0.0, %v737
    %v739 = vpop.f32.mrf.mxu0
    %v740 = vadd.f32 0.0, %v739
    %741 = vmatmul.bf16.gmra.mxu0 %v387
    %v742 = vpop.f32.mrf.mxu0
    %v743 = vadd.f32 0.0, %v742
    %v744 = vpop.f32.mrf.mxu0
    %v745 = vadd.f32 0.0, %v744
    %746 = vmatmul.bf16.gmra.mxu0 %v390
    %v747 = vpop.f32.mrf.mxu0
    %v748 = vadd.f32 0.0, %v747
    %v749 = vpop.f32.mrf.mxu0
    %v750 = vadd.f32 0.0, %v749
    %751 = vmatmul.bf16.gmra.mxu0 %v393
    %v752 = vpop.f32.mrf.mxu0
    %v753 = vadd.f32 0.0, %v752
    %v754 = vpop.f32.mrf.mxu0
    %v755 = vadd.f32 0.0, %v754
    %756 = vmatmul.bf16.gmra.mxu0 %v396
    %v757 = vpop.f32.mrf.mxu0
    %v758 = vadd.f32 0.0, %v757
    %v759 = vpop.f32.mrf.mxu0
    %v760 = vadd.f32 0.0, %v759
    %761 = vmatmul.bf16.gmra.mxu0 %v399
    %v762 = vpop.f32.mrf.mxu0
    %v763 = vadd.f32 0.0, %v762
    %v764 = vpop.f32.mrf.mxu0
    %v765 = vadd.f32 0.0, %v764
    %766 = vmatmul.bf16.gmra.mxu0 %v402
    %v767 = vpop.f32.mrf.mxu0
    %v768 = vadd.f32 0.0, %v767
    %v769 = vpop.f32.mrf.mxu0
    %v770 = vadd.f32 0.0, %v769
    %771 = vmatmul.bf16.gmra.mxu0 %v405
    %v772 = vpop.f32.mrf.mxu0
    %v773 = vadd.f32 0.0, %v772
    %v774 = vpop.f32.mrf.mxu0
    %v775 = vadd.f32 0.0, %v774
    %776 = vmatmul.bf16.gmra.mxu0 %v408
    %v777 = vpop.f32.mrf.mxu0
    %v778 = vadd.f32 0.0, %v777
    %v779 = vpop.f32.mrf.mxu0
    %v780 = vadd.f32 0.0, %v779
    %781 = vmatmul.bf16.gmra.mxu0 %v411
    %v782 = vpop.f32.mrf.mxu0
    %v783 = vadd.f32 0.0, %v782
    %v784 = vpop.f32.mrf.mxu0
    %v785 = vadd.f32 0.0, %v784
    %786 = vmatmul.bf16.gmra.mxu0 %v414
    %v787 = vpop.f32.mrf.mxu0
    %v788 = vadd.f32 0.0, %v787
    %v789 = vpop.f32.mrf.mxu0
    %v790 = vadd.f32 0.0, %v789
    %791 = vmatmul.bf16.gmra.mxu0 %v417
    %v792 = vpop.f32.mrf.mxu0
    %v793 = vadd.f32 0.0, %v792
    %v794 = vpop.f32.mrf.mxu0
    %v795 = vadd.f32 0.0, %v794
    %796 = vmatmul.bf16.gmra.mxu0 %v420
    %v797 = vpop.f32.mrf.mxu0
    %v798 = vadd.f32 0.0, %v797
    %v799 = vpop.f32.mrf.mxu0
    %v800 = vadd.f32 0.0, %v799
    %801 = vmatmul.bf16.gmra.mxu0 %v423
    %v802 = vpop.f32.mrf.mxu0
    %v803 = vadd.f32 0.0, %v802
    %v804 = vpop.f32.mrf.mxu0
    %v805 = vadd.f32 0.0, %v804
    %806 = vmatmul.bf16.gmra.mxu0 %v426
    %v807 = vpop.f32.mrf.mxu0
    %v808 = vadd.f32 0.0, %v807
    %v809 = vpop.f32.mrf.mxu0
    %v810 = vadd.f32 0.0, %v809
    %811 = vmatmul.bf16.gmra.mxu0 %v429
    %v812 = vpop.f32.mrf.mxu0
    %v813 = vadd.f32 0.0, %v812
    %v814 = vpop.f32.mrf.mxu0
    %v815 = vadd.f32 0.0, %v814
    %816 = vmatmul.bf16.gmra.mxu0 %v432
    %v817 = vpop.f32.mrf.mxu0
    %v818 = vadd.f32 0.0, %v817
    %v819 = vpop.f32.mrf.mxu0
    %v820 = vadd.f32 0.0, %v819
    %821 = vmatmul.bf16.gmra.mxu0 %v435
    %v822 = vpop.f32.mrf.mxu0
    %v823 = vadd.f32 0.0, %v822
    %v824 = vpop.f32.mrf.mxu0
    %v825 = vadd.f32 0.0, %v824
    %826 = vmatmul.bf16.gmra.mxu0 %v438
    %v827 = vpop.f32.mrf.mxu0
    %v828 = vadd.f32 0.0, %v827
    %v829 = vpop.f32.mrf.mxu0
    %v830 = vadd.f32 0.0, %v829
    %831 = vmatmul.bf16.gmra.mxu0 %v441
    %v832 = vpop.f32.mrf.mxu0
    %v833 = vadd.f32 0.0, %v832
    %v834 = vpop.f32.mrf.mxu0
    %v835 = vadd.f32 0.0, %v834
    %836 = vmatmul.bf16.gmra.mxu0 %v444
    %v837 = vpop.f32.mrf.mxu0
    %v838 = vadd.f32 0.0, %v837
    %v839 = vpop.f32.mrf.mxu0
    %v840 = vadd.f32 0.0, %v839
    %841 = vmatmul.bf16.gmra.mxu0 %v447
    %v842 = vpop.f32.mrf.mxu0
    %v843 = vadd.f32 0.0, %v842
    %v844 = vpop.f32.mrf.mxu0
    %v845 = vadd.f32 0.0, %v844
    %846 = vmatmul.bf16.gmra.mxu0 %v450
    %v847 = vpop.f32.mrf.mxu0
    %v848 = vadd.f32 0.0, %v847
    %v849 = vpop.f32.mrf.mxu0
    %v850 = vadd.f32 0.0, %v849
    %851 = vdwg.mxu0
    %852 = vmatpush.bf16.msra.mxu0 0
    %853 = vmatpush.bf16.msra.mxu0 0
    %854 = vmatpush.bf16.msra.mxu0 0
    %855 = vmatpush.bf16.msra.mxu0 0
    %856 = vmatpush.bf16.msra.mxu0 0
    %857 = vmatpush.bf16.msra.mxu0 0
    %858 = vmatpush.bf16.msra.mxu0 %v463
    %859 = vmatpush.bf16.msra.mxu0 %v370
    %860 = vmatmul.bf16.gmra.mxu0 %v381
    %v861 = vpop.f32.mrf.mxu0
    %v862 = vadd.f32 0.0, %v861
    %v863 = vpop.f32.mrf.mxu0
    %v864 = vadd.f32 0.0, %v863
    %865 = vmatmul.bf16.gmra.mxu0 %v384
    %v866 = vpop.f32.mrf.mxu0
    %v867 = vadd.f32 0.0, %v866
    %v868 = vpop.f32.mrf.mxu0
    %v869 = vadd.f32 0.0, %v868
    %870 = vmatmul.bf16.gmra.mxu0 %v387
    %v871 = vpop.f32.mrf.mxu0
    %v872 = vadd.f32 0.0, %v871
    %v873 = vpop.f32.mrf.mxu0
    %v874 = vadd.f32 0.0, %v873
    %875 = vmatmul.bf16.gmra.mxu0 %v390
    %v876 = vpop.f32.mrf.mxu0
    %v877 = vadd.f32 0.0, %v876
    %v878 = vpop.f32.mrf.mxu0
    %v879 = vadd.f32 0.0, %v878
    %880 = vmatmul.bf16.gmra.mxu0 %v393
    %v881 = vpop.f32.mrf.mxu0
    %v882 = vadd.f32 0.0, %v881
    %v883 = vpop.f32.mrf.mxu0
    %v884 = vadd.f32 0.0, %v883
    %885 = vmatmul.bf16.gmra.mxu0 %v396
    %v886 = vpop.f32.mrf.mxu0
    %v887 = vadd.f32 0.0, %v886
    %v888 = vpop.f32.mrf.mxu0
    %v889 = vadd.f32 0.0, %v888
    %890 = vmatmul.bf16.gmra.mxu0 %v399
    %v891 = vpop.f32.mrf.mxu0
    %v892 = vadd.f32 0.0, %v891
    %v893 = vpop.f32.mrf.mxu0
    %v894 = vadd.f32 0.0, %v893
    %895 = vmatmul.bf16.gmra.mxu0 %v402
    %v896 = vpop.f32.mrf.mxu0
    %v897 = vadd.f32 0.0, %v896
    %v898 = vpop.f32.mrf.mxu0
    %v899 = vadd.f32 0.0, %v898
    %900 = vmatmul.bf16.gmra.mxu0 %v405
    %v901 = vpop.f32.mrf.mxu0
    %v902 = vadd.f32 0.0, %v901
    %v903 = vpop.f32.mrf.mxu0
    %v904 = vadd.f32 0.0, %v903
    %905 = vmatmul.bf16.gmra.mxu0 %v408
    %v906 = vpop.f32.mrf.mxu0
    %v907 = vadd.f32 0.0, %v906
    %v908 = vpop.f32.mrf.mxu0
    %v909 = vadd.f32 0.0, %v908
    %910 = vmatmul.bf16.gmra.mxu0 %v411
    %v911 = vpop.f32.mrf.mxu0
    %v912 = vadd.f32 0.0, %v911
    %v913 = vpop.f32.mrf.mxu0
    %v914 = vadd.f32 0.0, %v913
    %915 = vmatmul.bf16.gmra.mxu0 %v414
    %v916 = vpop.f32.mrf.mxu0
    %v917 = vadd.f32 0.0, %v916
    %v918 = vpop.f32.mrf.mxu0
    %v919 = vadd.f32 0.0, %v918
    %920 = vmatmul.bf16.gmra.mxu0 %v417
    %v921 = vpop.f32.mrf.mxu0
    %v922 = vadd.f32 0.0, %v921
    %v923 = vpop.f32.mrf.mxu0
    %v924 = vadd.f32 0.0, %v923
    %925 = vmatmul.bf16.gmra.mxu0 %v420
    %v926 = vpop.f32.mrf.mxu0
    %v927 = vadd.f32 0.0, %v926
    %v928 = vpop.f32.mrf.mxu0
    %v929 = vadd.f32 0.0, %v928
    %930 = vmatmul.bf16.gmra.mxu0 %v423
    %v931 = vpop.f32.mrf.mxu0
    %v932 = vadd.f32 0.0, %v931
    %v933 = vpop.f32.mrf.mxu0
    %v934 = vadd.f32 0.0, %v933
    %935 = vmatmul.bf16.gmra.mxu0 %v426
    %v936 = vpop.f32.mrf.mxu0
    %v937 = vadd.f32 0.0, %v936
    %v938 = vpop.f32.mrf.mxu0
    %v939 = vadd.f32 0.0, %v938
    %940 = vmatmul.bf16.gmra.mxu0 %v429
    %v941 = vpop.f32.mrf.mxu0
    %v942 = vadd.f32 0.0, %v941
    %v943 = vpop.f32.mrf.mxu0
    %v944 = vadd.f32 0.0, %v943
    %945 = vmatmul.bf16.gmra.mxu0 %v432
    %v946 = vpop.f32.mrf.mxu0
    %v947 = vadd.f32 0.0, %v946
    %v948 = vpop.f32.mrf.mxu0
    %v949 = vadd.f32 0.0, %v948
    %950 = vmatmul.bf16.gmra.mxu0 %v435
    %v951 = vpop.f32.mrf.mxu0
    %v952 = vadd.f32 0.0, %v951
    %v953 = vpop.f32.mrf.mxu0
    %v954 = vadd.f32 0.0, %v953
    %955 = vmatmul.bf16.gmra.mxu0 %v438
    %v956 = vpop.f32.mrf.mxu0
    %v957 = vadd.f32 0.0, %v956
    %v958 = vpop.f32.mrf.mxu0
    %v959 = vadd.f32 0.0, %v958
    %960 = vmatmul.bf16.gmra.mxu0 %v441
    %v961 = vpop.f32.mrf.mxu0
    %v962 = vadd.f32 0.0, %v961
    %v963 = vpop.f32.mrf.mxu0
    %v964 = vadd.f32 0.0, %v963
    %965 = vmatmul.bf16.gmra.mxu0 %v444
    %v966 = vpop.f32.mrf.mxu0
    %v967 = vadd.f32 0.0, %v966
    %v968 = vpop.f32.mrf.mxu0
    %v969 = vadd.f32 0.0, %v968
    %970 = vmatmul.bf16.gmra.mxu0 %v447
    %v971 = vpop.f32.mrf.mxu0
    %v972 = vadd.f32 0.0, %v971
    %v973 = vpop.f32.mrf.mxu0
    %v974 = vadd.f32 0.0, %v973
    %975 = vmatmul.bf16.gmra.mxu0 %v450
    %v976 = vpop.f32.mrf.mxu0
    %v977 = vadd.f32 0.0, %v976
    %v978 = vpop.f32.mrf.mxu0
    %v979 = vadd.f32 0.0, %v978
    %980 = vdwg.mxu0
    %v983 = vunpack.c.l.b16 %v150
    %v984 = vunpack.c.l.b16 %v151
    %v985 = vpack.c.b16 %v984, %v983
    %v994 = vunpack.c.l.b16 %v206
    %v995 = vunpack.c.h.b16 %v206
    %v996 = vunpack.c.l.b16 %v207
    %v997 = vunpack.c.h.b16 %v207
    %v998 = vunpack.c.l.b16 %v208
    %v999 = vunpack.c.h.b16 %v208
    %v1000 = vunpack.c.l.b16 %v209
    %v1001 = vunpack.c.h.b16 %v209
    %v1002 = vunpack.c.l.b16 %v210
    %v1003 = vunpack.c.h.b16 %v210
    %v1004 = vunpack.c.l.b16 %v211
    %v1005 = vunpack.c.h.b16 %v211
    %v1006 = vunpack.c.l.b16 %v212
    %v1007 = vunpack.c.h.b16 %v212
    %v1008 = vunpack.c.l.b16 %v213
    %v1009 = vunpack.c.h.b16 %v213
    %v1010 = vpack.c.b16 %v998, %v994
    %v1011 = vpack.c.b16 %v999, %v995
    %v1012 = vpack.c.b16 %v1000, %v996
    %v1013 = vpack.c.b16 %v1001, %v997
    %v1014 = vpack.c.b16 %v1006, %v1002
    %v1015 = vpack.c.b16 %v1007, %v1003
    %v1016 = vpack.c.b16 %v1008, %v1004
    %v1017 = vpack.c.b16 %v1009, %v1005
    %v1023 = vsel %vm379, %v985, 0
    %v1026 = vsel %vm452, %v1014, 0
    %v1029 = vsel %vm452, %v1015, 0
    %v1032 = vsel %vm452, %v1016, 0
    %v1035 = vsel %vm452, %v1017, 0
    %1037 = vmatpush.bf16.msra.mxu0 0
    %1038 = vmatpush.bf16.msra.mxu0 0
    %1039 = vmatpush.bf16.msra.mxu0 0
    %1040 = vmatpush.bf16.msra.mxu0 0
    %1041 = vmatpush.bf16.msra.mxu0 0
    %1042 = vmatpush.bf16.msra.mxu0 0
    %1043 = vmatpush.bf16.msra.mxu0 %v1026
    %1044 = vmatpush.bf16.msra.mxu0 %v1010
    %1045 = vmatmul.bf16.gmra.mxu0 %v1023
    %v1046 = vpop.f32.mrf.mxu0
    %v1047 = vadd.f32 %v475, %v1046
    %v1048 = vpop.f32.mrf.mxu0
    %v1049 = vadd.f32 %v477, %v1048
    %1050 = vmatmul.bf16.gmra.mxu0 %v381
    %v1051 = vpop.f32.mrf.mxu0
    %v1052 = vadd.f32 %v480, %v1051
    %v1053 = vpop.f32.mrf.mxu0
    %v1054 = vadd.f32 %v482, %v1053
    %1055 = vmatmul.bf16.gmra.mxu0 %v384
    %v1056 = vpop.f32.mrf.mxu0
    %v1057 = vadd.f32 %v485, %v1056
    %v1058 = vpop.f32.mrf.mxu0
    %v1059 = vadd.f32 %v487, %v1058
    %1060 = vmatmul.bf16.gmra.mxu0 %v387
    %v1061 = vpop.f32.mrf.mxu0
    %v1062 = vadd.f32 %v490, %v1061
    %v1063 = vpop.f32.mrf.mxu0
    %v1064 = vadd.f32 %v492, %v1063
    %1065 = vmatmul.bf16.gmra.mxu0 %v390
    %v1066 = vpop.f32.mrf.mxu0
    %v1067 = vadd.f32 %v495, %v1066
    %v1068 = vpop.f32.mrf.mxu0
    %v1069 = vadd.f32 %v497, %v1068
    %1070 = vmatmul.bf16.gmra.mxu0 %v393
    %v1071 = vpop.f32.mrf.mxu0
    %v1072 = vadd.f32 %v500, %v1071
    %v1073 = vpop.f32.mrf.mxu0
    %v1074 = vadd.f32 %v502, %v1073
    %1075 = vmatmul.bf16.gmra.mxu0 %v396
    %v1076 = vpop.f32.mrf.mxu0
    %v1077 = vadd.f32 %v505, %v1076
    %v1078 = vpop.f32.mrf.mxu0
    %v1079 = vadd.f32 %v507, %v1078
    %1080 = vmatmul.bf16.gmra.mxu0 %v399
    %v1081 = vpop.f32.mrf.mxu0
    %v1082 = vadd.f32 %v510, %v1081
    %v1083 = vpop.f32.mrf.mxu0
    %v1084 = vadd.f32 %v512, %v1083
    %1085 = vmatmul.bf16.gmra.mxu0 %v402
    %v1086 = vpop.f32.mrf.mxu0
    %v1087 = vadd.f32 %v515, %v1086
    %v1088 = vpop.f32.mrf.mxu0
    %v1089 = vadd.f32 %v517, %v1088
    %1090 = vmatmul.bf16.gmra.mxu0 %v405
    %v1091 = vpop.f32.mrf.mxu0
    %v1092 = vadd.f32 %v520, %v1091
    %v1093 = vpop.f32.mrf.mxu0
    %v1094 = vadd.f32 %v522, %v1093
    %1095 = vmatmul.bf16.gmra.mxu0 %v408
    %v1096 = vpop.f32.mrf.mxu0
    %v1097 = vadd.f32 %v525, %v1096
    %v1098 = vpop.f32.mrf.mxu0
    %v1099 = vadd.f32 %v527, %v1098
    %1100 = vmatmul.bf16.gmra.mxu0 %v411
    %v1101 = vpop.f32.mrf.mxu0
    %v1102 = vadd.f32 %v530, %v1101
    %v1103 = vpop.f32.mrf.mxu0
    %v1104 = vadd.f32 %v532, %v1103
    %1105 = vmatmul.bf16.gmra.mxu0 %v414
    %v1106 = vpop.f32.mrf.mxu0
    %v1107 = vadd.f32 %v535, %v1106
    %v1108 = vpop.f32.mrf.mxu0
    %v1109 = vadd.f32 %v537, %v1108
    %1110 = vmatmul.bf16.gmra.mxu0 %v417
    %v1111 = vpop.f32.mrf.mxu0
    %v1112 = vadd.f32 %v540, %v1111
    %v1113 = vpop.f32.mrf.mxu0
    %v1114 = vadd.f32 %v542, %v1113
    %1115 = vmatmul.bf16.gmra.mxu0 %v420
    %v1116 = vpop.f32.mrf.mxu0
    %v1117 = vadd.f32 %v545, %v1116
    %v1118 = vpop.f32.mrf.mxu0
    %v1119 = vadd.f32 %v547, %v1118
    %1120 = vmatmul.bf16.gmra.mxu0 %v423
    %v1121 = vpop.f32.mrf.mxu0
    %v1122 = vadd.f32 %v550, %v1121
    %v1123 = vpop.f32.mrf.mxu0
    %v1124 = vadd.f32 %v552, %v1123
    %1125 = vmatmul.bf16.gmra.mxu0 %v426
    %v1126 = vpop.f32.mrf.mxu0
    %v1127 = vadd.f32 %v555, %v1126
    %v1128 = vpop.f32.mrf.mxu0
    %v1129 = vadd.f32 %v557, %v1128
    %1130 = vmatmul.bf16.gmra.mxu0 %v429
    %v1131 = vpop.f32.mrf.mxu0
    %v1132 = vadd.f32 %v560, %v1131
    %v1133 = vpop.f32.mrf.mxu0
    %v1134 = vadd.f32 %v562, %v1133
    %1135 = vmatmul.bf16.gmra.mxu0 %v432
    %v1136 = vpop.f32.mrf.mxu0
    %v1137 = vadd.f32 %v565, %v1136
    %v1138 = vpop.f32.mrf.mxu0
    %v1139 = vadd.f32 %v567, %v1138
    %1140 = vmatmul.bf16.gmra.mxu0 %v435
    %v1141 = vpop.f32.mrf.mxu0
    %v1142 = vadd.f32 %v570, %v1141
    %v1143 = vpop.f32.mrf.mxu0
    %v1144 = vadd.f32 %v572, %v1143
    %1145 = vmatmul.bf16.gmra.mxu0 %v438
    %v1146 = vpop.f32.mrf.mxu0
    %v1147 = vadd.f32 %v575, %v1146
    %v1148 = vpop.f32.mrf.mxu0
    %v1149 = vadd.f32 %v577, %v1148
    %1150 = vmatmul.bf16.gmra.mxu0 %v441
    %v1151 = vpop.f32.mrf.mxu0
    %v1152 = vadd.f32 %v580, %v1151
    %v1153 = vpop.f32.mrf.mxu0
    %v1154 = vadd.f32 %v582, %v1153
    %1155 = vmatmul.bf16.gmra.mxu0 %v444
    %v1156 = vpop.f32.mrf.mxu0
    %v1157 = vadd.f32 %v585, %v1156
    %v1158 = vpop.f32.mrf.mxu0
    %v1159 = vadd.f32 %v587, %v1158
    %1160 = vmatmul.bf16.gmra.mxu0 %v447
    %v1161 = vpop.f32.mrf.mxu0
    %v1162 = vadd.f32 %v590, %v1161
    %v1163 = vpop.f32.mrf.mxu0
    %v1164 = vadd.f32 %v592, %v1163
    %1165 = vdwg.mxu0
    %1166 = vmatpush.bf16.msra.mxu0 0
    %1167 = vmatpush.bf16.msra.mxu0 0
    %1168 = vmatpush.bf16.msra.mxu0 0
    %1169 = vmatpush.bf16.msra.mxu0 0
    %1170 = vmatpush.bf16.msra.mxu0 0
    %1171 = vmatpush.bf16.msra.mxu0 0
    %1172 = vmatpush.bf16.msra.mxu0 %v1029
    %1173 = vmatpush.bf16.msra.mxu0 %v1011
    %1174 = vmatmul.bf16.gmra.mxu0 %v1023
    %v1175 = vpop.f32.mrf.mxu0
    %v1176 = vadd.f32 %v604, %v1175
    %v1177 = vpop.f32.mrf.mxu0
    %v1178 = vadd.f32 %v606, %v1177
    %1179 = vmatmul.bf16.gmra.mxu0 %v381
    %v1180 = vpop.f32.mrf.mxu0
    %v1181 = vadd.f32 %v609, %v1180
    %v1182 = vpop.f32.mrf.mxu0
    %v1183 = vadd.f32 %v611, %v1182
    %1184 = vmatmul.bf16.gmra.mxu0 %v384
    %v1185 = vpop.f32.mrf.mxu0
    %v1186 = vadd.f32 %v614, %v1185
    %v1187 = vpop.f32.mrf.mxu0
    %v1188 = vadd.f32 %v616, %v1187
    %1189 = vmatmul.bf16.gmra.mxu0 %v387
    %v1190 = vpop.f32.mrf.mxu0
    %v1191 = vadd.f32 %v619, %v1190
    %v1192 = vpop.f32.mrf.mxu0
    %v1193 = vadd.f32 %v621, %v1192
    %1194 = vmatmul.bf16.gmra.mxu0 %v390
    %v1195 = vpop.f32.mrf.mxu0
    %v1196 = vadd.f32 %v624, %v1195
    %v1197 = vpop.f32.mrf.mxu0
    %v1198 = vadd.f32 %v626, %v1197
    %1199 = vmatmul.bf16.gmra.mxu0 %v393
    %v1200 = vpop.f32.mrf.mxu0
    %v1201 = vadd.f32 %v629, %v1200
    %v1202 = vpop.f32.mrf.mxu0
    %v1203 = vadd.f32 %v631, %v1202
    %1204 = vmatmul.bf16.gmra.mxu0 %v396
    %v1205 = vpop.f32.mrf.mxu0
    %v1206 = vadd.f32 %v634, %v1205
    %v1207 = vpop.f32.mrf.mxu0
    %v1208 = vadd.f32 %v636, %v1207
    %1209 = vmatmul.bf16.gmra.mxu0 %v399
    %v1210 = vpop.f32.mrf.mxu0
    %v1211 = vadd.f32 %v639, %v1210
    %v1212 = vpop.f32.mrf.mxu0
    %v1213 = vadd.f32 %v641, %v1212
    %1214 = vmatmul.bf16.gmra.mxu0 %v402
    %v1215 = vpop.f32.mrf.mxu0
    %v1216 = vadd.f32 %v644, %v1215
    %v1217 = vpop.f32.mrf.mxu0
    %v1218 = vadd.f32 %v646, %v1217
    %1219 = vmatmul.bf16.gmra.mxu0 %v405
    %v1220 = vpop.f32.mrf.mxu0
    %v1221 = vadd.f32 %v649, %v1220
    %v1222 = vpop.f32.mrf.mxu0
    %v1223 = vadd.f32 %v651, %v1222
    %1224 = vmatmul.bf16.gmra.mxu0 %v408
    %v1225 = vpop.f32.mrf.mxu0
    %v1226 = vadd.f32 %v654, %v1225
    %v1227 = vpop.f32.mrf.mxu0
    %v1228 = vadd.f32 %v656, %v1227
    %1229 = vmatmul.bf16.gmra.mxu0 %v411
    %v1230 = vpop.f32.mrf.mxu0
    %v1231 = vadd.f32 %v659, %v1230
    %v1232 = vpop.f32.mrf.mxu0
    %v1233 = vadd.f32 %v661, %v1232
    %1234 = vmatmul.bf16.gmra.mxu0 %v414
    %v1235 = vpop.f32.mrf.mxu0
    %v1236 = vadd.f32 %v664, %v1235
    %v1237 = vpop.f32.mrf.mxu0
    %v1238 = vadd.f32 %v666, %v1237
    %1239 = vmatmul.bf16.gmra.mxu0 %v417
    %v1240 = vpop.f32.mrf.mxu0
    %v1241 = vadd.f32 %v669, %v1240
    %v1242 = vpop.f32.mrf.mxu0
    %v1243 = vadd.f32 %v671, %v1242
    %1244 = vmatmul.bf16.gmra.mxu0 %v420
    %v1245 = vpop.f32.mrf.mxu0
    %v1246 = vadd.f32 %v674, %v1245
    %v1247 = vpop.f32.mrf.mxu0
    %v1248 = vadd.f32 %v676, %v1247
    %1249 = vmatmul.bf16.gmra.mxu0 %v423
    %v1250 = vpop.f32.mrf.mxu0
    %v1251 = vadd.f32 %v679, %v1250
    %v1252 = vpop.f32.mrf.mxu0
    %v1253 = vadd.f32 %v681, %v1252
    %1254 = vmatmul.bf16.gmra.mxu0 %v426
    %v1255 = vpop.f32.mrf.mxu0
    %v1256 = vadd.f32 %v684, %v1255
    %v1257 = vpop.f32.mrf.mxu0
    %v1258 = vadd.f32 %v686, %v1257
    %1259 = vmatmul.bf16.gmra.mxu0 %v429
    %v1260 = vpop.f32.mrf.mxu0
    %v1261 = vadd.f32 %v689, %v1260
    %v1262 = vpop.f32.mrf.mxu0
    %v1263 = vadd.f32 %v691, %v1262
    %1264 = vmatmul.bf16.gmra.mxu0 %v432
    %v1265 = vpop.f32.mrf.mxu0
    %v1266 = vadd.f32 %v694, %v1265
    %v1267 = vpop.f32.mrf.mxu0
    %v1268 = vadd.f32 %v696, %v1267
    %1269 = vmatmul.bf16.gmra.mxu0 %v435
    %v1270 = vpop.f32.mrf.mxu0
    %v1271 = vadd.f32 %v699, %v1270
    %v1272 = vpop.f32.mrf.mxu0
    %v1273 = vadd.f32 %v701, %v1272
    %1274 = vmatmul.bf16.gmra.mxu0 %v438
    %v1275 = vpop.f32.mrf.mxu0
    %v1276 = vadd.f32 %v704, %v1275
    %v1277 = vpop.f32.mrf.mxu0
    %v1278 = vadd.f32 %v706, %v1277
    %1279 = vmatmul.bf16.gmra.mxu0 %v441
    %v1280 = vpop.f32.mrf.mxu0
    %v1281 = vadd.f32 %v709, %v1280
    %v1282 = vpop.f32.mrf.mxu0
    %v1283 = vadd.f32 %v711, %v1282
    %1284 = vmatmul.bf16.gmra.mxu0 %v444
    %v1285 = vpop.f32.mrf.mxu0
    %v1286 = vadd.f32 %v714, %v1285
    %v1287 = vpop.f32.mrf.mxu0
    %v1288 = vadd.f32 %v716, %v1287
    %1289 = vmatmul.bf16.gmra.mxu0 %v447
    %v1290 = vpop.f32.mrf.mxu0
    %v1291 = vadd.f32 %v719, %v1290
    %v1292 = vpop.f32.mrf.mxu0
    %v1293 = vadd.f32 %v721, %v1292
    %1294 = vdwg.mxu0
    %1295 = vmatpush.bf16.msra.mxu0 0
    %1296 = vmatpush.bf16.msra.mxu0 0
    %1297 = vmatpush.bf16.msra.mxu0 0
    %1298 = vmatpush.bf16.msra.mxu0 0
    %1299 = vmatpush.bf16.msra.mxu0 0
    %1300 = vmatpush.bf16.msra.mxu0 0
    %1301 = vmatpush.bf16.msra.mxu0 %v1032
    %1302 = vmatpush.bf16.msra.mxu0 %v1012
    %1303 = vmatmul.bf16.gmra.mxu0 %v1023
    %v1304 = vpop.f32.mrf.mxu0
    %v1305 = vadd.f32 %v733, %v1304
    %v1306 = vpop.f32.mrf.mxu0
    %v1307 = vadd.f32 %v735, %v1306
    %1308 = vmatmul.bf16.gmra.mxu0 %v381
    %v1309 = vpop.f32.mrf.mxu0
    %v1310 = vadd.f32 %v738, %v1309
    %v1311 = vpop.f32.mrf.mxu0
    %v1312 = vadd.f32 %v740, %v1311
    %1313 = vmatmul.bf16.gmra.mxu0 %v384
    %v1314 = vpop.f32.mrf.mxu0
    %v1315 = vadd.f32 %v743, %v1314
    %v1316 = vpop.f32.mrf.mxu0
    %v1317 = vadd.f32 %v745, %v1316
    %1318 = vmatmul.bf16.gmra.mxu0 %v387
    %v1319 = vpop.f32.mrf.mxu0
    %v1320 = vadd.f32 %v748, %v1319
    %v1321 = vpop.f32.mrf.mxu0
    %v1322 = vadd.f32 %v750, %v1321
    %1323 = vmatmul.bf16.gmra.mxu0 %v390
    %v1324 = vpop.f32.mrf.mxu0
    %v1325 = vadd.f32 %v753, %v1324
    %v1326 = vpop.f32.mrf.mxu0
    %v1327 = vadd.f32 %v755, %v1326
    %1328 = vmatmul.bf16.gmra.mxu0 %v393
    %v1329 = vpop.f32.mrf.mxu0
    %v1330 = vadd.f32 %v758, %v1329
    %v1331 = vpop.f32.mrf.mxu0
    %v1332 = vadd.f32 %v760, %v1331
    %1333 = vmatmul.bf16.gmra.mxu0 %v396
    %v1334 = vpop.f32.mrf.mxu0
    %v1335 = vadd.f32 %v763, %v1334
    %v1336 = vpop.f32.mrf.mxu0
    %v1337 = vadd.f32 %v765, %v1336
    %1338 = vmatmul.bf16.gmra.mxu0 %v399
    %v1339 = vpop.f32.mrf.mxu0
    %v1340 = vadd.f32 %v768, %v1339
    %v1341 = vpop.f32.mrf.mxu0
    %v1342 = vadd.f32 %v770, %v1341
    %1343 = vmatmul.bf16.gmra.mxu0 %v402
    %v1344 = vpop.f32.mrf.mxu0
    %v1345 = vadd.f32 %v773, %v1344
    %v1346 = vpop.f32.mrf.mxu0
    %v1347 = vadd.f32 %v775, %v1346
    %1348 = vmatmul.bf16.gmra.mxu0 %v405
    %v1349 = vpop.f32.mrf.mxu0
    %v1350 = vadd.f32 %v778, %v1349
    %v1351 = vpop.f32.mrf.mxu0
    %v1352 = vadd.f32 %v780, %v1351
    %1353 = vmatmul.bf16.gmra.mxu0 %v408
    %v1354 = vpop.f32.mrf.mxu0
    %v1355 = vadd.f32 %v783, %v1354
    %v1356 = vpop.f32.mrf.mxu0
    %v1357 = vadd.f32 %v785, %v1356
    %1358 = vmatmul.bf16.gmra.mxu0 %v411
    %v1359 = vpop.f32.mrf.mxu0
    %v1360 = vadd.f32 %v788, %v1359
    %v1361 = vpop.f32.mrf.mxu0
    %v1362 = vadd.f32 %v790, %v1361
    %1363 = vmatmul.bf16.gmra.mxu0 %v414
    %v1364 = vpop.f32.mrf.mxu0
    %v1365 = vadd.f32 %v793, %v1364
    %v1366 = vpop.f32.mrf.mxu0
    %v1367 = vadd.f32 %v795, %v1366
    %1368 = vmatmul.bf16.gmra.mxu0 %v417
    %v1369 = vpop.f32.mrf.mxu0
    %v1370 = vadd.f32 %v798, %v1369
    %v1371 = vpop.f32.mrf.mxu0
    %v1372 = vadd.f32 %v800, %v1371
    %1373 = vmatmul.bf16.gmra.mxu0 %v420
    %v1374 = vpop.f32.mrf.mxu0
    %v1375 = vadd.f32 %v803, %v1374
    %v1376 = vpop.f32.mrf.mxu0
    %v1377 = vadd.f32 %v805, %v1376
    %1378 = vmatmul.bf16.gmra.mxu0 %v423
    %v1379 = vpop.f32.mrf.mxu0
    %v1380 = vadd.f32 %v808, %v1379
    %v1381 = vpop.f32.mrf.mxu0
    %v1382 = vadd.f32 %v810, %v1381
    %1383 = vmatmul.bf16.gmra.mxu0 %v426
    %v1384 = vpop.f32.mrf.mxu0
    %v1385 = vadd.f32 %v813, %v1384
    %v1386 = vpop.f32.mrf.mxu0
    %v1387 = vadd.f32 %v815, %v1386
    %1388 = vmatmul.bf16.gmra.mxu0 %v429
    %v1389 = vpop.f32.mrf.mxu0
    %v1390 = vadd.f32 %v818, %v1389
    %v1391 = vpop.f32.mrf.mxu0
    %v1392 = vadd.f32 %v820, %v1391
    %1393 = vmatmul.bf16.gmra.mxu0 %v432
    %v1394 = vpop.f32.mrf.mxu0
    %v1395 = vadd.f32 %v823, %v1394
    %v1396 = vpop.f32.mrf.mxu0
    %v1397 = vadd.f32 %v825, %v1396
    %1398 = vmatmul.bf16.gmra.mxu0 %v435
    %v1399 = vpop.f32.mrf.mxu0
    %v1400 = vadd.f32 %v828, %v1399
    %v1401 = vpop.f32.mrf.mxu0
    %v1402 = vadd.f32 %v830, %v1401
    %1403 = vmatmul.bf16.gmra.mxu0 %v438
    %v1404 = vpop.f32.mrf.mxu0
    %v1405 = vadd.f32 %v833, %v1404
    %v1406 = vpop.f32.mrf.mxu0
    %v1407 = vadd.f32 %v835, %v1406
    %1408 = vmatmul.bf16.gmra.mxu0 %v441
    %v1409 = vpop.f32.mrf.mxu0
    %v1410 = vadd.f32 %v838, %v1409
    %v1411 = vpop.f32.mrf.mxu0
    %v1412 = vadd.f32 %v840, %v1411
    %1413 = vmatmul.bf16.gmra.mxu0 %v444
    %v1414 = vpop.f32.mrf.mxu0
    %v1415 = vadd.f32 %v843, %v1414
    %v1416 = vpop.f32.mrf.mxu0
    %v1417 = vadd.f32 %v845, %v1416
    %1418 = vmatmul.bf16.gmra.mxu0 %v447
    %v1419 = vpop.f32.mrf.mxu0
    %v1420 = vadd.f32 %v848, %v1419
    %v1421 = vpop.f32.mrf.mxu0
    %v1422 = vadd.f32 %v850, %v1421
    %1423 = vdwg.mxu0
    %1424 = vmatpush.bf16.msra.mxu0 0
    %1425 = vmatpush.bf16.msra.mxu0 0
    %1426 = vmatpush.bf16.msra.mxu0 0
    %1427 = vmatpush.bf16.msra.mxu0 0
    %1428 = vmatpush.bf16.msra.mxu0 0
    %1429 = vmatpush.bf16.msra.mxu0 0
    %1430 = vmatpush.bf16.msra.mxu0 %v1035
    %1431 = vmatpush.bf16.msra.mxu0 %v1013
    %1432 = vmatmul.bf16.gmra.mxu0 %v1023
    %v1433 = vpop.f32.mrf.mxu0
    %v1434 = vadd.f32 %v862, %v1433
    %v1435 = vpop.f32.mrf.mxu0
    %v1436 = vadd.f32 %v864, %v1435
    %1437 = vmatmul.bf16.gmra.mxu0 %v381
    %v1438 = vpop.f32.mrf.mxu0
    %v1439 = vadd.f32 %v867, %v1438
    %v1440 = vpop.f32.mrf.mxu0
    %v1441 = vadd.f32 %v869, %v1440
    %1442 = vmatmul.bf16.gmra.mxu0 %v384
    %v1443 = vpop.f32.mrf.mxu0
    %v1444 = vadd.f32 %v872, %v1443
    %v1445 = vpop.f32.mrf.mxu0
    %v1446 = vadd.f32 %v874, %v1445
    %1447 = vmatmul.bf16.gmra.mxu0 %v387
    %v1448 = vpop.f32.mrf.mxu0
    %v1449 = vadd.f32 %v877, %v1448
    %v1450 = vpop.f32.mrf.mxu0
    %v1451 = vadd.f32 %v879, %v1450
    %1452 = vmatmul.bf16.gmra.mxu0 %v390
    %v1453 = vpop.f32.mrf.mxu0
    %v1454 = vadd.f32 %v882, %v1453
    %v1455 = vpop.f32.mrf.mxu0
    %v1456 = vadd.f32 %v884, %v1455
    %1457 = vmatmul.bf16.gmra.mxu0 %v393
    %v1458 = vpop.f32.mrf.mxu0
    %v1459 = vadd.f32 %v887, %v1458
    %v1460 = vpop.f32.mrf.mxu0
    %v1461 = vadd.f32 %v889, %v1460
    %1462 = vmatmul.bf16.gmra.mxu0 %v396
    %v1463 = vpop.f32.mrf.mxu0
    %v1464 = vadd.f32 %v892, %v1463
    %v1465 = vpop.f32.mrf.mxu0
    %v1466 = vadd.f32 %v894, %v1465
    %1467 = vmatmul.bf16.gmra.mxu0 %v399
    %v1468 = vpop.f32.mrf.mxu0
    %v1469 = vadd.f32 %v897, %v1468
    %v1470 = vpop.f32.mrf.mxu0
    %v1471 = vadd.f32 %v899, %v1470
    %1472 = vmatmul.bf16.gmra.mxu0 %v402
    %v1473 = vpop.f32.mrf.mxu0
    %v1474 = vadd.f32 %v902, %v1473
    %v1475 = vpop.f32.mrf.mxu0
    %v1476 = vadd.f32 %v904, %v1475
    %1477 = vmatmul.bf16.gmra.mxu0 %v405
    %v1478 = vpop.f32.mrf.mxu0
    %v1479 = vadd.f32 %v907, %v1478
    %v1480 = vpop.f32.mrf.mxu0
    %v1481 = vadd.f32 %v909, %v1480
    %1482 = vmatmul.bf16.gmra.mxu0 %v408
    %v1483 = vpop.f32.mrf.mxu0
    %v1484 = vadd.f32 %v912, %v1483
    %v1485 = vpop.f32.mrf.mxu0
    %v1486 = vadd.f32 %v914, %v1485
    %1487 = vmatmul.bf16.gmra.mxu0 %v411
    %v1488 = vpop.f32.mrf.mxu0
    %v1489 = vadd.f32 %v917, %v1488
    %v1490 = vpop.f32.mrf.mxu0
    %v1491 = vadd.f32 %v919, %v1490
    %1492 = vmatmul.bf16.gmra.mxu0 %v414
    %v1493 = vpop.f32.mrf.mxu0
    %v1494 = vadd.f32 %v922, %v1493
    %v1495 = vpop.f32.mrf.mxu0
    %v1496 = vadd.f32 %v924, %v1495
    %1497 = vmatmul.bf16.gmra.mxu0 %v417
    %v1498 = vpop.f32.mrf.mxu0
    %v1499 = vadd.f32 %v927, %v1498
    %v1500 = vpop.f32.mrf.mxu0
    %v1501 = vadd.f32 %v929, %v1500
    %1502 = vmatmul.bf16.gmra.mxu0 %v420
    %v1503 = vpop.f32.mrf.mxu0
    %v1504 = vadd.f32 %v932, %v1503
    %v1505 = vpop.f32.mrf.mxu0
    %v1506 = vadd.f32 %v934, %v1505
    %1507 = vmatmul.bf16.gmra.mxu0 %v423
    %v1508 = vpop.f32.mrf.mxu0
    %v1509 = vadd.f32 %v937, %v1508
    %v1510 = vpop.f32.mrf.mxu0
    %v1511 = vadd.f32 %v939, %v1510
    %1512 = vmatmul.bf16.gmra.mxu0 %v426
    %v1513 = vpop.f32.mrf.mxu0
    %v1514 = vadd.f32 %v942, %v1513
    %v1515 = vpop.f32.mrf.mxu0
    %v1516 = vadd.f32 %v944, %v1515
    %1517 = vmatmul.bf16.gmra.mxu0 %v429
    %v1518 = vpop.f32.mrf.mxu0
    %v1519 = vadd.f32 %v947, %v1518
    %v1520 = vpop.f32.mrf.mxu0
    %v1521 = vadd.f32 %v949, %v1520
    %1522 = vmatmul.bf16.gmra.mxu0 %v432
    %v1523 = vpop.f32.mrf.mxu0
    %v1524 = vadd.f32 %v952, %v1523
    %v1525 = vpop.f32.mrf.mxu0
    %v1526 = vadd.f32 %v954, %v1525
    %1527 = vmatmul.bf16.gmra.mxu0 %v435
    %v1528 = vpop.f32.mrf.mxu0
    %v1529 = vadd.f32 %v957, %v1528
    %v1530 = vpop.f32.mrf.mxu0
    %v1531 = vadd.f32 %v959, %v1530
    %1532 = vmatmul.bf16.gmra.mxu0 %v438
    %v1533 = vpop.f32.mrf.mxu0
    %v1534 = vadd.f32 %v962, %v1533
    %v1535 = vpop.f32.mrf.mxu0
    %v1536 = vadd.f32 %v964, %v1535
    %1537 = vmatmul.bf16.gmra.mxu0 %v441
    %v1538 = vpop.f32.mrf.mxu0
    %v1539 = vadd.f32 %v967, %v1538
    %v1540 = vpop.f32.mrf.mxu0
    %v1541 = vadd.f32 %v969, %v1540
    %1542 = vmatmul.bf16.gmra.mxu0 %v444
    %v1543 = vpop.f32.mrf.mxu0
    %v1544 = vadd.f32 %v972, %v1543
    %v1545 = vpop.f32.mrf.mxu0
    %v1546 = vadd.f32 %v974, %v1545
    %1547 = vmatmul.bf16.gmra.mxu0 %v447
    %v1548 = vpop.f32.mrf.mxu0
    %v1549 = vadd.f32 %v977, %v1548
    %v1550 = vpop.f32.mrf.mxu0
    %v1551 = vadd.f32 %v979, %v1550
    %1552 = vdwg.mxu0
    %s1553 = scalar_lea.vmem [#allocation2], 128
    %v1554 = vld [vmem:[%s1553] sm:$0xff]
    %v1555 = vld [vmem:[%s1553 + $0x8] sm:$0xff]
    %v1556 = vld [vmem:[%s1553 + $0x10] sm:$0xff]
    %v1557 = vld [vmem:[%s1553 + $0x18] sm:$0xff]
    %v1558 = vld [vmem:[%s1553 + $0x20] sm:$0xff]
    %v1559 = vld [vmem:[%s1553 + $0x28] sm:$0xff]
    %v1560 = vld [vmem:[%s1553 + $0x30] sm:$0x33]
    %v1561 = vld [vmem:[%s1553 + $0x38] sm:$0x33]
    %v1564 = vunpack.c.l.b16 %v200
    %v1565 = vunpack.c.l.b16 %v201
    %v1566 = vpack.c.b16 %v1565, %v1564
    %v1575 = vunpack.c.l.b16 %v1554
    %v1576 = vunpack.c.h.b16 %v1554
    %v1577 = vunpack.c.l.b16 %v1555
    %v1578 = vunpack.c.h.b16 %v1555
    %v1579 = vunpack.c.l.b16 %v1556
    %v1580 = vunpack.c.h.b16 %v1556
    %v1581 = vunpack.c.l.b16 %v1557
    %v1582 = vunpack.c.h.b16 %v1557
    %v1583 = vunpack.c.l.b16 %v1558
    %v1584 = vunpack.c.h.b16 %v1558
    %v1585 = vunpack.c.l.b16 %v1559
    %v1586 = vunpack.c.h.b16 %v1559
    %v1587 = vunpack.c.l.b16 %v1560
    %v1588 = vunpack.c.h.b16 %v1560
    %v1589 = vunpack.c.l.b16 %v1561
    %v1590 = vunpack.c.h.b16 %v1561
    %v1591 = vpack.c.b16 %v1579, %v1575
    %v1592 = vpack.c.b16 %v1580, %v1576
    %v1593 = vpack.c.b16 %v1581, %v1577
    %v1594 = vpack.c.b16 %v1582, %v1578
    %v1595 = vpack.c.b16 %v1587, %v1583
    %v1596 = vpack.c.b16 %v1588, %v1584
    %v1597 = vpack.c.b16 %v1589, %v1585
    %v1598 = vpack.c.b16 %v1590, %v1586
    %v1604 = vsel %vm379, %v1566, 0
    %v1607 = vsel %vm452, %v1595, 0
    %v1610 = vsel %vm452, %v1596, 0
    %v1613 = vsel %vm452, %v1597, 0
    %v1616 = vsel %vm452, %v1598, 0
    %1618 = vmatpush.bf16.msra.mxu0 0
    %1619 = vmatpush.bf16.msra.mxu0 0
    %1620 = vmatpush.bf16.msra.mxu0 0
    %1621 = vmatpush.bf16.msra.mxu0 0
    %1622 = vmatpush.bf16.msra.mxu0 0
    %1623 = vmatpush.bf16.msra.mxu0 0
    %1624 = vmatpush.bf16.msra.mxu0 %v1607
    %1625 = vmatpush.bf16.msra.mxu0 %v1591
    %1626 = vmatmul.bf16.gmra.mxu0 %v384
    %v1627 = vpop.f32.mrf.mxu0
    %v1628 = vadd.f32 0.0, %v1627
    %v1629 = vpop.f32.mrf.mxu0
    %v1630 = vadd.f32 0.0, %v1629
    %1631 = vmatmul.bf16.gmra.mxu0 %v387
    %v1632 = vpop.f32.mrf.mxu0
    %v1633 = vadd.f32 0.0, %v1632
    %v1634 = vpop.f32.mrf.mxu0
    %v1635 = vadd.f32 0.0, %v1634
    %1636 = vmatmul.bf16.gmra.mxu0 %v390
    %v1637 = vpop.f32.mrf.mxu0
    %v1638 = vadd.f32 0.0, %v1637
    %v1639 = vpop.f32.mrf.mxu0
    %v1640 = vadd.f32 0.0, %v1639
    %1641 = vmatmul.bf16.gmra.mxu0 %v393
    %v1642 = vpop.f32.mrf.mxu0
    %v1643 = vadd.f32 0.0, %v1642
    %v1644 = vpop.f32.mrf.mxu0
    %v1645 = vadd.f32 0.0, %v1644
    %1646 = vmatmul.bf16.gmra.mxu0 %v396
    %v1647 = vpop.f32.mrf.mxu0
    %v1648 = vadd.f32 0.0, %v1647
    %v1649 = vpop.f32.mrf.mxu0
    %v1650 = vadd.f32 0.0, %v1649
    %1651 = vmatmul.bf16.gmra.mxu0 %v399
    %v1652 = vpop.f32.mrf.mxu0
    %v1653 = vadd.f32 0.0, %v1652
    %v1654 = vpop.f32.mrf.mxu0
    %v1655 = vadd.f32 0.0, %v1654
    %1656 = vmatmul.bf16.gmra.mxu0 %v402
    %v1657 = vpop.f32.mrf.mxu0
    %v1658 = vadd.f32 0.0, %v1657
    %v1659 = vpop.f32.mrf.mxu0
    %v1660 = vadd.f32 0.0, %v1659
    %1661 = vmatmul.bf16.gmra.mxu0 %v405
    %v1662 = vpop.f32.mrf.mxu0
    %v1663 = vadd.f32 0.0, %v1662
    %v1664 = vpop.f32.mrf.mxu0
    %v1665 = vadd.f32 0.0, %v1664
    %1666 = vmatmul.bf16.gmra.mxu0 %v408
    %v1667 = vpop.f32.mrf.mxu0
    %v1668 = vadd.f32 0.0, %v1667
    %v1669 = vpop.f32.mrf.mxu0
    %v1670 = vadd.f32 0.0, %v1669
    %1671 = vmatmul.bf16.gmra.mxu0 %v411
    %v1672 = vpop.f32.mrf.mxu0
    %v1673 = vadd.f32 0.0, %v1672
    %v1674 = vpop.f32.mrf.mxu0
    %v1675 = vadd.f32 0.0, %v1674
    %1676 = vmatmul.bf16.gmra.mxu0 %v414
    %v1677 = vpop.f32.mrf.mxu0
    %v1678 = vadd.f32 0.0, %v1677
    %v1679 = vpop.f32.mrf.mxu0
    %v1680 = vadd.f32 0.0, %v1679
    %1681 = vmatmul.bf16.gmra.mxu0 %v417
    %v1682 = vpop.f32.mrf.mxu0
    %v1683 = vadd.f32 0.0, %v1682
    %v1684 = vpop.f32.mrf.mxu0
    %v1685 = vadd.f32 0.0, %v1684
    %1686 = vmatmul.bf16.gmra.mxu0 %v420
    %v1687 = vpop.f32.mrf.mxu0
    %v1688 = vadd.f32 0.0, %v1687
    %v1689 = vpop.f32.mrf.mxu0
    %v1690 = vadd.f32 0.0, %v1689
    %1691 = vmatmul.bf16.gmra.mxu0 %v423
    %v1692 = vpop.f32.mrf.mxu0
    %v1693 = vadd.f32 0.0, %v1692
    %v1694 = vpop.f32.mrf.mxu0
    %v1695 = vadd.f32 0.0, %v1694
    %1696 = vmatmul.bf16.gmra.mxu0 %v426
    %v1697 = vpop.f32.mrf.mxu0
    %v1698 = vadd.f32 0.0, %v1697
    %v1699 = vpop.f32.mrf.mxu0
    %v1700 = vadd.f32 0.0, %v1699
    %1701 = vmatmul.bf16.gmra.mxu0 %v429
    %v1702 = vpop.f32.mrf.mxu0
    %v1703 = vadd.f32 0.0, %v1702
    %v1704 = vpop.f32.mrf.mxu0
    %v1705 = vadd.f32 0.0, %v1704
    %1706 = vmatmul.bf16.gmra.mxu0 %v432
    %v1707 = vpop.f32.mrf.mxu0
    %v1708 = vadd.f32 0.0, %v1707
    %v1709 = vpop.f32.mrf.mxu0
    %v1710 = vadd.f32 0.0, %v1709
    %1711 = vmatmul.bf16.gmra.mxu0 %v435
    %v1712 = vpop.f32.mrf.mxu0
    %v1713 = vadd.f32 0.0, %v1712
    %v1714 = vpop.f32.mrf.mxu0
    %v1715 = vadd.f32 0.0, %v1714
    %1716 = vmatmul.bf16.gmra.mxu0 %v438
    %v1717 = vpop.f32.mrf.mxu0
    %v1718 = vadd.f32 0.0, %v1717
    %v1719 = vpop.f32.mrf.mxu0
    %v1720 = vadd.f32 0.0, %v1719
    %1721 = vmatmul.bf16.gmra.mxu0 %v441
    %v1722 = vpop.f32.mrf.mxu0
    %v1723 = vadd.f32 0.0, %v1722
    %v1724 = vpop.f32.mrf.mxu0
    %v1725 = vadd.f32 0.0, %v1724
    %1726 = vmatmul.bf16.gmra.mxu0 %v444
    %v1727 = vpop.f32.mrf.mxu0
    %v1728 = vadd.f32 0.0, %v1727
    %v1729 = vpop.f32.mrf.mxu0
    %v1730 = vadd.f32 0.0, %v1729
    %1731 = vmatmul.bf16.gmra.mxu0 %v447
    %v1732 = vpop.f32.mrf.mxu0
    %v1733 = vadd.f32 0.0, %v1732
    %v1734 = vpop.f32.mrf.mxu0
    %v1735 = vadd.f32 0.0, %v1734
    %1736 = vmatmul.bf16.gmra.mxu0 %v450
    %v1737 = vpop.f32.mrf.mxu0
    %v1738 = vadd.f32 0.0, %v1737
    %v1739 = vpop.f32.mrf.mxu0
    %v1740 = vadd.f32 0.0, %v1739
    %1741 = vmatmul.bf16.gmra.mxu0 %v1604
    %v1742 = vpop.f32.mrf.mxu0
    %v1743 = vadd.f32 0.0, %v1742
    %v1744 = vpop.f32.mrf.mxu0
    %v1745 = vadd.f32 0.0, %v1744
    %1746 = vdwg.mxu0
    %1747 = vmatpush.bf16.msra.mxu0 0
    %1748 = vmatpush.bf16.msra.mxu0 0
    %1749 = vmatpush.bf16.msra.mxu0 0
    %1750 = vmatpush.bf16.msra.mxu0 0
    %1751 = vmatpush.bf16.msra.mxu0 0
    %1752 = vmatpush.bf16.msra.mxu0 0
    %1753 = vmatpush.bf16.msra.mxu0 %v1610
    %1754 = vmatpush.bf16.msra.mxu0 %v1592
    %1755 = vmatmul.bf16.gmra.mxu0 %v384
    %v1756 = vpop.f32.mrf.mxu0
    %v1757 = vadd.f32 0.0, %v1756
    %v1758 = vpop.f32.mrf.mxu0
    %v1759 = vadd.f32 0.0, %v1758
    %1760 = vmatmul.bf16.gmra.mxu0 %v387
    %v1761 = vpop.f32.mrf.mxu0
    %v1762 = vadd.f32 0.0, %v1761
    %v1763 = vpop.f32.mrf.mxu0
    %v1764 = vadd.f32 0.0, %v1763
    %1765 = vmatmul.bf16.gmra.mxu0 %v390
    %v1766 = vpop.f32.mrf.mxu0
    %v1767 = vadd.f32 0.0, %v1766
    %v1768 = vpop.f32.mrf.mxu0
    %v1769 = vadd.f32 0.0, %v1768
    %1770 = vmatmul.bf16.gmra.mxu0 %v393
    %v1771 = vpop.f32.mrf.mxu0
    %v1772 = vadd.f32 0.0, %v1771
    %v1773 = vpop.f32.mrf.mxu0
    %v1774 = vadd.f32 0.0, %v1773
    %1775 = vmatmul.bf16.gmra.mxu0 %v396
    %v1776 = vpop.f32.mrf.mxu0
    %v1777 = vadd.f32 0.0, %v1776
    %v1778 = vpop.f32.mrf.mxu0
    %v1779 = vadd.f32 0.0, %v1778
    %1780 = vmatmul.bf16.gmra.mxu0 %v399
    %v1781 = vpop.f32.mrf.mxu0
    %v1782 = vadd.f32 0.0, %v1781
    %v1783 = vpop.f32.mrf.mxu0
    %v1784 = vadd.f32 0.0, %v1783
    %1785 = vmatmul.bf16.gmra.mxu0 %v402
    %v1786 = vpop.f32.mrf.mxu0
    %v1787 = vadd.f32 0.0, %v1786
    %v1788 = vpop.f32.mrf.mxu0
    %v1789 = vadd.f32 0.0, %v1788
    %1790 = vmatmul.bf16.gmra.mxu0 %v405
    %v1791 = vpop.f32.mrf.mxu0
    %v1792 = vadd.f32 0.0, %v1791
    %v1793 = vpop.f32.mrf.mxu0
    %v1794 = vadd.f32 0.0, %v1793
    %1795 = vmatmul.bf16.gmra.mxu0 %v408
    %v1796 = vpop.f32.mrf.mxu0
    %v1797 = vadd.f32 0.0, %v1796
    %v1798 = vpop.f32.mrf.mxu0
    %v1799 = vadd.f32 0.0, %v1798
    %1800 = vmatmul.bf16.gmra.mxu0 %v411
    %v1801 = vpop.f32.mrf.mxu0
    %v1802 = vadd.f32 0.0, %v1801
    %v1803 = vpop.f32.mrf.mxu0
    %v1804 = vadd.f32 0.0, %v1803
    %1805 = vmatmul.bf16.gmra.mxu0 %v414
    %v1806 = vpop.f32.mrf.mxu0
    %v1807 = vadd.f32 0.0, %v1806
    %v1808 = vpop.f32.mrf.mxu0
    %v1809 = vadd.f32 0.0, %v1808
    %1810 = vmatmul.bf16.gmra.mxu0 %v417
    %v1811 = vpop.f32.mrf.mxu0
    %v1812 = vadd.f32 0.0, %v1811
    %v1813 = vpop.f32.mrf.mxu0
    %v1814 = vadd.f32 0.0, %v1813
    %1815 = vmatmul.bf16.gmra.mxu0 %v420
    %v1816 = vpop.f32.mrf.mxu0
    %v1817 = vadd.f32 0.0, %v1816
    %v1818 = vpop.f32.mrf.mxu0
    %v1819 = vadd.f32 0.0, %v1818
    %1820 = vmatmul.bf16.gmra.mxu0 %v423
    %v1821 = vpop.f32.mrf.mxu0
    %v1822 = vadd.f32 0.0, %v1821
    %v1823 = vpop.f32.mrf.mxu0
    %v1824 = vadd.f32 0.0, %v1823
    %1825 = vmatmul.bf16.gmra.mxu0 %v426
    %v1826 = vpop.f32.mrf.mxu0
    %v1827 = vadd.f32 0.0, %v1826
    %v1828 = vpop.f32.mrf.mxu0
    %v1829 = vadd.f32 0.0, %v1828
    %1830 = vmatmul.bf16.gmra.mxu0 %v429
    %v1831 = vpop.f32.mrf.mxu0
    %v1832 = vadd.f32 0.0, %v1831
    %v1833 = vpop.f32.mrf.mxu0
    %v1834 = vadd.f32 0.0, %v1833
    %1835 = vmatmul.bf16.gmra.mxu0 %v432
    %v1836 = vpop.f32.mrf.mxu0
    %v1837 = vadd.f32 0.0, %v1836
    %v1838 = vpop.f32.mrf.mxu0
    %v1839 = vadd.f32 0.0, %v1838
    %1840 = vmatmul.bf16.gmra.mxu0 %v435
    %v1841 = vpop.f32.mrf.mxu0
    %v1842 = vadd.f32 0.0, %v1841
    %v1843 = vpop.f32.mrf.mxu0
    %v1844 = vadd.f32 0.0, %v1843
    %1845 = vmatmul.bf16.gmra.mxu0 %v438
    %v1846 = vpop.f32.mrf.mxu0
    %v1847 = vadd.f32 0.0, %v1846
    %v1848 = vpop.f32.mrf.mxu0
    %v1849 = vadd.f32 0.0, %v1848
    %1850 = vmatmul.bf16.gmra.mxu0 %v441
    %v1851 = vpop.f32.mrf.mxu0
    %v1852 = vadd.f32 0.0, %v1851
    %v1853 = vpop.f32.mrf.mxu0
    %v1854 = vadd.f32 0.0, %v1853
    %1855 = vmatmul.bf16.gmra.mxu0 %v444
    %v1856 = vpop.f32.mrf.mxu0
    %v1857 = vadd.f32 0.0, %v1856
    %v1858 = vpop.f32.mrf.mxu0
    %v1859 = vadd.f32 0.0, %v1858
    %1860 = vmatmul.bf16.gmra.mxu0 %v447
    %v1861 = vpop.f32.mrf.mxu0
    %v1862 = vadd.f32 0.0, %v1861
    %v1863 = vpop.f32.mrf.mxu0
    %v1864 = vadd.f32 0.0, %v1863
    %1865 = vmatmul.bf16.gmra.mxu0 %v450
    %v1866 = vpop.f32.mrf.mxu0
    %v1867 = vadd.f32 0.0, %v1866
    %v1868 = vpop.f32.mrf.mxu0
    %v1869 = vadd.f32 0.0, %v1868
    %1870 = vmatmul.bf16.gmra.mxu0 %v1604
    %v1871 = vpop.f32.mrf.mxu0
    %v1872 = vadd.f32 0.0, %v1871
    %v1873 = vpop.f32.mrf.mxu0
    %v1874 = vadd.f32 0.0, %v1873
    %1875 = vdwg.mxu0
    %1876 = vmatpush.bf16.msra.mxu0 0
    %1877 = vmatpush.bf16.msra.mxu0 0
    %1878 = vmatpush.bf16.msra.mxu0 0
    %1879 = vmatpush.bf16.msra.mxu0 0
    %1880 = vmatpush.bf16.msra.mxu0 0
    %1881 = vmatpush.bf16.msra.mxu0 0
    %1882 = vmatpush.bf16.msra.mxu0 %v1613
    %1883 = vmatpush.bf16.msra.mxu0 %v1593
    %1884 = vmatmul.bf16.gmra.mxu0 %v384
    %v1885 = vpop.f32.mrf.mxu0
    %v1886 = vadd.f32 0.0, %v1885
    %v1887 = vpop.f32.mrf.mxu0
    %v1888 = vadd.f32 0.0, %v1887
    %1889 = vmatmul.bf16.gmra.mxu0 %v387
    %v1890 = vpop.f32.mrf.mxu0
    %v1891 = vadd.f32 0.0, %v1890
    %v1892 = vpop.f32.mrf.mxu0
    %v1893 = vadd.f32 0.0, %v1892
    %1894 = vmatmul.bf16.gmra.mxu0 %v390
    %v1895 = vpop.f32.mrf.mxu0
    %v1896 = vadd.f32 0.0, %v1895
    %v1897 = vpop.f32.mrf.mxu0
    %v1898 = vadd.f32 0.0, %v1897
    %1899 = vmatmul.bf16.gmra.mxu0 %v393
    %v1900 = vpop.f32.mrf.mxu0
    %v1901 = vadd.f32 0.0, %v1900
    %v1902 = vpop.f32.mrf.mxu0
    %v1903 = vadd.f32 0.0, %v1902
    %1904 = vmatmul.bf16.gmra.mxu0 %v396
    %v1905 = vpop.f32.mrf.mxu0
    %v1906 = vadd.f32 0.0, %v1905
    %v1907 = vpop.f32.mrf.mxu0
    %v1908 = vadd.f32 0.0, %v1907
    %1909 = vmatmul.bf16.gmra.mxu0 %v399
    %v1910 = vpop.f32.mrf.mxu0
    %v1911 = vadd.f32 0.0, %v1910
    %v1912 = vpop.f32.mrf.mxu0
    %v1913 = vadd.f32 0.0, %v1912
    %1914 = vmatmul.bf16.gmra.mxu0 %v402
    %v1915 = vpop.f32.mrf.mxu0
    %v1916 = vadd.f32 0.0, %v1915
    %v1917 = vpop.f32.mrf.mxu0
    %v1918 = vadd.f32 0.0, %v1917
    %1919 = vmatmul.bf16.gmra.mxu0 %v405
    %v1920 = vpop.f32.mrf.mxu0
    %v1921 = vadd.f32 0.0, %v1920
    %v1922 = vpop.f32.mrf.mxu0
    %v1923 = vadd.f32 0.0, %v1922
    %1924 = vmatmul.bf16.gmra.mxu0 %v408
    %v1925 = vpop.f32.mrf.mxu0
    %v1926 = vadd.f32 0.0, %v1925
    %v1927 = vpop.f32.mrf.mxu0
    %v1928 = vadd.f32 0.0, %v1927
    %1929 = vmatmul.bf16.gmra.mxu0 %v411
    %v1930 = vpop.f32.mrf.mxu0
    %v1931 = vadd.f32 0.0, %v1930
    %v1932 = vpop.f32.mrf.mxu0
    %v1933 = vadd.f32 0.0, %v1932
    %1934 = vmatmul.bf16.gmra.mxu0 %v414
    %v1935 = vpop.f32.mrf.mxu0
    %v1936 = vadd.f32 0.0, %v1935
    %v1937 = vpop.f32.mrf.mxu0
    %v1938 = vadd.f32 0.0, %v1937
    %1939 = vmatmul.bf16.gmra.mxu0 %v417
    %v1940 = vpop.f32.mrf.mxu0
    %v1941 = vadd.f32 0.0, %v1940
    %v1942 = vpop.f32.mrf.mxu0
    %v1943 = vadd.f32 0.0, %v1942
    %1944 = vmatmul.bf16.gmra.mxu0 %v420
    %v1945 = vpop.f32.mrf.mxu0
    %v1946 = vadd.f32 0.0, %v1945
    %v1947 = vpop.f32.mrf.mxu0
    %v1948 = vadd.f32 0.0, %v1947
    %1949 = vmatmul.bf16.gmra.mxu0 %v423
    %v1950 = vpop.f32.mrf.mxu0
    %v1951 = vadd.f32 0.0, %v1950
    %v1952 = vpop.f32.mrf.mxu0
    %v1953 = vadd.f32 0.0, %v1952
    %1954 = vmatmul.bf16.gmra.mxu0 %v426
    %v1955 = vpop.f32.mrf.mxu0
    %v1956 = vadd.f32 0.0, %v1955
    %v1957 = vpop.f32.mrf.mxu0
    %v1958 = vadd.f32 0.0, %v1957
    %1959 = vmatmul.bf16.gmra.mxu0 %v429
    %v1960 = vpop.f32.mrf.mxu0
    %v1961 = vadd.f32 0.0, %v1960
    %v1962 = vpop.f32.mrf.mxu0
    %v1963 = vadd.f32 0.0, %v1962
    %1964 = vmatmul.bf16.gmra.mxu0 %v432
    %v1965 = vpop.f32.mrf.mxu0
    %v1966 = vadd.f32 0.0, %v1965
    %v1967 = vpop.f32.mrf.mxu0
    %v1968 = vadd.f32 0.0, %v1967
    %1969 = vmatmul.bf16.gmra.mxu0 %v435
    %v1970 = vpop.f32.mrf.mxu0
    %v1971 = vadd.f32 0.0, %v1970
    %v1972 = vpop.f32.mrf.mxu0
    %v1973 = vadd.f32 0.0, %v1972
    %1974 = vmatmul.bf16.gmra.mxu0 %v438
    %v1975 = vpop.f32.mrf.mxu0
    %v1976 = vadd.f32 0.0, %v1975
    %v1977 = vpop.f32.mrf.mxu0
    %v1978 = vadd.f32 0.0, %v1977
    %1979 = vmatmul.bf16.gmra.mxu0 %v441
    %v1980 = vpop.f32.mrf.mxu0
    %v1981 = vadd.f32 0.0, %v1980
    %v1982 = vpop.f32.mrf.mxu0
    %v1983 = vadd.f32 0.0, %v1982
    %1984 = vmatmul.bf16.gmra.mxu0 %v444
    %v1985 = vpop.f32.mrf.mxu0
    %v1986 = vadd.f32 0.0, %v1985
    %v1987 = vpop.f32.mrf.mxu0
    %v1988 = vadd.f32 0.0, %v1987
    %1989 = vmatmul.bf16.gmra.mxu0 %v447
    %v1990 = vpop.f32.mrf.mxu0
    %v1991 = vadd.f32 0.0, %v1990
    %v1992 = vpop.f32.mrf.mxu0
    %v1993 = vadd.f32 0.0, %v1992
    %1994 = vmatmul.bf16.gmra.mxu0 %v450
    %v1995 = vpop.f32.mrf.mxu0
    %v1996 = vadd.f32 0.0, %v1995
    %v1997 = vpop.f32.mrf.mxu0
    %v1998 = vadd.f32 0.0, %v1997
    %1999 = vmatmul.bf16.gmra.mxu0 %v1604
    %v2000 = vpop.f32.mrf.mxu0
    %v2001 = vadd.f32 0.0, %v2000
    %v2002 = vpop.f32.mrf.mxu0
    %v2003 = vadd.f32 0.0, %v2002
    %2004 = vdwg.mxu0
    %2005 = vmatpush.bf16.msra.mxu0 0
    %2006 = vmatpush.bf16.msra.mxu0 0
    %2007 = vmatpush.bf16.msra.mxu0 0
    %2008 = vmatpush.bf16.msra.mxu0 0
    %2009 = vmatpush.bf16.msra.mxu0 0
    %2010 = vmatpush.bf16.msra.mxu0 0
    %2011 = vmatpush.bf16.msra.mxu0 %v1616
    %2012 = vmatpush.bf16.msra.mxu0 %v1594
    %2013 = vmatmul.bf16.gmra.mxu0 %v384
    %v2014 = vpop.f32.mrf.mxu0
    %v2015 = vadd.f32 0.0, %v2014
    %v2016 = vpop.f32.mrf.mxu0
    %v2017 = vadd.f32 0.0, %v2016
    %2018 = vmatmul.bf16.gmra.mxu0 %v387
    %v2019 = vpop.f32.mrf.mxu0
    %v2020 = vadd.f32 0.0, %v2019
    %v2021 = vpop.f32.mrf.mxu0
    %v2022 = vadd.f32 0.0, %v2021
    %2023 = vmatmul.bf16.gmra.mxu0 %v390
    %v2024 = vpop.f32.mrf.mxu0
    %v2025 = vadd.f32 0.0, %v2024
    %v2026 = vpop.f32.mrf.mxu0
    %v2027 = vadd.f32 0.0, %v2026
    %2028 = vmatmul.bf16.gmra.mxu0 %v393
    %v2029 = vpop.f32.mrf.mxu0
    %v2030 = vadd.f32 0.0, %v2029
    %v2031 = vpop.f32.mrf.mxu0
    %v2032 = vadd.f32 0.0, %v2031
    %2033 = vmatmul.bf16.gmra.mxu0 %v396
    %v2034 = vpop.f32.mrf.mxu0
    %v2035 = vadd.f32 0.0, %v2034
    %v2036 = vpop.f32.mrf.mxu0
    %v2037 = vadd.f32 0.0, %v2036
    %2038 = vmatmul.bf16.gmra.mxu0 %v399
    %v2039 = vpop.f32.mrf.mxu0
    %v2040 = vadd.f32 0.0, %v2039
    %v2041 = vpop.f32.mrf.mxu0
    %v2042 = vadd.f32 0.0, %v2041
    %2043 = vmatmul.bf16.gmra.mxu0 %v402
    %v2044 = vpop.f32.mrf.mxu0
    %v2045 = vadd.f32 0.0, %v2044
    %v2046 = vpop.f32.mrf.mxu0
    %v2047 = vadd.f32 0.0, %v2046
    %2048 = vmatmul.bf16.gmra.mxu0 %v405
    %v2049 = vpop.f32.mrf.mxu0
    %v2050 = vadd.f32 0.0, %v2049
    %v2051 = vpop.f32.mrf.mxu0
    %v2052 = vadd.f32 0.0, %v2051
    %2053 = vmatmul.bf16.gmra.mxu0 %v408
    %v2054 = vpop.f32.mrf.mxu0
    %v2055 = vadd.f32 0.0, %v2054
    %v2056 = vpop.f32.mrf.mxu0
    %v2057 = vadd.f32 0.0, %v2056
    %2058 = vmatmul.bf16.gmra.mxu0 %v411
    %v2059 = vpop.f32.mrf.mxu0
    %v2060 = vadd.f32 0.0, %v2059
    %v2061 = vpop.f32.mrf.mxu0
    %v2062 = vadd.f32 0.0, %v2061
    %2063 = vmatmul.bf16.gmra.mxu0 %v414
    %v2064 = vpop.f32.mrf.mxu0
    %v2065 = vadd.f32 0.0, %v2064
    %v2066 = vpop.f32.mrf.mxu0
    %v2067 = vadd.f32 0.0, %v2066
    %2068 = vmatmul.bf16.gmra.mxu0 %v417
    %v2069 = vpop.f32.mrf.mxu0
    %v2070 = vadd.f32 0.0, %v2069
    %v2071 = vpop.f32.mrf.mxu0
    %v2072 = vadd.f32 0.0, %v2071
    %2073 = vmatmul.bf16.gmra.mxu0 %v420
    %v2074 = vpop.f32.mrf.mxu0
    %v2075 = vadd.f32 0.0, %v2074
    %v2076 = vpop.f32.mrf.mxu0
    %v2077 = vadd.f32 0.0, %v2076
    %2078 = vmatmul.bf16.gmra.mxu0 %v423
    %v2079 = vpop.f32.mrf.mxu0
    %v2080 = vadd.f32 0.0, %v2079
    %v2081 = vpop.f32.mrf.mxu0
    %v2082 = vadd.f32 0.0, %v2081
    %2083 = vmatmul.bf16.gmra.mxu0 %v426
    %v2084 = vpop.f32.mrf.mxu0
    %v2085 = vadd.f32 0.0, %v2084
    %v2086 = vpop.f32.mrf.mxu0
    %v2087 = vadd.f32 0.0, %v2086
    %2088 = vmatmul.bf16.gmra.mxu0 %v429
    %v2089 = vpop.f32.mrf.mxu0
    %v2090 = vadd.f32 0.0, %v2089
    %v2091 = vpop.f32.mrf.mxu0
    %v2092 = vadd.f32 0.0, %v2091
    %2093 = vmatmul.bf16.gmra.mxu0 %v432
    %v2094 = vpop.f32.mrf.mxu0
    %v2095 = vadd.f32 0.0, %v2094
    %v2096 = vpop.f32.mrf.mxu0
    %v2097 = vadd.f32 0.0, %v2096
    %2098 = vmatmul.bf16.gmra.mxu0 %v435
    %v2099 = vpop.f32.mrf.mxu0
    %v2100 = vadd.f32 0.0, %v2099
    %v2101 = vpop.f32.mrf.mxu0
    %v2102 = vadd.f32 0.0, %v2101
    %2103 = vmatmul.bf16.gmra.mxu0 %v438
    %v2104 = vpop.f32.mrf.mxu0
    %v2105 = vadd.f32 0.0, %v2104
    %v2106 = vpop.f32.mrf.mxu0
    %v2107 = vadd.f32 0.0, %v2106
    %2108 = vmatmul.bf16.gmra.mxu0 %v441
    %v2109 = vpop.f32.mrf.mxu0
    %v2110 = vadd.f32 0.0, %v2109
    %v2111 = vpop.f32.mrf.mxu0
    %v2112 = vadd.f32 0.0, %v2111
    %2113 = vmatmul.bf16.gmra.mxu0 %v444
    %v2114 = vpop.f32.mrf.mxu0
    %v2115 = vadd.f32 0.0, %v2114
    %v2116 = vpop.f32.mrf.mxu0
    %v2117 = vadd.f32 0.0, %v2116
    %2118 = vmatmul.bf16.gmra.mxu0 %v447
    %v2119 = vpop.f32.mrf.mxu0
    %v2120 = vadd.f32 0.0, %v2119
    %v2121 = vpop.f32.mrf.mxu0
    %v2122 = vadd.f32 0.0, %v2121
    %2123 = vmatmul.bf16.gmra.mxu0 %v450
    %v2124 = vpop.f32.mrf.mxu0
    %v2125 = vadd.f32 0.0, %v2124
    %v2126 = vpop.f32.mrf.mxu0
    %v2127 = vadd.f32 0.0, %v2126
    %2128 = vmatmul.bf16.gmra.mxu0 %v1604
    %v2129 = vpop.f32.mrf.mxu0
    %v2130 = vadd.f32 0.0, %v2129
    %v2131 = vpop.f32.mrf.mxu0
    %v2132 = vadd.f32 0.0, %v2131
    %2133 = vdwg.mxu0
    %v2134 = vadd.f32 %v1047, %v1628
    %v2135 = vadd.f32 %v1176, %v1757
    %v2136 = vadd.f32 %v1305, %v1886
    %v2137 = vadd.f32 %v1434, %v2015
    %v2138 = vadd.f32 %v1049, %v1630
    %v2139 = vadd.f32 %v1178, %v1759
    %v2140 = vadd.f32 %v1307, %v1888
    %v2141 = vadd.f32 %v1436, %v2017
    %v2142 = vadd.f32 %v1052, %v1633
    %v2143 = vadd.f32 %v1181, %v1762
    %v2144 = vadd.f32 %v1310, %v1891
    %v2145 = vadd.f32 %v1439, %v2020
    %v2146 = vadd.f32 %v1054, %v1635
    %v2147 = vadd.f32 %v1183, %v1764
    %v2148 = vadd.f32 %v1312, %v1893
    %v2149 = vadd.f32 %v1441, %v2022
    %v2150 = vadd.f32 %v1057, %v1638
    %v2151 = vadd.f32 %v1186, %v1767
    %v2152 = vadd.f32 %v1315, %v1896
    %v2153 = vadd.f32 %v1444, %v2025
    %v2154 = vadd.f32 %v1059, %v1640
    %v2155 = vadd.f32 %v1188, %v1769
    %v2156 = vadd.f32 %v1317, %v1898
    %v2157 = vadd.f32 %v1446, %v2027
    %v2158 = vadd.f32 %v1062, %v1643
    %v2159 = vadd.f32 %v1191, %v1772
    %v2160 = vadd.f32 %v1320, %v1901
    %v2161 = vadd.f32 %v1449, %v2030
    %v2162 = vadd.f32 %v1064, %v1645
    %v2163 = vadd.f32 %v1193, %v1774
    %v2164 = vadd.f32 %v1322, %v1903
    %v2165 = vadd.f32 %v1451, %v2032
    %v2166 = vadd.f32 %v1067, %v1648
    %v2167 = vadd.f32 %v1196, %v1777
    %v2168 = vadd.f32 %v1325, %v1906
    %v2169 = vadd.f32 %v1454, %v2035
    %v2170 = vadd.f32 %v1069, %v1650
    %v2171 = vadd.f32 %v1198, %v1779
    %v2172 = vadd.f32 %v1327, %v1908
    %v2173 = vadd.f32 %v1456, %v2037
    %v2174 = vadd.f32 %v1072, %v1653
    %v2175 = vadd.f32 %v1201, %v1782
    %v2176 = vadd.f32 %v1330, %v1911
    %v2177 = vadd.f32 %v1459, %v2040
    %v2178 = vadd.f32 %v1074, %v1655
    %v2179 = vadd.f32 %v1203, %v1784
    %v2180 = vadd.f32 %v1332, %v1913
    %v2181 = vadd.f32 %v1461, %v2042
    %v2182 = vadd.f32 %v1077, %v1658
    %v2183 = vadd.f32 %v1206, %v1787
    %v2184 = vadd.f32 %v1335, %v1916
    %v2185 = vadd.f32 %v1464, %v2045
    %v2186 = vadd.f32 %v1079, %v1660
    %v2187 = vadd.f32 %v1208, %v1789
    %v2188 = vadd.f32 %v1337, %v1918
    %v2189 = vadd.f32 %v1466, %v2047
    %v2190 = vadd.f32 %v1082, %v1663
    %v2191 = vadd.f32 %v1211, %v1792
    %v2192 = vadd.f32 %v1340, %v1921
    %v2193 = vadd.f32 %v1469, %v2050
    %v2194 = vadd.f32 %v1084, %v1665
    %v2195 = vadd.f32 %v1213, %v1794
    %v2196 = vadd.f32 %v1342, %v1923
    %v2197 = vadd.f32 %v1471, %v2052
    %v2198 = vadd.f32 %v1087, %v1668
    %v2199 = vadd.f32 %v1216, %v1797
    %v2200 = vadd.f32 %v1345, %v1926
    %v2201 = vadd.f32 %v1474, %v2055
    %v2202 = vadd.f32 %v1089, %v1670
    %v2203 = vadd.f32 %v1218, %v1799
    %v2204 = vadd.f32 %v1347, %v1928
    %v2205 = vadd.f32 %v1476, %v2057
    %v2206 = vadd.f32 %v1092, %v1673
    %v2207 = vadd.f32 %v1221, %v1802
    %v2208 = vadd.f32 %v1350, %v1931
    %v2209 = vadd.f32 %v1479, %v2060
    %v2210 = vadd.f32 %v1094, %v1675
    %v2211 = vadd.f32 %v1223, %v1804
    %v2212 = vadd.f32 %v1352, %v1933
    %v2213 = vadd.f32 %v1481, %v2062
    %v2214 = vadd.f32 %v1097, %v1678
    %v2215 = vadd.f32 %v1226, %v1807
    %v2216 = vadd.f32 %v1355, %v1936
    %v2217 = vadd.f32 %v1484, %v2065
    %v2218 = vadd.f32 %v1099, %v1680
    %v2219 = vadd.f32 %v1228, %v1809
    %v2220 = vadd.f32 %v1357, %v1938
    %v2221 = vadd.f32 %v1486, %v2067
    %v2222 = vadd.f32 %v1102, %v1683
    %v2223 = vadd.f32 %v1231, %v1812
    %v2224 = vadd.f32 %v1360, %v1941
    %v2225 = vadd.f32 %v1489, %v2070
    %v2226 = vadd.f32 %v1104, %v1685
    %v2227 = vadd.f32 %v1233, %v1814
    %v2228 = vadd.f32 %v1362, %v1943
    %v2229 = vadd.f32 %v1491, %v2072
    %v2230 = vadd.f32 %v1107, %v1688
    %v2231 = vadd.f32 %v1236, %v1817
    %v2232 = vadd.f32 %v1365, %v1946
    %v2233 = vadd.f32 %v1494, %v2075
    %v2234 = vadd.f32 %v1109, %v1690
    %v2235 = vadd.f32 %v1238, %v1819
    %v2236 = vadd.f32 %v1367, %v1948
    %v2237 = vadd.f32 %v1496, %v2077
    %v2238 = vadd.f32 %v1112, %v1693
    %v2239 = vadd.f32 %v1241, %v1822
    %v2240 = vadd.f32 %v1370, %v1951
    %v2241 = vadd.f32 %v1499, %v2080
    %v2242 = vadd.f32 %v1114, %v1695
    %v2243 = vadd.f32 %v1243, %v1824
    %v2244 = vadd.f32 %v1372, %v1953
    %v2245 = vadd.f32 %v1501, %v2082
    %v2246 = vadd.f32 %v1117, %v1698
    %v2247 = vadd.f32 %v1246, %v1827
    %v2248 = vadd.f32 %v1375, %v1956
    %v2249 = vadd.f32 %v1504, %v2085
    %v2250 = vadd.f32 %v1119, %v1700
    %v2251 = vadd.f32 %v1248, %v1829
    %v2252 = vadd.f32 %v1377, %v1958
    %v2253 = vadd.f32 %v1506, %v2087
    %v2254 = vadd.f32 %v1122, %v1703
    %v2255 = vadd.f32 %v1251, %v1832
    %v2256 = vadd.f32 %v1380, %v1961
    %v2257 = vadd.f32 %v1509, %v2090
    %v2258 = vadd.f32 %v1124, %v1705
    %v2259 = vadd.f32 %v1253, %v1834
    %v2260 = vadd.f32 %v1382, %v1963
    %v2261 = vadd.f32 %v1511, %v2092
    %v2262 = vadd.f32 %v1127, %v1708
    %v2263 = vadd.f32 %v1256, %v1837
    %v2264 = vadd.f32 %v1385, %v1966
    %v2265 = vadd.f32 %v1514, %v2095
    %v2266 = vadd.f32 %v1129, %v1710
    %v2267 = vadd.f32 %v1258, %v1839
    %v2268 = vadd.f32 %v1387, %v1968
    %v2269 = vadd.f32 %v1516, %v2097
    %v2270 = vadd.f32 %v1132, %v1713
    %v2271 = vadd.f32 %v1261, %v1842
    %v2272 = vadd.f32 %v1390, %v1971
    %v2273 = vadd.f32 %v1519, %v2100
    %v2274 = vadd.f32 %v1134, %v1715
    %v2275 = vadd.f32 %v1263, %v1844
    %v2276 = vadd.f32 %v1392, %v1973
    %v2277 = vadd.f32 %v1521, %v2102
    %v2278 = vadd.f32 %v1137, %v1718
    %v2279 = vadd.f32 %v1266, %v1847
    %v2280 = vadd.f32 %v1395, %v1976
    %v2281 = vadd.f32 %v1524, %v2105
    %v2282 = vadd.f32 %v1139, %v1720
    %v2283 = vadd.f32 %v1268, %v1849
    %v2284 = vadd.f32 %v1397, %v1978
    %v2285 = vadd.f32 %v1526, %v2107
    %v2286 = vadd.f32 %v1142, %v1723
    %v2287 = vadd.f32 %v1271, %v1852
    %v2288 = vadd.f32 %v1400, %v1981
    %v2289 = vadd.f32 %v1529, %v2110
    %v2290 = vadd.f32 %v1144, %v1725
    %v2291 = vadd.f32 %v1273, %v1854
    %v2292 = vadd.f32 %v1402, %v1983
    %v2293 = vadd.f32 %v1531, %v2112
    %v2294 = vadd.f32 %v1147, %v1728
    %v2295 = vadd.f32 %v1276, %v1857
    %v2296 = vadd.f32 %v1405, %v1986
    %v2297 = vadd.f32 %v1534, %v2115
    %v2298 = vadd.f32 %v1149, %v1730
    %v2299 = vadd.f32 %v1278, %v1859
    %v2300 = vadd.f32 %v1407, %v1988
    %v2301 = vadd.f32 %v1536, %v2117
    %v2302 = vadd.f32 %v1152, %v1733
    %v2303 = vadd.f32 %v1281, %v1862
    %v2304 = vadd.f32 %v1410, %v1991
    %v2305 = vadd.f32 %v1539, %v2120
    %v2306 = vadd.f32 %v1154, %v1735
    %v2307 = vadd.f32 %v1283, %v1864
    %v2308 = vadd.f32 %v1412, %v1993
    %v2309 = vadd.f32 %v1541, %v2122
    %v2310 = vadd.f32 %v1157, %v1738
    %v2311 = vadd.f32 %v1286, %v1867
    %v2312 = vadd.f32 %v1415, %v1996
    %v2313 = vadd.f32 %v1544, %v2125
    %v2314 = vadd.f32 %v1159, %v1740
    %v2315 = vadd.f32 %v1288, %v1869
    %v2316 = vadd.f32 %v1417, %v1998
    %v2317 = vadd.f32 %v1546, %v2127
    %v2318 = vadd.f32 %v1162, %v1743
    %v2319 = vadd.f32 %v1291, %v1872
    %v2320 = vadd.f32 %v1420, %v2001
    %v2321 = vadd.f32 %v1549, %v2130
    %v2322 = vadd.f32 %v1164, %v1745
    %v2323 = vadd.f32 %v1293, %v1874
    %v2324 = vadd.f32 %v1422, %v2003
    %v2325 = vadd.f32 %v1551, %v2132
    %s2326 = scalar_lea.vmem [#allocation2], 192
    %v2327 = vld [vmem:[%s2326] sm:$0xff]
    %v2328 = vld [vmem:[%s2326 + $0x8] sm:$0xff]
    %v2329 = vld [vmem:[%s2326 + $0x10] sm:$0xff]
    %v2330 = vld [vmem:[%s2326 + $0x18] sm:$0xff]
    %v2331 = vld [vmem:[%s2326 + $0x20] sm:$0xff]
    %v2332 = vld [vmem:[%s2326 + $0x28] sm:$0xff]
    %v2333 = vld [vmem:[%s2326 + $0x30] sm:$0x33]
    %v2334 = vld [vmem:[%s2326 + $0x38] sm:$0x33]
    %v2337 = vunpack.c.l.b16 %v202
    %v2338 = vunpack.c.l.b16 %v203
    %v2339 = vpack.c.b16 %v2338, %v2337
    %v2348 = vunpack.c.l.b16 %v2327
    %v2349 = vunpack.c.h.b16 %v2327
    %v2350 = vunpack.c.l.b16 %v2328
    %v2351 = vunpack.c.h.b16 %v2328
    %v2352 = vunpack.c.l.b16 %v2329
    %v2353 = vunpack.c.h.b16 %v2329
    %v2354 = vunpack.c.l.b16 %v2330
    %v2355 = vunpack.c.h.b16 %v2330
    %v2356 = vunpack.c.l.b16 %v2331
    %v2357 = vunpack.c.h.b16 %v2331
    %v2358 = vunpack.c.l.b16 %v2332
    %v2359 = vunpack.c.h.b16 %v2332
    %v2360 = vunpack.c.l.b16 %v2333
    %v2361 = vunpack.c.h.b16 %v2333
    %v2362 = vunpack.c.l.b16 %v2334
    %v2363 = vunpack.c.h.b16 %v2334
    %v2364 = vpack.c.b16 %v2352, %v2348
    %v2365 = vpack.c.b16 %v2353, %v2349
    %v2366 = vpack.c.b16 %v2354, %v2350
    %v2367 = vpack.c.b16 %v2355, %v2351
    %v2368 = vpack.c.b16 %v2360, %v2356
    %v2369 = vpack.c.b16 %v2361, %v2357
    %v2370 = vpack.c.b16 %v2362, %v2358
    %v2371 = vpack.c.b16 %v2363, %v2359
    %v2377 = vsel %vm379, %v2339, 0
    %v2380 = vsel %vm452, %v2368, 0
    %v2383 = vsel %vm452, %v2369, 0
    %v2386 = vsel %vm452, %v2370, 0
    %v2389 = vsel %vm452, %v2371, 0
    %2391 = vmatpush.bf16.msra.mxu0 0
    %2392 = vmatpush.bf16.msra.mxu0 0
    %2393 = vmatpush.bf16.msra.mxu0 0
    %2394 = vmatpush.bf16.msra.mxu0 0
    %2395 = vmatpush.bf16.msra.mxu0 0
    %2396 = vmatpush.bf16.msra.mxu0 0
    %2397 = vmatpush.bf16.msra.mxu0 %v2380
    %2398 = vmatpush.bf16.msra.mxu0 %v2364
    %2399 = vmatmul.bf16.gmra.mxu0 %v387
    %v2400 = vpop.f32.mrf.mxu0
    %v2401 = vadd.f32 0.0, %v2400
    %v2402 = vpop.f32.mrf.mxu0
    %v2403 = vadd.f32 0.0, %v2402
    %2404 = vmatmul.bf16.gmra.mxu0 %v390
    %v2405 = vpop.f32.mrf.mxu0
    %v2406 = vadd.f32 0.0, %v2405
    %v2407 = vpop.f32.mrf.mxu0
    %v2408 = vadd.f32 0.0, %v2407
    %2409 = vmatmul.bf16.gmra.mxu0 %v393
    %v2410 = vpop.f32.mrf.mxu0
    %v2411 = vadd.f32 0.0, %v2410
    %v2412 = vpop.f32.mrf.mxu0
    %v2413 = vadd.f32 0.0, %v2412
    %2414 = vmatmul.bf16.gmra.mxu0 %v396
    %v2415 = vpop.f32.mrf.mxu0
    %v2416 = vadd.f32 0.0, %v2415
    %v2417 = vpop.f32.mrf.mxu0
    %v2418 = vadd.f32 0.0, %v2417
    %2419 = vmatmul.bf16.gmra.mxu0 %v399
    %v2420 = vpop.f32.mrf.mxu0
    %v2421 = vadd.f32 0.0, %v2420
    %v2422 = vpop.f32.mrf.mxu0
    %v2423 = vadd.f32 0.0, %v2422
    %2424 = vmatmul.bf16.gmra.mxu0 %v402
    %v2425 = vpop.f32.mrf.mxu0
    %v2426 = vadd.f32 0.0, %v2425
    %v2427 = vpop.f32.mrf.mxu0
    %v2428 = vadd.f32 0.0, %v2427
    %2429 = vmatmul.bf16.gmra.mxu0 %v405
    %v2430 = vpop.f32.mrf.mxu0
    %v2431 = vadd.f32 0.0, %v2430
    %v2432 = vpop.f32.mrf.mxu0
    %v2433 = vadd.f32 0.0, %v2432
    %2434 = vmatmul.bf16.gmra.mxu0 %v408
    %v2435 = vpop.f32.mrf.mxu0
    %v2436 = vadd.f32 0.0, %v2435
    %v2437 = vpop.f32.mrf.mxu0
    %v2438 = vadd.f32 0.0, %v2437
    %2439 = vmatmul.bf16.gmra.mxu0 %v411
    %v2440 = vpop.f32.mrf.mxu0
    %v2441 = vadd.f32 0.0, %v2440
    %v2442 = vpop.f32.mrf.mxu0
    %v2443 = vadd.f32 0.0, %v2442
    %2444 = vmatmul.bf16.gmra.mxu0 %v414
    %v2445 = vpop.f32.mrf.mxu0
    %v2446 = vadd.f32 0.0, %v2445
    %v2447 = vpop.f32.mrf.mxu0
    %v2448 = vadd.f32 0.0, %v2447
    %2449 = vmatmul.bf16.gmra.mxu0 %v417
    %v2450 = vpop.f32.mrf.mxu0
    %v2451 = vadd.f32 0.0, %v2450
    %v2452 = vpop.f32.mrf.mxu0
    %v2453 = vadd.f32 0.0, %v2452
    %2454 = vmatmul.bf16.gmra.mxu0 %v420
    %v2455 = vpop.f32.mrf.mxu0
    %v2456 = vadd.f32 0.0, %v2455
    %v2457 = vpop.f32.mrf.mxu0
    %v2458 = vadd.f32 0.0, %v2457
    %2459 = vmatmul.bf16.gmra.mxu0 %v423
    %v2460 = vpop.f32.mrf.mxu0
    %v2461 = vadd.f32 0.0, %v2460
    %v2462 = vpop.f32.mrf.mxu0
    %v2463 = vadd.f32 0.0, %v2462
    %2464 = vmatmul.bf16.gmra.mxu0 %v426
    %v2465 = vpop.f32.mrf.mxu0
    %v2466 = vadd.f32 0.0, %v2465
    %v2467 = vpop.f32.mrf.mxu0
    %v2468 = vadd.f32 0.0, %v2467
    %2469 = vmatmul.bf16.gmra.mxu0 %v429
    %v2470 = vpop.f32.mrf.mxu0
    %v2471 = vadd.f32 0.0, %v2470
    %v2472 = vpop.f32.mrf.mxu0
    %v2473 = vadd.f32 0.0, %v2472
    %2474 = vmatmul.bf16.gmra.mxu0 %v432
    %v2475 = vpop.f32.mrf.mxu0
    %v2476 = vadd.f32 0.0, %v2475
    %v2477 = vpop.f32.mrf.mxu0
    %v2478 = vadd.f32 0.0, %v2477
    %2479 = vmatmul.bf16.gmra.mxu0 %v435
    %v2480 = vpop.f32.mrf.mxu0
    %v2481 = vadd.f32 0.0, %v2480
    %v2482 = vpop.f32.mrf.mxu0
    %v2483 = vadd.f32 0.0, %v2482
    %2484 = vmatmul.bf16.gmra.mxu0 %v438
    %v2485 = vpop.f32.mrf.mxu0
    %v2486 = vadd.f32 0.0, %v2485
    %v2487 = vpop.f32.mrf.mxu0
    %v2488 = vadd.f32 0.0, %v2487
    %2489 = vmatmul.bf16.gmra.mxu0 %v441
    %v2490 = vpop.f32.mrf.mxu0
    %v2491 = vadd.f32 0.0, %v2490
    %v2492 = vpop.f32.mrf.mxu0
    %v2493 = vadd.f32 0.0, %v2492
    %2494 = vmatmul.bf16.gmra.mxu0 %v444
    %v2495 = vpop.f32.mrf.mxu0
    %v2496 = vadd.f32 0.0, %v2495
    %v2497 = vpop.f32.mrf.mxu0
    %v2498 = vadd.f32 0.0, %v2497
    %2499 = vmatmul.bf16.gmra.mxu0 %v447
    %v2500 = vpop.f32.mrf.mxu0
    %v2501 = vadd.f32 0.0, %v2500
    %v2502 = vpop.f32.mrf.mxu0
    %v2503 = vadd.f32 0.0, %v2502
    %2504 = vmatmul.bf16.gmra.mxu0 %v450
    %v2505 = vpop.f32.mrf.mxu0
    %v2506 = vadd.f32 0.0, %v2505
    %v2507 = vpop.f32.mrf.mxu0
    %v2508 = vadd.f32 0.0, %v2507
    %2509 = vmatmul.bf16.gmra.mxu0 %v1604
    %v2510 = vpop.f32.mrf.mxu0
    %v2511 = vadd.f32 0.0, %v2510
    %v2512 = vpop.f32.mrf.mxu0
    %v2513 = vadd.f32 0.0, %v2512
    %2514 = vmatmul.bf16.gmra.mxu0 %v2377
    %v2515 = vpop.f32.mrf.mxu0
    %v2516 = vadd.f32 0.0, %v2515
    %v2517 = vpop.f32.mrf.mxu0
    %v2518 = vadd.f32 0.0, %v2517
    %2519 = vdwg.mxu0
    %2520 = vmatpush.bf16.msra.mxu0 0
    %2521 = vmatpush.bf16.msra.mxu0 0
    %2522 = vmatpush.bf16.msra.mxu0 0
    %2523 = vmatpush.bf16.msra.mxu0 0
    %2524 = vmatpush.bf16.msra.mxu0 0
    %2525 = vmatpush.bf16.msra.mxu0 0
    %2526 = vmatpush.bf16.msra.mxu0 %v2383
    %2527 = vmatpush.bf16.msra.mxu0 %v2365
    %2528 = vmatmul.bf16.gmra.mxu0 %v387
    %v2529 = vpop.f32.mrf.mxu0
    %v2530 = vadd.f32 0.0, %v2529
    %v2531 = vpop.f32.mrf.mxu0
    %v2532 = vadd.f32 0.0, %v2531
    %2533 = vmatmul.bf16.gmra.mxu0 %v390
    %v2534 = vpop.f32.mrf.mxu0
    %v2535 = vadd.f32 0.0, %v2534
    %v2536 = vpop.f32.mrf.mxu0
    %v2537 = vadd.f32 0.0, %v2536
    %2538 = vmatmul.bf16.gmra.mxu0 %v393
    %v2539 = vpop.f32.mrf.mxu0
    %v2540 = vadd.f32 0.0, %v2539
    %v2541 = vpop.f32.mrf.mxu0
    %v2542 = vadd.f32 0.0, %v2541
    %2543 = vmatmul.bf16.gmra.mxu0 %v396
    %v2544 = vpop.f32.mrf.mxu0
    %v2545 = vadd.f32 0.0, %v2544
    %v2546 = vpop.f32.mrf.mxu0
    %v2547 = vadd.f32 0.0, %v2546
    %2548 = vmatmul.bf16.gmra.mxu0 %v399
    %v2549 = vpop.f32.mrf.mxu0
    %v2550 = vadd.f32 0.0, %v2549
    %v2551 = vpop.f32.mrf.mxu0
    %v2552 = vadd.f32 0.0, %v2551
    %2553 = vmatmul.bf16.gmra.mxu0 %v402
    %v2554 = vpop.f32.mrf.mxu0
    %v2555 = vadd.f32 0.0, %v2554
    %v2556 = vpop.f32.mrf.mxu0
    %v2557 = vadd.f32 0.0, %v2556
    %2558 = vmatmul.bf16.gmra.mxu0 %v405
    %v2559 = vpop.f32.mrf.mxu0
    %v2560 = vadd.f32 0.0, %v2559
    %v2561 = vpop.f32.mrf.mxu0
    %v2562 = vadd.f32 0.0, %v2561
    %2563 = vmatmul.bf16.gmra.mxu0 %v408
    %v2564 = vpop.f32.mrf.mxu0
    %v2565 = vadd.f32 0.0, %v2564
    %v2566 = vpop.f32.mrf.mxu0
    %v2567 = vadd.f32 0.0, %v2566
    %2568 = vmatmul.bf16.gmra.mxu0 %v411
    %v2569 = vpop.f32.mrf.mxu0
    %v2570 = vadd.f32 0.0, %v2569
    %v2571 = vpop.f32.mrf.mxu0
    %v2572 = vadd.f32 0.0, %v2571
    %2573 = vmatmul.bf16.gmra.mxu0 %v414
    %v2574 = vpop.f32.mrf.mxu0
    %v2575 = vadd.f32 0.0, %v2574
    %v2576 = vpop.f32.mrf.mxu0
    %v2577 = vadd.f32 0.0, %v2576
    %2578 = vmatmul.bf16.gmra.mxu0 %v417
    %v2579 = vpop.f32.mrf.mxu0
    %v2580 = vadd.f32 0.0, %v2579
    %v2581 = vpop.f32.mrf.mxu0
    %v2582 = vadd.f32 0.0, %v2581
    %2583 = vmatmul.bf16.gmra.mxu0 %v420
    %v2584 = vpop.f32.mrf.mxu0
    %v2585 = vadd.f32 0.0, %v2584
    %v2586 = vpop.f32.mrf.mxu0
    %v2587 = vadd.f32 0.0, %v2586
    %2588 = vmatmul.bf16.gmra.mxu0 %v423
    %v2589 = vpop.f32.mrf.mxu0
    %v2590 = vadd.f32 0.0, %v2589
    %v2591 = vpop.f32.mrf.mxu0
    %v2592 = vadd.f32 0.0, %v2591
    %2593 = vmatmul.bf16.gmra.mxu0 %v426
    %v2594 = vpop.f32.mrf.mxu0
    %v2595 = vadd.f32 0.0, %v2594
    %v2596 = vpop.f32.mrf.mxu0
    %v2597 = vadd.f32 0.0, %v2596
    %2598 = vmatmul.bf16.gmra.mxu0 %v429
    %v2599 = vpop.f32.mrf.mxu0
    %v2600 = vadd.f32 0.0, %v2599
    %v2601 = vpop.f32.mrf.mxu0
    %v2602 = vadd.f32 0.0, %v2601
    %2603 = vmatmul.bf16.gmra.mxu0 %v432
    %v2604 = vpop.f32.mrf.mxu0
    %v2605 = vadd.f32 0.0, %v2604
    %v2606 = vpop.f32.mrf.mxu0
    %v2607 = vadd.f32 0.0, %v2606
    %2608 = vmatmul.bf16.gmra.mxu0 %v435
    %v2609 = vpop.f32.mrf.mxu0
    %v2610 = vadd.f32 0.0, %v2609
    %v2611 = vpop.f32.mrf.mxu0
    %v2612 = vadd.f32 0.0, %v2611
    %2613 = vmatmul.bf16.gmra.mxu0 %v438
    %v2614 = vpop.f32.mrf.mxu0
    %v2615 = vadd.f32 0.0, %v2614
    %v2616 = vpop.f32.mrf.mxu0
    %v2617 = vadd.f32 0.0, %v2616
    %2618 = vmatmul.bf16.gmra.mxu0 %v441
    %v2619 = vpop.f32.mrf.mxu0
    %v2620 = vadd.f32 0.0, %v2619
    %v2621 = vpop.f32.mrf.mxu0
    %v2622 = vadd.f32 0.0, %v2621
    %2623 = vmatmul.bf16.gmra.mxu0 %v444
    %v2624 = vpop.f32.mrf.mxu0
    %v2625 = vadd.f32 0.0, %v2624
    %v2626 = vpop.f32.mrf.mxu0
    %v2627 = vadd.f32 0.0, %v2626
    %2628 = vmatmul.bf16.gmra.mxu0 %v447
    %v2629 = vpop.f32.mrf.mxu0
    %v2630 = vadd.f32 0.0, %v2629
    %v2631 = vpop.f32.mrf.mxu0
    %v2632 = vadd.f32 0.0, %v2631
    %2633 = vmatmul.bf16.gmra.mxu0 %v450
    %v2634 = vpop.f32.mrf.mxu0
    %v2635 = vadd.f32 0.0, %v2634
    %v2636 = vpop.f32.mrf.mxu0
    %v2637 = vadd.f32 0.0, %v2636
    %2638 = vmatmul.bf16.gmra.mxu0 %v1604
    %v2639 = vpop.f32.mrf.mxu0
    %v2640 = vadd.f32 0.0, %v2639
    %v2641 = vpop.f32.mrf.mxu0
    %v2642 = vadd.f32 0.0, %v2641
    %2643 = vmatmul.bf16.gmra.mxu0 %v2377
    %v2644 = vpop.f32.mrf.mxu0
    %v2645 = vadd.f32 0.0, %v2644
    %v2646 = vpop.f32.mrf.mxu0
    %v2647 = vadd.f32 0.0, %v2646
    %2648 = vdwg.mxu0
    %2649 = vmatpush.bf16.msra.mxu0 0
    %2650 = vmatpush.bf16.msra.mxu0 0
    %2651 = vmatpush.bf16.msra.mxu0 0
    %2652 = vmatpush.bf16.msra.mxu0 0
    %2653 = vmatpush.bf16.msra.mxu0 0
    %2654 = vmatpush.bf16.msra.mxu0 0
    %2655 = vmatpush.bf16.msra.mxu0 %v2386
    %2656 = vmatpush.bf16.msra.mxu0 %v2366
    %2657 = vmatmul.bf16.gmra.mxu0 %v387
    %v2658 = vpop.f32.mrf.mxu0
    %v2659 = vadd.f32 0.0, %v2658
    %v2660 = vpop.f32.mrf.mxu0
    %v2661 = vadd.f32 0.0, %v2660
    %2662 = vmatmul.bf16.gmra.mxu0 %v390
    %v2663 = vpop.f32.mrf.mxu0
    %v2664 = vadd.f32 0.0, %v2663
    %v2665 = vpop.f32.mrf.mxu0
    %v2666 = vadd.f32 0.0, %v2665
    %2667 = vmatmul.bf16.gmra.mxu0 %v393
    %v2668 = vpop.f32.mrf.mxu0
    %v2669 = vadd.f32 0.0, %v2668
    %v2670 = vpop.f32.mrf.mxu0
    %v2671 = vadd.f32 0.0, %v2670
    %2672 = vmatmul.bf16.gmra.mxu0 %v396
    %v2673 = vpop.f32.mrf.mxu0
    %v2674 = vadd.f32 0.0, %v2673
    %v2675 = vpop.f32.mrf.mxu0
    %v2676 = vadd.f32 0.0, %v2675
    %2677 = vmatmul.bf16.gmra.mxu0 %v399
    %v2678 = vpop.f32.mrf.mxu0
    %v2679 = vadd.f32 0.0, %v2678
    %v2680 = vpop.f32.mrf.mxu0
    %v2681 = vadd.f32 0.0, %v2680
    %2682 = vmatmul.bf16.gmra.mxu0 %v402
    %v2683 = vpop.f32.mrf.mxu0
    %v2684 = vadd.f32 0.0, %v2683
    %v2685 = vpop.f32.mrf.mxu0
    %v2686 = vadd.f32 0.0, %v2685
    %2687 = vmatmul.bf16.gmra.mxu0 %v405
    %v2688 = vpop.f32.mrf.mxu0
    %v2689 = vadd.f32 0.0, %v2688
    %v2690 = vpop.f32.mrf.mxu0
    %v2691 = vadd.f32 0.0, %v2690
    %2692 = vmatmul.bf16.gmra.mxu0 %v408
    %v2693 = vpop.f32.mrf.mxu0
    %v2694 = vadd.f32 0.0, %v2693
    %v2695 = vpop.f32.mrf.mxu0
    %v2696 = vadd.f32 0.0, %v2695
    %2697 = vmatmul.bf16.gmra.mxu0 %v411
    %v2698 = vpop.f32.mrf.mxu0
    %v2699 = vadd.f32 0.0, %v2698
    %v2700 = vpop.f32.mrf.mxu0
    %v2701 = vadd.f32 0.0, %v2700
    %2702 = vmatmul.bf16.gmra.mxu0 %v414
    %v2703 = vpop.f32.mrf.mxu0
    %v2704 = vadd.f32 0.0, %v2703
    %v2705 = vpop.f32.mrf.mxu0
    %v2706 = vadd.f32 0.0, %v2705
    %2707 = vmatmul.bf16.gmra.mxu0 %v417
    %v2708 = vpop.f32.mrf.mxu0
    %v2709 = vadd.f32 0.0, %v2708
    %v2710 = vpop.f32.mrf.mxu0
    %v2711 = vadd.f32 0.0, %v2710
    %2712 = vmatmul.bf16.gmra.mxu0 %v420
    %v2713 = vpop.f32.mrf.mxu0
    %v2714 = vadd.f32 0.0, %v2713
    %v2715 = vpop.f32.mrf.mxu0
    %v2716 = vadd.f32 0.0, %v2715
    %2717 = vmatmul.bf16.gmra.mxu0 %v423
    %v2718 = vpop.f32.mrf.mxu0
    %v2719 = vadd.f32 0.0, %v2718
    %v2720 = vpop.f32.mrf.mxu0
    %v2721 = vadd.f32 0.0, %v2720
    %2722 = vmatmul.bf16.gmra.mxu0 %v426
    %v2723 = vpop.f32.mrf.mxu0
    %v2724 = vadd.f32 0.0, %v2723
    %v2725 = vpop.f32.mrf.mxu0
    %v2726 = vadd.f32 0.0, %v2725
    %2727 = vmatmul.bf16.gmra.mxu0 %v429
    %v2728 = vpop.f32.mrf.mxu0
    %v2729 = vadd.f32 0.0, %v2728
    %v2730 = vpop.f32.mrf.mxu0
    %v2731 = vadd.f32 0.0, %v2730
    %2732 = vmatmul.bf16.gmra.mxu0 %v432
    %v2733 = vpop.f32.mrf.mxu0
    %v2734 = vadd.f32 0.0, %v2733
    %v2735 = vpop.f32.mrf.mxu0
    %v2736 = vadd.f32 0.0, %v2735
    %2737 = vmatmul.bf16.gmra.mxu0 %v435
    %v2738 = vpop.f32.mrf.mxu0
    %v2739 = vadd.f32 0.0, %v2738
    %v2740 = vpop.f32.mrf.mxu0
    %v2741 = vadd.f32 0.0, %v2740
    %2742 = vmatmul.bf16.gmra.mxu0 %v438
    %v2743 = vpop.f32.mrf.mxu0
    %v2744 = vadd.f32 0.0, %v2743
    %v2745 = vpop.f32.mrf.mxu0
    %v2746 = vadd.f32 0.0, %v2745
    %2747 = vmatmul.bf16.gmra.mxu0 %v441
    %v2748 = vpop.f32.mrf.mxu0
    %v2749 = vadd.f32 0.0, %v2748
    %v2750 = vpop.f32.mrf.mxu0
    %v2751 = vadd.f32 0.0, %v2750
    %2752 = vmatmul.bf16.gmra.mxu0 %v444
    %v2753 = vpop.f32.mrf.mxu0
    %v2754 = vadd.f32 0.0, %v2753
    %v2755 = vpop.f32.mrf.mxu0
    %v2756 = vadd.f32 0.0, %v2755
    %2757 = vmatmul.bf16.gmra.mxu0 %v447
    %v2758 = vpop.f32.mrf.mxu0
    %v2759 = vadd.f32 0.0, %v2758
    %v2760 = vpop.f32.mrf.mxu0
    %v2761 = vadd.f32 0.0, %v2760
    %2762 = vmatmul.bf16.gmra.mxu0 %v450
    %v2763 = vpop.f32.mrf.mxu0
    %v2764 = vadd.f32 0.0, %v2763
    %v2765 = vpop.f32.mrf.mxu0
    %v2766 = vadd.f32 0.0, %v2765
    %2767 = vmatmul.bf16.gmra.mxu0 %v1604
    %v2768 = vpop.f32.mrf.mxu0
    %v2769 = vadd.f32 0.0, %v2768
    %v2770 = vpop.f32.mrf.mxu0
    %v2771 = vadd.f32 0.0, %v2770
    %2772 = vmatmul.bf16.gmra.mxu0 %v2377
    %v2773 = vpop.f32.mrf.mxu0
    %v2774 = vadd.f32 0.0, %v2773
    %v2775 = vpop.f32.mrf.mxu0
    %v2776 = vadd.f32 0.0, %v2775
    %2777 = vdwg.mxu0
    %2778 = vmatpush.bf16.msra.mxu0 0
    %2779 = vmatpush.bf16.msra.mxu0 0
    %2780 = vmatpush.bf16.msra.mxu0 0
    %2781 = vmatpush.bf16.msra.mxu0 0
    %2782 = vmatpush.bf16.msra.mxu0 0
    %2783 = vmatpush.bf16.msra.mxu0 0
    %2784 = vmatpush.bf16.msra.mxu0 %v2389
    %2785 = vmatpush.bf16.msra.mxu0 %v2367
    %2786 = vmatmul.bf16.gmra.mxu0 %v387
    %v2787 = vpop.f32.mrf.mxu0
    %v2788 = vadd.f32 0.0, %v2787
    %v2789 = vpop.f32.mrf.mxu0
    %v2790 = vadd.f32 0.0, %v2789
    %2791 = vmatmul.bf16.gmra.mxu0 %v390
    %v2792 = vpop.f32.mrf.mxu0
    %v2793 = vadd.f32 0.0, %v2792
    %v2794 = vpop.f32.mrf.mxu0
    %v2795 = vadd.f32 0.0, %v2794
    %2796 = vmatmul.bf16.gmra.mxu0 %v393
    %v2797 = vpop.f32.mrf.mxu0
    %v2798 = vadd.f32 0.0, %v2797
    %v2799 = vpop.f32.mrf.mxu0
    %v2800 = vadd.f32 0.0, %v2799
    %2801 = vmatmul.bf16.gmra.mxu0 %v396
    %v2802 = vpop.f32.mrf.mxu0
    %v2803 = vadd.f32 0.0, %v2802
    %v2804 = vpop.f32.mrf.mxu0
    %v2805 = vadd.f32 0.0, %v2804
    %2806 = vmatmul.bf16.gmra.mxu0 %v399
    %v2807 = vpop.f32.mrf.mxu0
    %v2808 = vadd.f32 0.0, %v2807
    %v2809 = vpop.f32.mrf.mxu0
    %v2810 = vadd.f32 0.0, %v2809
    %2811 = vmatmul.bf16.gmra.mxu0 %v402
    %v2812 = vpop.f32.mrf.mxu0
    %v2813 = vadd.f32 0.0, %v2812
    %v2814 = vpop.f32.mrf.mxu0
    %v2815 = vadd.f32 0.0, %v2814
    %2816 = vmatmul.bf16.gmra.mxu0 %v405
    %v2817 = vpop.f32.mrf.mxu0
    %v2818 = vadd.f32 0.0, %v2817
    %v2819 = vpop.f32.mrf.mxu0
    %v2820 = vadd.f32 0.0, %v2819
    %2821 = vmatmul.bf16.gmra.mxu0 %v408
    %v2822 = vpop.f32.mrf.mxu0
    %v2823 = vadd.f32 0.0, %v2822
    %v2824 = vpop.f32.mrf.mxu0
    %v2825 = vadd.f32 0.0, %v2824
    %2826 = vmatmul.bf16.gmra.mxu0 %v411
    %v2827 = vpop.f32.mrf.mxu0
    %v2828 = vadd.f32 0.0, %v2827
    %v2829 = vpop.f32.mrf.mxu0
    %v2830 = vadd.f32 0.0, %v2829
    %2831 = vmatmul.bf16.gmra.mxu0 %v414
    %v2832 = vpop.f32.mrf.mxu0
    %v2833 = vadd.f32 0.0, %v2832
    %v2834 = vpop.f32.mrf.mxu0
    %v2835 = vadd.f32 0.0, %v2834
    %2836 = vmatmul.bf16.gmra.mxu0 %v417
    %v2837 = vpop.f32.mrf.mxu0
    %v2838 = vadd.f32 0.0, %v2837
    %v2839 = vpop.f32.mrf.mxu0
    %v2840 = vadd.f32 0.0, %v2839
    %2841 = vmatmul.bf16.gmra.mxu0 %v420
    %v2842 = vpop.f32.mrf.mxu0
    %v2843 = vadd.f32 0.0, %v2842
    %v2844 = vpop.f32.mrf.mxu0
    %v2845 = vadd.f32 0.0, %v2844
    %2846 = vmatmul.bf16.gmra.mxu0 %v423
    %v2847 = vpop.f32.mrf.mxu0
    %v2848 = vadd.f32 0.0, %v2847
    %v2849 = vpop.f32.mrf.mxu0
    %v2850 = vadd.f32 0.0, %v2849
    %2851 = vmatmul.bf16.gmra.mxu0 %v426
    %v2852 = vpop.f32.mrf.mxu0
    %v2853 = vadd.f32 0.0, %v2852
    %v2854 = vpop.f32.mrf.mxu0
    %v2855 = vadd.f32 0.0, %v2854
    %2856 = vmatmul.bf16.gmra.mxu0 %v429
    %v2857 = vpop.f32.mrf.mxu0
    %v2858 = vadd.f32 0.0, %v2857
    %v2859 = vpop.f32.mrf.mxu0
    %v2860 = vadd.f32 0.0, %v2859
    %2861 = vmatmul.bf16.gmra.mxu0 %v432
    %v2862 = vpop.f32.mrf.mxu0
    %v2863 = vadd.f32 0.0, %v2862
    %v2864 = vpop.f32.mrf.mxu0
    %v2865 = vadd.f32 0.0, %v2864
    %2866 = vmatmul.bf16.gmra.mxu0 %v435
    %v2867 = vpop.f32.mrf.mxu0
    %v2868 = vadd.f32 0.0, %v2867
    %v2869 = vpop.f32.mrf.mxu0
    %v2870 = vadd.f32 0.0, %v2869
    %2871 = vmatmul.bf16.gmra.mxu0 %v438
    %v2872 = vpop.f32.mrf.mxu0
    %v2873 = vadd.f32 0.0, %v2872
    %v2874 = vpop.f32.mrf.mxu0
    %v2875 = vadd.f32 0.0, %v2874
    %2876 = vmatmul.bf16.gmra.mxu0 %v441
    %v2877 = vpop.f32.mrf.mxu0
    %v2878 = vadd.f32 0.0, %v2877
    %v2879 = vpop.f32.mrf.mxu0
    %v2880 = vadd.f32 0.0, %v2879
    %2881 = vmatmul.bf16.gmra.mxu0 %v444
    %v2882 = vpop.f32.mrf.mxu0
    %v2883 = vadd.f32 0.0, %v2882
    %v2884 = vpop.f32.mrf.mxu0
    %v2885 = vadd.f32 0.0, %v2884
    %2886 = vmatmul.bf16.gmra.mxu0 %v447
    %v2887 = vpop.f32.mrf.mxu0
    %v2888 = vadd.f32 0.0, %v2887
    %v2889 = vpop.f32.mrf.mxu0
    %v2890 = vadd.f32 0.0, %v2889
    %2891 = vmatmul.bf16.gmra.mxu0 %v450
    %v2892 = vpop.f32.mrf.mxu0
    %v2893 = vadd.f32 0.0, %v2892
    %v2894 = vpop.f32.mrf.mxu0
    %v2895 = vadd.f32 0.0, %v2894
    %2896 = vmatmul.bf16.gmra.mxu0 %v1604
    %v2897 = vpop.f32.mrf.mxu0
    %v2898 = vadd.f32 0.0, %v2897
    %v2899 = vpop.f32.mrf.mxu0
    %v2900 = vadd.f32 0.0, %v2899
    %2901 = vmatmul.bf16.gmra.mxu0 %v2377
    %v2902 = vpop.f32.mrf.mxu0
    %v2903 = vadd.f32 0.0, %v2902
    %v2904 = vpop.f32.mrf.mxu0
    %v2905 = vadd.f32 0.0, %v2904
    %2906 = vdwg.mxu0
    %v2907 = vadd.f32 %v2134, %v2401
    %v2908 = vadd.f32 %v2135, %v2530
    %v2909 = vadd.f32 %v2136, %v2659
    %v2910 = vadd.f32 %v2137, %v2788
    %v2911 = vadd.f32 %v2138, %v2403
    %v2912 = vadd.f32 %v2139, %v2532
    %v2913 = vadd.f32 %v2140, %v2661
    %v2914 = vadd.f32 %v2141, %v2790
    %v2915 = vadd.f32 %v2142, %v2406
    %v2916 = vadd.f32 %v2143, %v2535
    %v2917 = vadd.f32 %v2144, %v2664
    %v2918 = vadd.f32 %v2145, %v2793
    %v2919 = vadd.f32 %v2146, %v2408
    %v2920 = vadd.f32 %v2147, %v2537
    %v2921 = vadd.f32 %v2148, %v2666
    %v2922 = vadd.f32 %v2149, %v2795
    %v2923 = vadd.f32 %v2150, %v2411
    %v2924 = vadd.f32 %v2151, %v2540
    %v2925 = vadd.f32 %v2152, %v2669
    %v2926 = vadd.f32 %v2153, %v2798
    %v2927 = vadd.f32 %v2154, %v2413
    %v2928 = vadd.f32 %v2155, %v2542
    %v2929 = vadd.f32 %v2156, %v2671
    %v2930 = vadd.f32 %v2157, %v2800
    %v2931 = vadd.f32 %v2158, %v2416
    %v2932 = vadd.f32 %v2159, %v2545
    %v2933 = vadd.f32 %v2160, %v2674
    %v2934 = vadd.f32 %v2161, %v2803
    %v2935 = vadd.f32 %v2162, %v2418
    %v2936 = vadd.f32 %v2163, %v2547
    %v2937 = vadd.f32 %v2164, %v2676
    %v2938 = vadd.f32 %v2165, %v2805
    %v2939 = vadd.f32 %v2166, %v2421
    %v2940 = vadd.f32 %v2167, %v2550
    %v2941 = vadd.f32 %v2168, %v2679
    %v2942 = vadd.f32 %v2169, %v2808
    %v2943 = vadd.f32 %v2170, %v2423
    %v2944 = vadd.f32 %v2171, %v2552
    %v2945 = vadd.f32 %v2172, %v2681
    %v2946 = vadd.f32 %v2173, %v2810
    %v2947 = vadd.f32 %v2174, %v2426
    %v2948 = vadd.f32 %v2175, %v2555
    %v2949 = vadd.f32 %v2176, %v2684
    %v2950 = vadd.f32 %v2177, %v2813
    %v2951 = vadd.f32 %v2178, %v2428
    %v2952 = vadd.f32 %v2179, %v2557
    %v2953 = vadd.f32 %v2180, %v2686
    %v2954 = vadd.f32 %v2181, %v2815
    %v2955 = vadd.f32 %v2182, %v2431
    %v2956 = vadd.f32 %v2183, %v2560
    %v2957 = vadd.f32 %v2184, %v2689
    %v2958 = vadd.f32 %v2185, %v2818
    %v2959 = vadd.f32 %v2186, %v2433
    %v2960 = vadd.f32 %v2187, %v2562
    %v2961 = vadd.f32 %v2188, %v2691
    %v2962 = vadd.f32 %v2189, %v2820
    %v2963 = vadd.f32 %v2190, %v2436
    %v2964 = vadd.f32 %v2191, %v2565
    %v2965 = vadd.f32 %v2192, %v2694
    %v2966 = vadd.f32 %v2193, %v2823
    %v2967 = vadd.f32 %v2194, %v2438
    %v2968 = vadd.f32 %v2195, %v2567
    %v2969 = vadd.f32 %v2196, %v2696
    %v2970 = vadd.f32 %v2197, %v2825
    %v2971 = vadd.f32 %v2198, %v2441
    %v2972 = vadd.f32 %v2199, %v2570
    %v2973 = vadd.f32 %v2200, %v2699
    %v2974 = vadd.f32 %v2201, %v2828
    %v2975 = vadd.f32 %v2202, %v2443
    %v2976 = vadd.f32 %v2203, %v2572
    %v2977 = vadd.f32 %v2204, %v2701
    %v2978 = vadd.f32 %v2205, %v2830
    %v2979 = vadd.f32 %v2206, %v2446
    %v2980 = vadd.f32 %v2207, %v2575
    %v2981 = vadd.f32 %v2208, %v2704
    %v2982 = vadd.f32 %v2209, %v2833
    %v2983 = vadd.f32 %v2210, %v2448
    %v2984 = vadd.f32 %v2211, %v2577
    %v2985 = vadd.f32 %v2212, %v2706
    %v2986 = vadd.f32 %v2213, %v2835
    %v2987 = vadd.f32 %v2214, %v2451
    %v2988 = vadd.f32 %v2215, %v2580
    %v2989 = vadd.f32 %v2216, %v2709
    %v2990 = vadd.f32 %v2217, %v2838
    %v2991 = vadd.f32 %v2218, %v2453
    %v2992 = vadd.f32 %v2219, %v2582
    %v2993 = vadd.f32 %v2220, %v2711
    %v2994 = vadd.f32 %v2221, %v2840
    %v2995 = vadd.f32 %v2222, %v2456
    %v2996 = vadd.f32 %v2223, %v2585
    %v2997 = vadd.f32 %v2224, %v2714
    %v2998 = vadd.f32 %v2225, %v2843
    %v2999 = vadd.f32 %v2226, %v2458
    %v3000 = vadd.f32 %v2227, %v2587
    %v3001 = vadd.f32 %v2228, %v2716
    %v3002 = vadd.f32 %v2229, %v2845
    %v3003 = vadd.f32 %v2230, %v2461
    %v3004 = vadd.f32 %v2231, %v2590
    %v3005 = vadd.f32 %v2232, %v2719
    %v3006 = vadd.f32 %v2233, %v2848
    %v3007 = vadd.f32 %v2234, %v2463
    %v3008 = vadd.f32 %v2235, %v2592
    %v3009 = vadd.f32 %v2236, %v2721
    %v3010 = vadd.f32 %v2237, %v2850
    %v3011 = vadd.f32 %v2238, %v2466
    %v3012 = vadd.f32 %v2239, %v2595
    %v3013 = vadd.f32 %v2240, %v2724
    %v3014 = vadd.f32 %v2241, %v2853
    %v3015 = vadd.f32 %v2242, %v2468
    %v3016 = vadd.f32 %v2243, %v2597
    %v3017 = vadd.f32 %v2244, %v2726
    %v3018 = vadd.f32 %v2245, %v2855
    %v3019 = vadd.f32 %v2246, %v2471
    %v3020 = vadd.f32 %v2247, %v2600
    %v3021 = vadd.f32 %v2248, %v2729
    %v3022 = vadd.f32 %v2249, %v2858
    %v3023 = vadd.f32 %v2250, %v2473
    %v3024 = vadd.f32 %v2251, %v2602
    %v3025 = vadd.f32 %v2252, %v2731
    %v3026 = vadd.f32 %v2253, %v2860
    %v3027 = vadd.f32 %v2254, %v2476
    %v3028 = vadd.f32 %v2255, %v2605
    %v3029 = vadd.f32 %v2256, %v2734
    %v3030 = vadd.f32 %v2257, %v2863
    %v3031 = vadd.f32 %v2258, %v2478
    %v3032 = vadd.f32 %v2259, %v2607
    %v3033 = vadd.f32 %v2260, %v2736
    %v3034 = vadd.f32 %v2261, %v2865
    %v3035 = vadd.f32 %v2262, %v2481
    %v3036 = vadd.f32 %v2263, %v2610
    %v3037 = vadd.f32 %v2264, %v2739
    %v3038 = vadd.f32 %v2265, %v2868
    %v3039 = vadd.f32 %v2266, %v2483
    %v3040 = vadd.f32 %v2267, %v2612
    %v3041 = vadd.f32 %v2268, %v2741
    %v3042 = vadd.f32 %v2269, %v2870
    %v3043 = vadd.f32 %v2270, %v2486
    %v3044 = vadd.f32 %v2271, %v2615
    %v3045 = vadd.f32 %v2272, %v2744
    %v3046 = vadd.f32 %v2273, %v2873
    %v3047 = vadd.f32 %v2274, %v2488
    %v3048 = vadd.f32 %v2275, %v2617
    %v3049 = vadd.f32 %v2276, %v2746
    %v3050 = vadd.f32 %v2277, %v2875
    %v3051 = vadd.f32 %v2278, %v2491
    %v3052 = vadd.f32 %v2279, %v2620
    %v3053 = vadd.f32 %v2280, %v2749
    %v3054 = vadd.f32 %v2281, %v2878
    %v3055 = vadd.f32 %v2282, %v2493
    %v3056 = vadd.f32 %v2283, %v2622
    %v3057 = vadd.f32 %v2284, %v2751
    %v3058 = vadd.f32 %v2285, %v2880
    %v3059 = vadd.f32 %v2286, %v2496
    %v3060 = vadd.f32 %v2287, %v2625
    %v3061 = vadd.f32 %v2288, %v2754
    %v3062 = vadd.f32 %v2289, %v2883
    %v3063 = vadd.f32 %v2290, %v2498
    %v3064 = vadd.f32 %v2291, %v2627
    %v3065 = vadd.f32 %v2292, %v2756
    %v3066 = vadd.f32 %v2293, %v2885
    %v3067 = vadd.f32 %v2294, %v2501
    %v3068 = vadd.f32 %v2295, %v2630
    %v3069 = vadd.f32 %v2296, %v2759
    %v3070 = vadd.f32 %v2297, %v2888
    %v3071 = vadd.f32 %v2298, %v2503
    %v3072 = vadd.f32 %v2299, %v2632
    %v3073 = vadd.f32 %v2300, %v2761
    %v3074 = vadd.f32 %v2301, %v2890
    %v3075 = vadd.f32 %v2302, %v2506
    %v3076 = vadd.f32 %v2303, %v2635
    %v3077 = vadd.f32 %v2304, %v2764
    %v3078 = vadd.f32 %v2305, %v2893
    %v3079 = vadd.f32 %v2306, %v2508
    %v3080 = vadd.f32 %v2307, %v2637
    %v3081 = vadd.f32 %v2308, %v2766
    %v3082 = vadd.f32 %v2309, %v2895
    %v3083 = vadd.f32 %v2310, %v2511
    %v3084 = vadd.f32 %v2311, %v2640
    %v3085 = vadd.f32 %v2312, %v2769
    %v3086 = vadd.f32 %v2313, %v2898
    %v3087 = vadd.f32 %v2314, %v2513
    %v3088 = vadd.f32 %v2315, %v2642
    %v3089 = vadd.f32 %v2316, %v2771
    %v3090 = vadd.f32 %v2317, %v2900
    %v3091 = vadd.f32 %v2318, %v2516
    %v3092 = vadd.f32 %v2319, %v2645
    %v3093 = vadd.f32 %v2320, %v2774
    %v3094 = vadd.f32 %v2321, %v2903
    %v3095 = vadd.f32 %v2322, %v2518
    %v3096 = vadd.f32 %v2323, %v2647
    %v3097 = vadd.f32 %v2324, %v2776
    %v3098 = vadd.f32 %v2325, %v2905
    %s3099 = scalar_lea.vmem [#allocation2], 256
    %v3100 = vld [vmem:[%s3099] sm:$0xff]
    %v3101 = vld [vmem:[%s3099 + $0x8] sm:$0xff]
    %v3102 = vld [vmem:[%s3099 + $0x10] sm:$0xff]
    %v3103 = vld [vmem:[%s3099 + $0x18] sm:$0xff]
    %v3104 = vld [vmem:[%s3099 + $0x20] sm:$0xff]
    %v3105 = vld [vmem:[%s3099 + $0x28] sm:$0xff]
    %v3106 = vld [vmem:[%s3099 + $0x30] sm:$0x33]
    %v3107 = vld [vmem:[%s3099 + $0x38] sm:$0x33]
    %v3110 = vunpack.c.l.b16 %v204
    %v3111 = vunpack.c.l.b16 %v205
    %v3112 = vpack.c.b16 %v3111, %v3110
    %v3121 = vunpack.c.l.b16 %v3100
    %v3122 = vunpack.c.h.b16 %v3100
    %v3123 = vunpack.c.l.b16 %v3101
    %v3124 = vunpack.c.h.b16 %v3101
    %v3125 = vunpack.c.l.b16 %v3102
    %v3126 = vunpack.c.h.b16 %v3102
    %v3127 = vunpack.c.l.b16 %v3103
    %v3128 = vunpack.c.h.b16 %v3103
    %v3129 = vunpack.c.l.b16 %v3104
    %v3130 = vunpack.c.h.b16 %v3104
    %v3131 = vunpack.c.l.b16 %v3105
    %v3132 = vunpack.c.h.b16 %v3105
    %v3133 = vunpack.c.l.b16 %v3106
    %v3134 = vunpack.c.h.b16 %v3106
    %v3135 = vunpack.c.l.b16 %v3107
    %v3136 = vunpack.c.h.b16 %v3107
    %v3137 = vpack.c.b16 %v3125, %v3121
    %v3138 = vpack.c.b16 %v3126, %v3122
    %v3139 = vpack.c.b16 %v3127, %v3123
    %v3140 = vpack.c.b16 %v3128, %v3124
    %v3141 = vpack.c.b16 %v3133, %v3129
    %v3142 = vpack.c.b16 %v3134, %v3130
    %v3143 = vpack.c.b16 %v3135, %v3131
    %v3144 = vpack.c.b16 %v3136, %v3132
    %v3150 = vsel %vm379, %v3112, 0
    %v3153 = vsel %vm452, %v3141, 0
    %v3156 = vsel %vm452, %v3142, 0
    %v3159 = vsel %vm452, %v3143, 0
    %v3162 = vsel %vm452, %v3144, 0
    %3164 = vmatpush.bf16.msra.mxu0 0
    %3165 = vmatpush.bf16.msra.mxu0 0
    %3166 = vmatpush.bf16.msra.mxu0 0
    %3167 = vmatpush.bf16.msra.mxu0 0
    %3168 = vmatpush.bf16.msra.mxu0 0
    %3169 = vmatpush.bf16.msra.mxu0 0
    %3170 = vmatpush.bf16.msra.mxu0 %v3153
    %3171 = vmatpush.bf16.msra.mxu0 %v3137
    %3172 = vmatmul.bf16.gmra.mxu0 %v390
    %v3173 = vpop.f32.mrf.mxu0
    %v3174 = vadd.f32 0.0, %v3173
    %v3175 = vpop.f32.mrf.mxu0
    %v3176 = vadd.f32 0.0, %v3175
    %3177 = vmatmul.bf16.gmra.mxu0 %v393
    %v3178 = vpop.f32.mrf.mxu0
    %v3179 = vadd.f32 0.0, %v3178
    %v3180 = vpop.f32.mrf.mxu0
    %v3181 = vadd.f32 0.0, %v3180
    %3182 = vmatmul.bf16.gmra.mxu0 %v396
    %v3183 = vpop.f32.mrf.mxu0
    %v3184 = vadd.f32 0.0, %v3183
    %v3185 = vpop.f32.mrf.mxu0
    %v3186 = vadd.f32 0.0, %v3185
    %3187 = vmatmul.bf16.gmra.mxu0 %v399
    %v3188 = vpop.f32.mrf.mxu0
    %v3189 = vadd.f32 0.0, %v3188
    %v3190 = vpop.f32.mrf.mxu0
    %v3191 = vadd.f32 0.0, %v3190
    %3192 = vmatmul.bf16.gmra.mxu0 %v402
    %v3193 = vpop.f32.mrf.mxu0
    %v3194 = vadd.f32 0.0, %v3193
    %v3195 = vpop.f32.mrf.mxu0
    %v3196 = vadd.f32 0.0, %v3195
    %3197 = vmatmul.bf16.gmra.mxu0 %v405
    %v3198 = vpop.f32.mrf.mxu0
    %v3199 = vadd.f32 0.0, %v3198
    %v3200 = vpop.f32.mrf.mxu0
    %v3201 = vadd.f32 0.0, %v3200
    %3202 = vmatmul.bf16.gmra.mxu0 %v408
    %v3203 = vpop.f32.mrf.mxu0
    %v3204 = vadd.f32 0.0, %v3203
    %v3205 = vpop.f32.mrf.mxu0
    %v3206 = vadd.f32 0.0, %v3205
    %3207 = vmatmul.bf16.gmra.mxu0 %v411
    %v3208 = vpop.f32.mrf.mxu0
    %v3209 = vadd.f32 0.0, %v3208
    %v3210 = vpop.f32.mrf.mxu0
    %v3211 = vadd.f32 0.0, %v3210
    %3212 = vmatmul.bf16.gmra.mxu0 %v414
    %v3213 = vpop.f32.mrf.mxu0
    %v3214 = vadd.f32 0.0, %v3213
    %v3215 = vpop.f32.mrf.mxu0
    %v3216 = vadd.f32 0.0, %v3215
    %3217 = vmatmul.bf16.gmra.mxu0 %v417
    %v3218 = vpop.f32.mrf.mxu0
    %v3219 = vadd.f32 0.0, %v3218
    %v3220 = vpop.f32.mrf.mxu0
    %v3221 = vadd.f32 0.0, %v3220
    %3222 = vmatmul.bf16.gmra.mxu0 %v420
    %v3223 = vpop.f32.mrf.mxu0
    %v3224 = vadd.f32 0.0, %v3223
    %v3225 = vpop.f32.mrf.mxu0
    %v3226 = vadd.f32 0.0, %v3225
    %3227 = vmatmul.bf16.gmra.mxu0 %v423
    %v3228 = vpop.f32.mrf.mxu0
    %v3229 = vadd.f32 0.0, %v3228
    %v3230 = vpop.f32.mrf.mxu0
    %v3231 = vadd.f32 0.0, %v3230
    %3232 = vmatmul.bf16.gmra.mxu0 %v426
    %v3233 = vpop.f32.mrf.mxu0
    %v3234 = vadd.f32 0.0, %v3233
    %v3235 = vpop.f32.mrf.mxu0
    %v3236 = vadd.f32 0.0, %v3235
    %3237 = vmatmul.bf16.gmra.mxu0 %v429
    %v3238 = vpop.f32.mrf.mxu0
    %v3239 = vadd.f32 0.0, %v3238
    %v3240 = vpop.f32.mrf.mxu0
    %v3241 = vadd.f32 0.0, %v3240
    %3242 = vmatmul.bf16.gmra.mxu0 %v432
    %v3243 = vpop.f32.mrf.mxu0
    %v3244 = vadd.f32 0.0, %v3243
    %v3245 = vpop.f32.mrf.mxu0
    %v3246 = vadd.f32 0.0, %v3245
    %3247 = vmatmul.bf16.gmra.mxu0 %v435
    %v3248 = vpop.f32.mrf.mxu0
    %v3249 = vadd.f32 0.0, %v3248
    %v3250 = vpop.f32.mrf.mxu0
    %v3251 = vadd.f32 0.0, %v3250
    %3252 = vmatmul.bf16.gmra.mxu0 %v438
    %v3253 = vpop.f32.mrf.mxu0
    %v3254 = vadd.f32 0.0, %v3253
    %v3255 = vpop.f32.mrf.mxu0
    %v3256 = vadd.f32 0.0, %v3255
    %3257 = vmatmul.bf16.gmra.mxu0 %v441
    %v3258 = vpop.f32.mrf.mxu0
    %v3259 = vadd.f32 0.0, %v3258
    %v3260 = vpop.f32.mrf.mxu0
    %v3261 = vadd.f32 0.0, %v3260
    %3262 = vmatmul.bf16.gmra.mxu0 %v444
    %v3263 = vpop.f32.mrf.mxu0
    %v3264 = vadd.f32 0.0, %v3263
    %v3265 = vpop.f32.mrf.mxu0
    %v3266 = vadd.f32 0.0, %v3265
    %3267 = vmatmul.bf16.gmra.mxu0 %v447
    %v3268 = vpop.f32.mrf.mxu0
    %v3269 = vadd.f32 0.0, %v3268
    %v3270 = vpop.f32.mrf.mxu0
    %v3271 = vadd.f32 0.0, %v3270
    %3272 = vmatmul.bf16.gmra.mxu0 %v450
    %v3273 = vpop.f32.mrf.mxu0
    %v3274 = vadd.f32 0.0, %v3273
    %v3275 = vpop.f32.mrf.mxu0
    %v3276 = vadd.f32 0.0, %v3275
    %3277 = vmatmul.bf16.gmra.mxu0 %v1604
    %v3278 = vpop.f32.mrf.mxu0
    %v3279 = vadd.f32 0.0, %v3278
    %v3280 = vpop.f32.mrf.mxu0
    %v3281 = vadd.f32 0.0, %v3280
    %3282 = vmatmul.bf16.gmra.mxu0 %v2377
    %v3283 = vpop.f32.mrf.mxu0
    %v3284 = vadd.f32 0.0, %v3283
    %v3285 = vpop.f32.mrf.mxu0
    %v3286 = vadd.f32 0.0, %v3285
    %3287 = vmatmul.bf16.gmra.mxu0 %v3150
    %v3288 = vpop.f32.mrf.mxu0
    %v3289 = vadd.f32 0.0, %v3288
    %v3290 = vpop.f32.mrf.mxu0
    %v3291 = vadd.f32 0.0, %v3290
    %3292 = vdwg.mxu0
    %3293 = vmatpush.bf16.msra.mxu0 0
    %3294 = vmatpush.bf16.msra.mxu0 0
    %3295 = vmatpush.bf16.msra.mxu0 0
    %3296 = vmatpush.bf16.msra.mxu0 0
    %3297 = vmatpush.bf16.msra.mxu0 0
    %3298 = vmatpush.bf16.msra.mxu0 0
    %3299 = vmatpush.bf16.msra.mxu0 %v3156
    %3300 = vmatpush.bf16.msra.mxu0 %v3138
    %3301 = vmatmul.bf16.gmra.mxu0 %v390
    %v3302 = vpop.f32.mrf.mxu0
    %v3303 = vadd.f32 0.0, %v3302
    %v3304 = vpop.f32.mrf.mxu0
    %v3305 = vadd.f32 0.0, %v3304
    %3306 = vmatmul.bf16.gmra.mxu0 %v393
    %v3307 = vpop.f32.mrf.mxu0
    %v3308 = vadd.f32 0.0, %v3307
    %v3309 = vpop.f32.mrf.mxu0
    %v3310 = vadd.f32 0.0, %v3309
    %3311 = vmatmul.bf16.gmra.mxu0 %v396
    %v3312 = vpop.f32.mrf.mxu0
    %v3313 = vadd.f32 0.0, %v3312
    %v3314 = vpop.f32.mrf.mxu0
    %v3315 = vadd.f32 0.0, %v3314
    %3316 = vmatmul.bf16.gmra.mxu0 %v399
    %v3317 = vpop.f32.mrf.mxu0
    %v3318 = vadd.f32 0.0, %v3317
    %v3319 = vpop.f32.mrf.mxu0
    %v3320 = vadd.f32 0.0, %v3319
    %3321 = vmatmul.bf16.gmra.mxu0 %v402
    %v3322 = vpop.f32.mrf.mxu0
    %v3323 = vadd.f32 0.0, %v3322
    %v3324 = vpop.f32.mrf.mxu0
    %v3325 = vadd.f32 0.0, %v3324
    %3326 = vmatmul.bf16.gmra.mxu0 %v405
    %v3327 = vpop.f32.mrf.mxu0
    %v3328 = vadd.f32 0.0, %v3327
    %v3329 = vpop.f32.mrf.mxu0
    %v3330 = vadd.f32 0.0, %v3329
    %3331 = vmatmul.bf16.gmra.mxu0 %v408
    %v3332 = vpop.f32.mrf.mxu0
    %v3333 = vadd.f32 0.0, %v3332
    %v3334 = vpop.f32.mrf.mxu0
    %v3335 = vadd.f32 0.0, %v3334
    %3336 = vmatmul.bf16.gmra.mxu0 %v411
    %v3337 = vpop.f32.mrf.mxu0
    %v3338 = vadd.f32 0.0, %v3337
    %v3339 = vpop.f32.mrf.mxu0
    %v3340 = vadd.f32 0.0, %v3339
    %3341 = vmatmul.bf16.gmra.mxu0 %v414
    %v3342 = vpop.f32.mrf.mxu0
    %v3343 = vadd.f32 0.0, %v3342
    %v3344 = vpop.f32.mrf.mxu0
    %v3345 = vadd.f32 0.0, %v3344
    %3346 = vmatmul.bf16.gmra.mxu0 %v417
    %v3347 = vpop.f32.mrf.mxu0
    %v3348 = vadd.f32 0.0, %v3347
    %v3349 = vpop.f32.mrf.mxu0
    %v3350 = vadd.f32 0.0, %v3349
    %3351 = vmatmul.bf16.gmra.mxu0 %v420
    %v3352 = vpop.f32.mrf.mxu0
    %v3353 = vadd.f32 0.0, %v3352
    %v3354 = vpop.f32.mrf.mxu0
    %v3355 = vadd.f32 0.0, %v3354
    %3356 = vmatmul.bf16.gmra.mxu0 %v423
    %v3357 = vpop.f32.mrf.mxu0
    %v3358 = vadd.f32 0.0, %v3357
    %v3359 = vpop.f32.mrf.mxu0
    %v3360 = vadd.f32 0.0, %v3359
    %3361 = vmatmul.bf16.gmra.mxu0 %v426
    %v3362 = vpop.f32.mrf.mxu0
    %v3363 = vadd.f32 0.0, %v3362
    %v3364 = vpop.f32.mrf.mxu0
    %v3365 = vadd.f32 0.0, %v3364
    %3366 = vmatmul.bf16.gmra.mxu0 %v429
    %v3367 = vpop.f32.mrf.mxu0
    %v3368 = vadd.f32 0.0, %v3367
    %v3369 = vpop.f32.mrf.mxu0
    %v3370 = vadd.f32 0.0, %v3369
    %3371 = vmatmul.bf16.gmra.mxu0 %v432
    %v3372 = vpop.f32.mrf.mxu0
    %v3373 = vadd.f32 0.0, %v3372
    %v3374 = vpop.f32.mrf.mxu0
    %v3375 = vadd.f32 0.0, %v3374
    %3376 = vmatmul.bf16.gmra.mxu0 %v435
    %v3377 = vpop.f32.mrf.mxu0
    %v3378 = vadd.f32 0.0, %v3377
    %v3379 = vpop.f32.mrf.mxu0
    %v3380 = vadd.f32 0.0, %v3379
    %3381 = vmatmul.bf16.gmra.mxu0 %v438
    %v3382 = vpop.f32.mrf.mxu0
    %v3383 = vadd.f32 0.0, %v3382
    %v3384 = vpop.f32.mrf.mxu0
    %v3385 = vadd.f32 0.0, %v3384
    %3386 = vmatmul.bf16.gmra.mxu0 %v441
    %v3387 = vpop.f32.mrf.mxu0
    %v3388 = vadd.f32 0.0, %v3387
    %v3389 = vpop.f32.mrf.mxu0
    %v3390 = vadd.f32 0.0, %v3389
    %3391 = vmatmul.bf16.gmra.mxu0 %v444
    %v3392 = vpop.f32.mrf.mxu0
    %v3393 = vadd.f32 0.0, %v3392
    %v3394 = vpop.f32.mrf.mxu0
    %v3395 = vadd.f32 0.0, %v3394
    %3396 = vmatmul.bf16.gmra.mxu0 %v447
    %v3397 = vpop.f32.mrf.mxu0
    %v3398 = vadd.f32 0.0, %v3397
    %v3399 = vpop.f32.mrf.mxu0
    %v3400 = vadd.f32 0.0, %v3399
    %3401 = vmatmul.bf16.gmra.mxu0 %v450
    %v3402 = vpop.f32.mrf.mxu0
    %v3403 = vadd.f32 0.0, %v3402
    %v3404 = vpop.f32.mrf.mxu0
    %v3405 = vadd.f32 0.0, %v3404
    %3406 = vmatmul.bf16.gmra.mxu0 %v1604
    %v3407 = vpop.f32.mrf.mxu0
    %v3408 = vadd.f32 0.0, %v3407
    %v3409 = vpop.f32.mrf.mxu0
    %v3410 = vadd.f32 0.0, %v3409
    %3411 = vmatmul.bf16.gmra.mxu0 %v2377
    %v3412 = vpop.f32.mrf.mxu0
    %v3413 = vadd.f32 0.0, %v3412
    %v3414 = vpop.f32.mrf.mxu0
    %v3415 = vadd.f32 0.0, %v3414
    %3416 = vmatmul.bf16.gmra.mxu0 %v3150
    %v3417 = vpop.f32.mrf.mxu0
    %v3418 = vadd.f32 0.0, %v3417
    %v3419 = vpop.f32.mrf.mxu0
    %v3420 = vadd.f32 0.0, %v3419
    %3421 = vdwg.mxu0
    %3422 = vmatpush.bf16.msra.mxu0 0
    %3423 = vmatpush.bf16.msra.mxu0 0
    %3424 = vmatpush.bf16.msra.mxu0 0
    %3425 = vmatpush.bf16.msra.mxu0 0
    %3426 = vmatpush.bf16.msra.mxu0 0
    %3427 = vmatpush.bf16.msra.mxu0 0
    %3428 = vmatpush.bf16.msra.mxu0 %v3159
    %3429 = vmatpush.bf16.msra.mxu0 %v3139
    %3430 = vmatmul.bf16.gmra.mxu0 %v390
    %v3431 = vpop.f32.mrf.mxu0
    %v3432 = vadd.f32 0.0, %v3431
    %v3433 = vpop.f32.mrf.mxu0
    %v3434 = vadd.f32 0.0, %v3433
    %3435 = vmatmul.bf16.gmra.mxu0 %v393
    %v3436 = vpop.f32.mrf.mxu0
    %v3437 = vadd.f32 0.0, %v3436
    %v3438 = vpop.f32.mrf.mxu0
    %v3439 = vadd.f32 0.0, %v3438
    %3440 = vmatmul.bf16.gmra.mxu0 %v396
    %v3441 = vpop.f32.mrf.mxu0
    %v3442 = vadd.f32 0.0, %v3441
    %v3443 = vpop.f32.mrf.mxu0
    %v3444 = vadd.f32 0.0, %v3443
    %3445 = vmatmul.bf16.gmra.mxu0 %v399
    %v3446 = vpop.f32.mrf.mxu0
    %v3447 = vadd.f32 0.0, %v3446
    %v3448 = vpop.f32.mrf.mxu0
    %v3449 = vadd.f32 0.0, %v3448
    %3450 = vmatmul.bf16.gmra.mxu0 %v402
    %v3451 = vpop.f32.mrf.mxu0
    %v3452 = vadd.f32 0.0, %v3451
    %v3453 = vpop.f32.mrf.mxu0
    %v3454 = vadd.f32 0.0, %v3453
    %3455 = vmatmul.bf16.gmra.mxu0 %v405
    %v3456 = vpop.f32.mrf.mxu0
    %v3457 = vadd.f32 0.0, %v3456
    %v3458 = vpop.f32.mrf.mxu0
    %v3459 = vadd.f32 0.0, %v3458
    %3460 = vmatmul.bf16.gmra.mxu0 %v408
    %v3461 = vpop.f32.mrf.mxu0
    %v3462 = vadd.f32 0.0, %v3461
    %v3463 = vpop.f32.mrf.mxu0
    %v3464 = vadd.f32 0.0, %v3463
    %3465 = vmatmul.bf16.gmra.mxu0 %v411
    %v3466 = vpop.f32.mrf.mxu0
    %v3467 = vadd.f32 0.0, %v3466
    %v3468 = vpop.f32.mrf.mxu0
    %v3469 = vadd.f32 0.0, %v3468
    %3470 = vmatmul.bf16.gmra.mxu0 %v414
    %v3471 = vpop.f32.mrf.mxu0
    %v3472 = vadd.f32 0.0, %v3471
    %v3473 = vpop.f32.mrf.mxu0
    %v3474 = vadd.f32 0.0, %v3473
    %3475 = vmatmul.bf16.gmra.mxu0 %v417
    %v3476 = vpop.f32.mrf.mxu0
    %v3477 = vadd.f32 0.0, %v3476
    %v3478 = vpop.f32.mrf.mxu0
    %v3479 = vadd.f32 0.0, %v3478
    %3480 = vmatmul.bf16.gmra.mxu0 %v420
    %v3481 = vpop.f32.mrf.mxu0
    %v3482 = vadd.f32 0.0, %v3481
    %v3483 = vpop.f32.mrf.mxu0
    %v3484 = vadd.f32 0.0, %v3483
    %3485 = vmatmul.bf16.gmra.mxu0 %v423
    %v3486 = vpop.f32.mrf.mxu0
    %v3487 = vadd.f32 0.0, %v3486
    %v3488 = vpop.f32.mrf.mxu0
    %v3489 = vadd.f32 0.0, %v3488
    %3490 = vmatmul.bf16.gmra.mxu0 %v426
    %v3491 = vpop.f32.mrf.mxu0
    %v3492 = vadd.f32 0.0, %v3491
    %v3493 = vpop.f32.mrf.mxu0
    %v3494 = vadd.f32 0.0, %v3493
    %3495 = vmatmul.bf16.gmra.mxu0 %v429
    %v3496 = vpop.f32.mrf.mxu0
    %v3497 = vadd.f32 0.0, %v3496
    %v3498 = vpop.f32.mrf.mxu0
    %v3499 = vadd.f32 0.0, %v3498
    %3500 = vmatmul.bf16.gmra.mxu0 %v432
    %v3501 = vpop.f32.mrf.mxu0
    %v3502 = vadd.f32 0.0, %v3501
    %v3503 = vpop.f32.mrf.mxu0
    %v3504 = vadd.f32 0.0, %v3503
    %3505 = vmatmul.bf16.gmra.mxu0 %v435
    %v3506 = vpop.f32.mrf.mxu0
    %v3507 = vadd.f32 0.0, %v3506
    %v3508 = vpop.f32.mrf.mxu0
    %v3509 = vadd.f32 0.0, %v3508
    %3510 = vmatmul.bf16.gmra.mxu0 %v438
    %v3511 = vpop.f32.mrf.mxu0
    %v3512 = vadd.f32 0.0, %v3511
    %v3513 = vpop.f32.mrf.mxu0
    %v3514 = vadd.f32 0.0, %v3513
    %3515 = vmatmul.bf16.gmra.mxu0 %v441
    %v3516 = vpop.f32.mrf.mxu0
    %v3517 = vadd.f32 0.0, %v3516
    %v3518 = vpop.f32.mrf.mxu0
    %v3519 = vadd.f32 0.0, %v3518
    %3520 = vmatmul.bf16.gmra.mxu0 %v444
    %v3521 = vpop.f32.mrf.mxu0
    %v3522 = vadd.f32 0.0, %v3521
    %v3523 = vpop.f32.mrf.mxu0
    %v3524 = vadd.f32 0.0, %v3523
    %3525 = vmatmul.bf16.gmra.mxu0 %v447
    %v3526 = vpop.f32.mrf.mxu0
    %v3527 = vadd.f32 0.0, %v3526
    %v3528 = vpop.f32.mrf.mxu0
    %v3529 = vadd.f32 0.0, %v3528
    %3530 = vmatmul.bf16.gmra.mxu0 %v450
    %v3531 = vpop.f32.mrf.mxu0
    %v3532 = vadd.f32 0.0, %v3531
    %v3533 = vpop.f32.mrf.mxu0
    %v3534 = vadd.f32 0.0, %v3533
    %3535 = vmatmul.bf16.gmra.mxu0 %v1604
    %v3536 = vpop.f32.mrf.mxu0
    %v3537 = vadd.f32 0.0, %v3536
    %v3538 = vpop.f32.mrf.mxu0
    %v3539 = vadd.f32 0.0, %v3538
    %3540 = vmatmul.bf16.gmra.mxu0 %v2377
    %v3541 = vpop.f32.mrf.mxu0
    %v3542 = vadd.f32 0.0, %v3541
    %v3543 = vpop.f32.mrf.mxu0
    %v3544 = vadd.f32 0.0, %v3543
    %3545 = vmatmul.bf16.gmra.mxu0 %v3150
    %v3546 = vpop.f32.mrf.mxu0
    %v3547 = vadd.f32 0.0, %v3546
    %v3548 = vpop.f32.mrf.mxu0
    %v3549 = vadd.f32 0.0, %v3548
    %3550 = vdwg.mxu0
    %3551 = vmatpush.bf16.msra.mxu0 0
    %3552 = vmatpush.bf16.msra.mxu0 0
    %3553 = vmatpush.bf16.msra.mxu0 0
    %3554 = vmatpush.bf16.msra.mxu0 0
    %3555 = vmatpush.bf16.msra.mxu0 0
    %3556 = vmatpush.bf16.msra.mxu0 0
    %3557 = vmatpush.bf16.msra.mxu0 %v3162
    %3558 = vmatpush.bf16.msra.mxu0 %v3140
    %3559 = vmatmul.bf16.gmra.mxu0 %v390
    %v3560 = vpop.f32.mrf.mxu0
    %v3561 = vadd.f32 0.0, %v3560
    %v3562 = vpop.f32.mrf.mxu0
    %v3563 = vadd.f32 0.0, %v3562
    %3564 = vmatmul.bf16.gmra.mxu0 %v393
    %v3565 = vpop.f32.mrf.mxu0
    %v3566 = vadd.f32 0.0, %v3565
    %v3567 = vpop.f32.mrf.mxu0
    %v3568 = vadd.f32 0.0, %v3567
    %3569 = vmatmul.bf16.gmra.mxu0 %v396
    %v3570 = vpop.f32.mrf.mxu0
    %v3571 = vadd.f32 0.0, %v3570
    %v3572 = vpop.f32.mrf.mxu0
    %v3573 = vadd.f32 0.0, %v3572
    %3574 = vmatmul.bf16.gmra.mxu0 %v399
    %v3575 = vpop.f32.mrf.mxu0
    %v3576 = vadd.f32 0.0, %v3575
    %v3577 = vpop.f32.mrf.mxu0
    %v3578 = vadd.f32 0.0, %v3577
    %3579 = vmatmul.bf16.gmra.mxu0 %v402
    %v3580 = vpop.f32.mrf.mxu0
    %v3581 = vadd.f32 0.0, %v3580
    %v3582 = vpop.f32.mrf.mxu0
    %v3583 = vadd.f32 0.0, %v3582
    %3584 = vmatmul.bf16.gmra.mxu0 %v405
    %v3585 = vpop.f32.mrf.mxu0
    %v3586 = vadd.f32 0.0, %v3585
    %v3587 = vpop.f32.mrf.mxu0
    %v3588 = vadd.f32 0.0, %v3587
    %3589 = vmatmul.bf16.gmra.mxu0 %v408
    %v3590 = vpop.f32.mrf.mxu0
    %v3591 = vadd.f32 0.0, %v3590
    %v3592 = vpop.f32.mrf.mxu0
    %v3593 = vadd.f32 0.0, %v3592
    %3594 = vmatmul.bf16.gmra.mxu0 %v411
    %v3595 = vpop.f32.mrf.mxu0
    %v3596 = vadd.f32 0.0, %v3595
    %v3597 = vpop.f32.mrf.mxu0
    %v3598 = vadd.f32 0.0, %v3597
    %3599 = vmatmul.bf16.gmra.mxu0 %v414
    %v3600 = vpop.f32.mrf.mxu0
    %v3601 = vadd.f32 0.0, %v3600
    %v3602 = vpop.f32.mrf.mxu0
    %v3603 = vadd.f32 0.0, %v3602
    %3604 = vmatmul.bf16.gmra.mxu0 %v417
    %v3605 = vpop.f32.mrf.mxu0
    %v3606 = vadd.f32 0.0, %v3605
    %v3607 = vpop.f32.mrf.mxu0
    %v3608 = vadd.f32 0.0, %v3607
    %3609 = vmatmul.bf16.gmra.mxu0 %v420
    %v3610 = vpop.f32.mrf.mxu0
    %v3611 = vadd.f32 0.0, %v3610
    %v3612 = vpop.f32.mrf.mxu0
    %v3613 = vadd.f32 0.0, %v3612
    %3614 = vmatmul.bf16.gmra.mxu0 %v423
    %v3615 = vpop.f32.mrf.mxu0
    %v3616 = vadd.f32 0.0, %v3615
    %v3617 = vpop.f32.mrf.mxu0
    %v3618 = vadd.f32 0.0, %v3617
    %3619 = vmatmul.bf16.gmra.mxu0 %v426
    %v3620 = vpop.f32.mrf.mxu0
    %v3621 = vadd.f32 0.0, %v3620
    %v3622 = vpop.f32.mrf.mxu0
    %v3623 = vadd.f32 0.0, %v3622
    %3624 = vmatmul.bf16.gmra.mxu0 %v429
    %v3625 = vpop.f32.mrf.mxu0
    %v3626 = vadd.f32 0.0, %v3625
    %v3627 = vpop.f32.mrf.mxu0
    %v3628 = vadd.f32 0.0, %v3627
    %3629 = vmatmul.bf16.gmra.mxu0 %v432
    %v3630 = vpop.f32.mrf.mxu0
    %v3631 = vadd.f32 0.0, %v3630
    %v3632 = vpop.f32.mrf.mxu0
    %v3633 = vadd.f32 0.0, %v3632
    %3634 = vmatmul.bf16.gmra.mxu0 %v435
    %v3635 = vpop.f32.mrf.mxu0
    %v3636 = vadd.f32 0.0, %v3635
    %v3637 = vpop.f32.mrf.mxu0
    %v3638 = vadd.f32 0.0, %v3637
    %3639 = vmatmul.bf16.gmra.mxu0 %v438
    %v3640 = vpop.f32.mrf.mxu0
    %v3641 = vadd.f32 0.0, %v3640
    %v3642 = vpop.f32.mrf.mxu0
    %v3643 = vadd.f32 0.0, %v3642
    %3644 = vmatmul.bf16.gmra.mxu0 %v441
    %v3645 = vpop.f32.mrf.mxu0
    %v3646 = vadd.f32 0.0, %v3645
    %v3647 = vpop.f32.mrf.mxu0
    %v3648 = vadd.f32 0.0, %v3647
    %3649 = vmatmul.bf16.gmra.mxu0 %v444
    %v3650 = vpop.f32.mrf.mxu0
    %v3651 = vadd.f32 0.0, %v3650
    %v3652 = vpop.f32.mrf.mxu0
    %v3653 = vadd.f32 0.0, %v3652
    %3654 = vmatmul.bf16.gmra.mxu0 %v447
    %v3655 = vpop.f32.mrf.mxu0
    %v3656 = vadd.f32 0.0, %v3655
    %v3657 = vpop.f32.mrf.mxu0
    %v3658 = vadd.f32 0.0, %v3657
    %3659 = vmatmul.bf16.gmra.mxu0 %v450
    %v3660 = vpop.f32.mrf.mxu0
    %v3661 = vadd.f32 0.0, %v3660
    %v3662 = vpop.f32.mrf.mxu0
    %v3663 = vadd.f32 0.0, %v3662
    %3664 = vmatmul.bf16.gmra.mxu0 %v1604
    %v3665 = vpop.f32.mrf.mxu0
    %v3666 = vadd.f32 0.0, %v3665
    %v3667 = vpop.f32.mrf.mxu0
    %v3668 = vadd.f32 0.0, %v3667
    %3669 = vmatmul.bf16.gmra.mxu0 %v2377
    %v3670 = vpop.f32.mrf.mxu0
    %v3671 = vadd.f32 0.0, %v3670
    %v3672 = vpop.f32.mrf.mxu0
    %v3673 = vadd.f32 0.0, %v3672
    %3674 = vmatmul.bf16.gmra.mxu0 %v3150
    %v3675 = vpop.f32.mrf.mxu0
    %v3676 = vadd.f32 0.0, %v3675
    %v3677 = vpop.f32.mrf.mxu0
    %v3678 = vadd.f32 0.0, %v3677
    %3679 = vdwg.mxu0
    %v3680 = vadd.f32 %v2907, %v3174
    %v3681 = vadd.f32 %v2908, %v3303
    %v3682 = vadd.f32 %v2909, %v3432
    %v3683 = vadd.f32 %v2910, %v3561
    %v3684 = vadd.f32 %v2911, %v3176
    %v3685 = vadd.f32 %v2912, %v3305
    %v3686 = vadd.f32 %v2913, %v3434
    %v3687 = vadd.f32 %v2914, %v3563
    %v3688 = vadd.f32 %v2915, %v3179
    %v3689 = vadd.f32 %v2916, %v3308
    %v3690 = vadd.f32 %v2917, %v3437
    %v3691 = vadd.f32 %v2918, %v3566
    %v3692 = vadd.f32 %v2919, %v3181
    %v3693 = vadd.f32 %v2920, %v3310
    %v3694 = vadd.f32 %v2921, %v3439
    %v3695 = vadd.f32 %v2922, %v3568
    %v3696 = vadd.f32 %v2923, %v3184
    %v3697 = vadd.f32 %v2924, %v3313
    %v3698 = vadd.f32 %v2925, %v3442
    %v3699 = vadd.f32 %v2926, %v3571
    %v3700 = vadd.f32 %v2927, %v3186
    %v3701 = vadd.f32 %v2928, %v3315
    %v3702 = vadd.f32 %v2929, %v3444
    %v3703 = vadd.f32 %v2930, %v3573
    %v3704 = vadd.f32 %v2931, %v3189
    %v3705 = vadd.f32 %v2932, %v3318
    %v3706 = vadd.f32 %v2933, %v3447
    %v3707 = vadd.f32 %v2934, %v3576
    %v3708 = vadd.f32 %v2935, %v3191
    %v3709 = vadd.f32 %v2936, %v3320
    %v3710 = vadd.f32 %v2937, %v3449
    %v3711 = vadd.f32 %v2938, %v3578
    %v3712 = vadd.f32 %v2939, %v3194
    %v3713 = vadd.f32 %v2940, %v3323
    %v3714 = vadd.f32 %v2941, %v3452
    %v3715 = vadd.f32 %v2942, %v3581
    %v3716 = vadd.f32 %v2943, %v3196
    %v3717 = vadd.f32 %v2944, %v3325
    %v3718 = vadd.f32 %v2945, %v3454
    %v3719 = vadd.f32 %v2946, %v3583
    %v3720 = vadd.f32 %v2947, %v3199
    %v3721 = vadd.f32 %v2948, %v3328
    %v3722 = vadd.f32 %v2949, %v3457
    %v3723 = vadd.f32 %v2950, %v3586
    %v3724 = vadd.f32 %v2951, %v3201
    %v3725 = vadd.f32 %v2952, %v3330
    %v3726 = vadd.f32 %v2953, %v3459
    %v3727 = vadd.f32 %v2954, %v3588
    %v3728 = vadd.f32 %v2955, %v3204
    %v3729 = vadd.f32 %v2956, %v3333
    %v3730 = vadd.f32 %v2957, %v3462
    %v3731 = vadd.f32 %v2958, %v3591
    %v3732 = vadd.f32 %v2959, %v3206
    %v3733 = vadd.f32 %v2960, %v3335
    %v3734 = vadd.f32 %v2961, %v3464
    %v3735 = vadd.f32 %v2962, %v3593
    %v3736 = vadd.f32 %v2963, %v3209
    %v3737 = vadd.f32 %v2964, %v3338
    %v3738 = vadd.f32 %v2965, %v3467
    %v3739 = vadd.f32 %v2966, %v3596
    %v3740 = vadd.f32 %v2967, %v3211
    %v3741 = vadd.f32 %v2968, %v3340
    %v3742 = vadd.f32 %v2969, %v3469
    %v3743 = vadd.f32 %v2970, %v3598
    %v3744 = vadd.f32 %v2971, %v3214
    %v3745 = vadd.f32 %v2972, %v3343
    %v3746 = vadd.f32 %v2973, %v3472
    %v3747 = vadd.f32 %v2974, %v3601
    %v3748 = vadd.f32 %v2975, %v3216
    %v3749 = vadd.f32 %v2976, %v3345
    %v3750 = vadd.f32 %v2977, %v3474
    %v3751 = vadd.f32 %v2978, %v3603
    %v3752 = vadd.f32 %v2979, %v3219
    %v3753 = vadd.f32 %v2980, %v3348
    %v3754 = vadd.f32 %v2981, %v3477
    %v3755 = vadd.f32 %v2982, %v3606
    %v3756 = vadd.f32 %v2983, %v3221
    %v3757 = vadd.f32 %v2984, %v3350
    %v3758 = vadd.f32 %v2985, %v3479
    %v3759 = vadd.f32 %v2986, %v3608
    %v3760 = vadd.f32 %v2987, %v3224
    %v3761 = vadd.f32 %v2988, %v3353
    %v3762 = vadd.f32 %v2989, %v3482
    %v3763 = vadd.f32 %v2990, %v3611
    %v3764 = vadd.f32 %v2991, %v3226
    %v3765 = vadd.f32 %v2992, %v3355
    %v3766 = vadd.f32 %v2993, %v3484
    %v3767 = vadd.f32 %v2994, %v3613
    %v3768 = vadd.f32 %v2995, %v3229
    %v3769 = vadd.f32 %v2996, %v3358
    %v3770 = vadd.f32 %v2997, %v3487
    %v3771 = vadd.f32 %v2998, %v3616
    %v3772 = vadd.f32 %v2999, %v3231
    %v3773 = vadd.f32 %v3000, %v3360
    %v3774 = vadd.f32 %v3001, %v3489
    %v3775 = vadd.f32 %v3002, %v3618
    %v3776 = vadd.f32 %v3003, %v3234
    %v3777 = vadd.f32 %v3004, %v3363
    %v3778 = vadd.f32 %v3005, %v3492
    %v3779 = vadd.f32 %v3006, %v3621
    %v3780 = vadd.f32 %v3007, %v3236
    %v3781 = vadd.f32 %v3008, %v3365
    %v3782 = vadd.f32 %v3009, %v3494
    %v3783 = vadd.f32 %v3010, %v3623
    %v3784 = vadd.f32 %v3011, %v3239
    %v3785 = vadd.f32 %v3012, %v3368
    %v3786 = vadd.f32 %v3013, %v3497
    %v3787 = vadd.f32 %v3014, %v3626
    %v3788 = vadd.f32 %v3015, %v3241
    %v3789 = vadd.f32 %v3016, %v3370
    %v3790 = vadd.f32 %v3017, %v3499
    %v3791 = vadd.f32 %v3018, %v3628
    %v3792 = vadd.f32 %v3019, %v3244
    %v3793 = vadd.f32 %v3020, %v3373
    %v3794 = vadd.f32 %v3021, %v3502
    %v3795 = vadd.f32 %v3022, %v3631
    %v3796 = vadd.f32 %v3023, %v3246
    %v3797 = vadd.f32 %v3024, %v3375
    %v3798 = vadd.f32 %v3025, %v3504
    %v3799 = vadd.f32 %v3026, %v3633
    %v3800 = vadd.f32 %v3027, %v3249
    %v3801 = vadd.f32 %v3028, %v3378
    %v3802 = vadd.f32 %v3029, %v3507
    %v3803 = vadd.f32 %v3030, %v3636
    %v3804 = vadd.f32 %v3031, %v3251
    %v3805 = vadd.f32 %v3032, %v3380
    %v3806 = vadd.f32 %v3033, %v3509
    %v3807 = vadd.f32 %v3034, %v3638
    %v3808 = vadd.f32 %v3035, %v3254
    %v3809 = vadd.f32 %v3036, %v3383
    %v3810 = vadd.f32 %v3037, %v3512
    %v3811 = vadd.f32 %v3038, %v3641
    %v3812 = vadd.f32 %v3039, %v3256
    %v3813 = vadd.f32 %v3040, %v3385
    %v3814 = vadd.f32 %v3041, %v3514
    %v3815 = vadd.f32 %v3042, %v3643
    %v3816 = vadd.f32 %v3043, %v3259
    %v3817 = vadd.f32 %v3044, %v3388
    %v3818 = vadd.f32 %v3045, %v3517
    %v3819 = vadd.f32 %v3046, %v3646
    %v3820 = vadd.f32 %v3047, %v3261
    %v3821 = vadd.f32 %v3048, %v3390
    %v3822 = vadd.f32 %v3049, %v3519
    %v3823 = vadd.f32 %v3050, %v3648
    %v3824 = vadd.f32 %v3051, %v3264
    %v3825 = vadd.f32 %v3052, %v3393
    %v3826 = vadd.f32 %v3053, %v3522
    %v3827 = vadd.f32 %v3054, %v3651
    %v3828 = vadd.f32 %v3055, %v3266
    %v3829 = vadd.f32 %v3056, %v3395
    %v3830 = vadd.f32 %v3057, %v3524
    %v3831 = vadd.f32 %v3058, %v3653
    %v3832 = vadd.f32 %v3059, %v3269
    %v3833 = vadd.f32 %v3060, %v3398
    %v3834 = vadd.f32 %v3061, %v3527
    %v3835 = vadd.f32 %v3062, %v3656
    %v3836 = vadd.f32 %v3063, %v3271
    %v3837 = vadd.f32 %v3064, %v3400
    %v3838 = vadd.f32 %v3065, %v3529
    %v3839 = vadd.f32 %v3066, %v3658
    %v3840 = vadd.f32 %v3067, %v3274
    %v3841 = vadd.f32 %v3068, %v3403
    %v3842 = vadd.f32 %v3069, %v3532
    %v3843 = vadd.f32 %v3070, %v3661
    %v3844 = vadd.f32 %v3071, %v3276
    %v3845 = vadd.f32 %v3072, %v3405
    %v3846 = vadd.f32 %v3073, %v3534
    %v3847 = vadd.f32 %v3074, %v3663
    %v3848 = vadd.f32 %v3075, %v3279
    %v3849 = vadd.f32 %v3076, %v3408
    %v3850 = vadd.f32 %v3077, %v3537
    %v3851 = vadd.f32 %v3078, %v3666
    %v3852 = vadd.f32 %v3079, %v3281
    %v3853 = vadd.f32 %v3080, %v3410
    %v3854 = vadd.f32 %v3081, %v3539
    %v3855 = vadd.f32 %v3082, %v3668
    %v3856 = vadd.f32 %v3083, %v3284
    %v3857 = vadd.f32 %v3084, %v3413
    %v3858 = vadd.f32 %v3085, %v3542
    %v3859 = vadd.f32 %v3086, %v3671
    %v3860 = vadd.f32 %v3087, %v3286
    %v3861 = vadd.f32 %v3088, %v3415
    %v3862 = vadd.f32 %v3089, %v3544
    %v3863 = vadd.f32 %v3090, %v3673
    %v3864 = vadd.f32 %v3091, %v3289
    %v3865 = vadd.f32 %v3092, %v3418
    %v3866 = vadd.f32 %v3093, %v3547
    %v3867 = vadd.f32 %v3094, %v3676
    %v3868 = vadd.f32 %v3095, %v3291
    %v3869 = vadd.f32 %v3096, %v3420
    %v3870 = vadd.f32 %v3097, %v3549
    %v3871 = vadd.f32 %v3098, %v3678
    %v3872 = vmax.f32 %v3680, %v3688
    %v3873 = vmax.f32 %v3681, %v3689
    %v3874 = vmax.f32 %v3682, %v3690
    %v3875 = vmax.f32 %v3683, %v3691
    %v3876 = vmax.f32 %v3684, %v3692
    %v3877 = vmax.f32 %v3685, %v3693
    %v3878 = vmax.f32 %v3686, %v3694
    %v3879 = vmax.f32 %v3687, %v3695
    %v3880 = vmax.f32 %v3696, %v3704
    %v3881 = vmax.f32 %v3697, %v3705
    %v3882 = vmax.f32 %v3698, %v3706
    %v3883 = vmax.f32 %v3699, %v3707
    %v3884 = vmax.f32 %v3700, %v3708
    %v3885 = vmax.f32 %v3701, %v3709
    %v3886 = vmax.f32 %v3702, %v3710
    %v3887 = vmax.f32 %v3703, %v3711
    %v3888 = vmax.f32 %v3712, %v3720
    %v3889 = vmax.f32 %v3713, %v3721
    %v3890 = vmax.f32 %v3714, %v3722
    %v3891 = vmax.f32 %v3715, %v3723
    %v3892 = vmax.f32 %v3716, %v3724
    %v3893 = vmax.f32 %v3717, %v3725
    %v3894 = vmax.f32 %v3718, %v3726
    %v3895 = vmax.f32 %v3719, %v3727
    %v3896 = vmax.f32 %v3728, %v3736
    %v3897 = vmax.f32 %v3729, %v3737
    %v3898 = vmax.f32 %v3730, %v3738
    %v3899 = vmax.f32 %v3731, %v3739
    %v3900 = vmax.f32 %v3732, %v3740
    %v3901 = vmax.f32 %v3733, %v3741
    %v3902 = vmax.f32 %v3734, %v3742
    %v3903 = vmax.f32 %v3735, %v3743
    %v3904 = vmax.f32 %v3744, %v3752
    %v3905 = vmax.f32 %v3745, %v3753
    %v3906 = vmax.f32 %v3746, %v3754
    %v3907 = vmax.f32 %v3747, %v3755
    %v3908 = vmax.f32 %v3748, %v3756
    %v3909 = vmax.f32 %v3749, %v3757
    %v3910 = vmax.f32 %v3750, %v3758
    %v3911 = vmax.f32 %v3751, %v3759
    %v3912 = vmax.f32 %v3760, %v3768
    %v3913 = vmax.f32 %v3761, %v3769
    %v3914 = vmax.f32 %v3762, %v3770
    %v3915 = vmax.f32 %v3763, %v3771
    %v3916 = vmax.f32 %v3764, %v3772
    %v3917 = vmax.f32 %v3765, %v3773
    %v3918 = vmax.f32 %v3766, %v3774
    %v3919 = vmax.f32 %v3767, %v3775
    %v3920 = vmax.f32 %v3776, %v3784
    %v3921 = vmax.f32 %v3777, %v3785
    %v3922 = vmax.f32 %v3778, %v3786
    %v3923 = vmax.f32 %v3779, %v3787
    %v3924 = vmax.f32 %v3780, %v3788
    %v3925 = vmax.f32 %v3781, %v3789
    %v3926 = vmax.f32 %v3782, %v3790
    %v3927 = vmax.f32 %v3783, %v3791
    %v3928 = vmax.f32 %v3792, %v3800
    %v3929 = vmax.f32 %v3793, %v3801
    %v3930 = vmax.f32 %v3794, %v3802
    %v3931 = vmax.f32 %v3795, %v3803
    %v3932 = vmax.f32 %v3796, %v3804
    %v3933 = vmax.f32 %v3797, %v3805
    %v3934 = vmax.f32 %v3798, %v3806
    %v3935 = vmax.f32 %v3799, %v3807
    %v3936 = vmax.f32 %v3808, %v3816
    %v3937 = vmax.f32 %v3809, %v3817
    %v3938 = vmax.f32 %v3810, %v3818
    %v3939 = vmax.f32 %v3811, %v3819
    %v3940 = vmax.f32 %v3812, %v3820
    %v3941 = vmax.f32 %v3813, %v3821
    %v3942 = vmax.f32 %v3814, %v3822
    %v3943 = vmax.f32 %v3815, %v3823
    %v3944 = vmax.f32 %v3824, %v3832
    %v3945 = vmax.f32 %v3825, %v3833
    %v3946 = vmax.f32 %v3826, %v3834
    %v3947 = vmax.f32 %v3827, %v3835
    %v3948 = vmax.f32 %v3828, %v3836
    %v3949 = vmax.f32 %v3829, %v3837
    %v3950 = vmax.f32 %v3830, %v3838
    %v3951 = vmax.f32 %v3831, %v3839
    %v3952 = vmax.f32 %v3840, %v3848
    %v3953 = vmax.f32 %v3841, %v3849
    %v3954 = vmax.f32 %v3842, %v3850
    %v3955 = vmax.f32 %v3843, %v3851
    %v3956 = vmax.f32 %v3844, %v3852
    %v3957 = vmax.f32 %v3845, %v3853
    %v3958 = vmax.f32 %v3846, %v3854
    %v3959 = vmax.f32 %v3847, %v3855
    %v3960 = vmax.f32 %v3856, %v3864
    %v3961 = vmax.f32 %v3857, %v3865
    %v3962 = vmax.f32 %v3858, %v3866
    %v3963 = vmax.f32 %v3859, %v3867
    %v3964 = vmax.f32 %v3860, %v3868
    %v3965 = vmax.f32 %v3861, %v3869
    %v3966 = vmax.f32 %v3862, %v3870
    %v3967 = vmax.f32 %v3863, %v3871
    %v3968 = vmax.f32 %v3872, %v3874
    %v3969 = vmax.f32 %v3873, %v3875
    %v3970 = vmax.f32 %v3876, %v3878
    %v3971 = vmax.f32 %v3877, %v3879
    %v3972 = vmax.f32 %v3880, %v3882
    %v3973 = vmax.f32 %v3881, %v3883
    %v3974 = vmax.f32 %v3884, %v3886
    %v3975 = vmax.f32 %v3885, %v3887
    %v3976 = vmax.f32 %v3888, %v3890
    %v3977 = vmax.f32 %v3889, %v3891
    %v3978 = vmax.f32 %v3892, %v3894
    %v3979 = vmax.f32 %v3893, %v3895
    %v3980 = vmax.f32 %v3896, %v3898
    %v3981 = vmax.f32 %v3897, %v3899
    %v3982 = vmax.f32 %v3900, %v3902
    %v3983 = vmax.f32 %v3901, %v3903
    %v3984 = vmax.f32 %v3904, %v3906
    %v3985 = vmax.f32 %v3905, %v3907
    %v3986 = vmax.f32 %v3908, %v3910
    %v3987 = vmax.f32 %v3909, %v3911
    %v3988 = vmax.f32 %v3912, %v3914
    %v3989 = vmax.f32 %v3913, %v3915
    %v3990 = vmax.f32 %v3916, %v3918
    %v3991 = vmax.f32 %v3917, %v3919
    %v3992 = vmax.f32 %v3920, %v3922
    %v3993 = vmax.f32 %v3921, %v3923
    %v3994 = vmax.f32 %v3924, %v3926
    %v3995 = vmax.f32 %v3925, %v3927
    %v3996 = vmax.f32 %v3928, %v3930
    %v3997 = vmax.f32 %v3929, %v3931
    %v3998 = vmax.f32 %v3932, %v3934
    %v3999 = vmax.f32 %v3933, %v3935
    %v4000 = vmax.f32 %v3936, %v3938
    %v4001 = vmax.f32 %v3937, %v3939
    %v4002 = vmax.f32 %v3940, %v3942
    %v4003 = vmax.f32 %v3941, %v3943
    %v4004 = vmax.f32 %v3944, %v3946
    %v4005 = vmax.f32 %v3945, %v3947
    %v4006 = vmax.f32 %v3948, %v3950
    %v4007 = vmax.f32 %v3949, %v3951
    %v4008 = vmax.f32 %v3952, %v3954
    %v4009 = vmax.f32 %v3953, %v3955
    %v4010 = vmax.f32 %v3956, %v3958
    %v4011 = vmax.f32 %v3957, %v3959
    %v4012 = vmax.f32 %v3960, %v3962
    %v4013 = vmax.f32 %v3961, %v3963
    %v4014 = vmax.f32 %v3964, %v3966
    %v4015 = vmax.f32 %v3965, %v3967
    %v4016 = vld [vmem:[#allocation4] sm:$0x3]
    %v4018 = vperm.slane %v4016, 0
    %v4019 = vperm.slane %v4016, 1
    %v4022 = vadd.f32 %v3968, %v4018
    %v4023 = vadd.f32 %v3969, %v4019
    %v4024 = vadd.f32 %v3970, %v4018
    %v4025 = vadd.f32 %v3971, %v4019
    %v4026 = vadd.f32 %v3972, %v4018
    %v4027 = vadd.f32 %v3973, %v4019
    %v4028 = vadd.f32 %v3974, %v4018
    %v4029 = vadd.f32 %v3975, %v4019
    %v4030 = vadd.f32 %v3976, %v4018
    %v4031 = vadd.f32 %v3977, %v4019
    %v4032 = vadd.f32 %v3978, %v4018
    %v4033 = vadd.f32 %v3979, %v4019
    %v4034 = vadd.f32 %v3980, %v4018
    %v4035 = vadd.f32 %v3981, %v4019
    %v4036 = vadd.f32 %v3982, %v4018
    %v4037 = vadd.f32 %v3983, %v4019
    %v4038 = vadd.f32 %v3984, %v4018
    %v4039 = vadd.f32 %v3985, %v4019
    %v4040 = vadd.f32 %v3986, %v4018
    %v4041 = vadd.f32 %v3987, %v4019
    %v4042 = vadd.f32 %v3988, %v4018
    %v4043 = vadd.f32 %v3989, %v4019
    %v4044 = vadd.f32 %v3990, %v4018
    %v4045 = vadd.f32 %v3991, %v4019
    %v4046 = vadd.f32 %v3992, %v4018
    %v4047 = vadd.f32 %v3993, %v4019
    %v4048 = vadd.f32 %v3994, %v4018
    %v4049 = vadd.f32 %v3995, %v4019
    %v4050 = vadd.f32 %v3996, %v4018
    %v4051 = vadd.f32 %v3997, %v4019
    %v4052 = vadd.f32 %v3998, %v4018
    %v4053 = vadd.f32 %v3999, %v4019
    %v4054 = vadd.f32 %v4000, %v4018
    %v4055 = vadd.f32 %v4001, %v4019
    %v4056 = vadd.f32 %v4002, %v4018
    %v4057 = vadd.f32 %v4003, %v4019
    %v4058 = vadd.f32 %v4004, %v4018
    %v4059 = vadd.f32 %v4005, %v4019
    %v4060 = vadd.f32 %v4006, %v4018
    %v4061 = vadd.f32 %v4007, %v4019
    %v4062 = vadd.f32 %v4008, %v4018
    %v4063 = vadd.f32 %v4009, %v4019
    %v4064 = vadd.f32 %v4010, %v4018
    %v4065 = vadd.f32 %v4011, %v4019
    %v4066 = vadd.f32 %v4012, %v4018
    %v4067 = vadd.f32 %v4013, %v4019
    %v4068 = vadd.f32 %v4014, %v4018
    %v4069 = vadd.f32 %v4015, %v4019
    %v4070 = vmax.f32 %v4022, 0.0
    %v4071 = vmax.f32 %v4023, 0.0
    %v4072 = vmax.f32 %v4024, 0.0
    %v4073 = vmax.f32 %v4025, 0.0
    %v4074 = vmax.f32 %v4026, 0.0
    %v4075 = vmax.f32 %v4027, 0.0
    %v4076 = vmax.f32 %v4028, 0.0
    %v4077 = vmax.f32 %v4029, 0.0
    %v4078 = vmax.f32 %v4030, 0.0
    %v4079 = vmax.f32 %v4031, 0.0
    %v4080 = vmax.f32 %v4032, 0.0
    %v4081 = vmax.f32 %v4033, 0.0
    %v4082 = vmax.f32 %v4034, 0.0
    %v4083 = vmax.f32 %v4035, 0.0
    %v4084 = vmax.f32 %v4036, 0.0
    %v4085 = vmax.f32 %v4037, 0.0
    %v4086 = vmax.f32 %v4038, 0.0
    %v4087 = vmax.f32 %v4039, 0.0
    %v4088 = vmax.f32 %v4040, 0.0
    %v4089 = vmax.f32 %v4041, 0.0
    %v4090 = vmax.f32 %v4042, 0.0
    %v4091 = vmax.f32 %v4043, 0.0
    %v4092 = vmax.f32 %v4044, 0.0
    %v4093 = vmax.f32 %v4045, 0.0
    %v4094 = vmax.f32 %v4046, 0.0
    %v4095 = vmax.f32 %v4047, 0.0
    %v4096 = vmax.f32 %v4048, 0.0
    %v4097 = vmax.f32 %v4049, 0.0
    %v4098 = vmax.f32 %v4050, 0.0
    %v4099 = vmax.f32 %v4051, 0.0
    %v4100 = vmax.f32 %v4052, 0.0
    %v4101 = vmax.f32 %v4053, 0.0
    %v4102 = vmax.f32 %v4054, 0.0
    %v4103 = vmax.f32 %v4055, 0.0
    %v4104 = vmax.f32 %v4056, 0.0
    %v4105 = vmax.f32 %v4057, 0.0
    %v4106 = vmax.f32 %v4058, 0.0
    %v4107 = vmax.f32 %v4059, 0.0
    %v4108 = vmax.f32 %v4060, 0.0
    %v4109 = vmax.f32 %v4061, 0.0
    %v4110 = vmax.f32 %v4062, 0.0
    %v4111 = vmax.f32 %v4063, 0.0
    %v4112 = vmax.f32 %v4064, 0.0
    %v4113 = vmax.f32 %v4065, 0.0
    %v4114 = vmax.f32 %v4066, 0.0
    %v4115 = vmax.f32 %v4067, 0.0
    %v4116 = vmax.f32 %v4068, 0.0
    %v4117 = vmax.f32 %v4069, 0.0
    %v4118 = vpack.c.bf16 %v4071, %v4070
    %v4119 = vpack.c.bf16 %v4073, %v4072
    %v4120 = vpack.c.bf16 %v4075, %v4074
    %v4121 = vpack.c.bf16 %v4077, %v4076
    %v4122 = vpack.c.bf16 %v4079, %v4078
    %v4123 = vpack.c.bf16 %v4081, %v4080
    %v4124 = vpack.c.bf16 %v4083, %v4082
    %v4125 = vpack.c.bf16 %v4085, %v4084
    %v4126 = vpack.c.bf16 %v4087, %v4086
    %v4127 = vpack.c.bf16 %v4089, %v4088
    %v4128 = vpack.c.bf16 %v4091, %v4090
    %v4129 = vpack.c.bf16 %v4093, %v4092
    %v4130 = vpack.c.bf16 %v4095, %v4094
    %v4131 = vpack.c.bf16 %v4097, %v4096
    %v4132 = vpack.c.bf16 %v4099, %v4098
    %v4133 = vpack.c.bf16 %v4101, %v4100
    %v4134 = vpack.c.bf16 %v4103, %v4102
    %v4135 = vpack.c.bf16 %v4105, %v4104
    %v4136 = vpack.c.bf16 %v4107, %v4106
    %v4137 = vpack.c.bf16 %v4109, %v4108
    %v4138 = vpack.c.bf16 %v4111, %v4110
    %v4139 = vpack.c.bf16 %v4113, %v4112
    %v4140 = vpack.c.bf16 %v4115, %v4114
    %v4141 = vpack.c.bf16 %v4117, %v4116
    %v4142 = vld [vmem:[#allocation6] sm:$0xff]
    %v4143 = vld [vmem:[#allocation6 + $0x8] sm:$0xff]
    %v4144 = vld [vmem:[#allocation6 + $0x10] sm:$0xff]
    %v4145 = vld [vmem:[#allocation6 + $0x18] sm:$0xff]
    %v4146 = vld [vmem:[#allocation6 + $0x20] sm:$0xff]
    %v4147 = vld [vmem:[#allocation6 + $0x28] sm:$0xff]
    %v4148 = vld [vmem:[#allocation6 + $0x30] sm:$0xff]
    %v4149 = vld [vmem:[#allocation6 + $0x38] sm:$0xff]
    %v4150 = vld [vmem:[#allocation6 + $0x40] sm:$0xff]
    %v4151 = vld [vmem:[#allocation6 + $0x48] sm:$0xff]
    %v4152 = vld [vmem:[#allocation6 + $0x50] sm:$0xff]
    %v4153 = vld [vmem:[#allocation6 + $0x58] sm:$0xff]
    %v4154 = vld [vmem:[#allocation6 + $0x60] sm:$0xff]
    %v4155 = vld [vmem:[#allocation6 + $0x68] sm:$0xff]
    %v4156 = vld [vmem:[#allocation6 + $0x70] sm:$0xff]
    %v4157 = vld [vmem:[#allocation6 + $0x78] sm:$0xff]
    %v4158 = vld [vmem:[#allocation6 + $0x80] sm:$0xff]
    %v4159 = vld [vmem:[#allocation6 + $0x88] sm:$0xff]
    %v4160 = vld [vmem:[#allocation6 + $0x90] sm:$0xff]
    %v4161 = vld [vmem:[#allocation6 + $0x98] sm:$0xff]
    %v4162 = vld [vmem:[#allocation6 + $0xa0] sm:$0xff]
    %v4163 = vld [vmem:[#allocation6 + $0xa8] sm:$0xff]
    %v4164 = vld [vmem:[#allocation6 + $0xb0] sm:$0xff]
    %v4165 = vld [vmem:[#allocation6 + $0xb8] sm:$0xff]
    %v4166 = vld [vmem:[#allocation6 + $0xc0] sm:$0xff]
    %v4167 = vld [vmem:[#allocation6 + $0xc8] sm:$0xff]
    %v4168 = vld [vmem:[#allocation6 + $0xd0] sm:$0xff]
    %v4169 = vld [vmem:[#allocation6 + $0xd8] sm:$0xff]
    %v4170 = vld [vmem:[#allocation6 + $0xe0] sm:$0xff]
    %v4171 = vld [vmem:[#allocation6 + $0xe8] sm:$0xff]
    %v4172 = vld [vmem:[#allocation6 + $0xf0] sm:$0xff]
    %v4173 = vld [vmem:[#allocation6 + $0xf8] sm:$0xff]
    %v4174 = vld [vmem:[#allocation6 + $0x100] sm:$0xff]
    %v4175 = vld [vmem:[#allocation6 + $0x108] sm:$0xff]
    %v4176 = vld [vmem:[#allocation6 + $0x110] sm:$0xff]
    %v4177 = vld [vmem:[#allocation6 + $0x118] sm:$0xff]
    %v4178 = vld [vmem:[#allocation6 + $0x120] sm:$0xff]
    %v4179 = vld [vmem:[#allocation6 + $0x128] sm:$0xff]
    %v4180 = vld [vmem:[#allocation6 + $0x130] sm:$0xff]
    %v4181 = vld [vmem:[#allocation6 + $0x138] sm:$0xff]
    %v4182 = vld [vmem:[#allocation6 + $0x140] sm:$0xff]
    %v4183 = vld [vmem:[#allocation6 + $0x148] sm:$0xff]
    %v4184 = vld [vmem:[#allocation6 + $0x150] sm:$0xff]
    %v4185 = vld [vmem:[#allocation6 + $0x158] sm:$0xff]
    %v4186 = vld [vmem:[#allocation6 + $0x160] sm:$0xff]
    %v4187 = vld [vmem:[#allocation6 + $0x168] sm:$0xff]
    %v4188 = vld [vmem:[#allocation6 + $0x170] sm:$0xff]
    %v4189 = vld [vmem:[#allocation6 + $0x178] sm:$0xff]
    %v4190 = vld [vmem:[#allocation6 + $0x180] sm:$0xff]
    %v4191 = vld [vmem:[#allocation6 + $0x188] sm:$0xff]
    %v4192 = vld [vmem:[#allocation6 + $0x190] sm:$0xff]
    %v4193 = vld [vmem:[#allocation6 + $0x198] sm:$0xff]
    %v4194 = vld [vmem:[#allocation6 + $0x1a0] sm:$0xff]
    %v4195 = vld [vmem:[#allocation6 + $0x1a8] sm:$0xff]
    %v4196 = vld [vmem:[#allocation6 + $0x1b0] sm:$0xff]
    %v4197 = vld [vmem:[#allocation6 + $0x1b8] sm:$0xff]
    %v4198 = vld [vmem:[#allocation6 + $0x1c0] sm:$0xff]
    %v4199 = vld [vmem:[#allocation6 + $0x1c8] sm:$0xff]
    %v4200 = vld [vmem:[#allocation6 + $0x1d0] sm:$0xff]
    %v4201 = vld [vmem:[#allocation6 + $0x1d8] sm:$0xff]
    %s4202 = scalar_lea.vmem [#allocation6], 480
    %v4203 = vld [vmem:[%s4202] sm:$0xff]
    %v4204 = vld [vmem:[%s4202 + $0x8] sm:$0xff]
    %v4205 = vld [vmem:[%s4202 + $0x10] sm:$0xff]
    %v4206 = vld [vmem:[%s4202 + $0x18] sm:$0xff]
    %v4207 = vld [vmem:[%s4202 + $0x20] sm:$0xff]
    %v4208 = vld [vmem:[%s4202 + $0x28] sm:$0xff]
    %v4209 = vld [vmem:[%s4202 + $0x30] sm:$0xff]
    %v4210 = vld [vmem:[%s4202 + $0x38] sm:$0xff]
    %v4211 = vld [vmem:[%s4202 + $0x40] sm:$0xff]
    %v4212 = vld [vmem:[%s4202 + $0x48] sm:$0xff]
    %v4213 = vld [vmem:[%s4202 + $0x50] sm:$0xff]
    %v4214 = vld [vmem:[%s4202 + $0x58] sm:$0xff]
    %v4215 = vld [vmem:[%s4202 + $0x60] sm:$0xff]
    %v4216 = vld [vmem:[%s4202 + $0x68] sm:$0xff]
    %v4217 = vld [vmem:[%s4202 + $0x70] sm:$0xff]
    %v4218 = vld [vmem:[%s4202 + $0x78] sm:$0xff]
    %v4219 = vld [vmem:[%s4202 + $0x80] sm:$0xff]
    %v4220 = vld [vmem:[%s4202 + $0x88] sm:$0xff]
    %v4221 = vld [vmem:[%s4202 + $0x90] sm:$0xff]
    %v4222 = vld [vmem:[%s4202 + $0x98] sm:$0xff]
    %v4223 = vld [vmem:[%s4202 + $0xa0] sm:$0xff]
    %v4224 = vld [vmem:[%s4202 + $0xa8] sm:$0xff]
    %v4225 = vld [vmem:[%s4202 + $0xb0] sm:$0xff]
    %v4226 = vld [vmem:[%s4202 + $0xb8] sm:$0xff]
    %v4227 = vld [vmem:[%s4202 + $0xc0] sm:$0xff]
    %v4228 = vld [vmem:[%s4202 + $0xc8] sm:$0xff]
    %v4229 = vld [vmem:[%s4202 + $0xd0] sm:$0xff]
    %v4230 = vld [vmem:[%s4202 + $0xd8] sm:$0xff]
    %v4231 = vld [vmem:[%s4202 + $0xe0] sm:$0xff]
    %v4232 = vld [vmem:[%s4202 + $0xe8] sm:$0xff]
    %v4233 = vld [vmem:[%s4202 + $0xf0] sm:$0xff]
    %v4234 = vld [vmem:[%s4202 + $0xf8] sm:$0xff]
    %v4235 = vld [vmem:[%s4202 + $0x100] sm:$0xff]
    %v4236 = vld [vmem:[%s4202 + $0x108] sm:$0xff]
    %v4237 = vld [vmem:[%s4202 + $0x110] sm:$0xff]
    %v4238 = vld [vmem:[%s4202 + $0x118] sm:$0xff]
    %v4239 = vld [vmem:[%s4202 + $0x120] sm:$0xff]
    %v4240 = vld [vmem:[%s4202 + $0x128] sm:$0xff]
    %v4241 = vld [vmem:[%s4202 + $0x130] sm:$0xff]
    %v4242 = vld [vmem:[%s4202 + $0x138] sm:$0xff]
    %v4243 = vld [vmem:[%s4202 + $0x140] sm:$0xff]
    %v4244 = vld [vmem:[%s4202 + $0x148] sm:$0xff]
    %v4245 = vld [vmem:[%s4202 + $0x150] sm:$0xff]
    %v4246 = vld [vmem:[%s4202 + $0x158] sm:$0xff]
    %v4247 = vld [vmem:[%s4202 + $0x160] sm:$0xff]
    %v4248 = vld [vmem:[%s4202 + $0x168] sm:$0xff]
    %v4249 = vld [vmem:[%s4202 + $0x170] sm:$0xff]
    %v4250 = vld [vmem:[%s4202 + $0x178] sm:$0xff]
    %v4251 = vld [vmem:[%s4202 + $0x180] sm:$0xff]
    %v4252 = vld [vmem:[%s4202 + $0x188] sm:$0xff]
    %v4253 = vld [vmem:[%s4202 + $0x190] sm:$0xff]
    %v4254 = vld [vmem:[%s4202 + $0x198] sm:$0xff]
    %v4255 = vld [vmem:[%s4202 + $0x1a0] sm:$0xff]
    %v4256 = vld [vmem:[%s4202 + $0x1a8] sm:$0xff]
    %v4257 = vld [vmem:[%s4202 + $0x1b0] sm:$0xff]
    %v4258 = vld [vmem:[%s4202 + $0x1b8] sm:$0xff]
    %v4259 = vld [vmem:[%s4202 + $0x1c0] sm:$0xff]
    %v4260 = vld [vmem:[%s4202 + $0x1c8] sm:$0xff]
    %v4261 = vld [vmem:[%s4202 + $0x1d0] sm:$0xff]
    %v4262 = vld [vmem:[%s4202 + $0x1d8] sm:$0xff]
    %v4279 = vunpack.c.l.b16 %v4120
    %v4280 = vunpack.c.h.b16 %v4120
    %v4281 = vunpack.c.l.b16 %v4121
    %v4282 = vunpack.c.h.b16 %v4121
    %v4283 = vunpack.c.l.b16 %v4122
    %v4284 = vunpack.c.h.b16 %v4122
    %v4285 = vunpack.c.l.b16 %v4123
    %v4286 = vunpack.c.h.b16 %v4123
    %v4287 = vunpack.c.l.b16 %v4124
    %v4288 = vunpack.c.h.b16 %v4124
    %v4289 = vunpack.c.l.b16 %v4125
    %v4290 = vunpack.c.h.b16 %v4125
    %v4291 = vunpack.c.l.b16 %v4126
    %v4292 = vunpack.c.h.b16 %v4126
    %v4293 = vunpack.c.l.b16 %v4127
    %v4294 = vunpack.c.h.b16 %v4127
    %v4295 = vunpack.c.l.b16 %v4128
    %v4296 = vunpack.c.h.b16 %v4128
    %v4297 = vunpack.c.l.b16 %v4129
    %v4298 = vunpack.c.h.b16 %v4129
    %v4299 = vunpack.c.l.b16 %v4130
    %v4300 = vunpack.c.h.b16 %v4130
    %v4301 = vunpack.c.l.b16 %v4131
    %v4302 = vunpack.c.h.b16 %v4131
    %v4303 = vunpack.c.l.b16 %v4132
    %v4304 = vunpack.c.h.b16 %v4132
    %v4305 = vunpack.c.l.b16 %v4133
    %v4306 = vunpack.c.h.b16 %v4133
    %v4307 = vunpack.c.l.b16 %v4134
    %v4308 = vunpack.c.h.b16 %v4134
    %v4309 = vunpack.c.l.b16 %v4135
    %v4310 = vunpack.c.h.b16 %v4135
    %v4311 = vpack.c.b16 %v4281, %v4279
    %v4312 = vpack.c.b16 %v4282, %v4280
    %v4313 = vpack.c.b16 %v4285, %v4283
    %v4314 = vpack.c.b16 %v4286, %v4284
    %v4315 = vpack.c.b16 %v4289, %v4287
    %v4316 = vpack.c.b16 %v4290, %v4288
    %v4317 = vpack.c.b16 %v4293, %v4291
    %v4318 = vpack.c.b16 %v4294, %v4292
    %v4319 = vpack.c.b16 %v4297, %v4295
    %v4320 = vpack.c.b16 %v4298, %v4296
    %v4321 = vpack.c.b16 %v4301, %v4299
    %v4322 = vpack.c.b16 %v4302, %v4300
    %v4323 = vpack.c.b16 %v4305, %v4303
    %v4324 = vpack.c.b16 %v4306, %v4304
    %v4325 = vpack.c.b16 %v4309, %v4307
    %v4326 = vpack.c.b16 %v4310, %v4308
    %v4395 = vunpack.c.l.b16 %v4203
    %v4396 = vunpack.c.h.b16 %v4203
    %v4397 = vunpack.c.l.b16 %v4204
    %v4398 = vunpack.c.h.b16 %v4204
    %v4399 = vunpack.c.l.b16 %v4205
    %v4400 = vunpack.c.h.b16 %v4205
    %v4401 = vunpack.c.l.b16 %v4206
    %v4402 = vunpack.c.h.b16 %v4206
    %v4403 = vunpack.c.l.b16 %v4207
    %v4404 = vunpack.c.h.b16 %v4207
    %v4405 = vunpack.c.l.b16 %v4208
    %v4406 = vunpack.c.h.b16 %v4208
    %v4407 = vunpack.c.l.b16 %v4209
    %v4408 = vunpack.c.h.b16 %v4209
    %v4409 = vunpack.c.l.b16 %v4210
    %v4410 = vunpack.c.h.b16 %v4210
    %v4411 = vunpack.c.l.b16 %v4211
    %v4412 = vunpack.c.h.b16 %v4211
    %v4413 = vunpack.c.l.b16 %v4212
    %v4414 = vunpack.c.h.b16 %v4212
    %v4415 = vunpack.c.l.b16 %v4213
    %v4416 = vunpack.c.h.b16 %v4213
    %v4417 = vunpack.c.l.b16 %v4214
    %v4418 = vunpack.c.h.b16 %v4214
    %v4419 = vunpack.c.l.b16 %v4215
    %v4420 = vunpack.c.h.b16 %v4215
    %v4421 = vunpack.c.l.b16 %v4216
    %v4422 = vunpack.c.h.b16 %v4216
    %v4423 = vunpack.c.l.b16 %v4217
    %v4424 = vunpack.c.h.b16 %v4217
    %v4425 = vunpack.c.l.b16 %v4218
    %v4426 = vunpack.c.h.b16 %v4218
    %v4427 = vunpack.c.l.b16 %v4219
    %v4428 = vunpack.c.h.b16 %v4219
    %v4429 = vunpack.c.l.b16 %v4220
    %v4430 = vunpack.c.h.b16 %v4220
    %v4431 = vunpack.c.l.b16 %v4221
    %v4432 = vunpack.c.h.b16 %v4221
    %v4433 = vunpack.c.l.b16 %v4222
    %v4434 = vunpack.c.h.b16 %v4222
    %v4435 = vunpack.c.l.b16 %v4223
    %v4436 = vunpack.c.h.b16 %v4223
    %v4437 = vunpack.c.l.b16 %v4224
    %v4438 = vunpack.c.h.b16 %v4224
    %v4439 = vunpack.c.l.b16 %v4225
    %v4440 = vunpack.c.h.b16 %v4225
    %v4441 = vunpack.c.l.b16 %v4226
    %v4442 = vunpack.c.h.b16 %v4226
    %v4443 = vunpack.c.l.b16 %v4227
    %v4444 = vunpack.c.h.b16 %v4227
    %v4445 = vunpack.c.l.b16 %v4228
    %v4446 = vunpack.c.h.b16 %v4228
    %v4447 = vunpack.c.l.b16 %v4229
    %v4448 = vunpack.c.h.b16 %v4229
    %v4449 = vunpack.c.l.b16 %v4230
    %v4450 = vunpack.c.h.b16 %v4230
    %v4451 = vunpack.c.l.b16 %v4231
    %v4452 = vunpack.c.h.b16 %v4231
    %v4453 = vunpack.c.l.b16 %v4232
    %v4454 = vunpack.c.h.b16 %v4232
    %v4455 = vunpack.c.l.b16 %v4233
    %v4456 = vunpack.c.h.b16 %v4233
    %v4457 = vunpack.c.l.b16 %v4234
    %v4458 = vunpack.c.h.b16 %v4234
    %v4459 = vunpack.c.l.b16 %v4235
    %v4460 = vunpack.c.h.b16 %v4235
    %v4461 = vunpack.c.l.b16 %v4236
    %v4462 = vunpack.c.h.b16 %v4236
    %v4463 = vunpack.c.l.b16 %v4237
    %v4464 = vunpack.c.h.b16 %v4237
    %v4465 = vunpack.c.l.b16 %v4238
    %v4466 = vunpack.c.h.b16 %v4238
    %v4467 = vunpack.c.l.b16 %v4239
    %v4468 = vunpack.c.h.b16 %v4239
    %v4469 = vunpack.c.l.b16 %v4240
    %v4470 = vunpack.c.h.b16 %v4240
    %v4471 = vunpack.c.l.b16 %v4241
    %v4472 = vunpack.c.h.b16 %v4241
    %v4473 = vunpack.c.l.b16 %v4242
    %v4474 = vunpack.c.h.b16 %v4242
    %v4475 = vunpack.c.l.b16 %v4243
    %v4476 = vunpack.c.h.b16 %v4243
    %v4477 = vunpack.c.l.b16 %v4244
    %v4478 = vunpack.c.h.b16 %v4244
    %v4479 = vunpack.c.l.b16 %v4245
    %v4480 = vunpack.c.h.b16 %v4245
    %v4481 = vunpack.c.l.b16 %v4246
    %v4482 = vunpack.c.h.b16 %v4246
    %v4483 = vunpack.c.l.b16 %v4247
    %v4484 = vunpack.c.h.b16 %v4247
    %v4485 = vunpack.c.l.b16 %v4248
    %v4486 = vunpack.c.h.b16 %v4248
    %v4487 = vunpack.c.l.b16 %v4249
    %v4488 = vunpack.c.h.b16 %v4249
    %v4489 = vunpack.c.l.b16 %v4250
    %v4490 = vunpack.c.h.b16 %v4250
    %v4491 = vunpack.c.l.b16 %v4251
    %v4492 = vunpack.c.h.b16 %v4251
    %v4493 = vunpack.c.l.b16 %v4252
    %v4494 = vunpack.c.h.b16 %v4252
    %v4495 = vunpack.c.l.b16 %v4253
    %v4496 = vunpack.c.h.b16 %v4253
    %v4497 = vunpack.c.l.b16 %v4254
    %v4498 = vunpack.c.h.b16 %v4254
    %v4499 = vunpack.c.l.b16 %v4255
    %v4500 = vunpack.c.h.b16 %v4255
    %v4501 = vunpack.c.l.b16 %v4256
    %v4502 = vunpack.c.h.b16 %v4256
    %v4503 = vunpack.c.l.b16 %v4257
    %v4504 = vunpack.c.h.b16 %v4257
    %v4505 = vunpack.c.l.b16 %v4258
    %v4506 = vunpack.c.h.b16 %v4258
    %v4507 = vunpack.c.l.b16 %v4259
    %v4508 = vunpack.c.h.b16 %v4259
    %v4509 = vunpack.c.l.b16 %v4260
    %v4510 = vunpack.c.h.b16 %v4260
    %v4511 = vunpack.c.l.b16 %v4261
    %v4512 = vunpack.c.h.b16 %v4261
    %v4513 = vunpack.c.l.b16 %v4262
    %v4514 = vunpack.c.h.b16 %v4262
    %v4515 = vpack.c.b16 %v4399, %v4395
    %v4516 = vpack.c.b16 %v4400, %v4396
    %v4517 = vpack.c.b16 %v4401, %v4397
    %v4518 = vpack.c.b16 %v4402, %v4398
    %v4519 = vpack.c.b16 %v4407, %v4403
    %v4520 = vpack.c.b16 %v4408, %v4404
    %v4521 = vpack.c.b16 %v4409, %v4405
    %v4522 = vpack.c.b16 %v4410, %v4406
    %v4523 = vpack.c.b16 %v4415, %v4411
    %v4524 = vpack.c.b16 %v4416, %v4412
    %v4525 = vpack.c.b16 %v4417, %v4413
    %v4526 = vpack.c.b16 %v4418, %v4414
    %v4527 = vpack.c.b16 %v4423, %v4419
    %v4528 = vpack.c.b16 %v4424, %v4420
    %v4529 = vpack.c.b16 %v4425, %v4421
    %v4530 = vpack.c.b16 %v4426, %v4422
    %v4531 = vpack.c.b16 %v4431, %v4427
    %v4532 = vpack.c.b16 %v4432, %v4428
    %v4533 = vpack.c.b16 %v4433, %v4429
    %v4534 = vpack.c.b16 %v4434, %v4430
    %v4535 = vpack.c.b16 %v4439, %v4435
    %v4536 = vpack.c.b16 %v4440, %v4436
    %v4537 = vpack.c.b16 %v4441, %v4437
    %v4538 = vpack.c.b16 %v4442, %v4438
    %v4539 = vpack.c.b16 %v4447, %v4443
    %v4540 = vpack.c.b16 %v4448, %v4444
    %v4541 = vpack.c.b16 %v4449, %v4445
    %v4542 = vpack.c.b16 %v4450, %v4446
    %v4543 = vpack.c.b16 %v4455, %v4451
    %v4544 = vpack.c.b16 %v4456, %v4452
    %v4545 = vpack.c.b16 %v4457, %v4453
    %v4546 = vpack.c.b16 %v4458, %v4454
    %v4547 = vpack.c.b16 %v4463, %v4459
    %v4548 = vpack.c.b16 %v4464, %v4460
    %v4549 = vpack.c.b16 %v4465, %v4461
    %v4550 = vpack.c.b16 %v4466, %v4462
    %v4551 = vpack.c.b16 %v4471, %v4467
    %v4552 = vpack.c.b16 %v4472, %v4468
    %v4553 = vpack.c.b16 %v4473, %v4469
    %v4554 = vpack.c.b16 %v4474, %v4470
    %v4555 = vpack.c.b16 %v4479, %v4475
    %v4556 = vpack.c.b16 %v4480, %v4476
    %v4557 = vpack.c.b16 %v4481, %v4477
    %v4558 = vpack.c.b16 %v4482, %v4478
    %v4559 = vpack.c.b16 %v4487, %v4483
    %v4560 = vpack.c.b16 %v4488, %v4484
    %v4561 = vpack.c.b16 %v4489, %v4485
    %v4562 = vpack.c.b16 %v4490, %v4486
    %v4563 = vpack.c.b16 %v4495, %v4491
    %v4564 = vpack.c.b16 %v4496, %v4492
    %v4565 = vpack.c.b16 %v4497, %v4493
    %v4566 = vpack.c.b16 %v4498, %v4494
    %v4567 = vpack.c.b16 %v4503, %v4499
    %v4568 = vpack.c.b16 %v4504, %v4500
    %v4569 = vpack.c.b16 %v4505, %v4501
    %v4570 = vpack.c.b16 %v4506, %v4502
    %v4571 = vpack.c.b16 %v4511, %v4507
    %v4572 = vpack.c.b16 %v4512, %v4508
    %v4573 = vpack.c.b16 %v4513, %v4509
    %v4574 = vpack.c.b16 %v4514, %v4510
    %vm4635 = vcmask 916480
    %v4637 = vsel %vm4635, %v4312, 0
    %v4640 = vsel %vm4635, %v4314, 0
    %v4643 = vsel %vm4635, %v4316, 0
    %v4646 = vsel %vm4635, %v4318, 0
    %v4649 = vsel %vm4635, %v4320, 0
    %v4652 = vsel %vm4635, %v4322, 0
    %v4655 = vsel %vm4635, %v4324, 0
    %v4658 = vsel %vm4635, %v4326, 0
    %4660 = vmatpush.bf16.msra.mxu0 %v4543
    %4661 = vmatpush.bf16.msra.mxu0 %v4539
    %4662 = vmatpush.bf16.msra.mxu0 %v4535
    %4663 = vmatpush.bf16.msra.mxu0 %v4531
    %4664 = vmatpush.bf16.msra.mxu0 %v4527
    %4665 = vmatpush.bf16.msra.mxu0 %v4523
    %4666 = vmatpush.bf16.msra.mxu0 %v4519
    %4667 = vmatpush.bf16.msra.mxu0 %v4515
    %4668 = vmatmul.bf16.gmra.mxu0 %v4311
    %v4669 = vpop.f32.mrf.mxu0
    %v4670 = vadd.f32 0.0, %v4669
    %v4671 = vpop.f32.mrf.mxu0
    %v4672 = vadd.f32 0.0, %v4671
    %4673 = vmatmul.bf16.gmra.mxu0 %v4313
    %v4674 = vpop.f32.mrf.mxu0
    %v4675 = vadd.f32 0.0, %v4674
    %v4676 = vpop.f32.mrf.mxu0
    %v4677 = vadd.f32 0.0, %v4676
    %4678 = vmatmul.bf16.gmra.mxu0 %v4315
    %v4679 = vpop.f32.mrf.mxu0
    %v4680 = vadd.f32 0.0, %v4679
    %v4681 = vpop.f32.mrf.mxu0
    %v4682 = vadd.f32 0.0, %v4681
    %4683 = vmatmul.bf16.gmra.mxu0 %v4317
    %v4684 = vpop.f32.mrf.mxu0
    %v4685 = vadd.f32 0.0, %v4684
    %v4686 = vpop.f32.mrf.mxu0
    %v4687 = vadd.f32 0.0, %v4686
    %4688 = vmatmul.bf16.gmra.mxu0 %v4319
    %v4689 = vpop.f32.mrf.mxu0
    %v4690 = vadd.f32 0.0, %v4689
    %v4691 = vpop.f32.mrf.mxu0
    %v4692 = vadd.f32 0.0, %v4691
    %4693 = vmatmul.bf16.gmra.mxu0 %v4321
    %v4694 = vpop.f32.mrf.mxu0
    %v4695 = vadd.f32 0.0, %v4694
    %v4696 = vpop.f32.mrf.mxu0
    %v4697 = vadd.f32 0.0, %v4696
    %4698 = vmatmul.bf16.gmra.mxu0 %v4323
    %v4699 = vpop.f32.mrf.mxu0
    %v4700 = vadd.f32 0.0, %v4699
    %v4701 = vpop.f32.mrf.mxu0
    %v4702 = vadd.f32 0.0, %v4701
    %4703 = vmatmul.bf16.gmra.mxu0 %v4325
    %v4704 = vpop.f32.mrf.mxu0
    %v4705 = vadd.f32 0.0, %v4704
    %v4706 = vpop.f32.mrf.mxu0
    %v4707 = vadd.f32 0.0, %v4706
    %4708 = vdwg.mxu0
    %4709 = vmatpush.bf16.msra.mxu0 0
    %4710 = vmatpush.bf16.msra.mxu0 %v4571
    %4711 = vmatpush.bf16.msra.mxu0 %v4567
    %4712 = vmatpush.bf16.msra.mxu0 %v4563
    %4713 = vmatpush.bf16.msra.mxu0 %v4559
    %4714 = vmatpush.bf16.msra.mxu0 %v4555
    %4715 = vmatpush.bf16.msra.mxu0 %v4551
    %4716 = vmatpush.bf16.msra.mxu0 %v4547
    %4717 = vmatmul.bf16.gmra.mxu0 %v4637
    %v4718 = vpop.f32.mrf.mxu0
    %v4719 = vadd.f32 %v4670, %v4718
    %v4720 = vpop.f32.mrf.mxu0
    %v4721 = vadd.f32 %v4672, %v4720
    %4722 = vmatmul.bf16.gmra.mxu0 %v4640
    %v4723 = vpop.f32.mrf.mxu0
    %v4724 = vadd.f32 %v4675, %v4723
    %v4725 = vpop.f32.mrf.mxu0
    %v4726 = vadd.f32 %v4677, %v4725
    %4727 = vmatmul.bf16.gmra.mxu0 %v4643
    %v4728 = vpop.f32.mrf.mxu0
    %v4729 = vadd.f32 %v4680, %v4728
    %v4730 = vpop.f32.mrf.mxu0
    %v4731 = vadd.f32 %v4682, %v4730
    %4732 = vmatmul.bf16.gmra.mxu0 %v4646
    %v4733 = vpop.f32.mrf.mxu0
    %v4734 = vadd.f32 %v4685, %v4733
    %v4735 = vpop.f32.mrf.mxu0
    %v4736 = vadd.f32 %v4687, %v4735
    %4737 = vmatmul.bf16.gmra.mxu0 %v4649
    %v4738 = vpop.f32.mrf.mxu0
    %v4739 = vadd.f32 %v4690, %v4738
    %v4740 = vpop.f32.mrf.mxu0
    %v4741 = vadd.f32 %v4692, %v4740
    %4742 = vmatmul.bf16.gmra.mxu0 %v4652
    %v4743 = vpop.f32.mrf.mxu0
    %v4744 = vadd.f32 %v4695, %v4743
    %v4745 = vpop.f32.mrf.mxu0
    %v4746 = vadd.f32 %v4697, %v4745
    %4747 = vmatmul.bf16.gmra.mxu0 %v4655
    %v4748 = vpop.f32.mrf.mxu0
    %v4749 = vadd.f32 %v4700, %v4748
    %v4750 = vpop.f32.mrf.mxu0
    %v4751 = vadd.f32 %v4702, %v4750
    %4752 = vmatmul.bf16.gmra.mxu0 %v4658
    %v4753 = vpop.f32.mrf.mxu0
    %v4754 = vadd.f32 %v4705, %v4753
    %v4755 = vpop.f32.mrf.mxu0
    %v4756 = vadd.f32 %v4707, %v4755
    %4757 = vdwg.mxu0
    %4758 = vmatpush.bf16.msra.mxu0 %v4544
    %4759 = vmatpush.bf16.msra.mxu0 %v4540
    %4760 = vmatpush.bf16.msra.mxu0 %v4536
    %4761 = vmatpush.bf16.msra.mxu0 %v4532
    %4762 = vmatpush.bf16.msra.mxu0 %v4528
    %4763 = vmatpush.bf16.msra.mxu0 %v4524
    %4764 = vmatpush.bf16.msra.mxu0 %v4520
    %4765 = vmatpush.bf16.msra.mxu0 %v4516
    %4766 = vmatmul.bf16.gmra.mxu0 %v4311
    %v4767 = vpop.f32.mrf.mxu0
    %v4768 = vadd.f32 0.0, %v4767
    %v4769 = vpop.f32.mrf.mxu0
    %v4770 = vadd.f32 0.0, %v4769
    %4771 = vmatmul.bf16.gmra.mxu0 %v4313
    %v4772 = vpop.f32.mrf.mxu0
    %v4773 = vadd.f32 0.0, %v4772
    %v4774 = vpop.f32.mrf.mxu0
    %v4775 = vadd.f32 0.0, %v4774
    %4776 = vmatmul.bf16.gmra.mxu0 %v4315
    %v4777 = vpop.f32.mrf.mxu0
    %v4778 = vadd.f32 0.0, %v4777
    %v4779 = vpop.f32.mrf.mxu0
    %v4780 = vadd.f32 0.0, %v4779
    %4781 = vmatmul.bf16.gmra.mxu0 %v4317
    %v4782 = vpop.f32.mrf.mxu0
    %v4783 = vadd.f32 0.0, %v4782
    %v4784 = vpop.f32.mrf.mxu0
    %v4785 = vadd.f32 0.0, %v4784
    %4786 = vmatmul.bf16.gmra.mxu0 %v4319
    %v4787 = vpop.f32.mrf.mxu0
    %v4788 = vadd.f32 0.0, %v4787
    %v4789 = vpop.f32.mrf.mxu0
    %v4790 = vadd.f32 0.0, %v4789
    %4791 = vmatmul.bf16.gmra.mxu0 %v4321
    %v4792 = vpop.f32.mrf.mxu0
    %v4793 = vadd.f32 0.0, %v4792
    %v4794 = vpop.f32.mrf.mxu0
    %v4795 = vadd.f32 0.0, %v4794
    %4796 = vmatmul.bf16.gmra.mxu0 %v4323
    %v4797 = vpop.f32.mrf.mxu0
    %v4798 = vadd.f32 0.0, %v4797
    %v4799 = vpop.f32.mrf.mxu0
    %v4800 = vadd.f32 0.0, %v4799
    %4801 = vmatmul.bf16.gmra.mxu0 %v4325
    %v4802 = vpop.f32.mrf.mxu0
    %v4803 = vadd.f32 0.0, %v4802
    %v4804 = vpop.f32.mrf.mxu0
    %v4805 = vadd.f32 0.0, %v4804
    %4806 = vdwg.mxu0
    %4807 = vmatpush.bf16.msra.mxu0 0
    %4808 = vmatpush.bf16.msra.mxu0 %v4572
    %4809 = vmatpush.bf16.msra.mxu0 %v4568
    %4810 = vmatpush.bf16.msra.mxu0 %v4564
    %4811 = vmatpush.bf16.msra.mxu0 %v4560
    %4812 = vmatpush.bf16.msra.mxu0 %v4556
    %4813 = vmatpush.bf16.msra.mxu0 %v4552
    %4814 = vmatpush.bf16.msra.mxu0 %v4548
    %4815 = vmatmul.bf16.gmra.mxu0 %v4637
    %v4816 = vpop.f32.mrf.mxu0
    %v4817 = vadd.f32 %v4768, %v4816
    %v4818 = vpop.f32.mrf.mxu0
    %v4819 = vadd.f32 %v4770, %v4818
    %4820 = vmatmul.bf16.gmra.mxu0 %v4640
    %v4821 = vpop.f32.mrf.mxu0
    %v4822 = vadd.f32 %v4773, %v4821
    %v4823 = vpop.f32.mrf.mxu0
    %v4824 = vadd.f32 %v4775, %v4823
    %4825 = vmatmul.bf16.gmra.mxu0 %v4643
    %v4826 = vpop.f32.mrf.mxu0
    %v4827 = vadd.f32 %v4778, %v4826
    %v4828 = vpop.f32.mrf.mxu0
    %v4829 = vadd.f32 %v4780, %v4828
    %4830 = vmatmul.bf16.gmra.mxu0 %v4646
    %v4831 = vpop.f32.mrf.mxu0
    %v4832 = vadd.f32 %v4783, %v4831
    %v4833 = vpop.f32.mrf.mxu0
    %v4834 = vadd.f32 %v4785, %v4833
    %4835 = vmatmul.bf16.gmra.mxu0 %v4649
    %v4836 = vpop.f32.mrf.mxu0
    %v4837 = vadd.f32 %v4788, %v4836
    %v4838 = vpop.f32.mrf.mxu0
    %v4839 = vadd.f32 %v4790, %v4838
    %4840 = vmatmul.bf16.gmra.mxu0 %v4652
    %v4841 = vpop.f32.mrf.mxu0
    %v4842 = vadd.f32 %v4793, %v4841
    %v4843 = vpop.f32.mrf.mxu0
    %v4844 = vadd.f32 %v4795, %v4843
    %4845 = vmatmul.bf16.gmra.mxu0 %v4655
    %v4846 = vpop.f32.mrf.mxu0
    %v4847 = vadd.f32 %v4798, %v4846
    %v4848 = vpop.f32.mrf.mxu0
    %v4849 = vadd.f32 %v4800, %v4848
    %4850 = vmatmul.bf16.gmra.mxu0 %v4658
    %v4851 = vpop.f32.mrf.mxu0
    %v4852 = vadd.f32 %v4803, %v4851
    %v4853 = vpop.f32.mrf.mxu0
    %v4854 = vadd.f32 %v4805, %v4853
    %4855 = vdwg.mxu0
    %4856 = vmatpush.bf16.msra.mxu0 %v4545
    %4857 = vmatpush.bf16.msra.mxu0 %v4541
    %4858 = vmatpush.bf16.msra.mxu0 %v4537
    %4859 = vmatpush.bf16.msra.mxu0 %v4533
    %4860 = vmatpush.bf16.msra.mxu0 %v4529
    %4861 = vmatpush.bf16.msra.mxu0 %v4525
    %4862 = vmatpush.bf16.msra.mxu0 %v4521
    %4863 = vmatpush.bf16.msra.mxu0 %v4517
    %4864 = vmatmul.bf16.gmra.mxu0 %v4311
    %v4865 = vpop.f32.mrf.mxu0
    %v4866 = vadd.f32 0.0, %v4865
    %v4867 = vpop.f32.mrf.mxu0
    %v4868 = vadd.f32 0.0, %v4867
    %4869 = vmatmul.bf16.gmra.mxu0 %v4313
    %v4870 = vpop.f32.mrf.mxu0
    %v4871 = vadd.f32 0.0, %v4870
    %v4872 = vpop.f32.mrf.mxu0
    %v4873 = vadd.f32 0.0, %v4872
    %4874 = vmatmul.bf16.gmra.mxu0 %v4315
    %v4875 = vpop.f32.mrf.mxu0
    %v4876 = vadd.f32 0.0, %v4875
    %v4877 = vpop.f32.mrf.mxu0
    %v4878 = vadd.f32 0.0, %v4877
    %4879 = vmatmul.bf16.gmra.mxu0 %v4317
    %v4880 = vpop.f32.mrf.mxu0
    %v4881 = vadd.f32 0.0, %v4880
    %v4882 = vpop.f32.mrf.mxu0
    %v4883 = vadd.f32 0.0, %v4882
    %4884 = vmatmul.bf16.gmra.mxu0 %v4319
    %v4885 = vpop.f32.mrf.mxu0
    %v4886 = vadd.f32 0.0, %v4885
    %v4887 = vpop.f32.mrf.mxu0
    %v4888 = vadd.f32 0.0, %v4887
    %4889 = vmatmul.bf16.gmra.mxu0 %v4321
    %v4890 = vpop.f32.mrf.mxu0
    %v4891 = vadd.f32 0.0, %v4890
    %v4892 = vpop.f32.mrf.mxu0
    %v4893 = vadd.f32 0.0, %v4892
    %4894 = vmatmul.bf16.gmra.mxu0 %v4323
    %v4895 = vpop.f32.mrf.mxu0
    %v4896 = vadd.f32 0.0, %v4895
    %v4897 = vpop.f32.mrf.mxu0
    %v4898 = vadd.f32 0.0, %v4897
    %4899 = vmatmul.bf16.gmra.mxu0 %v4325
    %v4900 = vpop.f32.mrf.mxu0
    %v4901 = vadd.f32 0.0, %v4900
    %v4902 = vpop.f32.mrf.mxu0
    %v4903 = vadd.f32 0.0, %v4902
    %4904 = vdwg.mxu0
    %4905 = vmatpush.bf16.msra.mxu0 0
    %4906 = vmatpush.bf16.msra.mxu0 %v4573
    %4907 = vmatpush.bf16.msra.mxu0 %v4569
    %4908 = vmatpush.bf16.msra.mxu0 %v4565
    %4909 = vmatpush.bf16.msra.mxu0 %v4561
    %4910 = vmatpush.bf16.msra.mxu0 %v4557
    %4911 = vmatpush.bf16.msra.mxu0 %v4553
    %4912 = vmatpush.bf16.msra.mxu0 %v4549
    %4913 = vmatmul.bf16.gmra.mxu0 %v4637
    %v4914 = vpop.f32.mrf.mxu0
    %v4915 = vadd.f32 %v4866, %v4914
    %v4916 = vpop.f32.mrf.mxu0
    %v4917 = vadd.f32 %v4868, %v4916
    %4918 = vmatmul.bf16.gmra.mxu0 %v4640
    %v4919 = vpop.f32.mrf.mxu0
    %v4920 = vadd.f32 %v4871, %v4919
    %v4921 = vpop.f32.mrf.mxu0
    %v4922 = vadd.f32 %v4873, %v4921
    %4923 = vmatmul.bf16.gmra.mxu0 %v4643
    %v4924 = vpop.f32.mrf.mxu0
    %v4925 = vadd.f32 %v4876, %v4924
    %v4926 = vpop.f32.mrf.mxu0
    %v4927 = vadd.f32 %v4878, %v4926
    %4928 = vmatmul.bf16.gmra.mxu0 %v4646
    %v4929 = vpop.f32.mrf.mxu0
    %v4930 = vadd.f32 %v4881, %v4929
    %v4931 = vpop.f32.mrf.mxu0
    %v4932 = vadd.f32 %v4883, %v4931
    %4933 = vmatmul.bf16.gmra.mxu0 %v4649
    %v4934 = vpop.f32.mrf.mxu0
    %v4935 = vadd.f32 %v4886, %v4934
    %v4936 = vpop.f32.mrf.mxu0
    %v4937 = vadd.f32 %v4888, %v4936
    %4938 = vmatmul.bf16.gmra.mxu0 %v4652
    %v4939 = vpop.f32.mrf.mxu0
    %v4940 = vadd.f32 %v4891, %v4939
    %v4941 = vpop.f32.mrf.mxu0
    %v4942 = vadd.f32 %v4893, %v4941
    %4943 = vmatmul.bf16.gmra.mxu0 %v4655
    %v4944 = vpop.f32.mrf.mxu0
    %v4945 = vadd.f32 %v4896, %v4944
    %v4946 = vpop.f32.mrf.mxu0
    %v4947 = vadd.f32 %v4898, %v4946
    %4948 = vmatmul.bf16.gmra.mxu0 %v4658
    %v4949 = vpop.f32.mrf.mxu0
    %v4950 = vadd.f32 %v4901, %v4949
    %v4951 = vpop.f32.mrf.mxu0
    %v4952 = vadd.f32 %v4903, %v4951
    %4953 = vdwg.mxu0
    %4954 = vmatpush.bf16.msra.mxu0 %v4546
    %4955 = vmatpush.bf16.msra.mxu0 %v4542
    %4956 = vmatpush.bf16.msra.mxu0 %v4538
    %4957 = vmatpush.bf16.msra.mxu0 %v4534
    %4958 = vmatpush.bf16.msra.mxu0 %v4530
    %4959 = vmatpush.bf16.msra.mxu0 %v4526
    %4960 = vmatpush.bf16.msra.mxu0 %v4522
    %4961 = vmatpush.bf16.msra.mxu0 %v4518
    %4962 = vmatmul.bf16.gmra.mxu0 %v4311
    %v4963 = vpop.f32.mrf.mxu0
    %v4964 = vadd.f32 0.0, %v4963
    %v4965 = vpop.f32.mrf.mxu0
    %v4966 = vadd.f32 0.0, %v4965
    %4967 = vmatmul.bf16.gmra.mxu0 %v4313
    %v4968 = vpop.f32.mrf.mxu0
    %v4969 = vadd.f32 0.0, %v4968
    %v4970 = vpop.f32.mrf.mxu0
    %v4971 = vadd.f32 0.0, %v4970
    %4972 = vmatmul.bf16.gmra.mxu0 %v4315
    %v4973 = vpop.f32.mrf.mxu0
    %v4974 = vadd.f32 0.0, %v4973
    %v4975 = vpop.f32.mrf.mxu0
    %v4976 = vadd.f32 0.0, %v4975
    %4977 = vmatmul.bf16.gmra.mxu0 %v4317
    %v4978 = vpop.f32.mrf.mxu0
    %v4979 = vadd.f32 0.0, %v4978
    %v4980 = vpop.f32.mrf.mxu0
    %v4981 = vadd.f32 0.0, %v4980
    %4982 = vmatmul.bf16.gmra.mxu0 %v4319
    %v4983 = vpop.f32.mrf.mxu0
    %v4984 = vadd.f32 0.0, %v4983
    %v4985 = vpop.f32.mrf.mxu0
    %v4986 = vadd.f32 0.0, %v4985
    %4987 = vmatmul.bf16.gmra.mxu0 %v4321
    %v4988 = vpop.f32.mrf.mxu0
    %v4989 = vadd.f32 0.0, %v4988
    %v4990 = vpop.f32.mrf.mxu0
    %v4991 = vadd.f32 0.0, %v4990
    %4992 = vmatmul.bf16.gmra.mxu0 %v4323
    %v4993 = vpop.f32.mrf.mxu0
    %v4994 = vadd.f32 0.0, %v4993
    %v4995 = vpop.f32.mrf.mxu0
    %v4996 = vadd.f32 0.0, %v4995
    %4997 = vmatmul.bf16.gmra.mxu0 %v4325
    %v4998 = vpop.f32.mrf.mxu0
    %v4999 = vadd.f32 0.0, %v4998
    %v5000 = vpop.f32.mrf.mxu0
    %v5001 = vadd.f32 0.0, %v5000
    %5002 = vdwg.mxu0
    %5003 = vmatpush.bf16.msra.mxu0 0
    %5004 = vmatpush.bf16.msra.mxu0 %v4574
    %5005 = vmatpush.bf16.msra.mxu0 %v4570
    %5006 = vmatpush.bf16.msra.mxu0 %v4566
    %5007 = vmatpush.bf16.msra.mxu0 %v4562
    %5008 = vmatpush.bf16.msra.mxu0 %v4558
    %5009 = vmatpush.bf16.msra.mxu0 %v4554
    %5010 = vmatpush.bf16.msra.mxu0 %v4550
    %5011 = vmatmul.bf16.gmra.mxu0 %v4637
    %v5012 = vpop.f32.mrf.mxu0
    %v5013 = vadd.f32 %v4964, %v5012
    %v5014 = vpop.f32.mrf.mxu0
    %v5015 = vadd.f32 %v4966, %v5014
    %5016 = vmatmul.bf16.gmra.mxu0 %v4640
    %v5017 = vpop.f32.mrf.mxu0
    %v5018 = vadd.f32 %v4969, %v5017
    %v5019 = vpop.f32.mrf.mxu0
    %v5020 = vadd.f32 %v4971, %v5019
    %5021 = vmatmul.bf16.gmra.mxu0 %v4643
    %v5022 = vpop.f32.mrf.mxu0
    %v5023 = vadd.f32 %v4974, %v5022
    %v5024 = vpop.f32.mrf.mxu0
    %v5025 = vadd.f32 %v4976, %v5024
    %5026 = vmatmul.bf16.gmra.mxu0 %v4646
    %v5027 = vpop.f32.mrf.mxu0
    %v5028 = vadd.f32 %v4979, %v5027
    %v5029 = vpop.f32.mrf.mxu0
    %v5030 = vadd.f32 %v4981, %v5029
    %5031 = vmatmul.bf16.gmra.mxu0 %v4649
    %v5032 = vpop.f32.mrf.mxu0
    %v5033 = vadd.f32 %v4984, %v5032
    %v5034 = vpop.f32.mrf.mxu0
    %v5035 = vadd.f32 %v4986, %v5034
    %5036 = vmatmul.bf16.gmra.mxu0 %v4652
    %v5037 = vpop.f32.mrf.mxu0
    %v5038 = vadd.f32 %v4989, %v5037
    %v5039 = vpop.f32.mrf.mxu0
    %v5040 = vadd.f32 %v4991, %v5039
    %5041 = vmatmul.bf16.gmra.mxu0 %v4655
    %v5042 = vpop.f32.mrf.mxu0
    %v5043 = vadd.f32 %v4994, %v5042
    %v5044 = vpop.f32.mrf.mxu0
    %v5045 = vadd.f32 %v4996, %v5044
    %5046 = vmatmul.bf16.gmra.mxu0 %v4658
    %v5047 = vpop.f32.mrf.mxu0
    %v5048 = vadd.f32 %v4999, %v5047
    %v5049 = vpop.f32.mrf.mxu0
    %v5050 = vadd.f32 %v5001, %v5049
    %5051 = vdwg.mxu0
    %v5054 = vunpack.c.l.b16 %v4118
    %v5055 = vunpack.c.h.b16 %v4118
    %v5056 = vunpack.c.l.b16 %v4119
    %v5057 = vunpack.c.h.b16 %v4119
    %v5058 = vpack.c.b16 %v5056, %v5054
    %v5059 = vpack.c.b16 %v5057, %v5055
    %v5121 = vunpack.c.l.b16 %v4142
    %v5122 = vunpack.c.h.b16 %v4142
    %v5123 = vunpack.c.l.b16 %v4143
    %v5124 = vunpack.c.h.b16 %v4143
    %v5125 = vunpack.c.l.b16 %v4144
    %v5126 = vunpack.c.h.b16 %v4144
    %v5127 = vunpack.c.l.b16 %v4145
    %v5128 = vunpack.c.h.b16 %v4145
    %v5129 = vunpack.c.l.b16 %v4146
    %v5130 = vunpack.c.h.b16 %v4146
    %v5131 = vunpack.c.l.b16 %v4147
    %v5132 = vunpack.c.h.b16 %v4147
    %v5133 = vunpack.c.l.b16 %v4148
    %v5134 = vunpack.c.h.b16 %v4148
    %v5135 = vunpack.c.l.b16 %v4149
    %v5136 = vunpack.c.h.b16 %v4149
    %v5137 = vunpack.c.l.b16 %v4150
    %v5138 = vunpack.c.h.b16 %v4150
    %v5139 = vunpack.c.l.b16 %v4151
    %v5140 = vunpack.c.h.b16 %v4151
    %v5141 = vunpack.c.l.b16 %v4152
    %v5142 = vunpack.c.h.b16 %v4152
    %v5143 = vunpack.c.l.b16 %v4153
    %v5144 = vunpack.c.h.b16 %v4153
    %v5145 = vunpack.c.l.b16 %v4154
    %v5146 = vunpack.c.h.b16 %v4154
    %v5147 = vunpack.c.l.b16 %v4155
    %v5148 = vunpack.c.h.b16 %v4155
    %v5149 = vunpack.c.l.b16 %v4156
    %v5150 = vunpack.c.h.b16 %v4156
    %v5151 = vunpack.c.l.b16 %v4157
    %v5152 = vunpack.c.h.b16 %v4157
    %v5153 = vunpack.c.l.b16 %v4158
    %v5154 = vunpack.c.h.b16 %v4158
    %v5155 = vunpack.c.l.b16 %v4159
    %v5156 = vunpack.c.h.b16 %v4159
    %v5157 = vunpack.c.l.b16 %v4160
    %v5158 = vunpack.c.h.b16 %v4160
    %v5159 = vunpack.c.l.b16 %v4161
    %v5160 = vunpack.c.h.b16 %v4161
    %v5161 = vunpack.c.l.b16 %v4162
    %v5162 = vunpack.c.h.b16 %v4162
    %v5163 = vunpack.c.l.b16 %v4163
    %v5164 = vunpack.c.h.b16 %v4163
    %v5165 = vunpack.c.l.b16 %v4164
    %v5166 = vunpack.c.h.b16 %v4164
    %v5167 = vunpack.c.l.b16 %v4165
    %v5168 = vunpack.c.h.b16 %v4165
    %v5169 = vunpack.c.l.b16 %v4166
    %v5170 = vunpack.c.h.b16 %v4166
    %v5171 = vunpack.c.l.b16 %v4167
    %v5172 = vunpack.c.h.b16 %v4167
    %v5173 = vunpack.c.l.b16 %v4168
    %v5174 = vunpack.c.h.b16 %v4168
    %v5175 = vunpack.c.l.b16 %v4169
    %v5176 = vunpack.c.h.b16 %v4169
    %v5177 = vunpack.c.l.b16 %v4170
    %v5178 = vunpack.c.h.b16 %v4170
    %v5179 = vunpack.c.l.b16 %v4171
    %v5180 = vunpack.c.h.b16 %v4171
    %v5181 = vunpack.c.l.b16 %v4172
    %v5182 = vunpack.c.h.b16 %v4172
    %v5183 = vunpack.c.l.b16 %v4173
    %v5184 = vunpack.c.h.b16 %v4173
    %v5185 = vunpack.c.l.b16 %v4174
    %v5186 = vunpack.c.h.b16 %v4174
    %v5187 = vunpack.c.l.b16 %v4175
    %v5188 = vunpack.c.h.b16 %v4175
    %v5189 = vunpack.c.l.b16 %v4176
    %v5190 = vunpack.c.h.b16 %v4176
    %v5191 = vunpack.c.l.b16 %v4177
    %v5192 = vunpack.c.h.b16 %v4177
    %v5193 = vunpack.c.l.b16 %v4178
    %v5194 = vunpack.c.h.b16 %v4178
    %v5195 = vunpack.c.l.b16 %v4179
    %v5196 = vunpack.c.h.b16 %v4179
    %v5197 = vunpack.c.l.b16 %v4180
    %v5198 = vunpack.c.h.b16 %v4180
    %v5199 = vunpack.c.l.b16 %v4181
    %v5200 = vunpack.c.h.b16 %v4181
    %v5201 = vunpack.c.l.b16 %v4182
    %v5202 = vunpack.c.h.b16 %v4182
    %v5203 = vunpack.c.l.b16 %v4183
    %v5204 = vunpack.c.h.b16 %v4183
    %v5205 = vunpack.c.l.b16 %v4184
    %v5206 = vunpack.c.h.b16 %v4184
    %v5207 = vunpack.c.l.b16 %v4185
    %v5208 = vunpack.c.h.b16 %v4185
    %v5209 = vunpack.c.l.b16 %v4186
    %v5210 = vunpack.c.h.b16 %v4186
    %v5211 = vunpack.c.l.b16 %v4187
    %v5212 = vunpack.c.h.b16 %v4187
    %v5213 = vunpack.c.l.b16 %v4188
    %v5214 = vunpack.c.h.b16 %v4188
    %v5215 = vunpack.c.l.b16 %v4189
    %v5216 = vunpack.c.h.b16 %v4189
    %v5217 = vunpack.c.l.b16 %v4190
    %v5218 = vunpack.c.h.b16 %v4190
    %v5219 = vunpack.c.l.b16 %v4191
    %v5220 = vunpack.c.h.b16 %v4191
    %v5221 = vunpack.c.l.b16 %v4192
    %v5222 = vunpack.c.h.b16 %v4192
    %v5223 = vunpack.c.l.b16 %v4193
    %v5224 = vunpack.c.h.b16 %v4193
    %v5225 = vunpack.c.l.b16 %v4194
    %v5226 = vunpack.c.h.b16 %v4194
    %v5227 = vunpack.c.l.b16 %v4195
    %v5228 = vunpack.c.h.b16 %v4195
    %v5229 = vunpack.c.l.b16 %v4196
    %v5230 = vunpack.c.h.b16 %v4196
    %v5231 = vunpack.c.l.b16 %v4197
    %v5232 = vunpack.c.h.b16 %v4197
    %v5233 = vunpack.c.l.b16 %v4198
    %v5234 = vunpack.c.h.b16 %v4198
    %v5235 = vunpack.c.l.b16 %v4199
    %v5236 = vunpack.c.h.b16 %v4199
    %v5237 = vunpack.c.l.b16 %v4200
    %v5238 = vunpack.c.h.b16 %v4200
    %v5239 = vunpack.c.l.b16 %v4201
    %v5240 = vunpack.c.h.b16 %v4201
    %v5241 = vpack.c.b16 %v5125, %v5121
    %v5242 = vpack.c.b16 %v5126, %v5122
    %v5243 = vpack.c.b16 %v5127, %v5123
    %v5244 = vpack.c.b16 %v5128, %v5124
    %v5245 = vpack.c.b16 %v5133, %v5129
    %v5246 = vpack.c.b16 %v5134, %v5130
    %v5247 = vpack.c.b16 %v5135, %v5131
    %v5248 = vpack.c.b16 %v5136, %v5132
    %v5249 = vpack.c.b16 %v5141, %v5137
    %v5250 = vpack.c.b16 %v5142, %v5138
    %v5251 = vpack.c.b16 %v5143, %v5139
    %v5252 = vpack.c.b16 %v5144, %v5140
    %v5253 = vpack.c.b16 %v5149, %v5145
    %v5254 = vpack.c.b16 %v5150, %v5146
    %v5255 = vpack.c.b16 %v5151, %v5147
    %v5256 = vpack.c.b16 %v5152, %v5148
    %v5257 = vpack.c.b16 %v5157, %v5153
    %v5258 = vpack.c.b16 %v5158, %v5154
    %v5259 = vpack.c.b16 %v5159, %v5155
    %v5260 = vpack.c.b16 %v5160, %v5156
    %v5261 = vpack.c.b16 %v5165, %v5161
    %v5262 = vpack.c.b16 %v5166, %v5162
    %v5263 = vpack.c.b16 %v5167, %v5163
    %v5264 = vpack.c.b16 %v5168, %v5164
    %v5265 = vpack.c.b16 %v5173, %v5169
    %v5266 = vpack.c.b16 %v5174, %v5170
    %v5267 = vpack.c.b16 %v5175, %v5171
    %v5268 = vpack.c.b16 %v5176, %v5172
    %v5269 = vpack.c.b16 %v5181, %v5177
    %v5270 = vpack.c.b16 %v5182, %v5178
    %v5271 = vpack.c.b16 %v5183, %v5179
    %v5272 = vpack.c.b16 %v5184, %v5180
    %v5273 = vpack.c.b16 %v5189, %v5185
    %v5274 = vpack.c.b16 %v5190, %v5186
    %v5275 = vpack.c.b16 %v5191, %v5187
    %v5276 = vpack.c.b16 %v5192, %v5188
    %v5277 = vpack.c.b16 %v5197, %v5193
    %v5278 = vpack.c.b16 %v5198, %v5194
    %v5279 = vpack.c.b16 %v5199, %v5195
    %v5280 = vpack.c.b16 %v5200, %v5196
    %v5281 = vpack.c.b16 %v5205, %v5201
    %v5282 = vpack.c.b16 %v5206, %v5202
    %v5283 = vpack.c.b16 %v5207, %v5203
    %v5284 = vpack.c.b16 %v5208, %v5204
    %v5285 = vpack.c.b16 %v5213, %v5209
    %v5286 = vpack.c.b16 %v5214, %v5210
    %v5287 = vpack.c.b16 %v5215, %v5211
    %v5288 = vpack.c.b16 %v5216, %v5212
    %v5289 = vpack.c.b16 %v5221, %v5217
    %v5290 = vpack.c.b16 %v5222, %v5218
    %v5291 = vpack.c.b16 %v5223, %v5219
    %v5292 = vpack.c.b16 %v5224, %v5220
    %v5293 = vpack.c.b16 %v5229, %v5225
    %v5294 = vpack.c.b16 %v5230, %v5226
    %v5295 = vpack.c.b16 %v5231, %v5227
    %v5296 = vpack.c.b16 %v5232, %v5228
    %v5297 = vpack.c.b16 %v5237, %v5233
    %v5298 = vpack.c.b16 %v5238, %v5234
    %v5299 = vpack.c.b16 %v5239, %v5235
    %v5300 = vpack.c.b16 %v5240, %v5236
    %v5362 = vsel %vm4635, %v5059, 0
    %5364 = vmatpush.bf16.msra.mxu0 %v5269
    %5365 = vmatpush.bf16.msra.mxu0 %v5265
    %5366 = vmatpush.bf16.msra.mxu0 %v5261
    %5367 = vmatpush.bf16.msra.mxu0 %v5257
    %5368 = vmatpush.bf16.msra.mxu0 %v5253
    %5369 = vmatpush.bf16.msra.mxu0 %v5249
    %5370 = vmatpush.bf16.msra.mxu0 %v5245
    %5371 = vmatpush.bf16.msra.mxu0 %v5241
    %5372 = vmatmul.bf16.gmra.mxu0 %v5058
    %v5373 = vpop.f32.mrf.mxu0
    %v5374 = vadd.f32 %v4719, %v5373
    %v5375 = vpop.f32.mrf.mxu0
    %v5376 = vadd.f32 %v4721, %v5375
    %5377 = vmatmul.bf16.gmra.mxu0 %v4311
    %v5378 = vpop.f32.mrf.mxu0
    %v5379 = vadd.f32 %v4724, %v5378
    %v5380 = vpop.f32.mrf.mxu0
    %v5381 = vadd.f32 %v4726, %v5380
    %5382 = vmatmul.bf16.gmra.mxu0 %v4313
    %v5383 = vpop.f32.mrf.mxu0
    %v5384 = vadd.f32 %v4729, %v5383
    %v5385 = vpop.f32.mrf.mxu0
    %v5386 = vadd.f32 %v4731, %v5385
    %5387 = vmatmul.bf16.gmra.mxu0 %v4315
    %v5388 = vpop.f32.mrf.mxu0
    %v5389 = vadd.f32 %v4734, %v5388
    %v5390 = vpop.f32.mrf.mxu0
    %v5391 = vadd.f32 %v4736, %v5390
    %5392 = vmatmul.bf16.gmra.mxu0 %v4317
    %v5393 = vpop.f32.mrf.mxu0
    %v5394 = vadd.f32 %v4739, %v5393
    %v5395 = vpop.f32.mrf.mxu0
    %v5396 = vadd.f32 %v4741, %v5395
    %5397 = vmatmul.bf16.gmra.mxu0 %v4319
    %v5398 = vpop.f32.mrf.mxu0
    %v5399 = vadd.f32 %v4744, %v5398
    %v5400 = vpop.f32.mrf.mxu0
    %v5401 = vadd.f32 %v4746, %v5400
    %5402 = vmatmul.bf16.gmra.mxu0 %v4321
    %v5403 = vpop.f32.mrf.mxu0
    %v5404 = vadd.f32 %v4749, %v5403
    %v5405 = vpop.f32.mrf.mxu0
    %v5406 = vadd.f32 %v4751, %v5405
    %5407 = vmatmul.bf16.gmra.mxu0 %v4323
    %v5408 = vpop.f32.mrf.mxu0
    %v5409 = vadd.f32 %v4754, %v5408
    %v5410 = vpop.f32.mrf.mxu0
    %v5411 = vadd.f32 %v4756, %v5410
    %5412 = vdwg.mxu0
    %5413 = vmatpush.bf16.msra.mxu0 0
    %5414 = vmatpush.bf16.msra.mxu0 %v5297
    %5415 = vmatpush.bf16.msra.mxu0 %v5293
    %5416 = vmatpush.bf16.msra.mxu0 %v5289
    %5417 = vmatpush.bf16.msra.mxu0 %v5285
    %5418 = vmatpush.bf16.msra.mxu0 %v5281
    %5419 = vmatpush.bf16.msra.mxu0 %v5277
    %5420 = vmatpush.bf16.msra.mxu0 %v5273
    %5421 = vmatmul.bf16.gmra.mxu0 %v5362
    %v5422 = vpop.f32.mrf.mxu0
    %v5423 = vadd.f32 %v5374, %v5422
    %v5424 = vpop.f32.mrf.mxu0
    %v5425 = vadd.f32 %v5376, %v5424
    %5426 = vmatmul.bf16.gmra.mxu0 %v4637
    %v5427 = vpop.f32.mrf.mxu0
    %v5428 = vadd.f32 %v5379, %v5427
    %v5429 = vpop.f32.mrf.mxu0
    %v5430 = vadd.f32 %v5381, %v5429
    %5431 = vmatmul.bf16.gmra.mxu0 %v4640
    %v5432 = vpop.f32.mrf.mxu0
    %v5433 = vadd.f32 %v5384, %v5432
    %v5434 = vpop.f32.mrf.mxu0
    %v5435 = vadd.f32 %v5386, %v5434
    %5436 = vmatmul.bf16.gmra.mxu0 %v4643
    %v5437 = vpop.f32.mrf.mxu0
    %v5438 = vadd.f32 %v5389, %v5437
    %v5439 = vpop.f32.mrf.mxu0
    %v5440 = vadd.f32 %v5391, %v5439
    %5441 = vmatmul.bf16.gmra.mxu0 %v4646
    %v5442 = vpop.f32.mrf.mxu0
    %v5443 = vadd.f32 %v5394, %v5442
    %v5444 = vpop.f32.mrf.mxu0
    %v5445 = vadd.f32 %v5396, %v5444
    %5446 = vmatmul.bf16.gmra.mxu0 %v4649
    %v5447 = vpop.f32.mrf.mxu0
    %v5448 = vadd.f32 %v5399, %v5447
    %v5449 = vpop.f32.mrf.mxu0
    %v5450 = vadd.f32 %v5401, %v5449
    %5451 = vmatmul.bf16.gmra.mxu0 %v4652
    %v5452 = vpop.f32.mrf.mxu0
    %v5453 = vadd.f32 %v5404, %v5452
    %v5454 = vpop.f32.mrf.mxu0
    %v5455 = vadd.f32 %v5406, %v5454
    %5456 = vmatmul.bf16.gmra.mxu0 %v4655
    %v5457 = vpop.f32.mrf.mxu0
    %v5458 = vadd.f32 %v5409, %v5457
    %v5459 = vpop.f32.mrf.mxu0
    %v5460 = vadd.f32 %v5411, %v5459
    %5461 = vdwg.mxu0
    %5462 = vmatpush.bf16.msra.mxu0 %v5270
    %5463 = vmatpush.bf16.msra.mxu0 %v5266
    %5464 = vmatpush.bf16.msra.mxu0 %v5262
    %5465 = vmatpush.bf16.msra.mxu0 %v5258
    %5466 = vmatpush.bf16.msra.mxu0 %v5254
    %5467 = vmatpush.bf16.msra.mxu0 %v5250
    %5468 = vmatpush.bf16.msra.mxu0 %v5246
    %5469 = vmatpush.bf16.msra.mxu0 %v5242
    %5470 = vmatmul.bf16.gmra.mxu0 %v5058
    %v5471 = vpop.f32.mrf.mxu0
    %v5472 = vadd.f32 %v4817, %v5471
    %v5473 = vpop.f32.mrf.mxu0
    %v5474 = vadd.f32 %v4819, %v5473
    %5475 = vmatmul.bf16.gmra.mxu0 %v4311
    %v5476 = vpop.f32.mrf.mxu0
    %v5477 = vadd.f32 %v4822, %v5476
    %v5478 = vpop.f32.mrf.mxu0
    %v5479 = vadd.f32 %v4824, %v5478
    %5480 = vmatmul.bf16.gmra.mxu0 %v4313
    %v5481 = vpop.f32.mrf.mxu0
    %v5482 = vadd.f32 %v4827, %v5481
    %v5483 = vpop.f32.mrf.mxu0
    %v5484 = vadd.f32 %v4829, %v5483
    %5485 = vmatmul.bf16.gmra.mxu0 %v4315
    %v5486 = vpop.f32.mrf.mxu0
    %v5487 = vadd.f32 %v4832, %v5486
    %v5488 = vpop.f32.mrf.mxu0
    %v5489 = vadd.f32 %v4834, %v5488
    %5490 = vmatmul.bf16.gmra.mxu0 %v4317
    %v5491 = vpop.f32.mrf.mxu0
    %v5492 = vadd.f32 %v4837, %v5491
    %v5493 = vpop.f32.mrf.mxu0
    %v5494 = vadd.f32 %v4839, %v5493
    %5495 = vmatmul.bf16.gmra.mxu0 %v4319
    %v5496 = vpop.f32.mrf.mxu0
    %v5497 = vadd.f32 %v4842, %v5496
    %v5498 = vpop.f32.mrf.mxu0
    %v5499 = vadd.f32 %v4844, %v5498
    %5500 = vmatmul.bf16.gmra.mxu0 %v4321
    %v5501 = vpop.f32.mrf.mxu0
    %v5502 = vadd.f32 %v4847, %v5501
    %v5503 = vpop.f32.mrf.mxu0
    %v5504 = vadd.f32 %v4849, %v5503
    %5505 = vmatmul.bf16.gmra.mxu0 %v4323
    %v5506 = vpop.f32.mrf.mxu0
    %v5507 = vadd.f32 %v4852, %v5506
    %v5508 = vpop.f32.mrf.mxu0
    %v5509 = vadd.f32 %v4854, %v5508
    %5510 = vdwg.mxu0
    %5511 = vmatpush.bf16.msra.mxu0 0
    %5512 = vmatpush.bf16.msra.mxu0 %v5298
    %5513 = vmatpush.bf16.msra.mxu0 %v5294
    %5514 = vmatpush.bf16.msra.mxu0 %v5290
    %5515 = vmatpush.bf16.msra.mxu0 %v5286
    %5516 = vmatpush.bf16.msra.mxu0 %v5282
    %5517 = vmatpush.bf16.msra.mxu0 %v5278
    %5518 = vmatpush.bf16.msra.mxu0 %v5274
    %5519 = vmatmul.bf16.gmra.mxu0 %v5362
    %v5520 = vpop.f32.mrf.mxu0
    %v5521 = vadd.f32 %v5472, %v5520
    %v5522 = vpop.f32.mrf.mxu0
    %v5523 = vadd.f32 %v5474, %v5522
    %5524 = vmatmul.bf16.gmra.mxu0 %v4637
    %v5525 = vpop.f32.mrf.mxu0
    %v5526 = vadd.f32 %v5477, %v5525
    %v5527 = vpop.f32.mrf.mxu0
    %v5528 = vadd.f32 %v5479, %v5527
    %5529 = vmatmul.bf16.gmra.mxu0 %v4640
    %v5530 = vpop.f32.mrf.mxu0
    %v5531 = vadd.f32 %v5482, %v5530
    %v5532 = vpop.f32.mrf.mxu0
    %v5533 = vadd.f32 %v5484, %v5532
    %5534 = vmatmul.bf16.gmra.mxu0 %v4643
    %v5535 = vpop.f32.mrf.mxu0
    %v5536 = vadd.f32 %v5487, %v5535
    %v5537 = vpop.f32.mrf.mxu0
    %v5538 = vadd.f32 %v5489, %v5537
    %5539 = vmatmul.bf16.gmra.mxu0 %v4646
    %v5540 = vpop.f32.mrf.mxu0
    %v5541 = vadd.f32 %v5492, %v5540
    %v5542 = vpop.f32.mrf.mxu0
    %v5543 = vadd.f32 %v5494, %v5542
    %5544 = vmatmul.bf16.gmra.mxu0 %v4649
    %v5545 = vpop.f32.mrf.mxu0
    %v5546 = vadd.f32 %v5497, %v5545
    %v5547 = vpop.f32.mrf.mxu0
    %v5548 = vadd.f32 %v5499, %v5547
    %5549 = vmatmul.bf16.gmra.mxu0 %v4652
    %v5550 = vpop.f32.mrf.mxu0
    %v5551 = vadd.f32 %v5502, %v5550
    %v5552 = vpop.f32.mrf.mxu0
    %v5553 = vadd.f32 %v5504, %v5552
    %5554 = vmatmul.bf16.gmra.mxu0 %v4655
    %v5555 = vpop.f32.mrf.mxu0
    %v5556 = vadd.f32 %v5507, %v5555
    %v5557 = vpop.f32.mrf.mxu0
    %v5558 = vadd.f32 %v5509, %v5557
    %5559 = vdwg.mxu0
    %5560 = vmatpush.bf16.msra.mxu0 %v5271
    %5561 = vmatpush.bf16.msra.mxu0 %v5267
    %5562 = vmatpush.bf16.msra.mxu0 %v5263
    %5563 = vmatpush.bf16.msra.mxu0 %v5259
    %5564 = vmatpush.bf16.msra.mxu0 %v5255
    %5565 = vmatpush.bf16.msra.mxu0 %v5251
    %5566 = vmatpush.bf16.msra.mxu0 %v5247
    %5567 = vmatpush.bf16.msra.mxu0 %v5243
    %5568 = vmatmul.bf16.gmra.mxu0 %v5058
    %v5569 = vpop.f32.mrf.mxu0
    %v5570 = vadd.f32 %v4915, %v5569
    %v5571 = vpop.f32.mrf.mxu0
    %v5572 = vadd.f32 %v4917, %v5571
    %5573 = vmatmul.bf16.gmra.mxu0 %v4311
    %v5574 = vpop.f32.mrf.mxu0
    %v5575 = vadd.f32 %v4920, %v5574
    %v5576 = vpop.f32.mrf.mxu0
    %v5577 = vadd.f32 %v4922, %v5576
    %5578 = vmatmul.bf16.gmra.mxu0 %v4313
    %v5579 = vpop.f32.mrf.mxu0
    %v5580 = vadd.f32 %v4925, %v5579
    %v5581 = vpop.f32.mrf.mxu0
    %v5582 = vadd.f32 %v4927, %v5581
    %5583 = vmatmul.bf16.gmra.mxu0 %v4315
    %v5584 = vpop.f32.mrf.mxu0
    %v5585 = vadd.f32 %v4930, %v5584
    %v5586 = vpop.f32.mrf.mxu0
    %v5587 = vadd.f32 %v4932, %v5586
    %5588 = vmatmul.bf16.gmra.mxu0 %v4317
    %v5589 = vpop.f32.mrf.mxu0
    %v5590 = vadd.f32 %v4935, %v5589
    %v5591 = vpop.f32.mrf.mxu0
    %v5592 = vadd.f32 %v4937, %v5591
    %5593 = vmatmul.bf16.gmra.mxu0 %v4319
    %v5594 = vpop.f32.mrf.mxu0
    %v5595 = vadd.f32 %v4940, %v5594
    %v5596 = vpop.f32.mrf.mxu0
    %v5597 = vadd.f32 %v4942, %v5596
    %5598 = vmatmul.bf16.gmra.mxu0 %v4321
    %v5599 = vpop.f32.mrf.mxu0
    %v5600 = vadd.f32 %v4945, %v5599
    %v5601 = vpop.f32.mrf.mxu0
    %v5602 = vadd.f32 %v4947, %v5601
    %5603 = vmatmul.bf16.gmra.mxu0 %v4323
    %v5604 = vpop.f32.mrf.mxu0
    %v5605 = vadd.f32 %v4950, %v5604
    %v5606 = vpop.f32.mrf.mxu0
    %v5607 = vadd.f32 %v4952, %v5606
    %5608 = vdwg.mxu0
    %5609 = vmatpush.bf16.msra.mxu0 0
    %5610 = vmatpush.bf16.msra.mxu0 %v5299
    %5611 = vmatpush.bf16.msra.mxu0 %v5295
    %5612 = vmatpush.bf16.msra.mxu0 %v5291
    %5613 = vmatpush.bf16.msra.mxu0 %v5287
    %5614 = vmatpush.bf16.msra.mxu0 %v5283
    %5615 = vmatpush.bf16.msra.mxu0 %v5279
    %5616 = vmatpush.bf16.msra.mxu0 %v5275
    %5617 = vmatmul.bf16.gmra.mxu0 %v5362
    %v5618 = vpop.f32.mrf.mxu0
    %v5619 = vadd.f32 %v5570, %v5618
    %v5620 = vpop.f32.mrf.mxu0
    %v5621 = vadd.f32 %v5572, %v5620
    %5622 = vmatmul.bf16.gmra.mxu0 %v4637
    %v5623 = vpop.f32.mrf.mxu0
    %v5624 = vadd.f32 %v5575, %v5623
    %v5625 = vpop.f32.mrf.mxu0
    %v5626 = vadd.f32 %v5577, %v5625
    %5627 = vmatmul.bf16.gmra.mxu0 %v4640
    %v5628 = vpop.f32.mrf.mxu0
    %v5629 = vadd.f32 %v5580, %v5628
    %v5630 = vpop.f32.mrf.mxu0
    %v5631 = vadd.f32 %v5582, %v5630
    %5632 = vmatmul.bf16.gmra.mxu0 %v4643
    %v5633 = vpop.f32.mrf.mxu0
    %v5634 = vadd.f32 %v5585, %v5633
    %v5635 = vpop.f32.mrf.mxu0
    %v5636 = vadd.f32 %v5587, %v5635
    %5637 = vmatmul.bf16.gmra.mxu0 %v4646
    %v5638 = vpop.f32.mrf.mxu0
    %v5639 = vadd.f32 %v5590, %v5638
    %v5640 = vpop.f32.mrf.mxu0
    %v5641 = vadd.f32 %v5592, %v5640
    %5642 = vmatmul.bf16.gmra.mxu0 %v4649
    %v5643 = vpop.f32.mrf.mxu0
    %v5644 = vadd.f32 %v5595, %v5643
    %v5645 = vpop.f32.mrf.mxu0
    %v5646 = vadd.f32 %v5597, %v5645
    %5647 = vmatmul.bf16.gmra.mxu0 %v4652
    %v5648 = vpop.f32.mrf.mxu0
    %v5649 = vadd.f32 %v5600, %v5648
    %v5650 = vpop.f32.mrf.mxu0
    %v5651 = vadd.f32 %v5602, %v5650
    %5652 = vmatmul.bf16.gmra.mxu0 %v4655
    %v5653 = vpop.f32.mrf.mxu0
    %v5654 = vadd.f32 %v5605, %v5653
    %v5655 = vpop.f32.mrf.mxu0
    %v5656 = vadd.f32 %v5607, %v5655
    %5657 = vdwg.mxu0
    %5658 = vmatpush.bf16.msra.mxu0 %v5272
    %5659 = vmatpush.bf16.msra.mxu0 %v5268
    %5660 = vmatpush.bf16.msra.mxu0 %v5264
    %5661 = vmatpush.bf16.msra.mxu0 %v5260
    %5662 = vmatpush.bf16.msra.mxu0 %v5256
    %5663 = vmatpush.bf16.msra.mxu0 %v5252
    %5664 = vmatpush.bf16.msra.mxu0 %v5248
    %5665 = vmatpush.bf16.msra.mxu0 %v5244
    %5666 = vmatmul.bf16.gmra.mxu0 %v5058
    %v5667 = vpop.f32.mrf.mxu0
    %v5668 = vadd.f32 %v5013, %v5667
    %v5669 = vpop.f32.mrf.mxu0
    %v5670 = vadd.f32 %v5015, %v5669
    %5671 = vmatmul.bf16.gmra.mxu0 %v4311
    %v5672 = vpop.f32.mrf.mxu0
    %v5673 = vadd.f32 %v5018, %v5672
    %v5674 = vpop.f32.mrf.mxu0
    %v5675 = vadd.f32 %v5020, %v5674
    %5676 = vmatmul.bf16.gmra.mxu0 %v4313
    %v5677 = vpop.f32.mrf.mxu0
    %v5678 = vadd.f32 %v5023, %v5677
    %v5679 = vpop.f32.mrf.mxu0
    %v5680 = vadd.f32 %v5025, %v5679
    %5681 = vmatmul.bf16.gmra.mxu0 %v4315
    %v5682 = vpop.f32.mrf.mxu0
    %v5683 = vadd.f32 %v5028, %v5682
    %v5684 = vpop.f32.mrf.mxu0
    %v5685 = vadd.f32 %v5030, %v5684
    %5686 = vmatmul.bf16.gmra.mxu0 %v4317
    %v5687 = vpop.f32.mrf.mxu0
    %v5688 = vadd.f32 %v5033, %v5687
    %v5689 = vpop.f32.mrf.mxu0
    %v5690 = vadd.f32 %v5035, %v5689
    %5691 = vmatmul.bf16.gmra.mxu0 %v4319
    %v5692 = vpop.f32.mrf.mxu0
    %v5693 = vadd.f32 %v5038, %v5692
    %v5694 = vpop.f32.mrf.mxu0
    %v5695 = vadd.f32 %v5040, %v5694
    %5696 = vmatmul.bf16.gmra.mxu0 %v4321
    %v5697 = vpop.f32.mrf.mxu0
    %v5698 = vadd.f32 %v5043, %v5697
    %v5699 = vpop.f32.mrf.mxu0
    %v5700 = vadd.f32 %v5045, %v5699
    %5701 = vmatmul.bf16.gmra.mxu0 %v4323
    %v5702 = vpop.f32.mrf.mxu0
    %v5703 = vadd.f32 %v5048, %v5702
    %v5704 = vpop.f32.mrf.mxu0
    %v5705 = vadd.f32 %v5050, %v5704
    %5706 = vdwg.mxu0
    %5707 = vmatpush.bf16.msra.mxu0 0
    %5708 = vmatpush.bf16.msra.mxu0 %v5300
    %5709 = vmatpush.bf16.msra.mxu0 %v5296
    %5710 = vmatpush.bf16.msra.mxu0 %v5292
    %5711 = vmatpush.bf16.msra.mxu0 %v5288
    %5712 = vmatpush.bf16.msra.mxu0 %v5284
    %5713 = vmatpush.bf16.msra.mxu0 %v5280
    %5714 = vmatpush.bf16.msra.mxu0 %v5276
    %5715 = vmatmul.bf16.gmra.mxu0 %v5362
    %v5716 = vpop.f32.mrf.mxu0
    %v5717 = vadd.f32 %v5668, %v5716
    %v5718 = vpop.f32.mrf.mxu0
    %v5719 = vadd.f32 %v5670, %v5718
    %5720 = vmatmul.bf16.gmra.mxu0 %v4637
    %v5721 = vpop.f32.mrf.mxu0
    %v5722 = vadd.f32 %v5673, %v5721
    %v5723 = vpop.f32.mrf.mxu0
    %v5724 = vadd.f32 %v5675, %v5723
    %5725 = vmatmul.bf16.gmra.mxu0 %v4640
    %v5726 = vpop.f32.mrf.mxu0
    %v5727 = vadd.f32 %v5678, %v5726
    %v5728 = vpop.f32.mrf.mxu0
    %v5729 = vadd.f32 %v5680, %v5728
    %5730 = vmatmul.bf16.gmra.mxu0 %v4643
    %v5731 = vpop.f32.mrf.mxu0
    %v5732 = vadd.f32 %v5683, %v5731
    %v5733 = vpop.f32.mrf.mxu0
    %v5734 = vadd.f32 %v5685, %v5733
    %5735 = vmatmul.bf16.gmra.mxu0 %v4646
    %v5736 = vpop.f32.mrf.mxu0
    %v5737 = vadd.f32 %v5688, %v5736
    %v5738 = vpop.f32.mrf.mxu0
    %v5739 = vadd.f32 %v5690, %v5738
    %5740 = vmatmul.bf16.gmra.mxu0 %v4649
    %v5741 = vpop.f32.mrf.mxu0
    %v5742 = vadd.f32 %v5693, %v5741
    %v5743 = vpop.f32.mrf.mxu0
    %v5744 = vadd.f32 %v5695, %v5743
    %5745 = vmatmul.bf16.gmra.mxu0 %v4652
    %v5746 = vpop.f32.mrf.mxu0
    %v5747 = vadd.f32 %v5698, %v5746
    %v5748 = vpop.f32.mrf.mxu0
    %v5749 = vadd.f32 %v5700, %v5748
    %5750 = vmatmul.bf16.gmra.mxu0 %v4655
    %v5751 = vpop.f32.mrf.mxu0
    %v5752 = vadd.f32 %v5703, %v5751
    %v5753 = vpop.f32.mrf.mxu0
    %v5754 = vadd.f32 %v5705, %v5753
    %5755 = vdwg.mxu0
    %s5756 = scalar_lea.vmem [#allocation6], 960
    %v5757 = vld [vmem:[%s5756] sm:$0xff]
    %v5758 = vld [vmem:[%s5756 + $0x8] sm:$0xff]
    %v5759 = vld [vmem:[%s5756 + $0x10] sm:$0xff]
    %v5760 = vld [vmem:[%s5756 + $0x18] sm:$0xff]
    %v5761 = vld [vmem:[%s5756 + $0x20] sm:$0xff]
    %v5762 = vld [vmem:[%s5756 + $0x28] sm:$0xff]
    %v5763 = vld [vmem:[%s5756 + $0x30] sm:$0xff]
    %v5764 = vld [vmem:[%s5756 + $0x38] sm:$0xff]
    %v5765 = vld [vmem:[%s5756 + $0x40] sm:$0xff]
    %v5766 = vld [vmem:[%s5756 + $0x48] sm:$0xff]
    %v5767 = vld [vmem:[%s5756 + $0x50] sm:$0xff]
    %v5768 = vld [vmem:[%s5756 + $0x58] sm:$0xff]
    %v5769 = vld [vmem:[%s5756 + $0x60] sm:$0xff]
    %v5770 = vld [vmem:[%s5756 + $0x68] sm:$0xff]
    %v5771 = vld [vmem:[%s5756 + $0x70] sm:$0xff]
    %v5772 = vld [vmem:[%s5756 + $0x78] sm:$0xff]
    %v5773 = vld [vmem:[%s5756 + $0x80] sm:$0xff]
    %v5774 = vld [vmem:[%s5756 + $0x88] sm:$0xff]
    %v5775 = vld [vmem:[%s5756 + $0x90] sm:$0xff]
    %v5776 = vld [vmem:[%s5756 + $0x98] sm:$0xff]
    %v5777 = vld [vmem:[%s5756 + $0xa0] sm:$0xff]
    %v5778 = vld [vmem:[%s5756 + $0xa8] sm:$0xff]
    %v5779 = vld [vmem:[%s5756 + $0xb0] sm:$0xff]
    %v5780 = vld [vmem:[%s5756 + $0xb8] sm:$0xff]
    %v5781 = vld [vmem:[%s5756 + $0xc0] sm:$0xff]
    %v5782 = vld [vmem:[%s5756 + $0xc8] sm:$0xff]
    %v5783 = vld [vmem:[%s5756 + $0xd0] sm:$0xff]
    %v5784 = vld [vmem:[%s5756 + $0xd8] sm:$0xff]
    %v5785 = vld [vmem:[%s5756 + $0xe0] sm:$0xff]
    %v5786 = vld [vmem:[%s5756 + $0xe8] sm:$0xff]
    %v5787 = vld [vmem:[%s5756 + $0xf0] sm:$0xff]
    %v5788 = vld [vmem:[%s5756 + $0xf8] sm:$0xff]
    %v5789 = vld [vmem:[%s5756 + $0x100] sm:$0xff]
    %v5790 = vld [vmem:[%s5756 + $0x108] sm:$0xff]
    %v5791 = vld [vmem:[%s5756 + $0x110] sm:$0xff]
    %v5792 = vld [vmem:[%s5756 + $0x118] sm:$0xff]
    %v5793 = vld [vmem:[%s5756 + $0x120] sm:$0xff]
    %v5794 = vld [vmem:[%s5756 + $0x128] sm:$0xff]
    %v5795 = vld [vmem:[%s5756 + $0x130] sm:$0xff]
    %v5796 = vld [vmem:[%s5756 + $0x138] sm:$0xff]
    %v5797 = vld [vmem:[%s5756 + $0x140] sm:$0xff]
    %v5798 = vld [vmem:[%s5756 + $0x148] sm:$0xff]
    %v5799 = vld [vmem:[%s5756 + $0x150] sm:$0xff]
    %v5800 = vld [vmem:[%s5756 + $0x158] sm:$0xff]
    %v5801 = vld [vmem:[%s5756 + $0x160] sm:$0xff]
    %v5802 = vld [vmem:[%s5756 + $0x168] sm:$0xff]
    %v5803 = vld [vmem:[%s5756 + $0x170] sm:$0xff]
    %v5804 = vld [vmem:[%s5756 + $0x178] sm:$0xff]
    %v5805 = vld [vmem:[%s5756 + $0x180] sm:$0xff]
    %v5806 = vld [vmem:[%s5756 + $0x188] sm:$0xff]
    %v5807 = vld [vmem:[%s5756 + $0x190] sm:$0xff]
    %v5808 = vld [vmem:[%s5756 + $0x198] sm:$0xff]
    %v5809 = vld [vmem:[%s5756 + $0x1a0] sm:$0xff]
    %v5810 = vld [vmem:[%s5756 + $0x1a8] sm:$0xff]
    %v5811 = vld [vmem:[%s5756 + $0x1b0] sm:$0xff]
    %v5812 = vld [vmem:[%s5756 + $0x1b8] sm:$0xff]
    %v5813 = vld [vmem:[%s5756 + $0x1c0] sm:$0xff]
    %v5814 = vld [vmem:[%s5756 + $0x1c8] sm:$0xff]
    %v5815 = vld [vmem:[%s5756 + $0x1d0] sm:$0xff]
    %v5816 = vld [vmem:[%s5756 + $0x1d8] sm:$0xff]
    %v5819 = vunpack.c.l.b16 %v4136
    %v5820 = vunpack.c.h.b16 %v4136
    %v5821 = vunpack.c.l.b16 %v4137
    %v5822 = vunpack.c.h.b16 %v4137
    %v5823 = vpack.c.b16 %v5821, %v5819
    %v5824 = vpack.c.b16 %v5822, %v5820
    %v5886 = vunpack.c.l.b16 %v5757
    %v5887 = vunpack.c.h.b16 %v5757
    %v5888 = vunpack.c.l.b16 %v5758
    %v5889 = vunpack.c.h.b16 %v5758
    %v5890 = vunpack.c.l.b16 %v5759
    %v5891 = vunpack.c.h.b16 %v5759
    %v5892 = vunpack.c.l.b16 %v5760
    %v5893 = vunpack.c.h.b16 %v5760
    %v5894 = vunpack.c.l.b16 %v5761
    %v5895 = vunpack.c.h.b16 %v5761
    %v5896 = vunpack.c.l.b16 %v5762
    %v5897 = vunpack.c.h.b16 %v5762
    %v5898 = vunpack.c.l.b16 %v5763
    %v5899 = vunpack.c.h.b16 %v5763
    %v5900 = vunpack.c.l.b16 %v5764
    %v5901 = vunpack.c.h.b16 %v5764
    %v5902 = vunpack.c.l.b16 %v5765
    %v5903 = vunpack.c.h.b16 %v5765
    %v5904 = vunpack.c.l.b16 %v5766
    %v5905 = vunpack.c.h.b16 %v5766
    %v5906 = vunpack.c.l.b16 %v5767
    %v5907 = vunpack.c.h.b16 %v5767
    %v5908 = vunpack.c.l.b16 %v5768
    %v5909 = vunpack.c.h.b16 %v5768
    %v5910 = vunpack.c.l.b16 %v5769
    %v5911 = vunpack.c.h.b16 %v5769
    %v5912 = vunpack.c.l.b16 %v5770
    %v5913 = vunpack.c.h.b16 %v5770
    %v5914 = vunpack.c.l.b16 %v5771
    %v5915 = vunpack.c.h.b16 %v5771
    %v5916 = vunpack.c.l.b16 %v5772
    %v5917 = vunpack.c.h.b16 %v5772
    %v5918 = vunpack.c.l.b16 %v5773
    %v5919 = vunpack.c.h.b16 %v5773
    %v5920 = vunpack.c.l.b16 %v5774
    %v5921 = vunpack.c.h.b16 %v5774
    %v5922 = vunpack.c.l.b16 %v5775
    %v5923 = vunpack.c.h.b16 %v5775
    %v5924 = vunpack.c.l.b16 %v5776
    %v5925 = vunpack.c.h.b16 %v5776
    %v5926 = vunpack.c.l.b16 %v5777
    %v5927 = vunpack.c.h.b16 %v5777
    %v5928 = vunpack.c.l.b16 %v5778
    %v5929 = vunpack.c.h.b16 %v5778
    %v5930 = vunpack.c.l.b16 %v5779
    %v5931 = vunpack.c.h.b16 %v5779
    %v5932 = vunpack.c.l.b16 %v5780
    %v5933 = vunpack.c.h.b16 %v5780
    %v5934 = vunpack.c.l.b16 %v5781
    %v5935 = vunpack.c.h.b16 %v5781
    %v5936 = vunpack.c.l.b16 %v5782
    %v5937 = vunpack.c.h.b16 %v5782
    %v5938 = vunpack.c.l.b16 %v5783
    %v5939 = vunpack.c.h.b16 %v5783
    %v5940 = vunpack.c.l.b16 %v5784
    %v5941 = vunpack.c.h.b16 %v5784
    %v5942 = vunpack.c.l.b16 %v5785
    %v5943 = vunpack.c.h.b16 %v5785
    %v5944 = vunpack.c.l.b16 %v5786
    %v5945 = vunpack.c.h.b16 %v5786
    %v5946 = vunpack.c.l.b16 %v5787
    %v5947 = vunpack.c.h.b16 %v5787
    %v5948 = vunpack.c.l.b16 %v5788
    %v5949 = vunpack.c.h.b16 %v5788
    %v5950 = vunpack.c.l.b16 %v5789
    %v5951 = vunpack.c.h.b16 %v5789
    %v5952 = vunpack.c.l.b16 %v5790
    %v5953 = vunpack.c.h.b16 %v5790
    %v5954 = vunpack.c.l.b16 %v5791
    %v5955 = vunpack.c.h.b16 %v5791
    %v5956 = vunpack.c.l.b16 %v5792
    %v5957 = vunpack.c.h.b16 %v5792
    %v5958 = vunpack.c.l.b16 %v5793
    %v5959 = vunpack.c.h.b16 %v5793
    %v5960 = vunpack.c.l.b16 %v5794
    %v5961 = vunpack.c.h.b16 %v5794
    %v5962 = vunpack.c.l.b16 %v5795
    %v5963 = vunpack.c.h.b16 %v5795
    %v5964 = vunpack.c.l.b16 %v5796
    %v5965 = vunpack.c.h.b16 %v5796
    %v5966 = vunpack.c.l.b16 %v5797
    %v5967 = vunpack.c.h.b16 %v5797
    %v5968 = vunpack.c.l.b16 %v5798
    %v5969 = vunpack.c.h.b16 %v5798
    %v5970 = vunpack.c.l.b16 %v5799
    %v5971 = vunpack.c.h.b16 %v5799
    %v5972 = vunpack.c.l.b16 %v5800
    %v5973 = vunpack.c.h.b16 %v5800
    %v5974 = vunpack.c.l.b16 %v5801
    %v5975 = vunpack.c.h.b16 %v5801
    %v5976 = vunpack.c.l.b16 %v5802
    %v5977 = vunpack.c.h.b16 %v5802
    %v5978 = vunpack.c.l.b16 %v5803
    %v5979 = vunpack.c.h.b16 %v5803
    %v5980 = vunpack.c.l.b16 %v5804
    %v5981 = vunpack.c.h.b16 %v5804
    %v5982 = vunpack.c.l.b16 %v5805
    %v5983 = vunpack.c.h.b16 %v5805
    %v5984 = vunpack.c.l.b16 %v5806
    %v5985 = vunpack.c.h.b16 %v5806
    %v5986 = vunpack.c.l.b16 %v5807
    %v5987 = vunpack.c.h.b16 %v5807
    %v5988 = vunpack.c.l.b16 %v5808
    %v5989 = vunpack.c.h.b16 %v5808
    %v5990 = vunpack.c.l.b16 %v5809
    %v5991 = vunpack.c.h.b16 %v5809
    %v5992 = vunpack.c.l.b16 %v5810
    %v5993 = vunpack.c.h.b16 %v5810
    %v5994 = vunpack.c.l.b16 %v5811
    %v5995 = vunpack.c.h.b16 %v5811
    %v5996 = vunpack.c.l.b16 %v5812
    %v5997 = vunpack.c.h.b16 %v5812
    %v5998 = vunpack.c.l.b16 %v5813
    %v5999 = vunpack.c.h.b16 %v5813
    %v6000 = vunpack.c.l.b16 %v5814
    %v6001 = vunpack.c.h.b16 %v5814
    %v6002 = vunpack.c.l.b16 %v5815
    %v6003 = vunpack.c.h.b16 %v5815
    %v6004 = vunpack.c.l.b16 %v5816
    %v6005 = vunpack.c.h.b16 %v5816
    %v6006 = vpack.c.b16 %v5890, %v5886
    %v6007 = vpack.c.b16 %v5891, %v5887
    %v6008 = vpack.c.b16 %v5892, %v5888
    %v6009 = vpack.c.b16 %v5893, %v5889
    %v6010 = vpack.c.b16 %v5898, %v5894
    %v6011 = vpack.c.b16 %v5899, %v5895
    %v6012 = vpack.c.b16 %v5900, %v5896
    %v6013 = vpack.c.b16 %v5901, %v5897
    %v6014 = vpack.c.b16 %v5906, %v5902
    %v6015 = vpack.c.b16 %v5907, %v5903
    %v6016 = vpack.c.b16 %v5908, %v5904
    %v6017 = vpack.c.b16 %v5909, %v5905
    %v6018 = vpack.c.b16 %v5914, %v5910
    %v6019 = vpack.c.b16 %v5915, %v5911
    %v6020 = vpack.c.b16 %v5916, %v5912
    %v6021 = vpack.c.b16 %v5917, %v5913
    %v6022 = vpack.c.b16 %v5922, %v5918
    %v6023 = vpack.c.b16 %v5923, %v5919
    %v6024 = vpack.c.b16 %v5924, %v5920
    %v6025 = vpack.c.b16 %v5925, %v5921
    %v6026 = vpack.c.b16 %v5930, %v5926
    %v6027 = vpack.c.b16 %v5931, %v5927
    %v6028 = vpack.c.b16 %v5932, %v5928
    %v6029 = vpack.c.b16 %v5933, %v5929
    %v6030 = vpack.c.b16 %v5938, %v5934
    %v6031 = vpack.c.b16 %v5939, %v5935
    %v6032 = vpack.c.b16 %v5940, %v5936
    %v6033 = vpack.c.b16 %v5941, %v5937
    %v6034 = vpack.c.b16 %v5946, %v5942
    %v6035 = vpack.c.b16 %v5947, %v5943
    %v6036 = vpack.c.b16 %v5948, %v5944
    %v6037 = vpack.c.b16 %v5949, %v5945
    %v6038 = vpack.c.b16 %v5954, %v5950
    %v6039 = vpack.c.b16 %v5955, %v5951
    %v6040 = vpack.c.b16 %v5956, %v5952
    %v6041 = vpack.c.b16 %v5957, %v5953
    %v6042 = vpack.c.b16 %v5962, %v5958
    %v6043 = vpack.c.b16 %v5963, %v5959
    %v6044 = vpack.c.b16 %v5964, %v5960
    %v6045 = vpack.c.b16 %v5965, %v5961
    %v6046 = vpack.c.b16 %v5970, %v5966
    %v6047 = vpack.c.b16 %v5971, %v5967
    %v6048 = vpack.c.b16 %v5972, %v5968
    %v6049 = vpack.c.b16 %v5973, %v5969
    %v6050 = vpack.c.b16 %v5978, %v5974
    %v6051 = vpack.c.b16 %v5979, %v5975
    %v6052 = vpack.c.b16 %v5980, %v5976
    %v6053 = vpack.c.b16 %v5981, %v5977
    %v6054 = vpack.c.b16 %v5986, %v5982
    %v6055 = vpack.c.b16 %v5987, %v5983
    %v6056 = vpack.c.b16 %v5988, %v5984
    %v6057 = vpack.c.b16 %v5989, %v5985
    %v6058 = vpack.c.b16 %v5994, %v5990
    %v6059 = vpack.c.b16 %v5995, %v5991
    %v6060 = vpack.c.b16 %v5996, %v5992
    %v6061 = vpack.c.b16 %v5997, %v5993
    %v6062 = vpack.c.b16 %v6002, %v5998
    %v6063 = vpack.c.b16 %v6003, %v5999
    %v6064 = vpack.c.b16 %v6004, %v6000
    %v6065 = vpack.c.b16 %v6005, %v6001
    %v6127 = vsel %vm4635, %v5824, 0
    %6129 = vmatpush.bf16.msra.mxu0 %v6034
    %6130 = vmatpush.bf16.msra.mxu0 %v6030
    %6131 = vmatpush.bf16.msra.mxu0 %v6026
    %6132 = vmatpush.bf16.msra.mxu0 %v6022
    %6133 = vmatpush.bf16.msra.mxu0 %v6018
    %6134 = vmatpush.bf16.msra.mxu0 %v6014
    %6135 = vmatpush.bf16.msra.mxu0 %v6010
    %6136 = vmatpush.bf16.msra.mxu0 %v6006
    %6137 = vmatmul.bf16.gmra.mxu0 %v4313
    %v6138 = vpop.f32.mrf.mxu0
    %v6139 = vadd.f32 0.0, %v6138
    %v6140 = vpop.f32.mrf.mxu0
    %v6141 = vadd.f32 0.0, %v6140
    %6142 = vmatmul.bf16.gmra.mxu0 %v4315
    %v6143 = vpop.f32.mrf.mxu0
    %v6144 = vadd.f32 0.0, %v6143
    %v6145 = vpop.f32.mrf.mxu0
    %v6146 = vadd.f32 0.0, %v6145
    %6147 = vmatmul.bf16.gmra.mxu0 %v4317
    %v6148 = vpop.f32.mrf.mxu0
    %v6149 = vadd.f32 0.0, %v6148
    %v6150 = vpop.f32.mrf.mxu0
    %v6151 = vadd.f32 0.0, %v6150
    %6152 = vmatmul.bf16.gmra.mxu0 %v4319
    %v6153 = vpop.f32.mrf.mxu0
    %v6154 = vadd.f32 0.0, %v6153
    %v6155 = vpop.f32.mrf.mxu0
    %v6156 = vadd.f32 0.0, %v6155
    %6157 = vmatmul.bf16.gmra.mxu0 %v4321
    %v6158 = vpop.f32.mrf.mxu0
    %v6159 = vadd.f32 0.0, %v6158
    %v6160 = vpop.f32.mrf.mxu0
    %v6161 = vadd.f32 0.0, %v6160
    %6162 = vmatmul.bf16.gmra.mxu0 %v4323
    %v6163 = vpop.f32.mrf.mxu0
    %v6164 = vadd.f32 0.0, %v6163
    %v6165 = vpop.f32.mrf.mxu0
    %v6166 = vadd.f32 0.0, %v6165
    %6167 = vmatmul.bf16.gmra.mxu0 %v4325
    %v6168 = vpop.f32.mrf.mxu0
    %v6169 = vadd.f32 0.0, %v6168
    %v6170 = vpop.f32.mrf.mxu0
    %v6171 = vadd.f32 0.0, %v6170
    %6172 = vmatmul.bf16.gmra.mxu0 %v5823
    %v6173 = vpop.f32.mrf.mxu0
    %v6174 = vadd.f32 0.0, %v6173
    %v6175 = vpop.f32.mrf.mxu0
    %v6176 = vadd.f32 0.0, %v6175
    %6177 = vdwg.mxu0
    %6178 = vmatpush.bf16.msra.mxu0 0
    %6179 = vmatpush.bf16.msra.mxu0 %v6062
    %6180 = vmatpush.bf16.msra.mxu0 %v6058
    %6181 = vmatpush.bf16.msra.mxu0 %v6054
    %6182 = vmatpush.bf16.msra.mxu0 %v6050
    %6183 = vmatpush.bf16.msra.mxu0 %v6046
    %6184 = vmatpush.bf16.msra.mxu0 %v6042
    %6185 = vmatpush.bf16.msra.mxu0 %v6038
    %6186 = vmatmul.bf16.gmra.mxu0 %v4640
    %v6187 = vpop.f32.mrf.mxu0
    %v6188 = vadd.f32 %v6139, %v6187
    %v6189 = vpop.f32.mrf.mxu0
    %v6190 = vadd.f32 %v6141, %v6189
    %6191 = vmatmul.bf16.gmra.mxu0 %v4643
    %v6192 = vpop.f32.mrf.mxu0
    %v6193 = vadd.f32 %v6144, %v6192
    %v6194 = vpop.f32.mrf.mxu0
    %v6195 = vadd.f32 %v6146, %v6194
    %6196 = vmatmul.bf16.gmra.mxu0 %v4646
    %v6197 = vpop.f32.mrf.mxu0
    %v6198 = vadd.f32 %v6149, %v6197
    %v6199 = vpop.f32.mrf.mxu0
    %v6200 = vadd.f32 %v6151, %v6199
    %6201 = vmatmul.bf16.gmra.mxu0 %v4649
    %v6202 = vpop.f32.mrf.mxu0
    %v6203 = vadd.f32 %v6154, %v6202
    %v6204 = vpop.f32.mrf.mxu0
    %v6205 = vadd.f32 %v6156, %v6204
    %6206 = vmatmul.bf16.gmra.mxu0 %v4652
    %v6207 = vpop.f32.mrf.mxu0
    %v6208 = vadd.f32 %v6159, %v6207
    %v6209 = vpop.f32.mrf.mxu0
    %v6210 = vadd.f32 %v6161, %v6209
    %6211 = vmatmul.bf16.gmra.mxu0 %v4655
    %v6212 = vpop.f32.mrf.mxu0
    %v6213 = vadd.f32 %v6164, %v6212
    %v6214 = vpop.f32.mrf.mxu0
    %v6215 = vadd.f32 %v6166, %v6214
    %6216 = vmatmul.bf16.gmra.mxu0 %v4658
    %v6217 = vpop.f32.mrf.mxu0
    %v6218 = vadd.f32 %v6169, %v6217
    %v6219 = vpop.f32.mrf.mxu0
    %v6220 = vadd.f32 %v6171, %v6219
    %6221 = vmatmul.bf16.gmra.mxu0 %v6127
    %v6222 = vpop.f32.mrf.mxu0
    %v6223 = vadd.f32 %v6174, %v6222
    %v6224 = vpop.f32.mrf.mxu0
    %v6225 = vadd.f32 %v6176, %v6224
    %6226 = vdwg.mxu0
    %6227 = vmatpush.bf16.msra.mxu0 %v6035
    %6228 = vmatpush.bf16.msra.mxu0 %v6031
    %6229 = vmatpush.bf16.msra.mxu0 %v6027
    %6230 = vmatpush.bf16.msra.mxu0 %v6023
    %6231 = vmatpush.bf16.msra.mxu0 %v6019
    %6232 = vmatpush.bf16.msra.mxu0 %v6015
    %6233 = vmatpush.bf16.msra.mxu0 %v6011
    %6234 = vmatpush.bf16.msra.mxu0 %v6007
    %6235 = vmatmul.bf16.gmra.mxu0 %v4313
    %v6236 = vpop.f32.mrf.mxu0
    %v6237 = vadd.f32 0.0, %v6236
    %v6238 = vpop.f32.mrf.mxu0
    %v6239 = vadd.f32 0.0, %v6238
    %6240 = vmatmul.bf16.gmra.mxu0 %v4315
    %v6241 = vpop.f32.mrf.mxu0
    %v6242 = vadd.f32 0.0, %v6241
    %v6243 = vpop.f32.mrf.mxu0
    %v6244 = vadd.f32 0.0, %v6243
    %6245 = vmatmul.bf16.gmra.mxu0 %v4317
    %v6246 = vpop.f32.mrf.mxu0
    %v6247 = vadd.f32 0.0, %v6246
    %v6248 = vpop.f32.mrf.mxu0
    %v6249 = vadd.f32 0.0, %v6248
    %6250 = vmatmul.bf16.gmra.mxu0 %v4319
    %v6251 = vpop.f32.mrf.mxu0
    %v6252 = vadd.f32 0.0, %v6251
    %v6253 = vpop.f32.mrf.mxu0
    %v6254 = vadd.f32 0.0, %v6253
    %6255 = vmatmul.bf16.gmra.mxu0 %v4321
    %v6256 = vpop.f32.mrf.mxu0
    %v6257 = vadd.f32 0.0, %v6256
    %v6258 = vpop.f32.mrf.mxu0
    %v6259 = vadd.f32 0.0, %v6258
    %6260 = vmatmul.bf16.gmra.mxu0 %v4323
    %v6261 = vpop.f32.mrf.mxu0
    %v6262 = vadd.f32 0.0, %v6261
    %v6263 = vpop.f32.mrf.mxu0
    %v6264 = vadd.f32 0.0, %v6263
    %6265 = vmatmul.bf16.gmra.mxu0 %v4325
    %v6266 = vpop.f32.mrf.mxu0
    %v6267 = vadd.f32 0.0, %v6266
    %v6268 = vpop.f32.mrf.mxu0
    %v6269 = vadd.f32 0.0, %v6268
    %6270 = vmatmul.bf16.gmra.mxu0 %v5823
    %v6271 = vpop.f32.mrf.mxu0
    %v6272 = vadd.f32 0.0, %v6271
    %v6273 = vpop.f32.mrf.mxu0
    %v6274 = vadd.f32 0.0, %v6273
    %6275 = vdwg.mxu0
    %6276 = vmatpush.bf16.msra.mxu0 0
    %6277 = vmatpush.bf16.msra.mxu0 %v6063
    %6278 = vmatpush.bf16.msra.mxu0 %v6059
    %6279 = vmatpush.bf16.msra.mxu0 %v6055
    %6280 = vmatpush.bf16.msra.mxu0 %v6051
    %6281 = vmatpush.bf16.msra.mxu0 %v6047
    %6282 = vmatpush.bf16.msra.mxu0 %v6043
    %6283 = vmatpush.bf16.msra.mxu0 %v6039
    %6284 = vmatmul.bf16.gmra.mxu0 %v4640
    %v6285 = vpop.f32.mrf.mxu0
    %v6286 = vadd.f32 %v6237, %v6285
    %v6287 = vpop.f32.mrf.mxu0
    %v6288 = vadd.f32 %v6239, %v6287
    %6289 = vmatmul.bf16.gmra.mxu0 %v4643
    %v6290 = vpop.f32.mrf.mxu0
    %v6291 = vadd.f32 %v6242, %v6290
    %v6292 = vpop.f32.mrf.mxu0
    %v6293 = vadd.f32 %v6244, %v6292
    %6294 = vmatmul.bf16.gmra.mxu0 %v4646
    %v6295 = vpop.f32.mrf.mxu0
    %v6296 = vadd.f32 %v6247, %v6295
    %v6297 = vpop.f32.mrf.mxu0
    %v6298 = vadd.f32 %v6249, %v6297
    %6299 = vmatmul.bf16.gmra.mxu0 %v4649
    %v6300 = vpop.f32.mrf.mxu0
    %v6301 = vadd.f32 %v6252, %v6300
    %v6302 = vpop.f32.mrf.mxu0
    %v6303 = vadd.f32 %v6254, %v6302
    %6304 = vmatmul.bf16.gmra.mxu0 %v4652
    %v6305 = vpop.f32.mrf.mxu0
    %v6306 = vadd.f32 %v6257, %v6305
    %v6307 = vpop.f32.mrf.mxu0
    %v6308 = vadd.f32 %v6259, %v6307
    %6309 = vmatmul.bf16.gmra.mxu0 %v4655
    %v6310 = vpop.f32.mrf.mxu0
    %v6311 = vadd.f32 %v6262, %v6310
    %v6312 = vpop.f32.mrf.mxu0
    %v6313 = vadd.f32 %v6264, %v6312
    %6314 = vmatmul.bf16.gmra.mxu0 %v4658
    %v6315 = vpop.f32.mrf.mxu0
    %v6316 = vadd.f32 %v6267, %v6315
    %v6317 = vpop.f32.mrf.mxu0
    %v6318 = vadd.f32 %v6269, %v6317
    %6319 = vmatmul.bf16.gmra.mxu0 %v6127
    %v6320 = vpop.f32.mrf.mxu0
    %v6321 = vadd.f32 %v6272, %v6320
    %v6322 = vpop.f32.mrf.mxu0
    %v6323 = vadd.f32 %v6274, %v6322
    %6324 = vdwg.mxu0
    %6325 = vmatpush.bf16.msra.mxu0 %v6036
    %6326 = vmatpush.bf16.msra.mxu0 %v6032
    %6327 = vmatpush.bf16.msra.mxu0 %v6028
    %6328 = vmatpush.bf16.msra.mxu0 %v6024
    %6329 = vmatpush.bf16.msra.mxu0 %v6020
    %6330 = vmatpush.bf16.msra.mxu0 %v6016
    %6331 = vmatpush.bf16.msra.mxu0 %v6012
    %6332 = vmatpush.bf16.msra.mxu0 %v6008
    %6333 = vmatmul.bf16.gmra.mxu0 %v4313
    %v6334 = vpop.f32.mrf.mxu0
    %v6335 = vadd.f32 0.0, %v6334
    %v6336 = vpop.f32.mrf.mxu0
    %v6337 = vadd.f32 0.0, %v6336
    %6338 = vmatmul.bf16.gmra.mxu0 %v4315
    %v6339 = vpop.f32.mrf.mxu0
    %v6340 = vadd.f32 0.0, %v6339
    %v6341 = vpop.f32.mrf.mxu0
    %v6342 = vadd.f32 0.0, %v6341
    %6343 = vmatmul.bf16.gmra.mxu0 %v4317
    %v6344 = vpop.f32.mrf.mxu0
    %v6345 = vadd.f32 0.0, %v6344
    %v6346 = vpop.f32.mrf.mxu0
    %v6347 = vadd.f32 0.0, %v6346
    %6348 = vmatmul.bf16.gmra.mxu0 %v4319
    %v6349 = vpop.f32.mrf.mxu0
    %v6350 = vadd.f32 0.0, %v6349
    %v6351 = vpop.f32.mrf.mxu0
    %v6352 = vadd.f32 0.0, %v6351
    %6353 = vmatmul.bf16.gmra.mxu0 %v4321
    %v6354 = vpop.f32.mrf.mxu0
    %v6355 = vadd.f32 0.0, %v6354
    %v6356 = vpop.f32.mrf.mxu0
    %v6357 = vadd.f32 0.0, %v6356
    %6358 = vmatmul.bf16.gmra.mxu0 %v4323
    %v6359 = vpop.f32.mrf.mxu0
    %v6360 = vadd.f32 0.0, %v6359
    %v6361 = vpop.f32.mrf.mxu0
    %v6362 = vadd.f32 0.0, %v6361
    %6363 = vmatmul.bf16.gmra.mxu0 %v4325
    %v6364 = vpop.f32.mrf.mxu0
    %v6365 = vadd.f32 0.0, %v6364
    %v6366 = vpop.f32.mrf.mxu0
    %v6367 = vadd.f32 0.0, %v6366
    %6368 = vmatmul.bf16.gmra.mxu0 %v5823
    %v6369 = vpop.f32.mrf.mxu0
    %v6370 = vadd.f32 0.0, %v6369
    %v6371 = vpop.f32.mrf.mxu0
    %v6372 = vadd.f32 0.0, %v6371
    %6373 = vdwg.mxu0
    %6374 = vmatpush.bf16.msra.mxu0 0
    %6375 = vmatpush.bf16.msra.mxu0 %v6064
    %6376 = vmatpush.bf16.msra.mxu0 %v6060
    %6377 = vmatpush.bf16.msra.mxu0 %v6056
    %6378 = vmatpush.bf16.msra.mxu0 %v6052
    %6379 = vmatpush.bf16.msra.mxu0 %v6048
    %6380 = vmatpush.bf16.msra.mxu0 %v6044
    %6381 = vmatpush.bf16.msra.mxu0 %v6040
    %6382 = vmatmul.bf16.gmra.mxu0 %v4640
    %v6383 = vpop.f32.mrf.mxu0
    %v6384 = vadd.f32 %v6335, %v6383
    %v6385 = vpop.f32.mrf.mxu0
    %v6386 = vadd.f32 %v6337, %v6385
    %6387 = vmatmul.bf16.gmra.mxu0 %v4643
    %v6388 = vpop.f32.mrf.mxu0
    %v6389 = vadd.f32 %v6340, %v6388
    %v6390 = vpop.f32.mrf.mxu0
    %v6391 = vadd.f32 %v6342, %v6390
    %6392 = vmatmul.bf16.gmra.mxu0 %v4646
    %v6393 = vpop.f32.mrf.mxu0
    %v6394 = vadd.f32 %v6345, %v6393
    %v6395 = vpop.f32.mrf.mxu0
    %v6396 = vadd.f32 %v6347, %v6395
    %6397 = vmatmul.bf16.gmra.mxu0 %v4649
    %v6398 = vpop.f32.mrf.mxu0
    %v6399 = vadd.f32 %v6350, %v6398
    %v6400 = vpop.f32.mrf.mxu0
    %v6401 = vadd.f32 %v6352, %v6400
    %6402 = vmatmul.bf16.gmra.mxu0 %v4652
    %v6403 = vpop.f32.mrf.mxu0
    %v6404 = vadd.f32 %v6355, %v6403
    %v6405 = vpop.f32.mrf.mxu0
    %v6406 = vadd.f32 %v6357, %v6405
    %6407 = vmatmul.bf16.gmra.mxu0 %v4655
    %v6408 = vpop.f32.mrf.mxu0
    %v6409 = vadd.f32 %v6360, %v6408
    %v6410 = vpop.f32.mrf.mxu0
    %v6411 = vadd.f32 %v6362, %v6410
    %6412 = vmatmul.bf16.gmra.mxu0 %v4658
    %v6413 = vpop.f32.mrf.mxu0
    %v6414 = vadd.f32 %v6365, %v6413
    %v6415 = vpop.f32.mrf.mxu0
    %v6416 = vadd.f32 %v6367, %v6415
    %6417 = vmatmul.bf16.gmra.mxu0 %v6127
    %v6418 = vpop.f32.mrf.mxu0
    %v6419 = vadd.f32 %v6370, %v6418
    %v6420 = vpop.f32.mrf.mxu0
    %v6421 = vadd.f32 %v6372, %v6420
    %6422 = vdwg.mxu0
    %6423 = vmatpush.bf16.msra.mxu0 %v6037
    %6424 = vmatpush.bf16.msra.mxu0 %v6033
    %6425 = vmatpush.bf16.msra.mxu0 %v6029
    %6426 = vmatpush.bf16.msra.mxu0 %v6025
    %6427 = vmatpush.bf16.msra.mxu0 %v6021
    %6428 = vmatpush.bf16.msra.mxu0 %v6017
    %6429 = vmatpush.bf16.msra.mxu0 %v6013
    %6430 = vmatpush.bf16.msra.mxu0 %v6009
    %6431 = vmatmul.bf16.gmra.mxu0 %v4313
    %v6432 = vpop.f32.mrf.mxu0
    %v6433 = vadd.f32 0.0, %v6432
    %v6434 = vpop.f32.mrf.mxu0
    %v6435 = vadd.f32 0.0, %v6434
    %6436 = vmatmul.bf16.gmra.mxu0 %v4315
    %v6437 = vpop.f32.mrf.mxu0
    %v6438 = vadd.f32 0.0, %v6437
    %v6439 = vpop.f32.mrf.mxu0
    %v6440 = vadd.f32 0.0, %v6439
    %6441 = vmatmul.bf16.gmra.mxu0 %v4317
    %v6442 = vpop.f32.mrf.mxu0
    %v6443 = vadd.f32 0.0, %v6442
    %v6444 = vpop.f32.mrf.mxu0
    %v6445 = vadd.f32 0.0, %v6444
    %6446 = vmatmul.bf16.gmra.mxu0 %v4319
    %v6447 = vpop.f32.mrf.mxu0
    %v6448 = vadd.f32 0.0, %v6447
    %v6449 = vpop.f32.mrf.mxu0
    %v6450 = vadd.f32 0.0, %v6449
    %6451 = vmatmul.bf16.gmra.mxu0 %v4321
    %v6452 = vpop.f32.mrf.mxu0
    %v6453 = vadd.f32 0.0, %v6452
    %v6454 = vpop.f32.mrf.mxu0
    %v6455 = vadd.f32 0.0, %v6454
    %6456 = vmatmul.bf16.gmra.mxu0 %v4323
    %v6457 = vpop.f32.mrf.mxu0
    %v6458 = vadd.f32 0.0, %v6457
    %v6459 = vpop.f32.mrf.mxu0
    %v6460 = vadd.f32 0.0, %v6459
    %6461 = vmatmul.bf16.gmra.mxu0 %v4325
    %v6462 = vpop.f32.mrf.mxu0
    %v6463 = vadd.f32 0.0, %v6462
    %v6464 = vpop.f32.mrf.mxu0
    %v6465 = vadd.f32 0.0, %v6464
    %6466 = vmatmul.bf16.gmra.mxu0 %v5823
    %v6467 = vpop.f32.mrf.mxu0
    %v6468 = vadd.f32 0.0, %v6467
    %v6469 = vpop.f32.mrf.mxu0
    %v6470 = vadd.f32 0.0, %v6469
    %6471 = vdwg.mxu0
    %6472 = vmatpush.bf16.msra.mxu0 0
    %6473 = vmatpush.bf16.msra.mxu0 %v6065
    %6474 = vmatpush.bf16.msra.mxu0 %v6061
    %6475 = vmatpush.bf16.msra.mxu0 %v6057
    %6476 = vmatpush.bf16.msra.mxu0 %v6053
    %6477 = vmatpush.bf16.msra.mxu0 %v6049
    %6478 = vmatpush.bf16.msra.mxu0 %v6045
    %6479 = vmatpush.bf16.msra.mxu0 %v6041
    %6480 = vmatmul.bf16.gmra.mxu0 %v4640
    %v6481 = vpop.f32.mrf.mxu0
    %v6482 = vadd.f32 %v6433, %v6481
    %v6483 = vpop.f32.mrf.mxu0
    %v6484 = vadd.f32 %v6435, %v6483
    %6485 = vmatmul.bf16.gmra.mxu0 %v4643
    %v6486 = vpop.f32.mrf.mxu0
    %v6487 = vadd.f32 %v6438, %v6486
    %v6488 = vpop.f32.mrf.mxu0
    %v6489 = vadd.f32 %v6440, %v6488
    %6490 = vmatmul.bf16.gmra.mxu0 %v4646
    %v6491 = vpop.f32.mrf.mxu0
    %v6492 = vadd.f32 %v6443, %v6491
    %v6493 = vpop.f32.mrf.mxu0
    %v6494 = vadd.f32 %v6445, %v6493
    %6495 = vmatmul.bf16.gmra.mxu0 %v4649
    %v6496 = vpop.f32.mrf.mxu0
    %v6497 = vadd.f32 %v6448, %v6496
    %v6498 = vpop.f32.mrf.mxu0
    %v6499 = vadd.f32 %v6450, %v6498
    %6500 = vmatmul.bf16.gmra.mxu0 %v4652
    %v6501 = vpop.f32.mrf.mxu0
    %v6502 = vadd.f32 %v6453, %v6501
    %v6503 = vpop.f32.mrf.mxu0
    %v6504 = vadd.f32 %v6455, %v6503
    %6505 = vmatmul.bf16.gmra.mxu0 %v4655
    %v6506 = vpop.f32.mrf.mxu0
    %v6507 = vadd.f32 %v6458, %v6506
    %v6508 = vpop.f32.mrf.mxu0
    %v6509 = vadd.f32 %v6460, %v6508
    %6510 = vmatmul.bf16.gmra.mxu0 %v4658
    %v6511 = vpop.f32.mrf.mxu0
    %v6512 = vadd.f32 %v6463, %v6511
    %v6513 = vpop.f32.mrf.mxu0
    %v6514 = vadd.f32 %v6465, %v6513
    %6515 = vmatmul.bf16.gmra.mxu0 %v6127
    %v6516 = vpop.f32.mrf.mxu0
    %v6517 = vadd.f32 %v6468, %v6516
    %v6518 = vpop.f32.mrf.mxu0
    %v6519 = vadd.f32 %v6470, %v6518
    %6520 = vdwg.mxu0
    %v6521 = vadd.f32 %v5423, %v6188
    %v6522 = vadd.f32 %v5521, %v6286
    %v6523 = vadd.f32 %v5619, %v6384
    %v6524 = vadd.f32 %v5717, %v6482
    %v6525 = vadd.f32 %v5425, %v6190
    %v6526 = vadd.f32 %v5523, %v6288
    %v6527 = vadd.f32 %v5621, %v6386
    %v6528 = vadd.f32 %v5719, %v6484
    %v6529 = vadd.f32 %v5428, %v6193
    %v6530 = vadd.f32 %v5526, %v6291
    %v6531 = vadd.f32 %v5624, %v6389
    %v6532 = vadd.f32 %v5722, %v6487
    %v6533 = vadd.f32 %v5430, %v6195
    %v6534 = vadd.f32 %v5528, %v6293
    %v6535 = vadd.f32 %v5626, %v6391
    %v6536 = vadd.f32 %v5724, %v6489
    %v6537 = vadd.f32 %v5433, %v6198
    %v6538 = vadd.f32 %v5531, %v6296
    %v6539 = vadd.f32 %v5629, %v6394
    %v6540 = vadd.f32 %v5727, %v6492
    %v6541 = vadd.f32 %v5435, %v6200
    %v6542 = vadd.f32 %v5533, %v6298
    %v6543 = vadd.f32 %v5631, %v6396
    %v6544 = vadd.f32 %v5729, %v6494
    %v6545 = vadd.f32 %v5438, %v6203
    %v6546 = vadd.f32 %v5536, %v6301
    %v6547 = vadd.f32 %v5634, %v6399
    %v6548 = vadd.f32 %v5732, %v6497
    %v6549 = vadd.f32 %v5440, %v6205
    %v6550 = vadd.f32 %v5538, %v6303
    %v6551 = vadd.f32 %v5636, %v6401
    %v6552 = vadd.f32 %v5734, %v6499
    %v6553 = vadd.f32 %v5443, %v6208
    %v6554 = vadd.f32 %v5541, %v6306
    %v6555 = vadd.f32 %v5639, %v6404
    %v6556 = vadd.f32 %v5737, %v6502
    %v6557 = vadd.f32 %v5445, %v6210
    %v6558 = vadd.f32 %v5543, %v6308
    %v6559 = vadd.f32 %v5641, %v6406
    %v6560 = vadd.f32 %v5739, %v6504
    %v6561 = vadd.f32 %v5448, %v6213
    %v6562 = vadd.f32 %v5546, %v6311
    %v6563 = vadd.f32 %v5644, %v6409
    %v6564 = vadd.f32 %v5742, %v6507
    %v6565 = vadd.f32 %v5450, %v6215
    %v6566 = vadd.f32 %v5548, %v6313
    %v6567 = vadd.f32 %v5646, %v6411
    %v6568 = vadd.f32 %v5744, %v6509
    %v6569 = vadd.f32 %v5453, %v6218
    %v6570 = vadd.f32 %v5551, %v6316
    %v6571 = vadd.f32 %v5649, %v6414
    %v6572 = vadd.f32 %v5747, %v6512
    %v6573 = vadd.f32 %v5455, %v6220
    %v6574 = vadd.f32 %v5553, %v6318
    %v6575 = vadd.f32 %v5651, %v6416
    %v6576 = vadd.f32 %v5749, %v6514
    %v6577 = vadd.f32 %v5458, %v6223
    %v6578 = vadd.f32 %v5556, %v6321
    %v6579 = vadd.f32 %v5654, %v6419
    %v6580 = vadd.f32 %v5752, %v6517
    %v6581 = vadd.f32 %v5460, %v6225
    %v6582 = vadd.f32 %v5558, %v6323
    %v6583 = vadd.f32 %v5656, %v6421
    %v6584 = vadd.f32 %v5754, %v6519
    %s6585 = scalar_lea.vmem [#allocation6], 1440
    %v6586 = vld [vmem:[%s6585] sm:$0xff]
    %v6587 = vld [vmem:[%s6585 + $0x8] sm:$0xff]
    %v6588 = vld [vmem:[%s6585 + $0x10] sm:$0xff]
    %v6589 = vld [vmem:[%s6585 + $0x18] sm:$0xff]
    %v6590 = vld [vmem:[%s6585 + $0x20] sm:$0xff]
    %v6591 = vld [vmem:[%s6585 + $0x28] sm:$0xff]
    %v6592 = vld [vmem:[%s6585 + $0x30] sm:$0xff]
    %v6593 = vld [vmem:[%s6585 + $0x38] sm:$0xff]
    %v6594 = vld [vmem:[%s6585 + $0x40] sm:$0xff]
    %v6595 = vld [vmem:[%s6585 + $0x48] sm:$0xff]
    %v6596 = vld [vmem:[%s6585 + $0x50] sm:$0xff]
    %v6597 = vld [vmem:[%s6585 + $0x58] sm:$0xff]
    %v6598 = vld [vmem:[%s6585 + $0x60] sm:$0xff]
    %v6599 = vld [vmem:[%s6585 + $0x68] sm:$0xff]
    %v6600 = vld [vmem:[%s6585 + $0x70] sm:$0xff]
    %v6601 = vld [vmem:[%s6585 + $0x78] sm:$0xff]
    %v6602 = vld [vmem:[%s6585 + $0x80] sm:$0xff]
    %v6603 = vld [vmem:[%s6585 + $0x88] sm:$0xff]
    %v6604 = vld [vmem:[%s6585 + $0x90] sm:$0xff]
    %v6605 = vld [vmem:[%s6585 + $0x98] sm:$0xff]
    %v6606 = vld [vmem:[%s6585 + $0xa0] sm:$0xff]
    %v6607 = vld [vmem:[%s6585 + $0xa8] sm:$0xff]
    %v6608 = vld [vmem:[%s6585 + $0xb0] sm:$0xff]
    %v6609 = vld [vmem:[%s6585 + $0xb8] sm:$0xff]
    %v6610 = vld [vmem:[%s6585 + $0xc0] sm:$0xff]
    %v6611 = vld [vmem:[%s6585 + $0xc8] sm:$0xff]
    %v6612 = vld [vmem:[%s6585 + $0xd0] sm:$0xff]
    %v6613 = vld [vmem:[%s6585 + $0xd8] sm:$0xff]
    %v6614 = vld [vmem:[%s6585 + $0xe0] sm:$0xff]
    %v6615 = vld [vmem:[%s6585 + $0xe8] sm:$0xff]
    %v6616 = vld [vmem:[%s6585 + $0xf0] sm:$0xff]
    %v6617 = vld [vmem:[%s6585 + $0xf8] sm:$0xff]
    %v6618 = vld [vmem:[%s6585 + $0x100] sm:$0xff]
    %v6619 = vld [vmem:[%s6585 + $0x108] sm:$0xff]
    %v6620 = vld [vmem:[%s6585 + $0x110] sm:$0xff]
    %v6621 = vld [vmem:[%s6585 + $0x118] sm:$0xff]
    %v6622 = vld [vmem:[%s6585 + $0x120] sm:$0xff]
    %v6623 = vld [vmem:[%s6585 + $0x128] sm:$0xff]
    %v6624 = vld [vmem:[%s6585 + $0x130] sm:$0xff]
    %v6625 = vld [vmem:[%s6585 + $0x138] sm:$0xff]
    %v6626 = vld [vmem:[%s6585 + $0x140] sm:$0xff]
    %v6627 = vld [vmem:[%s6585 + $0x148] sm:$0xff]
    %v6628 = vld [vmem:[%s6585 + $0x150] sm:$0xff]
    %v6629 = vld [vmem:[%s6585 + $0x158] sm:$0xff]
    %v6630 = vld [vmem:[%s6585 + $0x160] sm:$0xff]
    %v6631 = vld [vmem:[%s6585 + $0x168] sm:$0xff]
    %v6632 = vld [vmem:[%s6585 + $0x170] sm:$0xff]
    %v6633 = vld [vmem:[%s6585 + $0x178] sm:$0xff]
    %v6634 = vld [vmem:[%s6585 + $0x180] sm:$0xff]
    %v6635 = vld [vmem:[%s6585 + $0x188] sm:$0xff]
    %v6636 = vld [vmem:[%s6585 + $0x190] sm:$0xff]
    %v6637 = vld [vmem:[%s6585 + $0x198] sm:$0xff]
    %v6638 = vld [vmem:[%s6585 + $0x1a0] sm:$0xff]
    %v6639 = vld [vmem:[%s6585 + $0x1a8] sm:$0xff]
    %v6640 = vld [vmem:[%s6585 + $0x1b0] sm:$0xff]
    %v6641 = vld [vmem:[%s6585 + $0x1b8] sm:$0xff]
    %v6642 = vld [vmem:[%s6585 + $0x1c0] sm:$0xff]
    %v6643 = vld [vmem:[%s6585 + $0x1c8] sm:$0xff]
    %v6644 = vld [vmem:[%s6585 + $0x1d0] sm:$0xff]
    %v6645 = vld [vmem:[%s6585 + $0x1d8] sm:$0xff]
    %v6648 = vunpack.c.l.b16 %v4138
    %v6649 = vunpack.c.h.b16 %v4138
    %v6650 = vunpack.c.l.b16 %v4139
    %v6651 = vunpack.c.h.b16 %v4139
    %v6652 = vpack.c.b16 %v6650, %v6648
    %v6653 = vpack.c.b16 %v6651, %v6649
    %v6715 = vunpack.c.l.b16 %v6586
    %v6716 = vunpack.c.h.b16 %v6586
    %v6717 = vunpack.c.l.b16 %v6587
    %v6718 = vunpack.c.h.b16 %v6587
    %v6719 = vunpack.c.l.b16 %v6588
    %v6720 = vunpack.c.h.b16 %v6588
    %v6721 = vunpack.c.l.b16 %v6589
    %v6722 = vunpack.c.h.b16 %v6589
    %v6723 = vunpack.c.l.b16 %v6590
    %v6724 = vunpack.c.h.b16 %v6590
    %v6725 = vunpack.c.l.b16 %v6591
    %v6726 = vunpack.c.h.b16 %v6591
    %v6727 = vunpack.c.l.b16 %v6592
    %v6728 = vunpack.c.h.b16 %v6592
    %v6729 = vunpack.c.l.b16 %v6593
    %v6730 = vunpack.c.h.b16 %v6593
    %v6731 = vunpack.c.l.b16 %v6594
    %v6732 = vunpack.c.h.b16 %v6594
    %v6733 = vunpack.c.l.b16 %v6595
    %v6734 = vunpack.c.h.b16 %v6595
    %v6735 = vunpack.c.l.b16 %v6596
    %v6736 = vunpack.c.h.b16 %v6596
    %v6737 = vunpack.c.l.b16 %v6597
    %v6738 = vunpack.c.h.b16 %v6597
    %v6739 = vunpack.c.l.b16 %v6598
    %v6740 = vunpack.c.h.b16 %v6598
    %v6741 = vunpack.c.l.b16 %v6599
    %v6742 = vunpack.c.h.b16 %v6599
    %v6743 = vunpack.c.l.b16 %v6600
    %v6744 = vunpack.c.h.b16 %v6600
    %v6745 = vunpack.c.l.b16 %v6601
    %v6746 = vunpack.c.h.b16 %v6601
    %v6747 = vunpack.c.l.b16 %v6602
    %v6748 = vunpack.c.h.b16 %v6602
    %v6749 = vunpack.c.l.b16 %v6603
    %v6750 = vunpack.c.h.b16 %v6603
    %v6751 = vunpack.c.l.b16 %v6604
    %v6752 = vunpack.c.h.b16 %v6604
    %v6753 = vunpack.c.l.b16 %v6605
    %v6754 = vunpack.c.h.b16 %v6605
    %v6755 = vunpack.c.l.b16 %v6606
    %v6756 = vunpack.c.h.b16 %v6606
    %v6757 = vunpack.c.l.b16 %v6607
    %v6758 = vunpack.c.h.b16 %v6607
    %v6759 = vunpack.c.l.b16 %v6608
    %v6760 = vunpack.c.h.b16 %v6608
    %v6761 = vunpack.c.l.b16 %v6609
    %v6762 = vunpack.c.h.b16 %v6609
    %v6763 = vunpack.c.l.b16 %v6610
    %v6764 = vunpack.c.h.b16 %v6610
    %v6765 = vunpack.c.l.b16 %v6611
    %v6766 = vunpack.c.h.b16 %v6611
    %v6767 = vunpack.c.l.b16 %v6612
    %v6768 = vunpack.c.h.b16 %v6612
    %v6769 = vunpack.c.l.b16 %v6613
    %v6770 = vunpack.c.h.b16 %v6613
    %v6771 = vunpack.c.l.b16 %v6614
    %v6772 = vunpack.c.h.b16 %v6614
    %v6773 = vunpack.c.l.b16 %v6615
    %v6774 = vunpack.c.h.b16 %v6615
    %v6775 = vunpack.c.l.b16 %v6616
    %v6776 = vunpack.c.h.b16 %v6616
    %v6777 = vunpack.c.l.b16 %v6617
    %v6778 = vunpack.c.h.b16 %v6617
    %v6779 = vunpack.c.l.b16 %v6618
    %v6780 = vunpack.c.h.b16 %v6618
    %v6781 = vunpack.c.l.b16 %v6619
    %v6782 = vunpack.c.h.b16 %v6619
    %v6783 = vunpack.c.l.b16 %v6620
    %v6784 = vunpack.c.h.b16 %v6620
    %v6785 = vunpack.c.l.b16 %v6621
    %v6786 = vunpack.c.h.b16 %v6621
    %v6787 = vunpack.c.l.b16 %v6622
    %v6788 = vunpack.c.h.b16 %v6622
    %v6789 = vunpack.c.l.b16 %v6623
    %v6790 = vunpack.c.h.b16 %v6623
    %v6791 = vunpack.c.l.b16 %v6624
    %v6792 = vunpack.c.h.b16 %v6624
    %v6793 = vunpack.c.l.b16 %v6625
    %v6794 = vunpack.c.h.b16 %v6625
    %v6795 = vunpack.c.l.b16 %v6626
    %v6796 = vunpack.c.h.b16 %v6626
    %v6797 = vunpack.c.l.b16 %v6627
    %v6798 = vunpack.c.h.b16 %v6627
    %v6799 = vunpack.c.l.b16 %v6628
    %v6800 = vunpack.c.h.b16 %v6628
    %v6801 = vunpack.c.l.b16 %v6629
    %v6802 = vunpack.c.h.b16 %v6629
    %v6803 = vunpack.c.l.b16 %v6630
    %v6804 = vunpack.c.h.b16 %v6630
    %v6805 = vunpack.c.l.b16 %v6631
    %v6806 = vunpack.c.h.b16 %v6631
    %v6807 = vunpack.c.l.b16 %v6632
    %v6808 = vunpack.c.h.b16 %v6632
    %v6809 = vunpack.c.l.b16 %v6633
    %v6810 = vunpack.c.h.b16 %v6633
    %v6811 = vunpack.c.l.b16 %v6634
    %v6812 = vunpack.c.h.b16 %v6634
    %v6813 = vunpack.c.l.b16 %v6635
    %v6814 = vunpack.c.h.b16 %v6635
    %v6815 = vunpack.c.l.b16 %v6636
    %v6816 = vunpack.c.h.b16 %v6636
    %v6817 = vunpack.c.l.b16 %v6637
    %v6818 = vunpack.c.h.b16 %v6637
    %v6819 = vunpack.c.l.b16 %v6638
    %v6820 = vunpack.c.h.b16 %v6638
    %v6821 = vunpack.c.l.b16 %v6639
    %v6822 = vunpack.c.h.b16 %v6639
    %v6823 = vunpack.c.l.b16 %v6640
    %v6824 = vunpack.c.h.b16 %v6640
    %v6825 = vunpack.c.l.b16 %v6641
    %v6826 = vunpack.c.h.b16 %v6641
    %v6827 = vunpack.c.l.b16 %v6642
    %v6828 = vunpack.c.h.b16 %v6642
    %v6829 = vunpack.c.l.b16 %v6643
    %v6830 = vunpack.c.h.b16 %v6643
    %v6831 = vunpack.c.l.b16 %v6644
    %v6832 = vunpack.c.h.b16 %v6644
    %v6833 = vunpack.c.l.b16 %v6645
    %v6834 = vunpack.c.h.b16 %v6645
    %v6835 = vpack.c.b16 %v6719, %v6715
    %v6836 = vpack.c.b16 %v6720, %v6716
    %v6837 = vpack.c.b16 %v6721, %v6717
    %v6838 = vpack.c.b16 %v6722, %v6718
    %v6839 = vpack.c.b16 %v6727, %v6723
    %v6840 = vpack.c.b16 %v6728, %v6724
    %v6841 = vpack.c.b16 %v6729, %v6725
    %v6842 = vpack.c.b16 %v6730, %v6726
    %v6843 = vpack.c.b16 %v6735, %v6731
    %v6844 = vpack.c.b16 %v6736, %v6732
    %v6845 = vpack.c.b16 %v6737, %v6733
    %v6846 = vpack.c.b16 %v6738, %v6734
    %v6847 = vpack.c.b16 %v6743, %v6739
    %v6848 = vpack.c.b16 %v6744, %v6740
    %v6849 = vpack.c.b16 %v6745, %v6741
    %v6850 = vpack.c.b16 %v6746, %v6742
    %v6851 = vpack.c.b16 %v6751, %v6747
    %v6852 = vpack.c.b16 %v6752, %v6748
    %v6853 = vpack.c.b16 %v6753, %v6749
    %v6854 = vpack.c.b16 %v6754, %v6750
    %v6855 = vpack.c.b16 %v6759, %v6755
    %v6856 = vpack.c.b16 %v6760, %v6756
    %v6857 = vpack.c.b16 %v6761, %v6757
    %v6858 = vpack.c.b16 %v6762, %v6758
    %v6859 = vpack.c.b16 %v6767, %v6763
    %v6860 = vpack.c.b16 %v6768, %v6764
    %v6861 = vpack.c.b16 %v6769, %v6765
    %v6862 = vpack.c.b16 %v6770, %v6766
    %v6863 = vpack.c.b16 %v6775, %v6771
    %v6864 = vpack.c.b16 %v6776, %v6772
    %v6865 = vpack.c.b16 %v6777, %v6773
    %v6866 = vpack.c.b16 %v6778, %v6774
    %v6867 = vpack.c.b16 %v6783, %v6779
    %v6868 = vpack.c.b16 %v6784, %v6780
    %v6869 = vpack.c.b16 %v6785, %v6781
    %v6870 = vpack.c.b16 %v6786, %v6782
    %v6871 = vpack.c.b16 %v6791, %v6787
    %v6872 = vpack.c.b16 %v6792, %v6788
    %v6873 = vpack.c.b16 %v6793, %v6789
    %v6874 = vpack.c.b16 %v6794, %v6790
    %v6875 = vpack.c.b16 %v6799, %v6795
    %v6876 = vpack.c.b16 %v6800, %v6796
    %v6877 = vpack.c.b16 %v6801, %v6797
    %v6878 = vpack.c.b16 %v6802, %v6798
    %v6879 = vpack.c.b16 %v6807, %v6803
    %v6880 = vpack.c.b16 %v6808, %v6804
    %v6881 = vpack.c.b16 %v6809, %v6805
    %v6882 = vpack.c.b16 %v6810, %v6806
    %v6883 = vpack.c.b16 %v6815, %v6811
    %v6884 = vpack.c.b16 %v6816, %v6812
    %v6885 = vpack.c.b16 %v6817, %v6813
    %v6886 = vpack.c.b16 %v6818, %v6814
    %v6887 = vpack.c.b16 %v6823, %v6819
    %v6888 = vpack.c.b16 %v6824, %v6820
    %v6889 = vpack.c.b16 %v6825, %v6821
    %v6890 = vpack.c.b16 %v6826, %v6822
    %v6891 = vpack.c.b16 %v6831, %v6827
    %v6892 = vpack.c.b16 %v6832, %v6828
    %v6893 = vpack.c.b16 %v6833, %v6829
    %v6894 = vpack.c.b16 %v6834, %v6830
    %v6956 = vsel %vm4635, %v6653, 0
    %6958 = vmatpush.bf16.msra.mxu0 %v6863
    %6959 = vmatpush.bf16.msra.mxu0 %v6859
    %6960 = vmatpush.bf16.msra.mxu0 %v6855
    %6961 = vmatpush.bf16.msra.mxu0 %v6851
    %6962 = vmatpush.bf16.msra.mxu0 %v6847
    %6963 = vmatpush.bf16.msra.mxu0 %v6843
    %6964 = vmatpush.bf16.msra.mxu0 %v6839
    %6965 = vmatpush.bf16.msra.mxu0 %v6835
    %6966 = vmatmul.bf16.gmra.mxu0 %v4315
    %v6967 = vpop.f32.mrf.mxu0
    %v6968 = vadd.f32 0.0, %v6967
    %v6969 = vpop.f32.mrf.mxu0
    %v6970 = vadd.f32 0.0, %v6969
    %6971 = vmatmul.bf16.gmra.mxu0 %v4317
    %v6972 = vpop.f32.mrf.mxu0
    %v6973 = vadd.f32 0.0, %v6972
    %v6974 = vpop.f32.mrf.mxu0
    %v6975 = vadd.f32 0.0, %v6974
    %6976 = vmatmul.bf16.gmra.mxu0 %v4319
    %v6977 = vpop.f32.mrf.mxu0
    %v6978 = vadd.f32 0.0, %v6977
    %v6979 = vpop.f32.mrf.mxu0
    %v6980 = vadd.f32 0.0, %v6979
    %6981 = vmatmul.bf16.gmra.mxu0 %v4321
    %v6982 = vpop.f32.mrf.mxu0
    %v6983 = vadd.f32 0.0, %v6982
    %v6984 = vpop.f32.mrf.mxu0
    %v6985 = vadd.f32 0.0, %v6984
    %6986 = vmatmul.bf16.gmra.mxu0 %v4323
    %v6987 = vpop.f32.mrf.mxu0
    %v6988 = vadd.f32 0.0, %v6987
    %v6989 = vpop.f32.mrf.mxu0
    %v6990 = vadd.f32 0.0, %v6989
    %6991 = vmatmul.bf16.gmra.mxu0 %v4325
    %v6992 = vpop.f32.mrf.mxu0
    %v6993 = vadd.f32 0.0, %v6992
    %v6994 = vpop.f32.mrf.mxu0
    %v6995 = vadd.f32 0.0, %v6994
    %6996 = vmatmul.bf16.gmra.mxu0 %v5823
    %v6997 = vpop.f32.mrf.mxu0
    %v6998 = vadd.f32 0.0, %v6997
    %v6999 = vpop.f32.mrf.mxu0
    %v7000 = vadd.f32 0.0, %v6999
    %7001 = vmatmul.bf16.gmra.mxu0 %v6652
    %v7002 = vpop.f32.mrf.mxu0
    %v7003 = vadd.f32 0.0, %v7002
    %v7004 = vpop.f32.mrf.mxu0
    %v7005 = vadd.f32 0.0, %v7004
    %7006 = vdwg.mxu0
    %7007 = vmatpush.bf16.msra.mxu0 0
    %7008 = vmatpush.bf16.msra.mxu0 %v6891
    %7009 = vmatpush.bf16.msra.mxu0 %v6887
    %7010 = vmatpush.bf16.msra.mxu0 %v6883
    %7011 = vmatpush.bf16.msra.mxu0 %v6879
    %7012 = vmatpush.bf16.msra.mxu0 %v6875
    %7013 = vmatpush.bf16.msra.mxu0 %v6871
    %7014 = vmatpush.bf16.msra.mxu0 %v6867
    %7015 = vmatmul.bf16.gmra.mxu0 %v4643
    %v7016 = vpop.f32.mrf.mxu0
    %v7017 = vadd.f32 %v6968, %v7016
    %v7018 = vpop.f32.mrf.mxu0
    %v7019 = vadd.f32 %v6970, %v7018
    %7020 = vmatmul.bf16.gmra.mxu0 %v4646
    %v7021 = vpop.f32.mrf.mxu0
    %v7022 = vadd.f32 %v6973, %v7021
    %v7023 = vpop.f32.mrf.mxu0
    %v7024 = vadd.f32 %v6975, %v7023
    %7025 = vmatmul.bf16.gmra.mxu0 %v4649
    %v7026 = vpop.f32.mrf.mxu0
    %v7027 = vadd.f32 %v6978, %v7026
    %v7028 = vpop.f32.mrf.mxu0
    %v7029 = vadd.f32 %v6980, %v7028
    %7030 = vmatmul.bf16.gmra.mxu0 %v4652
    %v7031 = vpop.f32.mrf.mxu0
    %v7032 = vadd.f32 %v6983, %v7031
    %v7033 = vpop.f32.mrf.mxu0
    %v7034 = vadd.f32 %v6985, %v7033
    %7035 = vmatmul.bf16.gmra.mxu0 %v4655
    %v7036 = vpop.f32.mrf.mxu0
    %v7037 = vadd.f32 %v6988, %v7036
    %v7038 = vpop.f32.mrf.mxu0
    %v7039 = vadd.f32 %v6990, %v7038
    %7040 = vmatmul.bf16.gmra.mxu0 %v4658
    %v7041 = vpop.f32.mrf.mxu0
    %v7042 = vadd.f32 %v6993, %v7041
    %v7043 = vpop.f32.mrf.mxu0
    %v7044 = vadd.f32 %v6995, %v7043
    %7045 = vmatmul.bf16.gmra.mxu0 %v6127
    %v7046 = vpop.f32.mrf.mxu0
    %v7047 = vadd.f32 %v6998, %v7046
    %v7048 = vpop.f32.mrf.mxu0
    %v7049 = vadd.f32 %v7000, %v7048
    %7050 = vmatmul.bf16.gmra.mxu0 %v6956
    %v7051 = vpop.f32.mrf.mxu0
    %v7052 = vadd.f32 %v7003, %v7051
    %v7053 = vpop.f32.mrf.mxu0
    %v7054 = vadd.f32 %v7005, %v7053
    %7055 = vdwg.mxu0
    %7056 = vmatpush.bf16.msra.mxu0 %v6864
    %7057 = vmatpush.bf16.msra.mxu0 %v6860
    %7058 = vmatpush.bf16.msra.mxu0 %v6856
    %7059 = vmatpush.bf16.msra.mxu0 %v6852
    %7060 = vmatpush.bf16.msra.mxu0 %v6848
    %7061 = vmatpush.bf16.msra.mxu0 %v6844
    %7062 = vmatpush.bf16.msra.mxu0 %v6840
    %7063 = vmatpush.bf16.msra.mxu0 %v6836
    %7064 = vmatmul.bf16.gmra.mxu0 %v4315
    %v7065 = vpop.f32.mrf.mxu0
    %v7066 = vadd.f32 0.0, %v7065
    %v7067 = vpop.f32.mrf.mxu0
    %v7068 = vadd.f32 0.0, %v7067
    %7069 = vmatmul.bf16.gmra.mxu0 %v4317
    %v7070 = vpop.f32.mrf.mxu0
    %v7071 = vadd.f32 0.0, %v7070
    %v7072 = vpop.f32.mrf.mxu0
    %v7073 = vadd.f32 0.0, %v7072
    %7074 = vmatmul.bf16.gmra.mxu0 %v4319
    %v7075 = vpop.f32.mrf.mxu0
    %v7076 = vadd.f32 0.0, %v7075
    %v7077 = vpop.f32.mrf.mxu0
    %v7078 = vadd.f32 0.0, %v7077
    %7079 = vmatmul.bf16.gmra.mxu0 %v4321
    %v7080 = vpop.f32.mrf.mxu0
    %v7081 = vadd.f32 0.0, %v7080
    %v7082 = vpop.f32.mrf.mxu0
    %v7083 = vadd.f32 0.0, %v7082
    %7084 = vmatmul.bf16.gmra.mxu0 %v4323
    %v7085 = vpop.f32.mrf.mxu0
    %v7086 = vadd.f32 0.0, %v7085
    %v7087 = vpop.f32.mrf.mxu0
    %v7088 = vadd.f32 0.0, %v7087
    %7089 = vmatmul.bf16.gmra.mxu0 %v4325
    %v7090 = vpop.f32.mrf.mxu0
    %v7091 = vadd.f32 0.0, %v7090
    %v7092 = vpop.f32.mrf.mxu0
    %v7093 = vadd.f32 0.0, %v7092
    %7094 = vmatmul.bf16.gmra.mxu0 %v5823
    %v7095 = vpop.f32.mrf.mxu0
    %v7096 = vadd.f32 0.0, %v7095
    %v7097 = vpop.f32.mrf.mxu0
    %v7098 = vadd.f32 0.0, %v7097
    %7099 = vmatmul.bf16.gmra.mxu0 %v6652
    %v7100 = vpop.f32.mrf.mxu0
    %v7101 = vadd.f32 0.0, %v7100
    %v7102 = vpop.f32.mrf.mxu0
    %v7103 = vadd.f32 0.0, %v7102
    %7104 = vdwg.mxu0
    %7105 = vmatpush.bf16.msra.mxu0 0
    %7106 = vmatpush.bf16.msra.mxu0 %v6892
    %7107 = vmatpush.bf16.msra.mxu0 %v6888
    %7108 = vmatpush.bf16.msra.mxu0 %v6884
    %7109 = vmatpush.bf16.msra.mxu0 %v6880
    %7110 = vmatpush.bf16.msra.mxu0 %v6876
    %7111 = vmatpush.bf16.msra.mxu0 %v6872
    %7112 = vmatpush.bf16.msra.mxu0 %v6868
    %7113 = vmatmul.bf16.gmra.mxu0 %v4643
    %v7114 = vpop.f32.mrf.mxu0
    %v7115 = vadd.f32 %v7066, %v7114
    %v7116 = vpop.f32.mrf.mxu0
    %v7117 = vadd.f32 %v7068, %v7116
    %7118 = vmatmul.bf16.gmra.mxu0 %v4646
    %v7119 = vpop.f32.mrf.mxu0
    %v7120 = vadd.f32 %v7071, %v7119
    %v7121 = vpop.f32.mrf.mxu0
    %v7122 = vadd.f32 %v7073, %v7121
    %7123 = vmatmul.bf16.gmra.mxu0 %v4649
    %v7124 = vpop.f32.mrf.mxu0
    %v7125 = vadd.f32 %v7076, %v7124
    %v7126 = vpop.f32.mrf.mxu0
    %v7127 = vadd.f32 %v7078, %v7126
    %7128 = vmatmul.bf16.gmra.mxu0 %v4652
    %v7129 = vpop.f32.mrf.mxu0
    %v7130 = vadd.f32 %v7081, %v7129
    %v7131 = vpop.f32.mrf.mxu0
    %v7132 = vadd.f32 %v7083, %v7131
    %7133 = vmatmul.bf16.gmra.mxu0 %v4655
    %v7134 = vpop.f32.mrf.mxu0
    %v7135 = vadd.f32 %v7086, %v7134
    %v7136 = vpop.f32.mrf.mxu0
    %v7137 = vadd.f32 %v7088, %v7136
    %7138 = vmatmul.bf16.gmra.mxu0 %v4658
    %v7139 = vpop.f32.mrf.mxu0
    %v7140 = vadd.f32 %v7091, %v7139
    %v7141 = vpop.f32.mrf.mxu0
    %v7142 = vadd.f32 %v7093, %v7141
    %7143 = vmatmul.bf16.gmra.mxu0 %v6127
    %v7144 = vpop.f32.mrf.mxu0
    %v7145 = vadd.f32 %v7096, %v7144
    %v7146 = vpop.f32.mrf.mxu0
    %v7147 = vadd.f32 %v7098, %v7146
    %7148 = vmatmul.bf16.gmra.mxu0 %v6956
    %v7149 = vpop.f32.mrf.mxu0
    %v7150 = vadd.f32 %v7101, %v7149
    %v7151 = vpop.f32.mrf.mxu0
    %v7152 = vadd.f32 %v7103, %v7151
    %7153 = vdwg.mxu0
    %7154 = vmatpush.bf16.msra.mxu0 %v6865
    %7155 = vmatpush.bf16.msra.mxu0 %v6861
    %7156 = vmatpush.bf16.msra.mxu0 %v6857
    %7157 = vmatpush.bf16.msra.mxu0 %v6853
    %7158 = vmatpush.bf16.msra.mxu0 %v6849
    %7159 = vmatpush.bf16.msra.mxu0 %v6845
    %7160 = vmatpush.bf16.msra.mxu0 %v6841
    %7161 = vmatpush.bf16.msra.mxu0 %v6837
    %7162 = vmatmul.bf16.gmra.mxu0 %v4315
    %v7163 = vpop.f32.mrf.mxu0
    %v7164 = vadd.f32 0.0, %v7163
    %v7165 = vpop.f32.mrf.mxu0
    %v7166 = vadd.f32 0.0, %v7165
    %7167 = vmatmul.bf16.gmra.mxu0 %v4317
    %v7168 = vpop.f32.mrf.mxu0
    %v7169 = vadd.f32 0.0, %v7168
    %v7170 = vpop.f32.mrf.mxu0
    %v7171 = vadd.f32 0.0, %v7170
    %7172 = vmatmul.bf16.gmra.mxu0 %v4319
    %v7173 = vpop.f32.mrf.mxu0
    %v7174 = vadd.f32 0.0, %v7173
    %v7175 = vpop.f32.mrf.mxu0
    %v7176 = vadd.f32 0.0, %v7175
    %7177 = vmatmul.bf16.gmra.mxu0 %v4321
    %v7178 = vpop.f32.mrf.mxu0
    %v7179 = vadd.f32 0.0, %v7178
    %v7180 = vpop.f32.mrf.mxu0
    %v7181 = vadd.f32 0.0, %v7180
    %7182 = vmatmul.bf16.gmra.mxu0 %v4323
    %v7183 = vpop.f32.mrf.mxu0
    %v7184 = vadd.f32 0.0, %v7183
    %v7185 = vpop.f32.mrf.mxu0
    %v7186 = vadd.f32 0.0, %v7185
    %7187 = vmatmul.bf16.gmra.mxu0 %v4325
    %v7188 = vpop.f32.mrf.mxu0
    %v7189 = vadd.f32 0.0, %v7188
    %v7190 = vpop.f32.mrf.mxu0
    %v7191 = vadd.f32 0.0, %v7190
    %7192 = vmatmul.bf16.gmra.mxu0 %v5823
    %v7193 = vpop.f32.mrf.mxu0
    %v7194 = vadd.f32 0.0, %v7193
    %v7195 = vpop.f32.mrf.mxu0
    %v7196 = vadd.f32 0.0, %v7195
    %7197 = vmatmul.bf16.gmra.mxu0 %v6652
    %v7198 = vpop.f32.mrf.mxu0
    %v7199 = vadd.f32 0.0, %v7198
    %v7200 = vpop.f32.mrf.mxu0
    %v7201 = vadd.f32 0.0, %v7200
    %7202 = vdwg.mxu0
    %7203 = vmatpush.bf16.msra.mxu0 0
    %7204 = vmatpush.bf16.msra.mxu0 %v6893
    %7205 = vmatpush.bf16.msra.mxu0 %v6889
    %7206 = vmatpush.bf16.msra.mxu0 %v6885
    %7207 = vmatpush.bf16.msra.mxu0 %v6881
    %7208 = vmatpush.bf16.msra.mxu0 %v6877
    %7209 = vmatpush.bf16.msra.mxu0 %v6873
    %7210 = vmatpush.bf16.msra.mxu0 %v6869
    %7211 = vmatmul.bf16.gmra.mxu0 %v4643
    %v7212 = vpop.f32.mrf.mxu0
    %v7213 = vadd.f32 %v7164, %v7212
    %v7214 = vpop.f32.mrf.mxu0
    %v7215 = vadd.f32 %v7166, %v7214
    %7216 = vmatmul.bf16.gmra.mxu0 %v4646
    %v7217 = vpop.f32.mrf.mxu0
    %v7218 = vadd.f32 %v7169, %v7217
    %v7219 = vpop.f32.mrf.mxu0
    %v7220 = vadd.f32 %v7171, %v7219
    %7221 = vmatmul.bf16.gmra.mxu0 %v4649
    %v7222 = vpop.f32.mrf.mxu0
    %v7223 = vadd.f32 %v7174, %v7222
    %v7224 = vpop.f32.mrf.mxu0
    %v7225 = vadd.f32 %v7176, %v7224
    %7226 = vmatmul.bf16.gmra.mxu0 %v4652
    %v7227 = vpop.f32.mrf.mxu0
    %v7228 = vadd.f32 %v7179, %v7227
    %v7229 = vpop.f32.mrf.mxu0
    %v7230 = vadd.f32 %v7181, %v7229
    %7231 = vmatmul.bf16.gmra.mxu0 %v4655
    %v7232 = vpop.f32.mrf.mxu0
    %v7233 = vadd.f32 %v7184, %v7232
    %v7234 = vpop.f32.mrf.mxu0
    %v7235 = vadd.f32 %v7186, %v7234
    %7236 = vmatmul.bf16.gmra.mxu0 %v4658
    %v7237 = vpop.f32.mrf.mxu0
    %v7238 = vadd.f32 %v7189, %v7237
    %v7239 = vpop.f32.mrf.mxu0
    %v7240 = vadd.f32 %v7191, %v7239
    %7241 = vmatmul.bf16.gmra.mxu0 %v6127
    %v7242 = vpop.f32.mrf.mxu0
    %v7243 = vadd.f32 %v7194, %v7242
    %v7244 = vpop.f32.mrf.mxu0
    %v7245 = vadd.f32 %v7196, %v7244
    %7246 = vmatmul.bf16.gmra.mxu0 %v6956
    %v7247 = vpop.f32.mrf.mxu0
    %v7248 = vadd.f32 %v7199, %v7247
    %v7249 = vpop.f32.mrf.mxu0
    %v7250 = vadd.f32 %v7201, %v7249
    %7251 = vdwg.mxu0
    %7252 = vmatpush.bf16.msra.mxu0 %v6866
    %7253 = vmatpush.bf16.msra.mxu0 %v6862
    %7254 = vmatpush.bf16.msra.mxu0 %v6858
    %7255 = vmatpush.bf16.msra.mxu0 %v6854
    %7256 = vmatpush.bf16.msra.mxu0 %v6850
    %7257 = vmatpush.bf16.msra.mxu0 %v6846
    %7258 = vmatpush.bf16.msra.mxu0 %v6842
    %7259 = vmatpush.bf16.msra.mxu0 %v6838
    %7260 = vmatmul.bf16.gmra.mxu0 %v4315
    %v7261 = vpop.f32.mrf.mxu0
    %v7262 = vadd.f32 0.0, %v7261
    %v7263 = vpop.f32.mrf.mxu0
    %v7264 = vadd.f32 0.0, %v7263
    %7265 = vmatmul.bf16.gmra.mxu0 %v4317
    %v7266 = vpop.f32.mrf.mxu0
    %v7267 = vadd.f32 0.0, %v7266
    %v7268 = vpop.f32.mrf.mxu0
    %v7269 = vadd.f32 0.0, %v7268
    %7270 = vmatmul.bf16.gmra.mxu0 %v4319
    %v7271 = vpop.f32.mrf.mxu0
    %v7272 = vadd.f32 0.0, %v7271
    %v7273 = vpop.f32.mrf.mxu0
    %v7274 = vadd.f32 0.0, %v7273
    %7275 = vmatmul.bf16.gmra.mxu0 %v4321
    %v7276 = vpop.f32.mrf.mxu0
    %v7277 = vadd.f32 0.0, %v7276
    %v7278 = vpop.f32.mrf.mxu0
    %v7279 = vadd.f32 0.0, %v7278
    %7280 = vmatmul.bf16.gmra.mxu0 %v4323
    %v7281 = vpop.f32.mrf.mxu0
    %v7282 = vadd.f32 0.0, %v7281
    %v7283 = vpop.f32.mrf.mxu0
    %v7284 = vadd.f32 0.0, %v7283
    %7285 = vmatmul.bf16.gmra.mxu0 %v4325
    %v7286 = vpop.f32.mrf.mxu0
    %v7287 = vadd.f32 0.0, %v7286
    %v7288 = vpop.f32.mrf.mxu0
    %v7289 = vadd.f32 0.0, %v7288
    %7290 = vmatmul.bf16.gmra.mxu0 %v5823
    %v7291 = vpop.f32.mrf.mxu0
    %v7292 = vadd.f32 0.0, %v7291
    %v7293 = vpop.f32.mrf.mxu0
    %v7294 = vadd.f32 0.0, %v7293
    %7295 = vmatmul.bf16.gmra.mxu0 %v6652
    %v7296 = vpop.f32.mrf.mxu0
    %v7297 = vadd.f32 0.0, %v7296
    %v7298 = vpop.f32.mrf.mxu0
    %v7299 = vadd.f32 0.0, %v7298
    %7300 = vdwg.mxu0
    %7301 = vmatpush.bf16.msra.mxu0 0
    %7302 = vmatpush.bf16.msra.mxu0 %v6894
    %7303 = vmatpush.bf16.msra.mxu0 %v6890
    %7304 = vmatpush.bf16.msra.mxu0 %v6886
    %7305 = vmatpush.bf16.msra.mxu0 %v6882
    %7306 = vmatpush.bf16.msra.mxu0 %v6878
    %7307 = vmatpush.bf16.msra.mxu0 %v6874
    %7308 = vmatpush.bf16.msra.mxu0 %v6870
    %7309 = vmatmul.bf16.gmra.mxu0 %v4643
    %v7310 = vpop.f32.mrf.mxu0
    %v7311 = vadd.f32 %v7262, %v7310
    %v7312 = vpop.f32.mrf.mxu0
    %v7313 = vadd.f32 %v7264, %v7312
    %7314 = vmatmul.bf16.gmra.mxu0 %v4646
    %v7315 = vpop.f32.mrf.mxu0
    %v7316 = vadd.f32 %v7267, %v7315
    %v7317 = vpop.f32.mrf.mxu0
    %v7318 = vadd.f32 %v7269, %v7317
    %7319 = vmatmul.bf16.gmra.mxu0 %v4649
    %v7320 = vpop.f32.mrf.mxu0
    %v7321 = vadd.f32 %v7272, %v7320
    %v7322 = vpop.f32.mrf.mxu0
    %v7323 = vadd.f32 %v7274, %v7322
    %7324 = vmatmul.bf16.gmra.mxu0 %v4652
    %v7325 = vpop.f32.mrf.mxu0
    %v7326 = vadd.f32 %v7277, %v7325
    %v7327 = vpop.f32.mrf.mxu0
    %v7328 = vadd.f32 %v7279, %v7327
    %7329 = vmatmul.bf16.gmra.mxu0 %v4655
    %v7330 = vpop.f32.mrf.mxu0
    %v7331 = vadd.f32 %v7282, %v7330
    %v7332 = vpop.f32.mrf.mxu0
    %v7333 = vadd.f32 %v7284, %v7332
    %7334 = vmatmul.bf16.gmra.mxu0 %v4658
    %v7335 = vpop.f32.mrf.mxu0
    %v7336 = vadd.f32 %v7287, %v7335
    %v7337 = vpop.f32.mrf.mxu0
    %v7338 = vadd.f32 %v7289, %v7337
    %7339 = vmatmul.bf16.gmra.mxu0 %v6127
    %v7340 = vpop.f32.mrf.mxu0
    %v7341 = vadd.f32 %v7292, %v7340
    %v7342 = vpop.f32.mrf.mxu0
    %v7343 = vadd.f32 %v7294, %v7342
    %7344 = vmatmul.bf16.gmra.mxu0 %v6956
    %v7345 = vpop.f32.mrf.mxu0
    %v7346 = vadd.f32 %v7297, %v7345
    %v7347 = vpop.f32.mrf.mxu0
    %v7348 = vadd.f32 %v7299, %v7347
    %7349 = vdwg.mxu0
    %v7350 = vadd.f32 %v6521, %v7017
    %v7351 = vadd.f32 %v6522, %v7115
    %v7352 = vadd.f32 %v6523, %v7213
    %v7353 = vadd.f32 %v6524, %v7311
    %v7354 = vadd.f32 %v6525, %v7019
    %v7355 = vadd.f32 %v6526, %v7117
    %v7356 = vadd.f32 %v6527, %v7215
    %v7357 = vadd.f32 %v6528, %v7313
    %v7358 = vadd.f32 %v6529, %v7022
    %v7359 = vadd.f32 %v6530, %v7120
    %v7360 = vadd.f32 %v6531, %v7218
    %v7361 = vadd.f32 %v6532, %v7316
    %v7362 = vadd.f32 %v6533, %v7024
    %v7363 = vadd.f32 %v6534, %v7122
    %v7364 = vadd.f32 %v6535, %v7220
    %v7365 = vadd.f32 %v6536, %v7318
    %v7366 = vadd.f32 %v6537, %v7027
    %v7367 = vadd.f32 %v6538, %v7125
    %v7368 = vadd.f32 %v6539, %v7223
    %v7369 = vadd.f32 %v6540, %v7321
    %v7370 = vadd.f32 %v6541, %v7029
    %v7371 = vadd.f32 %v6542, %v7127
    %v7372 = vadd.f32 %v6543, %v7225
    %v7373 = vadd.f32 %v6544, %v7323
    %v7374 = vadd.f32 %v6545, %v7032
    %v7375 = vadd.f32 %v6546, %v7130
    %v7376 = vadd.f32 %v6547, %v7228
    %v7377 = vadd.f32 %v6548, %v7326
    %v7378 = vadd.f32 %v6549, %v7034
    %v7379 = vadd.f32 %v6550, %v7132
    %v7380 = vadd.f32 %v6551, %v7230
    %v7381 = vadd.f32 %v6552, %v7328
    %v7382 = vadd.f32 %v6553, %v7037
    %v7383 = vadd.f32 %v6554, %v7135
    %v7384 = vadd.f32 %v6555, %v7233
    %v7385 = vadd.f32 %v6556, %v7331
    %v7386 = vadd.f32 %v6557, %v7039
    %v7387 = vadd.f32 %v6558, %v7137
    %v7388 = vadd.f32 %v6559, %v7235
    %v7389 = vadd.f32 %v6560, %v7333
    %v7390 = vadd.f32 %v6561, %v7042
    %v7391 = vadd.f32 %v6562, %v7140
    %v7392 = vadd.f32 %v6563, %v7238
    %v7393 = vadd.f32 %v6564, %v7336
    %v7394 = vadd.f32 %v6565, %v7044
    %v7395 = vadd.f32 %v6566, %v7142
    %v7396 = vadd.f32 %v6567, %v7240
    %v7397 = vadd.f32 %v6568, %v7338
    %v7398 = vadd.f32 %v6569, %v7047
    %v7399 = vadd.f32 %v6570, %v7145
    %v7400 = vadd.f32 %v6571, %v7243
    %v7401 = vadd.f32 %v6572, %v7341
    %v7402 = vadd.f32 %v6573, %v7049
    %v7403 = vadd.f32 %v6574, %v7147
    %v7404 = vadd.f32 %v6575, %v7245
    %v7405 = vadd.f32 %v6576, %v7343
    %v7406 = vadd.f32 %v6577, %v7052
    %v7407 = vadd.f32 %v6578, %v7150
    %v7408 = vadd.f32 %v6579, %v7248
    %v7409 = vadd.f32 %v6580, %v7346
    %v7410 = vadd.f32 %v6581, %v7054
    %v7411 = vadd.f32 %v6582, %v7152
    %v7412 = vadd.f32 %v6583, %v7250
    %v7413 = vadd.f32 %v6584, %v7348
    %s7414 = scalar_lea.vmem [#allocation6], 1920
    %v7415 = vld [vmem:[%s7414] sm:$0xff]
    %v7416 = vld [vmem:[%s7414 + $0x8] sm:$0xff]
    %v7417 = vld [vmem:[%s7414 + $0x10] sm:$0xff]
    %v7418 = vld [vmem:[%s7414 + $0x18] sm:$0xff]
    %v7419 = vld [vmem:[%s7414 + $0x20] sm:$0xff]
    %v7420 = vld [vmem:[%s7414 + $0x28] sm:$0xff]
    %v7421 = vld [vmem:[%s7414 + $0x30] sm:$0xff]
    %v7422 = vld [vmem:[%s7414 + $0x38] sm:$0xff]
    %v7423 = vld [vmem:[%s7414 + $0x40] sm:$0xff]
    %v7424 = vld [vmem:[%s7414 + $0x48] sm:$0xff]
    %v7425 = vld [vmem:[%s7414 + $0x50] sm:$0xff]
    %v7426 = vld [vmem:[%s7414 + $0x58] sm:$0xff]
    %v7427 = vld [vmem:[%s7414 + $0x60] sm:$0xff]
    %v7428 = vld [vmem:[%s7414 + $0x68] sm:$0xff]
    %v7429 = vld [vmem:[%s7414 + $0x70] sm:$0xff]
    %v7430 = vld [vmem:[%s7414 + $0x78] sm:$0xff]
    %v7431 = vld [vmem:[%s7414 + $0x80] sm:$0xff]
    %v7432 = vld [vmem:[%s7414 + $0x88] sm:$0xff]
    %v7433 = vld [vmem:[%s7414 + $0x90] sm:$0xff]
    %v7434 = vld [vmem:[%s7414 + $0x98] sm:$0xff]
    %v7435 = vld [vmem:[%s7414 + $0xa0] sm:$0xff]
    %v7436 = vld [vmem:[%s7414 + $0xa8] sm:$0xff]
    %v7437 = vld [vmem:[%s7414 + $0xb0] sm:$0xff]
    %v7438 = vld [vmem:[%s7414 + $0xb8] sm:$0xff]
    %v7439 = vld [vmem:[%s7414 + $0xc0] sm:$0xff]
    %v7440 = vld [vmem:[%s7414 + $0xc8] sm:$0xff]
    %v7441 = vld [vmem:[%s7414 + $0xd0] sm:$0xff]
    %v7442 = vld [vmem:[%s7414 + $0xd8] sm:$0xff]
    %v7443 = vld [vmem:[%s7414 + $0xe0] sm:$0xff]
    %v7444 = vld [vmem:[%s7414 + $0xe8] sm:$0xff]
    %v7445 = vld [vmem:[%s7414 + $0xf0] sm:$0xff]
    %v7446 = vld [vmem:[%s7414 + $0xf8] sm:$0xff]
    %v7447 = vld [vmem:[%s7414 + $0x100] sm:$0xff]
    %v7448 = vld [vmem:[%s7414 + $0x108] sm:$0xff]
    %v7449 = vld [vmem:[%s7414 + $0x110] sm:$0xff]
    %v7450 = vld [vmem:[%s7414 + $0x118] sm:$0xff]
    %v7451 = vld [vmem:[%s7414 + $0x120] sm:$0xff]
    %v7452 = vld [vmem:[%s7414 + $0x128] sm:$0xff]
    %v7453 = vld [vmem:[%s7414 + $0x130] sm:$0xff]
    %v7454 = vld [vmem:[%s7414 + $0x138] sm:$0xff]
    %v7455 = vld [vmem:[%s7414 + $0x140] sm:$0xff]
    %v7456 = vld [vmem:[%s7414 + $0x148] sm:$0xff]
    %v7457 = vld [vmem:[%s7414 + $0x150] sm:$0xff]
    %v7458 = vld [vmem:[%s7414 + $0x158] sm:$0xff]
    %v7459 = vld [vmem:[%s7414 + $0x160] sm:$0xff]
    %v7460 = vld [vmem:[%s7414 + $0x168] sm:$0xff]
    %v7461 = vld [vmem:[%s7414 + $0x170] sm:$0xff]
    %v7462 = vld [vmem:[%s7414 + $0x178] sm:$0xff]
    %v7463 = vld [vmem:[%s7414 + $0x180] sm:$0xff]
    %v7464 = vld [vmem:[%s7414 + $0x188] sm:$0xff]
    %v7465 = vld [vmem:[%s7414 + $0x190] sm:$0xff]
    %v7466 = vld [vmem:[%s7414 + $0x198] sm:$0xff]
    %v7467 = vld [vmem:[%s7414 + $0x1a0] sm:$0xff]
    %v7468 = vld [vmem:[%s7414 + $0x1a8] sm:$0xff]
    %v7469 = vld [vmem:[%s7414 + $0x1b0] sm:$0xff]
    %v7470 = vld [vmem:[%s7414 + $0x1b8] sm:$0xff]
    %v7471 = vld [vmem:[%s7414 + $0x1c0] sm:$0xff]
    %v7472 = vld [vmem:[%s7414 + $0x1c8] sm:$0xff]
    %v7473 = vld [vmem:[%s7414 + $0x1d0] sm:$0xff]
    %v7474 = vld [vmem:[%s7414 + $0x1d8] sm:$0xff]
    %v7477 = vunpack.c.l.b16 %v4140
    %v7478 = vunpack.c.h.b16 %v4140
    %v7479 = vunpack.c.l.b16 %v4141
    %v7480 = vunpack.c.h.b16 %v4141
    %v7481 = vpack.c.b16 %v7479, %v7477
    %v7482 = vpack.c.b16 %v7480, %v7478
    %v7544 = vunpack.c.l.b16 %v7415
    %v7545 = vunpack.c.h.b16 %v7415
    %v7546 = vunpack.c.l.b16 %v7416
    %v7547 = vunpack.c.h.b16 %v7416
    %v7548 = vunpack.c.l.b16 %v7417
    %v7549 = vunpack.c.h.b16 %v7417
    %v7550 = vunpack.c.l.b16 %v7418
    %v7551 = vunpack.c.h.b16 %v7418
    %v7552 = vunpack.c.l.b16 %v7419
    %v7553 = vunpack.c.h.b16 %v7419
    %v7554 = vunpack.c.l.b16 %v7420
    %v7555 = vunpack.c.h.b16 %v7420
    %v7556 = vunpack.c.l.b16 %v7421
    %v7557 = vunpack.c.h.b16 %v7421
    %v7558 = vunpack.c.l.b16 %v7422
    %v7559 = vunpack.c.h.b16 %v7422
    %v7560 = vunpack.c.l.b16 %v7423
    %v7561 = vunpack.c.h.b16 %v7423
    %v7562 = vunpack.c.l.b16 %v7424
    %v7563 = vunpack.c.h.b16 %v7424
    %v7564 = vunpack.c.l.b16 %v7425
    %v7565 = vunpack.c.h.b16 %v7425
    %v7566 = vunpack.c.l.b16 %v7426
    %v7567 = vunpack.c.h.b16 %v7426
    %v7568 = vunpack.c.l.b16 %v7427
    %v7569 = vunpack.c.h.b16 %v7427
    %v7570 = vunpack.c.l.b16 %v7428
    %v7571 = vunpack.c.h.b16 %v7428
    %v7572 = vunpack.c.l.b16 %v7429
    %v7573 = vunpack.c.h.b16 %v7429
    %v7574 = vunpack.c.l.b16 %v7430
    %v7575 = vunpack.c.h.b16 %v7430
    %v7576 = vunpack.c.l.b16 %v7431
    %v7577 = vunpack.c.h.b16 %v7431
    %v7578 = vunpack.c.l.b16 %v7432
    %v7579 = vunpack.c.h.b16 %v7432
    %v7580 = vunpack.c.l.b16 %v7433
    %v7581 = vunpack.c.h.b16 %v7433
    %v7582 = vunpack.c.l.b16 %v7434
    %v7583 = vunpack.c.h.b16 %v7434
    %v7584 = vunpack.c.l.b16 %v7435
    %v7585 = vunpack.c.h.b16 %v7435
    %v7586 = vunpack.c.l.b16 %v7436
    %v7587 = vunpack.c.h.b16 %v7436
    %v7588 = vunpack.c.l.b16 %v7437
    %v7589 = vunpack.c.h.b16 %v7437
    %v7590 = vunpack.c.l.b16 %v7438
    %v7591 = vunpack.c.h.b16 %v7438
    %v7592 = vunpack.c.l.b16 %v7439
    %v7593 = vunpack.c.h.b16 %v7439
    %v7594 = vunpack.c.l.b16 %v7440
    %v7595 = vunpack.c.h.b16 %v7440
    %v7596 = vunpack.c.l.b16 %v7441
    %v7597 = vunpack.c.h.b16 %v7441
    %v7598 = vunpack.c.l.b16 %v7442
    %v7599 = vunpack.c.h.b16 %v7442
    %v7600 = vunpack.c.l.b16 %v7443
    %v7601 = vunpack.c.h.b16 %v7443
    %v7602 = vunpack.c.l.b16 %v7444
    %v7603 = vunpack.c.h.b16 %v7444
    %v7604 = vunpack.c.l.b16 %v7445
    %v7605 = vunpack.c.h.b16 %v7445
    %v7606 = vunpack.c.l.b16 %v7446
    %v7607 = vunpack.c.h.b16 %v7446
    %v7608 = vunpack.c.l.b16 %v7447
    %v7609 = vunpack.c.h.b16 %v7447
    %v7610 = vunpack.c.l.b16 %v7448
    %v7611 = vunpack.c.h.b16 %v7448
    %v7612 = vunpack.c.l.b16 %v7449
    %v7613 = vunpack.c.h.b16 %v7449
    %v7614 = vunpack.c.l.b16 %v7450
    %v7615 = vunpack.c.h.b16 %v7450
    %v7616 = vunpack.c.l.b16 %v7451
    %v7617 = vunpack.c.h.b16 %v7451
    %v7618 = vunpack.c.l.b16 %v7452
    %v7619 = vunpack.c.h.b16 %v7452
    %v7620 = vunpack.c.l.b16 %v7453
    %v7621 = vunpack.c.h.b16 %v7453
    %v7622 = vunpack.c.l.b16 %v7454
    %v7623 = vunpack.c.h.b16 %v7454
    %v7624 = vunpack.c.l.b16 %v7455
    %v7625 = vunpack.c.h.b16 %v7455
    %v7626 = vunpack.c.l.b16 %v7456
    %v7627 = vunpack.c.h.b16 %v7456
    %v7628 = vunpack.c.l.b16 %v7457
    %v7629 = vunpack.c.h.b16 %v7457
    %v7630 = vunpack.c.l.b16 %v7458
    %v7631 = vunpack.c.h.b16 %v7458
    %v7632 = vunpack.c.l.b16 %v7459
    %v7633 = vunpack.c.h.b16 %v7459
    %v7634 = vunpack.c.l.b16 %v7460
    %v7635 = vunpack.c.h.b16 %v7460
    %v7636 = vunpack.c.l.b16 %v7461
    %v7637 = vunpack.c.h.b16 %v7461
    %v7638 = vunpack.c.l.b16 %v7462
    %v7639 = vunpack.c.h.b16 %v7462
    %v7640 = vunpack.c.l.b16 %v7463
    %v7641 = vunpack.c.h.b16 %v7463
    %v7642 = vunpack.c.l.b16 %v7464
    %v7643 = vunpack.c.h.b16 %v7464
    %v7644 = vunpack.c.l.b16 %v7465
    %v7645 = vunpack.c.h.b16 %v7465
    %v7646 = vunpack.c.l.b16 %v7466
    %v7647 = vunpack.c.h.b16 %v7466
    %v7648 = vunpack.c.l.b16 %v7467
    %v7649 = vunpack.c.h.b16 %v7467
    %v7650 = vunpack.c.l.b16 %v7468
    %v7651 = vunpack.c.h.b16 %v7468
    %v7652 = vunpack.c.l.b16 %v7469
    %v7653 = vunpack.c.h.b16 %v7469
    %v7654 = vunpack.c.l.b16 %v7470
    %v7655 = vunpack.c.h.b16 %v7470
    %v7656 = vunpack.c.l.b16 %v7471
    %v7657 = vunpack.c.h.b16 %v7471
    %v7658 = vunpack.c.l.b16 %v7472
    %v7659 = vunpack.c.h.b16 %v7472
    %v7660 = vunpack.c.l.b16 %v7473
    %v7661 = vunpack.c.h.b16 %v7473
    %v7662 = vunpack.c.l.b16 %v7474
    %v7663 = vunpack.c.h.b16 %v7474
    %v7664 = vpack.c.b16 %v7548, %v7544
    %v7665 = vpack.c.b16 %v7549, %v7545
    %v7666 = vpack.c.b16 %v7550, %v7546
    %v7667 = vpack.c.b16 %v7551, %v7547
    %v7668 = vpack.c.b16 %v7556, %v7552
    %v7669 = vpack.c.b16 %v7557, %v7553
    %v7670 = vpack.c.b16 %v7558, %v7554
    %v7671 = vpack.c.b16 %v7559, %v7555
    %v7672 = vpack.c.b16 %v7564, %v7560
    %v7673 = vpack.c.b16 %v7565, %v7561
    %v7674 = vpack.c.b16 %v7566, %v7562
    %v7675 = vpack.c.b16 %v7567, %v7563
    %v7676 = vpack.c.b16 %v7572, %v7568
    %v7677 = vpack.c.b16 %v7573, %v7569
    %v7678 = vpack.c.b16 %v7574, %v7570
    %v7679 = vpack.c.b16 %v7575, %v7571
    %v7680 = vpack.c.b16 %v7580, %v7576
    %v7681 = vpack.c.b16 %v7581, %v7577
    %v7682 = vpack.c.b16 %v7582, %v7578
    %v7683 = vpack.c.b16 %v7583, %v7579
    %v7684 = vpack.c.b16 %v7588, %v7584
    %v7685 = vpack.c.b16 %v7589, %v7585
    %v7686 = vpack.c.b16 %v7590, %v7586
    %v7687 = vpack.c.b16 %v7591, %v7587
    %v7688 = vpack.c.b16 %v7596, %v7592
    %v7689 = vpack.c.b16 %v7597, %v7593
    %v7690 = vpack.c.b16 %v7598, %v7594
    %v7691 = vpack.c.b16 %v7599, %v7595
    %v7692 = vpack.c.b16 %v7604, %v7600
    %v7693 = vpack.c.b16 %v7605, %v7601
    %v7694 = vpack.c.b16 %v7606, %v7602
    %v7695 = vpack.c.b16 %v7607, %v7603
    %v7696 = vpack.c.b16 %v7612, %v7608
    %v7697 = vpack.c.b16 %v7613, %v7609
    %v7698 = vpack.c.b16 %v7614, %v7610
    %v7699 = vpack.c.b16 %v7615, %v7611
    %v7700 = vpack.c.b16 %v7620, %v7616
    %v7701 = vpack.c.b16 %v7621, %v7617
    %v7702 = vpack.c.b16 %v7622, %v7618
    %v7703 = vpack.c.b16 %v7623, %v7619
    %v7704 = vpack.c.b16 %v7628, %v7624
    %v7705 = vpack.c.b16 %v7629, %v7625
    %v7706 = vpack.c.b16 %v7630, %v7626
    %v7707 = vpack.c.b16 %v7631, %v7627
    %v7708 = vpack.c.b16 %v7636, %v7632
    %v7709 = vpack.c.b16 %v7637, %v7633
    %v7710 = vpack.c.b16 %v7638, %v7634
    %v7711 = vpack.c.b16 %v7639, %v7635
    %v7712 = vpack.c.b16 %v7644, %v7640
    %v7713 = vpack.c.b16 %v7645, %v7641
    %v7714 = vpack.c.b16 %v7646, %v7642
    %v7715 = vpack.c.b16 %v7647, %v7643
    %v7716 = vpack.c.b16 %v7652, %v7648
    %v7717 = vpack.c.b16 %v7653, %v7649
    %v7718 = vpack.c.b16 %v7654, %v7650
    %v7719 = vpack.c.b16 %v7655, %v7651
    %v7720 = vpack.c.b16 %v7660, %v7656
    %v7721 = vpack.c.b16 %v7661, %v7657
    %v7722 = vpack.c.b16 %v7662, %v7658
    %v7723 = vpack.c.b16 %v7663, %v7659
    %v7785 = vsel %vm4635, %v7482, 0
    %7787 = vmatpush.bf16.msra.mxu0 %v7692
    %7788 = vmatpush.bf16.msra.mxu0 %v7688
    %7789 = vmatpush.bf16.msra.mxu0 %v7684
    %7790 = vmatpush.bf16.msra.mxu0 %v7680
    %7791 = vmatpush.bf16.msra.mxu0 %v7676
    %7792 = vmatpush.bf16.msra.mxu0 %v7672
    %7793 = vmatpush.bf16.msra.mxu0 %v7668
    %7794 = vmatpush.bf16.msra.mxu0 %v7664
    %7795 = vmatmul.bf16.gmra.mxu0 %v4317
    %v7796 = vpop.f32.mrf.mxu0
    %v7797 = vadd.f32 0.0, %v7796
    %v7798 = vpop.f32.mrf.mxu0
    %v7799 = vadd.f32 0.0, %v7798
    %7800 = vmatmul.bf16.gmra.mxu0 %v4319
    %v7801 = vpop.f32.mrf.mxu0
    %v7802 = vadd.f32 0.0, %v7801
    %v7803 = vpop.f32.mrf.mxu0
    %v7804 = vadd.f32 0.0, %v7803
    %7805 = vmatmul.bf16.gmra.mxu0 %v4321
    %v7806 = vpop.f32.mrf.mxu0
    %v7807 = vadd.f32 0.0, %v7806
    %v7808 = vpop.f32.mrf.mxu0
    %v7809 = vadd.f32 0.0, %v7808
    %7810 = vmatmul.bf16.gmra.mxu0 %v4323
    %v7811 = vpop.f32.mrf.mxu0
    %v7812 = vadd.f32 0.0, %v7811
    %v7813 = vpop.f32.mrf.mxu0
    %v7814 = vadd.f32 0.0, %v7813
    %7815 = vmatmul.bf16.gmra.mxu0 %v4325
    %v7816 = vpop.f32.mrf.mxu0
    %v7817 = vadd.f32 0.0, %v7816
    %v7818 = vpop.f32.mrf.mxu0
    %v7819 = vadd.f32 0.0, %v7818
    %7820 = vmatmul.bf16.gmra.mxu0 %v5823
    %v7821 = vpop.f32.mrf.mxu0
    %v7822 = vadd.f32 0.0, %v7821
    %v7823 = vpop.f32.mrf.mxu0
    %v7824 = vadd.f32 0.0, %v7823
    %7825 = vmatmul.bf16.gmra.mxu0 %v6652
    %v7826 = vpop.f32.mrf.mxu0
    %v7827 = vadd.f32 0.0, %v7826
    %v7828 = vpop.f32.mrf.mxu0
    %v7829 = vadd.f32 0.0, %v7828
    %7830 = vmatmul.bf16.gmra.mxu0 %v7481
    %v7831 = vpop.f32.mrf.mxu0
    %v7832 = vadd.f32 0.0, %v7831
    %v7833 = vpop.f32.mrf.mxu0
    %v7834 = vadd.f32 0.0, %v7833
    %7835 = vdwg.mxu0
    %7836 = vmatpush.bf16.msra.mxu0 0
    %7837 = vmatpush.bf16.msra.mxu0 %v7720
    %7838 = vmatpush.bf16.msra.mxu0 %v7716
    %7839 = vmatpush.bf16.msra.mxu0 %v7712
    %7840 = vmatpush.bf16.msra.mxu0 %v7708
    %7841 = vmatpush.bf16.msra.mxu0 %v7704
    %7842 = vmatpush.bf16.msra.mxu0 %v7700
    %7843 = vmatpush.bf16.msra.mxu0 %v7696
    %7844 = vmatmul.bf16.gmra.mxu0 %v4646
    %v7845 = vpop.f32.mrf.mxu0
    %v7846 = vadd.f32 %v7797, %v7845
    %v7847 = vpop.f32.mrf.mxu0
    %v7848 = vadd.f32 %v7799, %v7847
    %7849 = vmatmul.bf16.gmra.mxu0 %v4649
    %v7850 = vpop.f32.mrf.mxu0
    %v7851 = vadd.f32 %v7802, %v7850
    %v7852 = vpop.f32.mrf.mxu0
    %v7853 = vadd.f32 %v7804, %v7852
    %7854 = vmatmul.bf16.gmra.mxu0 %v4652
    %v7855 = vpop.f32.mrf.mxu0
    %v7856 = vadd.f32 %v7807, %v7855
    %v7857 = vpop.f32.mrf.mxu0
    %v7858 = vadd.f32 %v7809, %v7857
    %7859 = vmatmul.bf16.gmra.mxu0 %v4655
    %v7860 = vpop.f32.mrf.mxu0
    %v7861 = vadd.f32 %v7812, %v7860
    %v7862 = vpop.f32.mrf.mxu0
    %v7863 = vadd.f32 %v7814, %v7862
    %7864 = vmatmul.bf16.gmra.mxu0 %v4658
    %v7865 = vpop.f32.mrf.mxu0
    %v7866 = vadd.f32 %v7817, %v7865
    %v7867 = vpop.f32.mrf.mxu0
    %v7868 = vadd.f32 %v7819, %v7867
    %7869 = vmatmul.bf16.gmra.mxu0 %v6127
    %v7870 = vpop.f32.mrf.mxu0
    %v7871 = vadd.f32 %v7822, %v7870
    %v7872 = vpop.f32.mrf.mxu0
    %v7873 = vadd.f32 %v7824, %v7872
    %7874 = vmatmul.bf16.gmra.mxu0 %v6956
    %v7875 = vpop.f32.mrf.mxu0
    %v7876 = vadd.f32 %v7827, %v7875
    %v7877 = vpop.f32.mrf.mxu0
    %v7878 = vadd.f32 %v7829, %v7877
    %7879 = vmatmul.bf16.gmra.mxu0 %v7785
    %v7880 = vpop.f32.mrf.mxu0
    %v7881 = vadd.f32 %v7832, %v7880
    %v7882 = vpop.f32.mrf.mxu0
    %v7883 = vadd.f32 %v7834, %v7882
    %7884 = vdwg.mxu0
    %7885 = vmatpush.bf16.msra.mxu0 %v7693
    %7886 = vmatpush.bf16.msra.mxu0 %v7689
    %7887 = vmatpush.bf16.msra.mxu0 %v7685
    %7888 = vmatpush.bf16.msra.mxu0 %v7681
    %7889 = vmatpush.bf16.msra.mxu0 %v7677
    %7890 = vmatpush.bf16.msra.mxu0 %v7673
    %7891 = vmatpush.bf16.msra.mxu0 %v7669
    %7892 = vmatpush.bf16.msra.mxu0 %v7665
    %7893 = vmatmul.bf16.gmra.mxu0 %v4317
    %v7894 = vpop.f32.mrf.mxu0
    %v7895 = vadd.f32 0.0, %v7894
    %v7896 = vpop.f32.mrf.mxu0
    %v7897 = vadd.f32 0.0, %v7896
    %7898 = vmatmul.bf16.gmra.mxu0 %v4319
    %v7899 = vpop.f32.mrf.mxu0
    %v7900 = vadd.f32 0.0, %v7899
    %v7901 = vpop.f32.mrf.mxu0
    %v7902 = vadd.f32 0.0, %v7901
    %7903 = vmatmul.bf16.gmra.mxu0 %v4321
    %v7904 = vpop.f32.mrf.mxu0
    %v7905 = vadd.f32 0.0, %v7904
    %v7906 = vpop.f32.mrf.mxu0
    %v7907 = vadd.f32 0.0, %v7906
    %7908 = vmatmul.bf16.gmra.mxu0 %v4323
    %v7909 = vpop.f32.mrf.mxu0
    %v7910 = vadd.f32 0.0, %v7909
    %v7911 = vpop.f32.mrf.mxu0
    %v7912 = vadd.f32 0.0, %v7911
    %7913 = vmatmul.bf16.gmra.mxu0 %v4325
    %v7914 = vpop.f32.mrf.mxu0
    %v7915 = vadd.f32 0.0, %v7914
    %v7916 = vpop.f32.mrf.mxu0
    %v7917 = vadd.f32 0.0, %v7916
    %7918 = vmatmul.bf16.gmra.mxu0 %v5823
    %v7919 = vpop.f32.mrf.mxu0
    %v7920 = vadd.f32 0.0, %v7919
    %v7921 = vpop.f32.mrf.mxu0
    %v7922 = vadd.f32 0.0, %v7921
    %7923 = vmatmul.bf16.gmra.mxu0 %v6652
    %v7924 = vpop.f32.mrf.mxu0
    %v7925 = vadd.f32 0.0, %v7924
    %v7926 = vpop.f32.mrf.mxu0
    %v7927 = vadd.f32 0.0, %v7926
    %7928 = vmatmul.bf16.gmra.mxu0 %v7481
    %v7929 = vpop.f32.mrf.mxu0
    %v7930 = vadd.f32 0.0, %v7929
    %v7931 = vpop.f32.mrf.mxu0
    %v7932 = vadd.f32 0.0, %v7931
    %7933 = vdwg.mxu0
    %7934 = vmatpush.bf16.msra.mxu0 0
    %7935 = vmatpush.bf16.msra.mxu0 %v7721
    %7936 = vmatpush.bf16.msra.mxu0 %v7717
    %7937 = vmatpush.bf16.msra.mxu0 %v7713
    %7938 = vmatpush.bf16.msra.mxu0 %v7709
    %7939 = vmatpush.bf16.msra.mxu0 %v7705
    %7940 = vmatpush.bf16.msra.mxu0 %v7701
    %7941 = vmatpush.bf16.msra.mxu0 %v7697
    %7942 = vmatmul.bf16.gmra.mxu0 %v4646
    %v7943 = vpop.f32.mrf.mxu0
    %v7944 = vadd.f32 %v7895, %v7943
    %v7945 = vpop.f32.mrf.mxu0
    %v7946 = vadd.f32 %v7897, %v7945
    %7947 = vmatmul.bf16.gmra.mxu0 %v4649
    %v7948 = vpop.f32.mrf.mxu0
    %v7949 = vadd.f32 %v7900, %v7948
    %v7950 = vpop.f32.mrf.mxu0
    %v7951 = vadd.f32 %v7902, %v7950
    %7952 = vmatmul.bf16.gmra.mxu0 %v4652
    %v7953 = vpop.f32.mrf.mxu0
    %v7954 = vadd.f32 %v7905, %v7953
    %v7955 = vpop.f32.mrf.mxu0
    %v7956 = vadd.f32 %v7907, %v7955
    %7957 = vmatmul.bf16.gmra.mxu0 %v4655
    %v7958 = vpop.f32.mrf.mxu0
    %v7959 = vadd.f32 %v7910, %v7958
    %v7960 = vpop.f32.mrf.mxu0
    %v7961 = vadd.f32 %v7912, %v7960
    %7962 = vmatmul.bf16.gmra.mxu0 %v4658
    %v7963 = vpop.f32.mrf.mxu0
    %v7964 = vadd.f32 %v7915, %v7963
    %v7965 = vpop.f32.mrf.mxu0
    %v7966 = vadd.f32 %v7917, %v7965
    %7967 = vmatmul.bf16.gmra.mxu0 %v6127
    %v7968 = vpop.f32.mrf.mxu0
    %v7969 = vadd.f32 %v7920, %v7968
    %v7970 = vpop.f32.mrf.mxu0
    %v7971 = vadd.f32 %v7922, %v7970
    %7972 = vmatmul.bf16.gmra.mxu0 %v6956
    %v7973 = vpop.f32.mrf.mxu0
    %v7974 = vadd.f32 %v7925, %v7973
    %v7975 = vpop.f32.mrf.mxu0
    %v7976 = vadd.f32 %v7927, %v7975
    %7977 = vmatmul.bf16.gmra.mxu0 %v7785
    %v7978 = vpop.f32.mrf.mxu0
    %v7979 = vadd.f32 %v7930, %v7978
    %v7980 = vpop.f32.mrf.mxu0
    %v7981 = vadd.f32 %v7932, %v7980
    %7982 = vdwg.mxu0
    %7983 = vmatpush.bf16.msra.mxu0 %v7694
    %7984 = vmatpush.bf16.msra.mxu0 %v7690
    %7985 = vmatpush.bf16.msra.mxu0 %v7686
    %7986 = vmatpush.bf16.msra.mxu0 %v7682
    %7987 = vmatpush.bf16.msra.mxu0 %v7678
    %7988 = vmatpush.bf16.msra.mxu0 %v7674
    %7989 = vmatpush.bf16.msra.mxu0 %v7670
    %7990 = vmatpush.bf16.msra.mxu0 %v7666
    %7991 = vmatmul.bf16.gmra.mxu0 %v4317
    %v7992 = vpop.f32.mrf.mxu0
    %v7993 = vadd.f32 0.0, %v7992
    %v7994 = vpop.f32.mrf.mxu0
    %v7995 = vadd.f32 0.0, %v7994
    %7996 = vmatmul.bf16.gmra.mxu0 %v4319
    %v7997 = vpop.f32.mrf.mxu0
    %v7998 = vadd.f32 0.0, %v7997
    %v7999 = vpop.f32.mrf.mxu0
    %v8000 = vadd.f32 0.0, %v7999
    %8001 = vmatmul.bf16.gmra.mxu0 %v4321
    %v8002 = vpop.f32.mrf.mxu0
    %v8003 = vadd.f32 0.0, %v8002
    %v8004 = vpop.f32.mrf.mxu0
    %v8005 = vadd.f32 0.0, %v8004
    %8006 = vmatmul.bf16.gmra.mxu0 %v4323
    %v8007 = vpop.f32.mrf.mxu0
    %v8008 = vadd.f32 0.0, %v8007
    %v8009 = vpop.f32.mrf.mxu0
    %v8010 = vadd.f32 0.0, %v8009
    %8011 = vmatmul.bf16.gmra.mxu0 %v4325
    %v8012 = vpop.f32.mrf.mxu0
    %v8013 = vadd.f32 0.0, %v8012
    %v8014 = vpop.f32.mrf.mxu0
    %v8015 = vadd.f32 0.0, %v8014
    %8016 = vmatmul.bf16.gmra.mxu0 %v5823
    %v8017 = vpop.f32.mrf.mxu0
    %v8018 = vadd.f32 0.0, %v8017
    %v8019 = vpop.f32.mrf.mxu0
    %v8020 = vadd.f32 0.0, %v8019
    %8021 = vmatmul.bf16.gmra.mxu0 %v6652
    %v8022 = vpop.f32.mrf.mxu0
    %v8023 = vadd.f32 0.0, %v8022
    %v8024 = vpop.f32.mrf.mxu0
    %v8025 = vadd.f32 0.0, %v8024
    %8026 = vmatmul.bf16.gmra.mxu0 %v7481
    %v8027 = vpop.f32.mrf.mxu0
    %v8028 = vadd.f32 0.0, %v8027
    %v8029 = vpop.f32.mrf.mxu0
    %v8030 = vadd.f32 0.0, %v8029
    %8031 = vdwg.mxu0
    %8032 = vmatpush.bf16.msra.mxu0 0
    %8033 = vmatpush.bf16.msra.mxu0 %v7722
    %8034 = vmatpush.bf16.msra.mxu0 %v7718
    %8035 = vmatpush.bf16.msra.mxu0 %v7714
    %8036 = vmatpush.bf16.msra.mxu0 %v7710
    %8037 = vmatpush.bf16.msra.mxu0 %v7706
    %8038 = vmatpush.bf16.msra.mxu0 %v7702
    %8039 = vmatpush.bf16.msra.mxu0 %v7698
    %8040 = vmatmul.bf16.gmra.mxu0 %v4646
    %v8041 = vpop.f32.mrf.mxu0
    %v8042 = vadd.f32 %v7993, %v8041
    %v8043 = vpop.f32.mrf.mxu0
    %v8044 = vadd.f32 %v7995, %v8043
    %8045 = vmatmul.bf16.gmra.mxu0 %v4649
    %v8046 = vpop.f32.mrf.mxu0
    %v8047 = vadd.f32 %v7998, %v8046
    %v8048 = vpop.f32.mrf.mxu0
    %v8049 = vadd.f32 %v8000, %v8048
    %8050 = vmatmul.bf16.gmra.mxu0 %v4652
    %v8051 = vpop.f32.mrf.mxu0
    %v8052 = vadd.f32 %v8003, %v8051
    %v8053 = vpop.f32.mrf.mxu0
    %v8054 = vadd.f32 %v8005, %v8053
    %8055 = vmatmul.bf16.gmra.mxu0 %v4655
    %v8056 = vpop.f32.mrf.mxu0
    %v8057 = vadd.f32 %v8008, %v8056
    %v8058 = vpop.f32.mrf.mxu0
    %v8059 = vadd.f32 %v8010, %v8058
    %8060 = vmatmul.bf16.gmra.mxu0 %v4658
    %v8061 = vpop.f32.mrf.mxu0
    %v8062 = vadd.f32 %v8013, %v8061
    %v8063 = vpop.f32.mrf.mxu0
    %v8064 = vadd.f32 %v8015, %v8063
    %8065 = vmatmul.bf16.gmra.mxu0 %v6127
    %v8066 = vpop.f32.mrf.mxu0
    %v8067 = vadd.f32 %v8018, %v8066
    %v8068 = vpop.f32.mrf.mxu0
    %v8069 = vadd.f32 %v8020, %v8068
    %8070 = vmatmul.bf16.gmra.mxu0 %v6956
    %v8071 = vpop.f32.mrf.mxu0
    %v8072 = vadd.f32 %v8023, %v8071
    %v8073 = vpop.f32.mrf.mxu0
    %v8074 = vadd.f32 %v8025, %v8073
    %8075 = vmatmul.bf16.gmra.mxu0 %v7785
    %v8076 = vpop.f32.mrf.mxu0
    %v8077 = vadd.f32 %v8028, %v8076
    %v8078 = vpop.f32.mrf.mxu0
    %v8079 = vadd.f32 %v8030, %v8078
    %8080 = vdwg.mxu0
    %8081 = vmatpush.bf16.msra.mxu0 %v7695
    %8082 = vmatpush.bf16.msra.mxu0 %v7691
    %8083 = vmatpush.bf16.msra.mxu0 %v7687
    %8084 = vmatpush.bf16.msra.mxu0 %v7683
    %8085 = vmatpush.bf16.msra.mxu0 %v7679
    %8086 = vmatpush.bf16.msra.mxu0 %v7675
    %8087 = vmatpush.bf16.msra.mxu0 %v7671
    %8088 = vmatpush.bf16.msra.mxu0 %v7667
    %8089 = vmatmul.bf16.gmra.mxu0 %v4317
    %v8090 = vpop.f32.mrf.mxu0
    %v8091 = vadd.f32 0.0, %v8090
    %v8092 = vpop.f32.mrf.mxu0
    %v8093 = vadd.f32 0.0, %v8092
    %8094 = vmatmul.bf16.gmra.mxu0 %v4319
    %v8095 = vpop.f32.mrf.mxu0
    %v8096 = vadd.f32 0.0, %v8095
    %v8097 = vpop.f32.mrf.mxu0
    %v8098 = vadd.f32 0.0, %v8097
    %8099 = vmatmul.bf16.gmra.mxu0 %v4321
    %v8100 = vpop.f32.mrf.mxu0
    %v8101 = vadd.f32 0.0, %v8100
    %v8102 = vpop.f32.mrf.mxu0
    %v8103 = vadd.f32 0.0, %v8102
    %8104 = vmatmul.bf16.gmra.mxu0 %v4323
    %v8105 = vpop.f32.mrf.mxu0
    %v8106 = vadd.f32 0.0, %v8105
    %v8107 = vpop.f32.mrf.mxu0
    %v8108 = vadd.f32 0.0, %v8107
    %8109 = vmatmul.bf16.gmra.mxu0 %v4325
    %v8110 = vpop.f32.mrf.mxu0
    %v8111 = vadd.f32 0.0, %v8110
    %v8112 = vpop.f32.mrf.mxu0
    %v8113 = vadd.f32 0.0, %v8112
    %8114 = vmatmul.bf16.gmra.mxu0 %v5823
    %v8115 = vpop.f32.mrf.mxu0
    %v8116 = vadd.f32 0.0, %v8115
    %v8117 = vpop.f32.mrf.mxu0
    %v8118 = vadd.f32 0.0, %v8117
    %8119 = vmatmul.bf16.gmra.mxu0 %v6652
    %v8120 = vpop.f32.mrf.mxu0
    %v8121 = vadd.f32 0.0, %v8120
    %v8122 = vpop.f32.mrf.mxu0
    %v8123 = vadd.f32 0.0, %v8122
    %8124 = vmatmul.bf16.gmra.mxu0 %v7481
    %v8125 = vpop.f32.mrf.mxu0
    %v8126 = vadd.f32 0.0, %v8125
    %v8127 = vpop.f32.mrf.mxu0
    %v8128 = vadd.f32 0.0, %v8127
    %8129 = vdwg.mxu0
    %8130 = vmatpush.bf16.msra.mxu0 0
    %8131 = vmatpush.bf16.msra.mxu0 %v7723
    %8132 = vmatpush.bf16.msra.mxu0 %v7719
    %8133 = vmatpush.bf16.msra.mxu0 %v7715
    %8134 = vmatpush.bf16.msra.mxu0 %v7711
    %8135 = vmatpush.bf16.msra.mxu0 %v7707
    %8136 = vmatpush.bf16.msra.mxu0 %v7703
    %8137 = vmatpush.bf16.msra.mxu0 %v7699
    %8138 = vmatmul.bf16.gmra.mxu0 %v4646
    %v8139 = vpop.f32.mrf.mxu0
    %v8140 = vadd.f32 %v8091, %v8139
    %v8141 = vpop.f32.mrf.mxu0
    %v8142 = vadd.f32 %v8093, %v8141
    %8143 = vmatmul.bf16.gmra.mxu0 %v4649
    %v8144 = vpop.f32.mrf.mxu0
    %v8145 = vadd.f32 %v8096, %v8144
    %v8146 = vpop.f32.mrf.mxu0
    %v8147 = vadd.f32 %v8098, %v8146
    %8148 = vmatmul.bf16.gmra.mxu0 %v4652
    %v8149 = vpop.f32.mrf.mxu0
    %v8150 = vadd.f32 %v8101, %v8149
    %v8151 = vpop.f32.mrf.mxu0
    %v8152 = vadd.f32 %v8103, %v8151
    %8153 = vmatmul.bf16.gmra.mxu0 %v4655
    %v8154 = vpop.f32.mrf.mxu0
    %v8155 = vadd.f32 %v8106, %v8154
    %v8156 = vpop.f32.mrf.mxu0
    %v8157 = vadd.f32 %v8108, %v8156
    %8158 = vmatmul.bf16.gmra.mxu0 %v4658
    %v8159 = vpop.f32.mrf.mxu0
    %v8160 = vadd.f32 %v8111, %v8159
    %v8161 = vpop.f32.mrf.mxu0
    %v8162 = vadd.f32 %v8113, %v8161
    %8163 = vmatmul.bf16.gmra.mxu0 %v6127
    %v8164 = vpop.f32.mrf.mxu0
    %v8165 = vadd.f32 %v8116, %v8164
    %v8166 = vpop.f32.mrf.mxu0
    %v8167 = vadd.f32 %v8118, %v8166
    %8168 = vmatmul.bf16.gmra.mxu0 %v6956
    %v8169 = vpop.f32.mrf.mxu0
    %v8170 = vadd.f32 %v8121, %v8169
    %v8171 = vpop.f32.mrf.mxu0
    %v8172 = vadd.f32 %v8123, %v8171
    %8173 = vmatmul.bf16.gmra.mxu0 %v7785
    %v8174 = vpop.f32.mrf.mxu0
    %v8175 = vadd.f32 %v8126, %v8174
    %v8176 = vpop.f32.mrf.mxu0
    %v8177 = vadd.f32 %v8128, %v8176
    %8178 = vdwg.mxu0
    %v8179 = vadd.f32 %v7350, %v7846
    %v8180 = vadd.f32 %v7351, %v7944
    %v8181 = vadd.f32 %v7352, %v8042
    %v8182 = vadd.f32 %v7353, %v8140
    %v8183 = vadd.f32 %v7354, %v7848
    %v8184 = vadd.f32 %v7355, %v7946
    %v8185 = vadd.f32 %v7356, %v8044
    %v8186 = vadd.f32 %v7357, %v8142
    %v8187 = vadd.f32 %v7358, %v7851
    %v8188 = vadd.f32 %v7359, %v7949
    %v8189 = vadd.f32 %v7360, %v8047
    %v8190 = vadd.f32 %v7361, %v8145
    %v8191 = vadd.f32 %v7362, %v7853
    %v8192 = vadd.f32 %v7363, %v7951
    %v8193 = vadd.f32 %v7364, %v8049
    %v8194 = vadd.f32 %v7365, %v8147
    %v8195 = vadd.f32 %v7366, %v7856
    %v8196 = vadd.f32 %v7367, %v7954
    %v8197 = vadd.f32 %v7368, %v8052
    %v8198 = vadd.f32 %v7369, %v8150
    %v8199 = vadd.f32 %v7370, %v7858
    %v8200 = vadd.f32 %v7371, %v7956
    %v8201 = vadd.f32 %v7372, %v8054
    %v8202 = vadd.f32 %v7373, %v8152
    %v8203 = vadd.f32 %v7374, %v7861
    %v8204 = vadd.f32 %v7375, %v7959
    %v8205 = vadd.f32 %v7376, %v8057
    %v8206 = vadd.f32 %v7377, %v8155
    %v8207 = vadd.f32 %v7378, %v7863
    %v8208 = vadd.f32 %v7379, %v7961
    %v8209 = vadd.f32 %v7380, %v8059
    %v8210 = vadd.f32 %v7381, %v8157
    %v8211 = vadd.f32 %v7382, %v7866
    %v8212 = vadd.f32 %v7383, %v7964
    %v8213 = vadd.f32 %v7384, %v8062
    %v8214 = vadd.f32 %v7385, %v8160
    %v8215 = vadd.f32 %v7386, %v7868
    %v8216 = vadd.f32 %v7387, %v7966
    %v8217 = vadd.f32 %v7388, %v8064
    %v8218 = vadd.f32 %v7389, %v8162
    %v8219 = vadd.f32 %v7390, %v7871
    %v8220 = vadd.f32 %v7391, %v7969
    %v8221 = vadd.f32 %v7392, %v8067
    %v8222 = vadd.f32 %v7393, %v8165
    %v8223 = vadd.f32 %v7394, %v7873
    %v8224 = vadd.f32 %v7395, %v7971
    %v8225 = vadd.f32 %v7396, %v8069
    %v8226 = vadd.f32 %v7397, %v8167
    %v8227 = vadd.f32 %v7398, %v7876
    %v8228 = vadd.f32 %v7399, %v7974
    %v8229 = vadd.f32 %v7400, %v8072
    %v8230 = vadd.f32 %v7401, %v8170
    %v8231 = vadd.f32 %v7402, %v7878
    %v8232 = vadd.f32 %v7403, %v7976
    %v8233 = vadd.f32 %v7404, %v8074
    %v8234 = vadd.f32 %v7405, %v8172
    %v8235 = vadd.f32 %v7406, %v7881
    %v8236 = vadd.f32 %v7407, %v7979
    %v8237 = vadd.f32 %v7408, %v8077
    %v8238 = vadd.f32 %v7409, %v8175
    %v8239 = vadd.f32 %v7410, %v7883
    %v8240 = vadd.f32 %v7411, %v7981
    %v8241 = vadd.f32 %v7412, %v8079
    %v8242 = vadd.f32 %v7413, %v8177
    %v8243 = vmax.f32 %v8179, %v8187
    %v8244 = vmax.f32 %v8180, %v8188
    %v8245 = vmax.f32 %v8181, %v8189
    %v8246 = vmax.f32 %v8182, %v8190
    %v8247 = vmax.f32 %v8183, %v8191
    %v8248 = vmax.f32 %v8184, %v8192
    %v8249 = vmax.f32 %v8185, %v8193
    %v8250 = vmax.f32 %v8186, %v8194
    %v8251 = vmax.f32 %v8195, %v8203
    %v8252 = vmax.f32 %v8196, %v8204
    %v8253 = vmax.f32 %v8197, %v8205
    %v8254 = vmax.f32 %v8198, %v8206
    %v8255 = vmax.f32 %v8199, %v8207
    %v8256 = vmax.f32 %v8200, %v8208
    %v8257 = vmax.f32 %v8201, %v8209
    %v8258 = vmax.f32 %v8202, %v8210
    %v8259 = vmax.f32 %v8211, %v8219
    %v8260 = vmax.f32 %v8212, %v8220
    %v8261 = vmax.f32 %v8213, %v8221
    %v8262 = vmax.f32 %v8214, %v8222
    %v8263 = vmax.f32 %v8215, %v8223
    %v8264 = vmax.f32 %v8216, %v8224
    %v8265 = vmax.f32 %v8217, %v8225
    %v8266 = vmax.f32 %v8218, %v8226
    %v8267 = vmax.f32 %v8227, %v8235
    %v8268 = vmax.f32 %v8228, %v8236
    %v8269 = vmax.f32 %v8229, %v8237
    %v8270 = vmax.f32 %v8230, %v8238
    %v8271 = vmax.f32 %v8231, %v8239
    %v8272 = vmax.f32 %v8232, %v8240
    %v8273 = vmax.f32 %v8233, %v8241
    %v8274 = vmax.f32 %v8234, %v8242
    %v8275 = vmax.f32 %v8243, %v8245
    %v8276 = vmax.f32 %v8244, %v8246
    %v8277 = vmax.f32 %v8247, %v8249
    %v8278 = vmax.f32 %v8248, %v8250
    %v8279 = vmax.f32 %v8251, %v8253
    %v8280 = vmax.f32 %v8252, %v8254
    %v8281 = vmax.f32 %v8255, %v8257
    %v8282 = vmax.f32 %v8256, %v8258
    %v8283 = vmax.f32 %v8259, %v8261
    %v8284 = vmax.f32 %v8260, %v8262
    %v8285 = vmax.f32 %v8263, %v8265
    %v8286 = vmax.f32 %v8264, %v8266
    %v8287 = vmax.f32 %v8267, %v8269
    %v8288 = vmax.f32 %v8268, %v8270
    %v8289 = vmax.f32 %v8271, %v8273
    %v8290 = vmax.f32 %v8272, %v8274
    %v8291 = vld [vmem:[#allocation7] sm:$0x3]
    %v8293 = vperm.slane %v8291, 0
    %v8294 = vperm.slane %v8291, 1
    %v8297 = vadd.f32 %v8275, %v8293
    %v8298 = vadd.f32 %v8276, %v8294
    %v8299 = vadd.f32 %v8277, %v8293
    %v8300 = vadd.f32 %v8278, %v8294
    %v8301 = vadd.f32 %v8279, %v8293
    %v8302 = vadd.f32 %v8280, %v8294
    %v8303 = vadd.f32 %v8281, %v8293
    %v8304 = vadd.f32 %v8282, %v8294
    %v8305 = vadd.f32 %v8283, %v8293
    %v8306 = vadd.f32 %v8284, %v8294
    %v8307 = vadd.f32 %v8285, %v8293
    %v8308 = vadd.f32 %v8286, %v8294
    %v8309 = vadd.f32 %v8287, %v8293
    %v8310 = vadd.f32 %v8288, %v8294
    %v8311 = vadd.f32 %v8289, %v8293
    %v8312 = vadd.f32 %v8290, %v8294
    %v8313 = vmax.f32 %v8297, 0.0
    %v8314 = vmax.f32 %v8298, 0.0
    %v8315 = vmax.f32 %v8299, 0.0
    %v8316 = vmax.f32 %v8300, 0.0
    %v8317 = vmax.f32 %v8301, 0.0
    %v8318 = vmax.f32 %v8302, 0.0
    %v8319 = vmax.f32 %v8303, 0.0
    %v8320 = vmax.f32 %v8304, 0.0
    %v8321 = vmax.f32 %v8305, 0.0
    %v8322 = vmax.f32 %v8306, 0.0
    %v8323 = vmax.f32 %v8307, 0.0
    %v8324 = vmax.f32 %v8308, 0.0
    %v8325 = vmax.f32 %v8309, 0.0
    %v8326 = vmax.f32 %v8310, 0.0
    %v8327 = vmax.f32 %v8311, 0.0
    %v8328 = vmax.f32 %v8312, 0.0
    %v8329 = vpack.c.bf16 %v8314, %v8313
    %v8330 = vpack.c.bf16 %v8316, %v8315
    %v8331 = vpack.c.bf16 %v8318, %v8317
    %v8332 = vpack.c.bf16 %v8320, %v8319
    %v8333 = vpack.c.bf16 %v8322, %v8321
    %v8334 = vpack.c.bf16 %v8324, %v8323
    %v8335 = vpack.c.bf16 %v8326, %v8325
    %v8336 = vpack.c.bf16 %v8328, %v8327
    %v8337 = vld [vmem:[#allocation9] sm:$0xff]
    %v8338 = vld [vmem:[#allocation9 + $0x8] sm:$0xff]
    %v8339 = vld [vmem:[#allocation9 + $0x10] sm:$0xff]
    %v8340 = vld [vmem:[#allocation9 + $0x18] sm:$0xff]
    %v8341 = vld [vmem:[#allocation9 + $0x20] sm:$0xff]
    %v8342 = vld [vmem:[#allocation9 + $0x28] sm:$0xff]
    %v8343 = vld [vmem:[#allocation9 + $0x30] sm:$0xff]
    %v8344 = vld [vmem:[#allocation9 + $0x38] sm:$0xff]
    %v8345 = vld [vmem:[#allocation9 + $0x40] sm:$0xff]
    %v8346 = vld [vmem:[#allocation9 + $0x48] sm:$0xff]
    %v8347 = vld [vmem:[#allocation9 + $0x50] sm:$0xff]
    %v8348 = vld [vmem:[#allocation9 + $0x58] sm:$0xff]
    %v8349 = vld [vmem:[#allocation9 + $0x60] sm:$0xff]
    %v8350 = vld [vmem:[#allocation9 + $0x68] sm:$0xff]
    %v8351 = vld [vmem:[#allocation9 + $0x70] sm:$0xff]
    %v8352 = vld [vmem:[#allocation9 + $0x78] sm:$0xff]
    %v8353 = vld [vmem:[#allocation9 + $0x80] sm:$0xff]
    %v8354 = vld [vmem:[#allocation9 + $0x88] sm:$0xff]
    %v8355 = vld [vmem:[#allocation9 + $0x90] sm:$0xff]
    %v8356 = vld [vmem:[#allocation9 + $0x98] sm:$0xff]
    %v8357 = vld [vmem:[#allocation9 + $0xa0] sm:$0xff]
    %v8358 = vld [vmem:[#allocation9 + $0xa8] sm:$0xff]
    %v8359 = vld [vmem:[#allocation9 + $0xb0] sm:$0xff]
    %v8360 = vld [vmem:[#allocation9 + $0xb8] sm:$0xff]
    %v8361 = vld [vmem:[#allocation9 + $0xc0] sm:$0xff]
    %v8362 = vld [vmem:[#allocation9 + $0xc8] sm:$0xff]
    %v8363 = vld [vmem:[#allocation9 + $0xd0] sm:$0xff]
    %v8364 = vld [vmem:[#allocation9 + $0xd8] sm:$0xff]
    %v8365 = vld [vmem:[#allocation9 + $0xe0] sm:$0xff]
    %v8366 = vld [vmem:[#allocation9 + $0xe8] sm:$0xff]
    %v8367 = vld [vmem:[#allocation9 + $0xf0] sm:$0xff]
    %v8368 = vld [vmem:[#allocation9 + $0xf8] sm:$0xff]
    %v8369 = vld [vmem:[#allocation9 + $0x100] sm:$0xff]
    %v8370 = vld [vmem:[#allocation9 + $0x108] sm:$0xff]
    %v8371 = vld [vmem:[#allocation9 + $0x110] sm:$0xff]
    %v8372 = vld [vmem:[#allocation9 + $0x118] sm:$0xff]
    %v8373 = vld [vmem:[#allocation9 + $0x120] sm:$0xff]
    %v8374 = vld [vmem:[#allocation9 + $0x128] sm:$0xff]
    %v8375 = vld [vmem:[#allocation9 + $0x130] sm:$0xff]
    %v8376 = vld [vmem:[#allocation9 + $0x138] sm:$0xff]
    %v8377 = vld [vmem:[#allocation9 + $0x140] sm:$0xff]
    %v8378 = vld [vmem:[#allocation9 + $0x148] sm:$0xff]
    %v8379 = vld [vmem:[#allocation9 + $0x150] sm:$0xff]
    %v8380 = vld [vmem:[#allocation9 + $0x158] sm:$0xff]
    %v8381 = vld [vmem:[#allocation9 + $0x160] sm:$0xff]
    %v8382 = vld [vmem:[#allocation9 + $0x168] sm:$0xff]
    %v8383 = vld [vmem:[#allocation9 + $0x170] sm:$0xff]
    %v8384 = vld [vmem:[#allocation9 + $0x178] sm:$0xff]
    %v8385 = vld [vmem:[#allocation9 + $0x180] sm:$0xff]
    %v8386 = vld [vmem:[#allocation9 + $0x188] sm:$0xff]
    %s8387 = scalar_lea.vmem [#allocation9], 400
    %v8388 = vld [vmem:[%s8387] sm:$0xff]
    %v8389 = vld [vmem:[%s8387 + $0x8] sm:$0xff]
    %v8390 = vld [vmem:[%s8387 + $0x10] sm:$0xff]
    %v8391 = vld [vmem:[%s8387 + $0x18] sm:$0xff]
    %v8392 = vld [vmem:[%s8387 + $0x20] sm:$0xff]
    %v8393 = vld [vmem:[%s8387 + $0x28] sm:$0xff]
    %v8394 = vld [vmem:[%s8387 + $0x30] sm:$0xff]
    %v8395 = vld [vmem:[%s8387 + $0x38] sm:$0xff]
    %v8396 = vld [vmem:[%s8387 + $0x40] sm:$0xff]
    %v8397 = vld [vmem:[%s8387 + $0x48] sm:$0xff]
    %v8398 = vld [vmem:[%s8387 + $0x50] sm:$0xff]
    %v8399 = vld [vmem:[%s8387 + $0x58] sm:$0xff]
    %v8400 = vld [vmem:[%s8387 + $0x60] sm:$0xff]
    %v8401 = vld [vmem:[%s8387 + $0x68] sm:$0xff]
    %v8402 = vld [vmem:[%s8387 + $0x70] sm:$0xff]
    %v8403 = vld [vmem:[%s8387 + $0x78] sm:$0xff]
    %v8404 = vld [vmem:[%s8387 + $0x80] sm:$0xff]
    %v8405 = vld [vmem:[%s8387 + $0x88] sm:$0xff]
    %v8406 = vld [vmem:[%s8387 + $0x90] sm:$0xff]
    %v8407 = vld [vmem:[%s8387 + $0x98] sm:$0xff]
    %v8408 = vld [vmem:[%s8387 + $0xa0] sm:$0xff]
    %v8409 = vld [vmem:[%s8387 + $0xa8] sm:$0xff]
    %v8410 = vld [vmem:[%s8387 + $0xb0] sm:$0xff]
    %v8411 = vld [vmem:[%s8387 + $0xb8] sm:$0xff]
    %v8412 = vld [vmem:[%s8387 + $0xc0] sm:$0xff]
    %v8413 = vld [vmem:[%s8387 + $0xc8] sm:$0xff]
    %v8414 = vld [vmem:[%s8387 + $0xd0] sm:$0xff]
    %v8415 = vld [vmem:[%s8387 + $0xd8] sm:$0xff]
    %v8416 = vld [vmem:[%s8387 + $0xe0] sm:$0xff]
    %v8417 = vld [vmem:[%s8387 + $0xe8] sm:$0xff]
    %v8418 = vld [vmem:[%s8387 + $0xf0] sm:$0xff]
    %v8419 = vld [vmem:[%s8387 + $0xf8] sm:$0xff]
    %v8420 = vld [vmem:[%s8387 + $0x100] sm:$0xff]
    %v8421 = vld [vmem:[%s8387 + $0x108] sm:$0xff]
    %v8422 = vld [vmem:[%s8387 + $0x110] sm:$0xff]
    %v8423 = vld [vmem:[%s8387 + $0x118] sm:$0xff]
    %v8424 = vld [vmem:[%s8387 + $0x120] sm:$0xff]
    %v8425 = vld [vmem:[%s8387 + $0x128] sm:$0xff]
    %v8426 = vld [vmem:[%s8387 + $0x130] sm:$0xff]
    %v8427 = vld [vmem:[%s8387 + $0x138] sm:$0xff]
    %v8428 = vld [vmem:[%s8387 + $0x140] sm:$0xff]
    %v8429 = vld [vmem:[%s8387 + $0x148] sm:$0xff]
    %v8430 = vld [vmem:[%s8387 + $0x150] sm:$0xff]
    %v8431 = vld [vmem:[%s8387 + $0x158] sm:$0xff]
    %v8432 = vld [vmem:[%s8387 + $0x160] sm:$0xff]
    %v8433 = vld [vmem:[%s8387 + $0x168] sm:$0xff]
    %v8434 = vld [vmem:[%s8387 + $0x170] sm:$0xff]
    %v8435 = vld [vmem:[%s8387 + $0x178] sm:$0xff]
    %v8436 = vld [vmem:[%s8387 + $0x180] sm:$0xff]
    %v8437 = vld [vmem:[%s8387 + $0x188] sm:$0xff]
    %v8440 = vunpack.c.l.b16 %v8331
    %v8441 = vunpack.c.h.b16 %v8331
    %v8442 = vunpack.c.l.b16 %v8332
    %v8443 = vunpack.c.h.b16 %v8332
    %v8444 = vpack.c.b16 %v8442, %v8440
    %v8445 = vpack.c.b16 %v8443, %v8441
    %v8497 = vunpack.c.l.b16 %v8388
    %v8498 = vunpack.c.h.b16 %v8388
    %v8499 = vunpack.c.l.b16 %v8389
    %v8500 = vunpack.c.h.b16 %v8389
    %v8501 = vunpack.c.l.b16 %v8390
    %v8502 = vunpack.c.h.b16 %v8390
    %v8503 = vunpack.c.l.b16 %v8391
    %v8504 = vunpack.c.h.b16 %v8391
    %v8505 = vunpack.c.l.b16 %v8392
    %v8506 = vunpack.c.h.b16 %v8392
    %v8507 = vunpack.c.l.b16 %v8393
    %v8508 = vunpack.c.h.b16 %v8393
    %v8509 = vunpack.c.l.b16 %v8394
    %v8510 = vunpack.c.h.b16 %v8394
    %v8511 = vunpack.c.l.b16 %v8395
    %v8512 = vunpack.c.h.b16 %v8395
    %v8513 = vunpack.c.l.b16 %v8396
    %v8514 = vunpack.c.h.b16 %v8396
    %v8515 = vunpack.c.l.b16 %v8397
    %v8516 = vunpack.c.h.b16 %v8397
    %v8517 = vunpack.c.l.b16 %v8398
    %v8518 = vunpack.c.h.b16 %v8398
    %v8519 = vunpack.c.l.b16 %v8399
    %v8520 = vunpack.c.h.b16 %v8399
    %v8521 = vunpack.c.l.b16 %v8400
    %v8522 = vunpack.c.h.b16 %v8400
    %v8523 = vunpack.c.l.b16 %v8401
    %v8524 = vunpack.c.h.b16 %v8401
    %v8525 = vunpack.c.l.b16 %v8402
    %v8526 = vunpack.c.h.b16 %v8402
    %v8527 = vunpack.c.l.b16 %v8403
    %v8528 = vunpack.c.h.b16 %v8403
    %v8529 = vunpack.c.l.b16 %v8404
    %v8530 = vunpack.c.h.b16 %v8404
    %v8531 = vunpack.c.l.b16 %v8405
    %v8532 = vunpack.c.h.b16 %v8405
    %v8533 = vunpack.c.l.b16 %v8406
    %v8534 = vunpack.c.h.b16 %v8406
    %v8535 = vunpack.c.l.b16 %v8407
    %v8536 = vunpack.c.h.b16 %v8407
    %v8537 = vunpack.c.l.b16 %v8408
    %v8538 = vunpack.c.h.b16 %v8408
    %v8539 = vunpack.c.l.b16 %v8409
    %v8540 = vunpack.c.h.b16 %v8409
    %v8541 = vunpack.c.l.b16 %v8410
    %v8542 = vunpack.c.h.b16 %v8410
    %v8543 = vunpack.c.l.b16 %v8411
    %v8544 = vunpack.c.h.b16 %v8411
    %v8545 = vunpack.c.l.b16 %v8412
    %v8546 = vunpack.c.h.b16 %v8412
    %v8547 = vunpack.c.l.b16 %v8413
    %v8548 = vunpack.c.h.b16 %v8413
    %v8549 = vunpack.c.l.b16 %v8414
    %v8550 = vunpack.c.h.b16 %v8414
    %v8551 = vunpack.c.l.b16 %v8415
    %v8552 = vunpack.c.h.b16 %v8415
    %v8553 = vunpack.c.l.b16 %v8416
    %v8554 = vunpack.c.h.b16 %v8416
    %v8555 = vunpack.c.l.b16 %v8417
    %v8556 = vunpack.c.h.b16 %v8417
    %v8557 = vunpack.c.l.b16 %v8418
    %v8558 = vunpack.c.h.b16 %v8418
    %v8559 = vunpack.c.l.b16 %v8419
    %v8560 = vunpack.c.h.b16 %v8419
    %v8561 = vunpack.c.l.b16 %v8420
    %v8562 = vunpack.c.h.b16 %v8420
    %v8563 = vunpack.c.l.b16 %v8421
    %v8564 = vunpack.c.h.b16 %v8421
    %v8565 = vunpack.c.l.b16 %v8422
    %v8566 = vunpack.c.h.b16 %v8422
    %v8567 = vunpack.c.l.b16 %v8423
    %v8568 = vunpack.c.h.b16 %v8423
    %v8569 = vunpack.c.l.b16 %v8424
    %v8570 = vunpack.c.h.b16 %v8424
    %v8571 = vunpack.c.l.b16 %v8425
    %v8572 = vunpack.c.h.b16 %v8425
    %v8573 = vunpack.c.l.b16 %v8426
    %v8574 = vunpack.c.h.b16 %v8426
    %v8575 = vunpack.c.l.b16 %v8427
    %v8576 = vunpack.c.h.b16 %v8427
    %v8577 = vunpack.c.l.b16 %v8428
    %v8578 = vunpack.c.h.b16 %v8428
    %v8579 = vunpack.c.l.b16 %v8429
    %v8580 = vunpack.c.h.b16 %v8429
    %v8581 = vunpack.c.l.b16 %v8430
    %v8582 = vunpack.c.h.b16 %v8430
    %v8583 = vunpack.c.l.b16 %v8431
    %v8584 = vunpack.c.h.b16 %v8431
    %v8585 = vunpack.c.l.b16 %v8432
    %v8586 = vunpack.c.h.b16 %v8432
    %v8587 = vunpack.c.l.b16 %v8433
    %v8588 = vunpack.c.h.b16 %v8433
    %v8589 = vunpack.c.l.b16 %v8434
    %v8590 = vunpack.c.h.b16 %v8434
    %v8591 = vunpack.c.l.b16 %v8435
    %v8592 = vunpack.c.h.b16 %v8435
    %v8593 = vunpack.c.l.b16 %v8436
    %v8594 = vunpack.c.h.b16 %v8436
    %v8595 = vunpack.c.l.b16 %v8437
    %v8596 = vunpack.c.h.b16 %v8437
    %v8597 = vpack.c.b16 %v8501, %v8497
    %v8598 = vpack.c.b16 %v8502, %v8498
    %v8599 = vpack.c.b16 %v8503, %v8499
    %v8600 = vpack.c.b16 %v8504, %v8500
    %v8601 = vpack.c.b16 %v8509, %v8505
    %v8602 = vpack.c.b16 %v8510, %v8506
    %v8603 = vpack.c.b16 %v8511, %v8507
    %v8604 = vpack.c.b16 %v8512, %v8508
    %v8605 = vpack.c.b16 %v8517, %v8513
    %v8606 = vpack.c.b16 %v8518, %v8514
    %v8607 = vpack.c.b16 %v8519, %v8515
    %v8608 = vpack.c.b16 %v8520, %v8516
    %v8609 = vpack.c.b16 %v8525, %v8521
    %v8610 = vpack.c.b16 %v8526, %v8522
    %v8611 = vpack.c.b16 %v8527, %v8523
    %v8612 = vpack.c.b16 %v8528, %v8524
    %v8613 = vpack.c.b16 %v8533, %v8529
    %v8614 = vpack.c.b16 %v8534, %v8530
    %v8615 = vpack.c.b16 %v8535, %v8531
    %v8616 = vpack.c.b16 %v8536, %v8532
    %v8617 = vpack.c.b16 %v8541, %v8537
    %v8618 = vpack.c.b16 %v8542, %v8538
    %v8619 = vpack.c.b16 %v8543, %v8539
    %v8620 = vpack.c.b16 %v8544, %v8540
    %v8621 = vpack.c.b16 %v8549, %v8545
    %v8622 = vpack.c.b16 %v8550, %v8546
    %v8623 = vpack.c.b16 %v8551, %v8547
    %v8624 = vpack.c.b16 %v8552, %v8548
    %v8625 = vpack.c.b16 %v8557, %v8553
    %v8626 = vpack.c.b16 %v8558, %v8554
    %v8627 = vpack.c.b16 %v8559, %v8555
    %v8628 = vpack.c.b16 %v8560, %v8556
    %v8629 = vpack.c.b16 %v8565, %v8561
    %v8630 = vpack.c.b16 %v8566, %v8562
    %v8631 = vpack.c.b16 %v8567, %v8563
    %v8632 = vpack.c.b16 %v8568, %v8564
    %v8633 = vpack.c.b16 %v8573, %v8569
    %v8634 = vpack.c.b16 %v8574, %v8570
    %v8635 = vpack.c.b16 %v8575, %v8571
    %v8636 = vpack.c.b16 %v8576, %v8572
    %v8637 = vpack.c.b16 %v8581, %v8577
    %v8638 = vpack.c.b16 %v8582, %v8578
    %v8639 = vpack.c.b16 %v8583, %v8579
    %v8640 = vpack.c.b16 %v8584, %v8580
    %v8641 = vpack.c.b16 %v8589, %v8585
    %v8642 = vpack.c.b16 %v8590, %v8586
    %v8643 = vpack.c.b16 %v8591, %v8587
    %v8644 = vpack.c.b16 %v8592, %v8588
    %v8645 = vpack.c.b16 %v8593, %v8593
    %v8646 = vpack.c.b16 %v8594, %v8594
    %v8647 = vpack.c.b16 %v8595, %v8595
    %v8648 = vpack.c.b16 %v8596, %v8596
    %vm8697 = vcmask 588800
    %v8699 = vsel %vm8697, %v8445, 0
    %vm8701 = vcmask 1043456
    %v8703 = vsel %vm8701, %v8645, 0
    %v8706 = vsel %vm8701, %v8646, 0
    %v8709 = vsel %vm8701, %v8647, 0
    %v8712 = vsel %vm8701, %v8648, 0
    %8714 = vmatpush.bf16.msra.mxu0 %v8625
    %8715 = vmatpush.bf16.msra.mxu0 %v8621
    %8716 = vmatpush.bf16.msra.mxu0 %v8617
    %8717 = vmatpush.bf16.msra.mxu0 %v8613
    %8718 = vmatpush.bf16.msra.mxu0 %v8609
    %8719 = vmatpush.bf16.msra.mxu0 %v8605
    %8720 = vmatpush.bf16.msra.mxu0 %v8601
    %8721 = vmatpush.bf16.msra.mxu0 %v8597
    %8722 = vmatmul.bf16.gmra.mxu0 %v8444
    %v8723 = vpop.f32.mrf.mxu0
    %v8724 = vadd.f32 0.0, %v8723
    %v8725 = vpop.f32.mrf.mxu0
    %v8726 = vadd.f32 0.0, %v8725
    %8727 = vdwg.mxu0
    %8728 = vmatpush.bf16.msra.mxu0 0
    %8729 = vmatpush.bf16.msra.mxu0 0
    %8730 = vmatpush.bf16.msra.mxu0 0
    %8731 = vmatpush.bf16.msra.mxu0 %v8703
    %8732 = vmatpush.bf16.msra.mxu0 %v8641
    %8733 = vmatpush.bf16.msra.mxu0 %v8637
    %8734 = vmatpush.bf16.msra.mxu0 %v8633
    %8735 = vmatpush.bf16.msra.mxu0 %v8629
    %8736 = vmatmul.bf16.gmra.mxu0 %v8699
    %v8737 = vpop.f32.mrf.mxu0
    %v8738 = vadd.f32 %v8724, %v8737
    %v8739 = vpop.f32.mrf.mxu0
    %v8740 = vadd.f32 %v8726, %v8739
    %8741 = vdwg.mxu0
    %8742 = vmatpush.bf16.msra.mxu0 %v8626
    %8743 = vmatpush.bf16.msra.mxu0 %v8622
    %8744 = vmatpush.bf16.msra.mxu0 %v8618
    %8745 = vmatpush.bf16.msra.mxu0 %v8614
    %8746 = vmatpush.bf16.msra.mxu0 %v8610
    %8747 = vmatpush.bf16.msra.mxu0 %v8606
    %8748 = vmatpush.bf16.msra.mxu0 %v8602
    %8749 = vmatpush.bf16.msra.mxu0 %v8598
    %8750 = vmatmul.bf16.gmra.mxu0 %v8444
    %v8751 = vpop.f32.mrf.mxu0
    %v8752 = vadd.f32 0.0, %v8751
    %v8753 = vpop.f32.mrf.mxu0
    %v8754 = vadd.f32 0.0, %v8753
    %8755 = vdwg.mxu0
    %8756 = vmatpush.bf16.msra.mxu0 0
    %8757 = vmatpush.bf16.msra.mxu0 0
    %8758 = vmatpush.bf16.msra.mxu0 0
    %8759 = vmatpush.bf16.msra.mxu0 %v8706
    %8760 = vmatpush.bf16.msra.mxu0 %v8642
    %8761 = vmatpush.bf16.msra.mxu0 %v8638
    %8762 = vmatpush.bf16.msra.mxu0 %v8634
    %8763 = vmatpush.bf16.msra.mxu0 %v8630
    %8764 = vmatmul.bf16.gmra.mxu0 %v8699
    %v8765 = vpop.f32.mrf.mxu0
    %v8766 = vadd.f32 %v8752, %v8765
    %v8767 = vpop.f32.mrf.mxu0
    %v8768 = vadd.f32 %v8754, %v8767
    %8769 = vdwg.mxu0
    %8770 = vmatpush.bf16.msra.mxu0 %v8627
    %8771 = vmatpush.bf16.msra.mxu0 %v8623
    %8772 = vmatpush.bf16.msra.mxu0 %v8619
    %8773 = vmatpush.bf16.msra.mxu0 %v8615
    %8774 = vmatpush.bf16.msra.mxu0 %v8611
    %8775 = vmatpush.bf16.msra.mxu0 %v8607
    %8776 = vmatpush.bf16.msra.mxu0 %v8603
    %8777 = vmatpush.bf16.msra.mxu0 %v8599
    %8778 = vmatmul.bf16.gmra.mxu0 %v8444
    %v8779 = vpop.f32.mrf.mxu0
    %v8780 = vadd.f32 0.0, %v8779
    %v8781 = vpop.f32.mrf.mxu0
    %v8782 = vadd.f32 0.0, %v8781
    %8783 = vdwg.mxu0
    %8784 = vmatpush.bf16.msra.mxu0 0
    %8785 = vmatpush.bf16.msra.mxu0 0
    %8786 = vmatpush.bf16.msra.mxu0 0
    %8787 = vmatpush.bf16.msra.mxu0 %v8709
    %8788 = vmatpush.bf16.msra.mxu0 %v8643
    %8789 = vmatpush.bf16.msra.mxu0 %v8639
    %8790 = vmatpush.bf16.msra.mxu0 %v8635
    %8791 = vmatpush.bf16.msra.mxu0 %v8631
    %8792 = vmatmul.bf16.gmra.mxu0 %v8699
    %v8793 = vpop.f32.mrf.mxu0
    %v8794 = vadd.f32 %v8780, %v8793
    %v8795 = vpop.f32.mrf.mxu0
    %v8796 = vadd.f32 %v8782, %v8795
    %8797 = vdwg.mxu0
    %8798 = vmatpush.bf16.msra.mxu0 %v8628
    %8799 = vmatpush.bf16.msra.mxu0 %v8624
    %8800 = vmatpush.bf16.msra.mxu0 %v8620
    %8801 = vmatpush.bf16.msra.mxu0 %v8616
    %8802 = vmatpush.bf16.msra.mxu0 %v8612
    %8803 = vmatpush.bf16.msra.mxu0 %v8608
    %8804 = vmatpush.bf16.msra.mxu0 %v8604
    %8805 = vmatpush.bf16.msra.mxu0 %v8600
    %8806 = vmatmul.bf16.gmra.mxu0 %v8444
    %v8807 = vpop.f32.mrf.mxu0
    %v8808 = vadd.f32 0.0, %v8807
    %v8809 = vpop.f32.mrf.mxu0
    %v8810 = vadd.f32 0.0, %v8809
    %8811 = vdwg.mxu0
    %8812 = vmatpush.bf16.msra.mxu0 0
    %8813 = vmatpush.bf16.msra.mxu0 0
    %8814 = vmatpush.bf16.msra.mxu0 0
    %8815 = vmatpush.bf16.msra.mxu0 %v8712
    %8816 = vmatpush.bf16.msra.mxu0 %v8644
    %8817 = vmatpush.bf16.msra.mxu0 %v8640
    %8818 = vmatpush.bf16.msra.mxu0 %v8636
    %8819 = vmatpush.bf16.msra.mxu0 %v8632
    %8820 = vmatmul.bf16.gmra.mxu0 %v8699
    %v8821 = vpop.f32.mrf.mxu0
    %v8822 = vadd.f32 %v8808, %v8821
    %v8823 = vpop.f32.mrf.mxu0
    %v8824 = vadd.f32 %v8810, %v8823
    %8825 = vdwg.mxu0
    %v8828 = vunpack.c.l.b16 %v8329
    %v8829 = vunpack.c.h.b16 %v8329
    %v8830 = vunpack.c.l.b16 %v8330
    %v8831 = vunpack.c.h.b16 %v8330
    %v8832 = vpack.c.b16 %v8830, %v8828
    %v8833 = vpack.c.b16 %v8831, %v8829
    %v8885 = vunpack.c.l.b16 %v8337
    %v8886 = vunpack.c.h.b16 %v8337
    %v8887 = vunpack.c.l.b16 %v8338
    %v8888 = vunpack.c.h.b16 %v8338
    %v8889 = vunpack.c.l.b16 %v8339
    %v8890 = vunpack.c.h.b16 %v8339
    %v8891 = vunpack.c.l.b16 %v8340
    %v8892 = vunpack.c.h.b16 %v8340
    %v8893 = vunpack.c.l.b16 %v8341
    %v8894 = vunpack.c.h.b16 %v8341
    %v8895 = vunpack.c.l.b16 %v8342
    %v8896 = vunpack.c.h.b16 %v8342
    %v8897 = vunpack.c.l.b16 %v8343
    %v8898 = vunpack.c.h.b16 %v8343
    %v8899 = vunpack.c.l.b16 %v8344
    %v8900 = vunpack.c.h.b16 %v8344
    %v8901 = vunpack.c.l.b16 %v8345
    %v8902 = vunpack.c.h.b16 %v8345
    %v8903 = vunpack.c.l.b16 %v8346
    %v8904 = vunpack.c.h.b16 %v8346
    %v8905 = vunpack.c.l.b16 %v8347
    %v8906 = vunpack.c.h.b16 %v8347
    %v8907 = vunpack.c.l.b16 %v8348
    %v8908 = vunpack.c.h.b16 %v8348
    %v8909 = vunpack.c.l.b16 %v8349
    %v8910 = vunpack.c.h.b16 %v8349
    %v8911 = vunpack.c.l.b16 %v8350
    %v8912 = vunpack.c.h.b16 %v8350
    %v8913 = vunpack.c.l.b16 %v8351
    %v8914 = vunpack.c.h.b16 %v8351
    %v8915 = vunpack.c.l.b16 %v8352
    %v8916 = vunpack.c.h.b16 %v8352
    %v8917 = vunpack.c.l.b16 %v8353
    %v8918 = vunpack.c.h.b16 %v8353
    %v8919 = vunpack.c.l.b16 %v8354
    %v8920 = vunpack.c.h.b16 %v8354
    %v8921 = vunpack.c.l.b16 %v8355
    %v8922 = vunpack.c.h.b16 %v8355
    %v8923 = vunpack.c.l.b16 %v8356
    %v8924 = vunpack.c.h.b16 %v8356
    %v8925 = vunpack.c.l.b16 %v8357
    %v8926 = vunpack.c.h.b16 %v8357
    %v8927 = vunpack.c.l.b16 %v8358
    %v8928 = vunpack.c.h.b16 %v8358
    %v8929 = vunpack.c.l.b16 %v8359
    %v8930 = vunpack.c.h.b16 %v8359
    %v8931 = vunpack.c.l.b16 %v8360
    %v8932 = vunpack.c.h.b16 %v8360
    %v8933 = vunpack.c.l.b16 %v8361
    %v8934 = vunpack.c.h.b16 %v8361
    %v8935 = vunpack.c.l.b16 %v8362
    %v8936 = vunpack.c.h.b16 %v8362
    %v8937 = vunpack.c.l.b16 %v8363
    %v8938 = vunpack.c.h.b16 %v8363
    %v8939 = vunpack.c.l.b16 %v8364
    %v8940 = vunpack.c.h.b16 %v8364
    %v8941 = vunpack.c.l.b16 %v8365
    %v8942 = vunpack.c.h.b16 %v8365
    %v8943 = vunpack.c.l.b16 %v8366
    %v8944 = vunpack.c.h.b16 %v8366
    %v8945 = vunpack.c.l.b16 %v8367
    %v8946 = vunpack.c.h.b16 %v8367
    %v8947 = vunpack.c.l.b16 %v8368
    %v8948 = vunpack.c.h.b16 %v8368
    %v8949 = vunpack.c.l.b16 %v8369
    %v8950 = vunpack.c.h.b16 %v8369
    %v8951 = vunpack.c.l.b16 %v8370
    %v8952 = vunpack.c.h.b16 %v8370
    %v8953 = vunpack.c.l.b16 %v8371
    %v8954 = vunpack.c.h.b16 %v8371
    %v8955 = vunpack.c.l.b16 %v8372
    %v8956 = vunpack.c.h.b16 %v8372
    %v8957 = vunpack.c.l.b16 %v8373
    %v8958 = vunpack.c.h.b16 %v8373
    %v8959 = vunpack.c.l.b16 %v8374
    %v8960 = vunpack.c.h.b16 %v8374
    %v8961 = vunpack.c.l.b16 %v8375
    %v8962 = vunpack.c.h.b16 %v8375
    %v8963 = vunpack.c.l.b16 %v8376
    %v8964 = vunpack.c.h.b16 %v8376
    %v8965 = vunpack.c.l.b16 %v8377
    %v8966 = vunpack.c.h.b16 %v8377
    %v8967 = vunpack.c.l.b16 %v8378
    %v8968 = vunpack.c.h.b16 %v8378
    %v8969 = vunpack.c.l.b16 %v8379
    %v8970 = vunpack.c.h.b16 %v8379
    %v8971 = vunpack.c.l.b16 %v8380
    %v8972 = vunpack.c.h.b16 %v8380
    %v8973 = vunpack.c.l.b16 %v8381
    %v8974 = vunpack.c.h.b16 %v8381
    %v8975 = vunpack.c.l.b16 %v8382
    %v8976 = vunpack.c.h.b16 %v8382
    %v8977 = vunpack.c.l.b16 %v8383
    %v8978 = vunpack.c.h.b16 %v8383
    %v8979 = vunpack.c.l.b16 %v8384
    %v8980 = vunpack.c.h.b16 %v8384
    %v8981 = vunpack.c.l.b16 %v8385
    %v8982 = vunpack.c.h.b16 %v8385
    %v8983 = vunpack.c.l.b16 %v8386
    %v8984 = vunpack.c.h.b16 %v8386
    %v8985 = vpack.c.b16 %v8889, %v8885
    %v8986 = vpack.c.b16 %v8890, %v8886
    %v8987 = vpack.c.b16 %v8891, %v8887
    %v8988 = vpack.c.b16 %v8892, %v8888
    %v8989 = vpack.c.b16 %v8897, %v8893
    %v8990 = vpack.c.b16 %v8898, %v8894
    %v8991 = vpack.c.b16 %v8899, %v8895
    %v8992 = vpack.c.b16 %v8900, %v8896
    %v8993 = vpack.c.b16 %v8905, %v8901
    %v8994 = vpack.c.b16 %v8906, %v8902
    %v8995 = vpack.c.b16 %v8907, %v8903
    %v8996 = vpack.c.b16 %v8908, %v8904
    %v8997 = vpack.c.b16 %v8913, %v8909
    %v8998 = vpack.c.b16 %v8914, %v8910
    %v8999 = vpack.c.b16 %v8915, %v8911
    %v9000 = vpack.c.b16 %v8916, %v8912
    %v9001 = vpack.c.b16 %v8921, %v8917
    %v9002 = vpack.c.b16 %v8922, %v8918
    %v9003 = vpack.c.b16 %v8923, %v8919
    %v9004 = vpack.c.b16 %v8924, %v8920
    %v9005 = vpack.c.b16 %v8929, %v8925
    %v9006 = vpack.c.b16 %v8930, %v8926
    %v9007 = vpack.c.b16 %v8931, %v8927
    %v9008 = vpack.c.b16 %v8932, %v8928
    %v9009 = vpack.c.b16 %v8937, %v8933
    %v9010 = vpack.c.b16 %v8938, %v8934
    %v9011 = vpack.c.b16 %v8939, %v8935
    %v9012 = vpack.c.b16 %v8940, %v8936
    %v9013 = vpack.c.b16 %v8945, %v8941
    %v9014 = vpack.c.b16 %v8946, %v8942
    %v9015 = vpack.c.b16 %v8947, %v8943
    %v9016 = vpack.c.b16 %v8948, %v8944
    %v9017 = vpack.c.b16 %v8953, %v8949
    %v9018 = vpack.c.b16 %v8954, %v8950
    %v9019 = vpack.c.b16 %v8955, %v8951
    %v9020 = vpack.c.b16 %v8956, %v8952
    %v9021 = vpack.c.b16 %v8961, %v8957
    %v9022 = vpack.c.b16 %v8962, %v8958
    %v9023 = vpack.c.b16 %v8963, %v8959
    %v9024 = vpack.c.b16 %v8964, %v8960
    %v9025 = vpack.c.b16 %v8969, %v8965
    %v9026 = vpack.c.b16 %v8970, %v8966
    %v9027 = vpack.c.b16 %v8971, %v8967
    %v9028 = vpack.c.b16 %v8972, %v8968
    %v9029 = vpack.c.b16 %v8977, %v8973
    %v9030 = vpack.c.b16 %v8978, %v8974
    %v9031 = vpack.c.b16 %v8979, %v8975
    %v9032 = vpack.c.b16 %v8980, %v8976
    %v9033 = vpack.c.b16 %v8981, %v8981
    %v9034 = vpack.c.b16 %v8982, %v8982
    %v9035 = vpack.c.b16 %v8983, %v8983
    %v9036 = vpack.c.b16 %v8984, %v8984
    %v9086 = vsel %vm8697, %v8833, 0
    %v9089 = vsel %vm8701, %v9033, 0
    %v9092 = vsel %vm8701, %v9034, 0
    %v9095 = vsel %vm8701, %v9035, 0
    %v9098 = vsel %vm8701, %v9036, 0
    %9100 = vmatpush.bf16.msra.mxu0 %v9013
    %9101 = vmatpush.bf16.msra.mxu0 %v9009
    %9102 = vmatpush.bf16.msra.mxu0 %v9005
    %9103 = vmatpush.bf16.msra.mxu0 %v9001
    %9104 = vmatpush.bf16.msra.mxu0 %v8997
    %9105 = vmatpush.bf16.msra.mxu0 %v8993
    %9106 = vmatpush.bf16.msra.mxu0 %v8989
    %9107 = vmatpush.bf16.msra.mxu0 %v8985
    %9108 = vmatmul.bf16.gmra.mxu0 %v8832
    %v9109 = vpop.f32.mrf.mxu0
    %v9110 = vadd.f32 %v8738, %v9109
    %v9111 = vpop.f32.mrf.mxu0
    %v9112 = vadd.f32 %v8740, %v9111
    %9113 = vdwg.mxu0
    %9114 = vmatpush.bf16.msra.mxu0 0
    %9115 = vmatpush.bf16.msra.mxu0 0
    %9116 = vmatpush.bf16.msra.mxu0 0
    %9117 = vmatpush.bf16.msra.mxu0 %v9089
    %9118 = vmatpush.bf16.msra.mxu0 %v9029
    %9119 = vmatpush.bf16.msra.mxu0 %v9025
    %9120 = vmatpush.bf16.msra.mxu0 %v9021
    %9121 = vmatpush.bf16.msra.mxu0 %v9017
    %9122 = vmatmul.bf16.gmra.mxu0 %v9086
    %v9123 = vpop.f32.mrf.mxu0
    %v9124 = vadd.f32 %v9110, %v9123
    %v9125 = vpop.f32.mrf.mxu0
    %v9126 = vadd.f32 %v9112, %v9125
    %9127 = vdwg.mxu0
    %9128 = vmatpush.bf16.msra.mxu0 %v9014
    %9129 = vmatpush.bf16.msra.mxu0 %v9010
    %9130 = vmatpush.bf16.msra.mxu0 %v9006
    %9131 = vmatpush.bf16.msra.mxu0 %v9002
    %9132 = vmatpush.bf16.msra.mxu0 %v8998
    %9133 = vmatpush.bf16.msra.mxu0 %v8994
    %9134 = vmatpush.bf16.msra.mxu0 %v8990
    %9135 = vmatpush.bf16.msra.mxu0 %v8986
    %9136 = vmatmul.bf16.gmra.mxu0 %v8832
    %v9137 = vpop.f32.mrf.mxu0
    %v9138 = vadd.f32 %v8766, %v9137
    %v9139 = vpop.f32.mrf.mxu0
    %v9140 = vadd.f32 %v8768, %v9139
    %9141 = vdwg.mxu0
    %9142 = vmatpush.bf16.msra.mxu0 0
    %9143 = vmatpush.bf16.msra.mxu0 0
    %9144 = vmatpush.bf16.msra.mxu0 0
    %9145 = vmatpush.bf16.msra.mxu0 %v9092
    %9146 = vmatpush.bf16.msra.mxu0 %v9030
    %9147 = vmatpush.bf16.msra.mxu0 %v9026
    %9148 = vmatpush.bf16.msra.mxu0 %v9022
    %9149 = vmatpush.bf16.msra.mxu0 %v9018
    %9150 = vmatmul.bf16.gmra.mxu0 %v9086
    %v9151 = vpop.f32.mrf.mxu0
    %v9152 = vadd.f32 %v9138, %v9151
    %v9153 = vpop.f32.mrf.mxu0
    %v9154 = vadd.f32 %v9140, %v9153
    %9155 = vdwg.mxu0
    %9156 = vmatpush.bf16.msra.mxu0 %v9015
    %9157 = vmatpush.bf16.msra.mxu0 %v9011
    %9158 = vmatpush.bf16.msra.mxu0 %v9007
    %9159 = vmatpush.bf16.msra.mxu0 %v9003
    %9160 = vmatpush.bf16.msra.mxu0 %v8999
    %9161 = vmatpush.bf16.msra.mxu0 %v8995
    %9162 = vmatpush.bf16.msra.mxu0 %v8991
    %9163 = vmatpush.bf16.msra.mxu0 %v8987
    %9164 = vmatmul.bf16.gmra.mxu0 %v8832
    %v9165 = vpop.f32.mrf.mxu0
    %v9166 = vadd.f32 %v8794, %v9165
    %v9167 = vpop.f32.mrf.mxu0
    %v9168 = vadd.f32 %v8796, %v9167
    %9169 = vdwg.mxu0
    %9170 = vmatpush.bf16.msra.mxu0 0
    %9171 = vmatpush.bf16.msra.mxu0 0
    %9172 = vmatpush.bf16.msra.mxu0 0
    %9173 = vmatpush.bf16.msra.mxu0 %v9095
    %9174 = vmatpush.bf16.msra.mxu0 %v9031
    %9175 = vmatpush.bf16.msra.mxu0 %v9027
    %9176 = vmatpush.bf16.msra.mxu0 %v9023
    %9177 = vmatpush.bf16.msra.mxu0 %v9019
    %9178 = vmatmul.bf16.gmra.mxu0 %v9086
    %v9179 = vpop.f32.mrf.mxu0
    %v9180 = vadd.f32 %v9166, %v9179
    %v9181 = vpop.f32.mrf.mxu0
    %v9182 = vadd.f32 %v9168, %v9181
    %9183 = vdwg.mxu0
    %9184 = vmatpush.bf16.msra.mxu0 %v9016
    %9185 = vmatpush.bf16.msra.mxu0 %v9012
    %9186 = vmatpush.bf16.msra.mxu0 %v9008
    %9187 = vmatpush.bf16.msra.mxu0 %v9004
    %9188 = vmatpush.bf16.msra.mxu0 %v9000
    %9189 = vmatpush.bf16.msra.mxu0 %v8996
    %9190 = vmatpush.bf16.msra.mxu0 %v8992
    %9191 = vmatpush.bf16.msra.mxu0 %v8988
    %9192 = vmatmul.bf16.gmra.mxu0 %v8832
    %v9193 = vpop.f32.mrf.mxu0
    %v9194 = vadd.f32 %v8822, %v9193
    %v9195 = vpop.f32.mrf.mxu0
    %v9196 = vadd.f32 %v8824, %v9195
    %9197 = vdwg.mxu0
    %9198 = vmatpush.bf16.msra.mxu0 0
    %9199 = vmatpush.bf16.msra.mxu0 0
    %9200 = vmatpush.bf16.msra.mxu0 0
    %9201 = vmatpush.bf16.msra.mxu0 %v9098
    %9202 = vmatpush.bf16.msra.mxu0 %v9032
    %9203 = vmatpush.bf16.msra.mxu0 %v9028
    %9204 = vmatpush.bf16.msra.mxu0 %v9024
    %9205 = vmatpush.bf16.msra.mxu0 %v9020
    %9206 = vmatmul.bf16.gmra.mxu0 %v9086
    %v9207 = vpop.f32.mrf.mxu0
    %v9208 = vadd.f32 %v9194, %v9207
    %v9209 = vpop.f32.mrf.mxu0
    %v9210 = vadd.f32 %v9196, %v9209
    %9211 = vdwg.mxu0
    %s9212 = scalar_lea.vmem [#allocation9], 800
    %v9213 = vld [vmem:[%s9212] sm:$0xff]
    %v9214 = vld [vmem:[%s9212 + $0x8] sm:$0xff]
    %v9215 = vld [vmem:[%s9212 + $0x10] sm:$0xff]
    %v9216 = vld [vmem:[%s9212 + $0x18] sm:$0xff]
    %v9217 = vld [vmem:[%s9212 + $0x20] sm:$0xff]
    %v9218 = vld [vmem:[%s9212 + $0x28] sm:$0xff]
    %v9219 = vld [vmem:[%s9212 + $0x30] sm:$0xff]
    %v9220 = vld [vmem:[%s9212 + $0x38] sm:$0xff]
    %v9221 = vld [vmem:[%s9212 + $0x40] sm:$0xff]
    %v9222 = vld [vmem:[%s9212 + $0x48] sm:$0xff]
    %v9223 = vld [vmem:[%s9212 + $0x50] sm:$0xff]
    %v9224 = vld [vmem:[%s9212 + $0x58] sm:$0xff]
    %v9225 = vld [vmem:[%s9212 + $0x60] sm:$0xff]
    %v9226 = vld [vmem:[%s9212 + $0x68] sm:$0xff]
    %v9227 = vld [vmem:[%s9212 + $0x70] sm:$0xff]
    %v9228 = vld [vmem:[%s9212 + $0x78] sm:$0xff]
    %v9229 = vld [vmem:[%s9212 + $0x80] sm:$0xff]
    %v9230 = vld [vmem:[%s9212 + $0x88] sm:$0xff]
    %v9231 = vld [vmem:[%s9212 + $0x90] sm:$0xff]
    %v9232 = vld [vmem:[%s9212 + $0x98] sm:$0xff]
    %v9233 = vld [vmem:[%s9212 + $0xa0] sm:$0xff]
    %v9234 = vld [vmem:[%s9212 + $0xa8] sm:$0xff]
    %v9235 = vld [vmem:[%s9212 + $0xb0] sm:$0xff]
    %v9236 = vld [vmem:[%s9212 + $0xb8] sm:$0xff]
    %v9237 = vld [vmem:[%s9212 + $0xc0] sm:$0xff]
    %v9238 = vld [vmem:[%s9212 + $0xc8] sm:$0xff]
    %v9239 = vld [vmem:[%s9212 + $0xd0] sm:$0xff]
    %v9240 = vld [vmem:[%s9212 + $0xd8] sm:$0xff]
    %v9241 = vld [vmem:[%s9212 + $0xe0] sm:$0xff]
    %v9242 = vld [vmem:[%s9212 + $0xe8] sm:$0xff]
    %v9243 = vld [vmem:[%s9212 + $0xf0] sm:$0xff]
    %v9244 = vld [vmem:[%s9212 + $0xf8] sm:$0xff]
    %v9245 = vld [vmem:[%s9212 + $0x100] sm:$0xff]
    %v9246 = vld [vmem:[%s9212 + $0x108] sm:$0xff]
    %v9247 = vld [vmem:[%s9212 + $0x110] sm:$0xff]
    %v9248 = vld [vmem:[%s9212 + $0x118] sm:$0xff]
    %v9249 = vld [vmem:[%s9212 + $0x120] sm:$0xff]
    %v9250 = vld [vmem:[%s9212 + $0x128] sm:$0xff]
    %v9251 = vld [vmem:[%s9212 + $0x130] sm:$0xff]
    %v9252 = vld [vmem:[%s9212 + $0x138] sm:$0xff]
    %v9253 = vld [vmem:[%s9212 + $0x140] sm:$0xff]
    %v9254 = vld [vmem:[%s9212 + $0x148] sm:$0xff]
    %v9255 = vld [vmem:[%s9212 + $0x150] sm:$0xff]
    %v9256 = vld [vmem:[%s9212 + $0x158] sm:$0xff]
    %v9257 = vld [vmem:[%s9212 + $0x160] sm:$0xff]
    %v9258 = vld [vmem:[%s9212 + $0x168] sm:$0xff]
    %v9259 = vld [vmem:[%s9212 + $0x170] sm:$0xff]
    %v9260 = vld [vmem:[%s9212 + $0x178] sm:$0xff]
    %v9261 = vld [vmem:[%s9212 + $0x180] sm:$0xff]
    %v9262 = vld [vmem:[%s9212 + $0x188] sm:$0xff]
    %v9265 = vunpack.c.l.b16 %v8333
    %v9266 = vunpack.c.h.b16 %v8333
    %v9267 = vunpack.c.l.b16 %v8334
    %v9268 = vunpack.c.h.b16 %v8334
    %v9269 = vpack.c.b16 %v9267, %v9265
    %v9270 = vpack.c.b16 %v9268, %v9266
    %v9322 = vunpack.c.l.b16 %v9213
    %v9323 = vunpack.c.h.b16 %v9213
    %v9324 = vunpack.c.l.b16 %v9214
    %v9325 = vunpack.c.h.b16 %v9214
    %v9326 = vunpack.c.l.b16 %v9215
    %v9327 = vunpack.c.h.b16 %v9215
    %v9328 = vunpack.c.l.b16 %v9216
    %v9329 = vunpack.c.h.b16 %v9216
    %v9330 = vunpack.c.l.b16 %v9217
    %v9331 = vunpack.c.h.b16 %v9217
    %v9332 = vunpack.c.l.b16 %v9218
    %v9333 = vunpack.c.h.b16 %v9218
    %v9334 = vunpack.c.l.b16 %v9219
    %v9335 = vunpack.c.h.b16 %v9219
    %v9336 = vunpack.c.l.b16 %v9220
    %v9337 = vunpack.c.h.b16 %v9220
    %v9338 = vunpack.c.l.b16 %v9221
    %v9339 = vunpack.c.h.b16 %v9221
    %v9340 = vunpack.c.l.b16 %v9222
    %v9341 = vunpack.c.h.b16 %v9222
    %v9342 = vunpack.c.l.b16 %v9223
    %v9343 = vunpack.c.h.b16 %v9223
    %v9344 = vunpack.c.l.b16 %v9224
    %v9345 = vunpack.c.h.b16 %v9224
    %v9346 = vunpack.c.l.b16 %v9225
    %v9347 = vunpack.c.h.b16 %v9225
    %v9348 = vunpack.c.l.b16 %v9226
    %v9349 = vunpack.c.h.b16 %v9226
    %v9350 = vunpack.c.l.b16 %v9227
    %v9351 = vunpack.c.h.b16 %v9227
    %v9352 = vunpack.c.l.b16 %v9228
    %v9353 = vunpack.c.h.b16 %v9228
    %v9354 = vunpack.c.l.b16 %v9229
    %v9355 = vunpack.c.h.b16 %v9229
    %v9356 = vunpack.c.l.b16 %v9230
    %v9357 = vunpack.c.h.b16 %v9230
    %v9358 = vunpack.c.l.b16 %v9231
    %v9359 = vunpack.c.h.b16 %v9231
    %v9360 = vunpack.c.l.b16 %v9232
    %v9361 = vunpack.c.h.b16 %v9232
    %v9362 = vunpack.c.l.b16 %v9233
    %v9363 = vunpack.c.h.b16 %v9233
    %v9364 = vunpack.c.l.b16 %v9234
    %v9365 = vunpack.c.h.b16 %v9234
    %v9366 = vunpack.c.l.b16 %v9235
    %v9367 = vunpack.c.h.b16 %v9235
    %v9368 = vunpack.c.l.b16 %v9236
    %v9369 = vunpack.c.h.b16 %v9236
    %v9370 = vunpack.c.l.b16 %v9237
    %v9371 = vunpack.c.h.b16 %v9237
    %v9372 = vunpack.c.l.b16 %v9238
    %v9373 = vunpack.c.h.b16 %v9238
    %v9374 = vunpack.c.l.b16 %v9239
    %v9375 = vunpack.c.h.b16 %v9239
    %v9376 = vunpack.c.l.b16 %v9240
    %v9377 = vunpack.c.h.b16 %v9240
    %v9378 = vunpack.c.l.b16 %v9241
    %v9379 = vunpack.c.h.b16 %v9241
    %v9380 = vunpack.c.l.b16 %v9242
    %v9381 = vunpack.c.h.b16 %v9242
    %v9382 = vunpack.c.l.b16 %v9243
    %v9383 = vunpack.c.h.b16 %v9243
    %v9384 = vunpack.c.l.b16 %v9244
    %v9385 = vunpack.c.h.b16 %v9244
    %v9386 = vunpack.c.l.b16 %v9245
    %v9387 = vunpack.c.h.b16 %v9245
    %v9388 = vunpack.c.l.b16 %v9246
    %v9389 = vunpack.c.h.b16 %v9246
    %v9390 = vunpack.c.l.b16 %v9247
    %v9391 = vunpack.c.h.b16 %v9247
    %v9392 = vunpack.c.l.b16 %v9248
    %v9393 = vunpack.c.h.b16 %v9248
    %v9394 = vunpack.c.l.b16 %v9249
    %v9395 = vunpack.c.h.b16 %v9249
    %v9396 = vunpack.c.l.b16 %v9250
    %v9397 = vunpack.c.h.b16 %v9250
    %v9398 = vunpack.c.l.b16 %v9251
    %v9399 = vunpack.c.h.b16 %v9251
    %v9400 = vunpack.c.l.b16 %v9252
    %v9401 = vunpack.c.h.b16 %v9252
    %v9402 = vunpack.c.l.b16 %v9253
    %v9403 = vunpack.c.h.b16 %v9253
    %v9404 = vunpack.c.l.b16 %v9254
    %v9405 = vunpack.c.h.b16 %v9254
    %v9406 = vunpack.c.l.b16 %v9255
    %v9407 = vunpack.c.h.b16 %v9255
    %v9408 = vunpack.c.l.b16 %v9256
    %v9409 = vunpack.c.h.b16 %v9256
    %v9410 = vunpack.c.l.b16 %v9257
    %v9411 = vunpack.c.h.b16 %v9257
    %v9412 = vunpack.c.l.b16 %v9258
    %v9413 = vunpack.c.h.b16 %v9258
    %v9414 = vunpack.c.l.b16 %v9259
    %v9415 = vunpack.c.h.b16 %v9259
    %v9416 = vunpack.c.l.b16 %v9260
    %v9417 = vunpack.c.h.b16 %v9260
    %v9418 = vunpack.c.l.b16 %v9261
    %v9419 = vunpack.c.h.b16 %v9261
    %v9420 = vunpack.c.l.b16 %v9262
    %v9421 = vunpack.c.h.b16 %v9262
    %v9422 = vpack.c.b16 %v9326, %v9322
    %v9423 = vpack.c.b16 %v9327, %v9323
    %v9424 = vpack.c.b16 %v9328, %v9324
    %v9425 = vpack.c.b16 %v9329, %v9325
    %v9426 = vpack.c.b16 %v9334, %v9330
    %v9427 = vpack.c.b16 %v9335, %v9331
    %v9428 = vpack.c.b16 %v9336, %v9332
    %v9429 = vpack.c.b16 %v9337, %v9333
    %v9430 = vpack.c.b16 %v9342, %v9338
    %v9431 = vpack.c.b16 %v9343, %v9339
    %v9432 = vpack.c.b16 %v9344, %v9340
    %v9433 = vpack.c.b16 %v9345, %v9341
    %v9434 = vpack.c.b16 %v9350, %v9346
    %v9435 = vpack.c.b16 %v9351, %v9347
    %v9436 = vpack.c.b16 %v9352, %v9348
    %v9437 = vpack.c.b16 %v9353, %v9349
    %v9438 = vpack.c.b16 %v9358, %v9354
    %v9439 = vpack.c.b16 %v9359, %v9355
    %v9440 = vpack.c.b16 %v9360, %v9356
    %v9441 = vpack.c.b16 %v9361, %v9357
    %v9442 = vpack.c.b16 %v9366, %v9362
    %v9443 = vpack.c.b16 %v9367, %v9363
    %v9444 = vpack.c.b16 %v9368, %v9364
    %v9445 = vpack.c.b16 %v9369, %v9365
    %v9446 = vpack.c.b16 %v9374, %v9370
    %v9447 = vpack.c.b16 %v9375, %v9371
    %v9448 = vpack.c.b16 %v9376, %v9372
    %v9449 = vpack.c.b16 %v9377, %v9373
    %v9450 = vpack.c.b16 %v9382, %v9378
    %v9451 = vpack.c.b16 %v9383, %v9379
    %v9452 = vpack.c.b16 %v9384, %v9380
    %v9453 = vpack.c.b16 %v9385, %v9381
    %v9454 = vpack.c.b16 %v9390, %v9386
    %v9455 = vpack.c.b16 %v9391, %v9387
    %v9456 = vpack.c.b16 %v9392, %v9388
    %v9457 = vpack.c.b16 %v9393, %v9389
    %v9458 = vpack.c.b16 %v9398, %v9394
    %v9459 = vpack.c.b16 %v9399, %v9395
    %v9460 = vpack.c.b16 %v9400, %v9396
    %v9461 = vpack.c.b16 %v9401, %v9397
    %v9462 = vpack.c.b16 %v9406, %v9402
    %v9463 = vpack.c.b16 %v9407, %v9403
    %v9464 = vpack.c.b16 %v9408, %v9404
    %v9465 = vpack.c.b16 %v9409, %v9405
    %v9466 = vpack.c.b16 %v9414, %v9410
    %v9467 = vpack.c.b16 %v9415, %v9411
    %v9468 = vpack.c.b16 %v9416, %v9412
    %v9469 = vpack.c.b16 %v9417, %v9413
    %v9470 = vpack.c.b16 %v9418, %v9418
    %v9471 = vpack.c.b16 %v9419, %v9419
    %v9472 = vpack.c.b16 %v9420, %v9420
    %v9473 = vpack.c.b16 %v9421, %v9421
    %v9523 = vsel %vm8697, %v9270, 0
    %v9526 = vsel %vm8701, %v9470, 0
    %v9529 = vsel %vm8701, %v9471, 0
    %v9532 = vsel %vm8701, %v9472, 0
    %v9535 = vsel %vm8701, %v9473, 0
    %9537 = vmatpush.bf16.msra.mxu0 %v9450
    %9538 = vmatpush.bf16.msra.mxu0 %v9446
    %9539 = vmatpush.bf16.msra.mxu0 %v9442
    %9540 = vmatpush.bf16.msra.mxu0 %v9438
    %9541 = vmatpush.bf16.msra.mxu0 %v9434
    %9542 = vmatpush.bf16.msra.mxu0 %v9430
    %9543 = vmatpush.bf16.msra.mxu0 %v9426
    %9544 = vmatpush.bf16.msra.mxu0 %v9422
    %9545 = vmatmul.bf16.gmra.mxu0 %v9269
    %v9546 = vpop.f32.mrf.mxu0
    %v9547 = vadd.f32 0.0, %v9546
    %v9548 = vpop.f32.mrf.mxu0
    %v9549 = vadd.f32 0.0, %v9548
    %9550 = vdwg.mxu0
    %9551 = vmatpush.bf16.msra.mxu0 0
    %9552 = vmatpush.bf16.msra.mxu0 0
    %9553 = vmatpush.bf16.msra.mxu0 0
    %9554 = vmatpush.bf16.msra.mxu0 %v9526
    %9555 = vmatpush.bf16.msra.mxu0 %v9466
    %9556 = vmatpush.bf16.msra.mxu0 %v9462
    %9557 = vmatpush.bf16.msra.mxu0 %v9458
    %9558 = vmatpush.bf16.msra.mxu0 %v9454
    %9559 = vmatmul.bf16.gmra.mxu0 %v9523
    %v9560 = vpop.f32.mrf.mxu0
    %v9561 = vadd.f32 %v9547, %v9560
    %v9562 = vpop.f32.mrf.mxu0
    %v9563 = vadd.f32 %v9549, %v9562
    %9564 = vdwg.mxu0
    %9565 = vmatpush.bf16.msra.mxu0 %v9451
    %9566 = vmatpush.bf16.msra.mxu0 %v9447
    %9567 = vmatpush.bf16.msra.mxu0 %v9443
    %9568 = vmatpush.bf16.msra.mxu0 %v9439
    %9569 = vmatpush.bf16.msra.mxu0 %v9435
    %9570 = vmatpush.bf16.msra.mxu0 %v9431
    %9571 = vmatpush.bf16.msra.mxu0 %v9427
    %9572 = vmatpush.bf16.msra.mxu0 %v9423
    %9573 = vmatmul.bf16.gmra.mxu0 %v9269
    %v9574 = vpop.f32.mrf.mxu0
    %v9575 = vadd.f32 0.0, %v9574
    %v9576 = vpop.f32.mrf.mxu0
    %v9577 = vadd.f32 0.0, %v9576
    %9578 = vdwg.mxu0
    %9579 = vmatpush.bf16.msra.mxu0 0
    %9580 = vmatpush.bf16.msra.mxu0 0
    %9581 = vmatpush.bf16.msra.mxu0 0
    %9582 = vmatpush.bf16.msra.mxu0 %v9529
    %9583 = vmatpush.bf16.msra.mxu0 %v9467
    %9584 = vmatpush.bf16.msra.mxu0 %v9463
    %9585 = vmatpush.bf16.msra.mxu0 %v9459
    %9586 = vmatpush.bf16.msra.mxu0 %v9455
    %9587 = vmatmul.bf16.gmra.mxu0 %v9523
    %v9588 = vpop.f32.mrf.mxu0
    %v9589 = vadd.f32 %v9575, %v9588
    %v9590 = vpop.f32.mrf.mxu0
    %v9591 = vadd.f32 %v9577, %v9590
    %9592 = vdwg.mxu0
    %9593 = vmatpush.bf16.msra.mxu0 %v9452
    %9594 = vmatpush.bf16.msra.mxu0 %v9448
    %9595 = vmatpush.bf16.msra.mxu0 %v9444
    %9596 = vmatpush.bf16.msra.mxu0 %v9440
    %9597 = vmatpush.bf16.msra.mxu0 %v9436
    %9598 = vmatpush.bf16.msra.mxu0 %v9432
    %9599 = vmatpush.bf16.msra.mxu0 %v9428
    %9600 = vmatpush.bf16.msra.mxu0 %v9424
    %9601 = vmatmul.bf16.gmra.mxu0 %v9269
    %v9602 = vpop.f32.mrf.mxu0
    %v9603 = vadd.f32 0.0, %v9602
    %v9604 = vpop.f32.mrf.mxu0
    %v9605 = vadd.f32 0.0, %v9604
    %9606 = vdwg.mxu0
    %9607 = vmatpush.bf16.msra.mxu0 0
    %9608 = vmatpush.bf16.msra.mxu0 0
    %9609 = vmatpush.bf16.msra.mxu0 0
    %9610 = vmatpush.bf16.msra.mxu0 %v9532
    %9611 = vmatpush.bf16.msra.mxu0 %v9468
    %9612 = vmatpush.bf16.msra.mxu0 %v9464
    %9613 = vmatpush.bf16.msra.mxu0 %v9460
    %9614 = vmatpush.bf16.msra.mxu0 %v9456
    %9615 = vmatmul.bf16.gmra.mxu0 %v9523
    %v9616 = vpop.f32.mrf.mxu0
    %v9617 = vadd.f32 %v9603, %v9616
    %v9618 = vpop.f32.mrf.mxu0
    %v9619 = vadd.f32 %v9605, %v9618
    %9620 = vdwg.mxu0
    %9621 = vmatpush.bf16.msra.mxu0 %v9453
    %9622 = vmatpush.bf16.msra.mxu0 %v9449
    %9623 = vmatpush.bf16.msra.mxu0 %v9445
    %9624 = vmatpush.bf16.msra.mxu0 %v9441
    %9625 = vmatpush.bf16.msra.mxu0 %v9437
    %9626 = vmatpush.bf16.msra.mxu0 %v9433
    %9627 = vmatpush.bf16.msra.mxu0 %v9429
    %9628 = vmatpush.bf16.msra.mxu0 %v9425
    %9629 = vmatmul.bf16.gmra.mxu0 %v9269
    %v9630 = vpop.f32.mrf.mxu0
    %v9631 = vadd.f32 0.0, %v9630
    %v9632 = vpop.f32.mrf.mxu0
    %v9633 = vadd.f32 0.0, %v9632
    %9634 = vdwg.mxu0
    %9635 = vmatpush.bf16.msra.mxu0 0
    %9636 = vmatpush.bf16.msra.mxu0 0
    %9637 = vmatpush.bf16.msra.mxu0 0
    %9638 = vmatpush.bf16.msra.mxu0 %v9535
    %9639 = vmatpush.bf16.msra.mxu0 %v9469
    %9640 = vmatpush.bf16.msra.mxu0 %v9465
    %9641 = vmatpush.bf16.msra.mxu0 %v9461
    %9642 = vmatpush.bf16.msra.mxu0 %v9457
    %9643 = vmatmul.bf16.gmra.mxu0 %v9523
    %v9644 = vpop.f32.mrf.mxu0
    %v9645 = vadd.f32 %v9631, %v9644
    %v9646 = vpop.f32.mrf.mxu0
    %v9647 = vadd.f32 %v9633, %v9646
    %9648 = vdwg.mxu0
    %v9649 = vadd.f32 %v9124, %v9561
    %v9650 = vadd.f32 %v9152, %v9589
    %v9651 = vadd.f32 %v9180, %v9617
    %v9652 = vadd.f32 %v9208, %v9645
    %v9653 = vadd.f32 %v9126, %v9563
    %v9654 = vadd.f32 %v9154, %v9591
    %v9655 = vadd.f32 %v9182, %v9619
    %v9656 = vadd.f32 %v9210, %v9647
    %s9657 = scalar_lea.vmem [#allocation9], 1200
    %v9658 = vld [vmem:[%s9657] sm:$0xff]
    %v9659 = vld [vmem:[%s9657 + $0x8] sm:$0xff]
    %v9660 = vld [vmem:[%s9657 + $0x10] sm:$0xff]
    %v9661 = vld [vmem:[%s9657 + $0x18] sm:$0xff]
    %v9662 = vld [vmem:[%s9657 + $0x20] sm:$0xff]
    %v9663 = vld [vmem:[%s9657 + $0x28] sm:$0xff]
    %v9664 = vld [vmem:[%s9657 + $0x30] sm:$0xff]
    %v9665 = vld [vmem:[%s9657 + $0x38] sm:$0xff]
    %v9666 = vld [vmem:[%s9657 + $0x40] sm:$0xff]
    %v9667 = vld [vmem:[%s9657 + $0x48] sm:$0xff]
    %v9668 = vld [vmem:[%s9657 + $0x50] sm:$0xff]
    %v9669 = vld [vmem:[%s9657 + $0x58] sm:$0xff]
    %v9670 = vld [vmem:[%s9657 + $0x60] sm:$0xff]
    %v9671 = vld [vmem:[%s9657 + $0x68] sm:$0xff]
    %v9672 = vld [vmem:[%s9657 + $0x70] sm:$0xff]
    %v9673 = vld [vmem:[%s9657 + $0x78] sm:$0xff]
    %v9674 = vld [vmem:[%s9657 + $0x80] sm:$0xff]
    %v9675 = vld [vmem:[%s9657 + $0x88] sm:$0xff]
    %v9676 = vld [vmem:[%s9657 + $0x90] sm:$0xff]
    %v9677 = vld [vmem:[%s9657 + $0x98] sm:$0xff]
    %v9678 = vld [vmem:[%s9657 + $0xa0] sm:$0xff]
    %v9679 = vld [vmem:[%s9657 + $0xa8] sm:$0xff]
    %v9680 = vld [vmem:[%s9657 + $0xb0] sm:$0xff]
    %v9681 = vld [vmem:[%s9657 + $0xb8] sm:$0xff]
    %v9682 = vld [vmem:[%s9657 + $0xc0] sm:$0xff]
    %v9683 = vld [vmem:[%s9657 + $0xc8] sm:$0xff]
    %v9684 = vld [vmem:[%s9657 + $0xd0] sm:$0xff]
    %v9685 = vld [vmem:[%s9657 + $0xd8] sm:$0xff]
    %v9686 = vld [vmem:[%s9657 + $0xe0] sm:$0xff]
    %v9687 = vld [vmem:[%s9657 + $0xe8] sm:$0xff]
    %v9688 = vld [vmem:[%s9657 + $0xf0] sm:$0xff]
    %v9689 = vld [vmem:[%s9657 + $0xf8] sm:$0xff]
    %v9690 = vld [vmem:[%s9657 + $0x100] sm:$0xff]
    %v9691 = vld [vmem:[%s9657 + $0x108] sm:$0xff]
    %v9692 = vld [vmem:[%s9657 + $0x110] sm:$0xff]
    %v9693 = vld [vmem:[%s9657 + $0x118] sm:$0xff]
    %v9694 = vld [vmem:[%s9657 + $0x120] sm:$0xff]
    %v9695 = vld [vmem:[%s9657 + $0x128] sm:$0xff]
    %v9696 = vld [vmem:[%s9657 + $0x130] sm:$0xff]
    %v9697 = vld [vmem:[%s9657 + $0x138] sm:$0xff]
    %v9698 = vld [vmem:[%s9657 + $0x140] sm:$0xff]
    %v9699 = vld [vmem:[%s9657 + $0x148] sm:$0xff]
    %v9700 = vld [vmem:[%s9657 + $0x150] sm:$0xff]
    %v9701 = vld [vmem:[%s9657 + $0x158] sm:$0xff]
    %v9702 = vld [vmem:[%s9657 + $0x160] sm:$0xff]
    %v9703 = vld [vmem:[%s9657 + $0x168] sm:$0xff]
    %v9704 = vld [vmem:[%s9657 + $0x170] sm:$0xff]
    %v9705 = vld [vmem:[%s9657 + $0x178] sm:$0xff]
    %v9706 = vld [vmem:[%s9657 + $0x180] sm:$0xff]
    %v9707 = vld [vmem:[%s9657 + $0x188] sm:$0xff]
    %v9710 = vunpack.c.l.b16 %v8335
    %v9711 = vunpack.c.h.b16 %v8335
    %v9712 = vunpack.c.l.b16 %v8336
    %v9713 = vunpack.c.h.b16 %v8336
    %v9714 = vpack.c.b16 %v9712, %v9710
    %v9715 = vpack.c.b16 %v9713, %v9711
    %v9767 = vunpack.c.l.b16 %v9658
    %v9768 = vunpack.c.h.b16 %v9658
    %v9769 = vunpack.c.l.b16 %v9659
    %v9770 = vunpack.c.h.b16 %v9659
    %v9771 = vunpack.c.l.b16 %v9660
    %v9772 = vunpack.c.h.b16 %v9660
    %v9773 = vunpack.c.l.b16 %v9661
    %v9774 = vunpack.c.h.b16 %v9661
    %v9775 = vunpack.c.l.b16 %v9662
    %v9776 = vunpack.c.h.b16 %v9662
    %v9777 = vunpack.c.l.b16 %v9663
    %v9778 = vunpack.c.h.b16 %v9663
    %v9779 = vunpack.c.l.b16 %v9664
    %v9780 = vunpack.c.h.b16 %v9664
    %v9781 = vunpack.c.l.b16 %v9665
    %v9782 = vunpack.c.h.b16 %v9665
    %v9783 = vunpack.c.l.b16 %v9666
    %v9784 = vunpack.c.h.b16 %v9666
    %v9785 = vunpack.c.l.b16 %v9667
    %v9786 = vunpack.c.h.b16 %v9667
    %v9787 = vunpack.c.l.b16 %v9668
    %v9788 = vunpack.c.h.b16 %v9668
    %v9789 = vunpack.c.l.b16 %v9669
    %v9790 = vunpack.c.h.b16 %v9669
    %v9791 = vunpack.c.l.b16 %v9670
    %v9792 = vunpack.c.h.b16 %v9670
    %v9793 = vunpack.c.l.b16 %v9671
    %v9794 = vunpack.c.h.b16 %v9671
    %v9795 = vunpack.c.l.b16 %v9672
    %v9796 = vunpack.c.h.b16 %v9672
    %v9797 = vunpack.c.l.b16 %v9673
    %v9798 = vunpack.c.h.b16 %v9673
    %v9799 = vunpack.c.l.b16 %v9674
    %v9800 = vunpack.c.h.b16 %v9674
    %v9801 = vunpack.c.l.b16 %v9675
    %v9802 = vunpack.c.h.b16 %v9675
    %v9803 = vunpack.c.l.b16 %v9676
    %v9804 = vunpack.c.h.b16 %v9676
    %v9805 = vunpack.c.l.b16 %v9677
    %v9806 = vunpack.c.h.b16 %v9677
    %v9807 = vunpack.c.l.b16 %v9678
    %v9808 = vunpack.c.h.b16 %v9678
    %v9809 = vunpack.c.l.b16 %v9679
    %v9810 = vunpack.c.h.b16 %v9679
    %v9811 = vunpack.c.l.b16 %v9680
    %v9812 = vunpack.c.h.b16 %v9680
    %v9813 = vunpack.c.l.b16 %v9681
    %v9814 = vunpack.c.h.b16 %v9681
    %v9815 = vunpack.c.l.b16 %v9682
    %v9816 = vunpack.c.h.b16 %v9682
    %v9817 = vunpack.c.l.b16 %v9683
    %v9818 = vunpack.c.h.b16 %v9683
    %v9819 = vunpack.c.l.b16 %v9684
    %v9820 = vunpack.c.h.b16 %v9684
    %v9821 = vunpack.c.l.b16 %v9685
    %v9822 = vunpack.c.h.b16 %v9685
    %v9823 = vunpack.c.l.b16 %v9686
    %v9824 = vunpack.c.h.b16 %v9686
    %v9825 = vunpack.c.l.b16 %v9687
    %v9826 = vunpack.c.h.b16 %v9687
    %v9827 = vunpack.c.l.b16 %v9688
    %v9828 = vunpack.c.h.b16 %v9688
    %v9829 = vunpack.c.l.b16 %v9689
    %v9830 = vunpack.c.h.b16 %v9689
    %v9831 = vunpack.c.l.b16 %v9690
    %v9832 = vunpack.c.h.b16 %v9690
    %v9833 = vunpack.c.l.b16 %v9691
    %v9834 = vunpack.c.h.b16 %v9691
    %v9835 = vunpack.c.l.b16 %v9692
    %v9836 = vunpack.c.h.b16 %v9692
    %v9837 = vunpack.c.l.b16 %v9693
    %v9838 = vunpack.c.h.b16 %v9693
    %v9839 = vunpack.c.l.b16 %v9694
    %v9840 = vunpack.c.h.b16 %v9694
    %v9841 = vunpack.c.l.b16 %v9695
    %v9842 = vunpack.c.h.b16 %v9695
    %v9843 = vunpack.c.l.b16 %v9696
    %v9844 = vunpack.c.h.b16 %v9696
    %v9845 = vunpack.c.l.b16 %v9697
    %v9846 = vunpack.c.h.b16 %v9697
    %v9847 = vunpack.c.l.b16 %v9698
    %v9848 = vunpack.c.h.b16 %v9698
    %v9849 = vunpack.c.l.b16 %v9699
    %v9850 = vunpack.c.h.b16 %v9699
    %v9851 = vunpack.c.l.b16 %v9700
    %v9852 = vunpack.c.h.b16 %v9700
    %v9853 = vunpack.c.l.b16 %v9701
    %v9854 = vunpack.c.h.b16 %v9701
    %v9855 = vunpack.c.l.b16 %v9702
    %v9856 = vunpack.c.h.b16 %v9702
    %v9857 = vunpack.c.l.b16 %v9703
    %v9858 = vunpack.c.h.b16 %v9703
    %v9859 = vunpack.c.l.b16 %v9704
    %v9860 = vunpack.c.h.b16 %v9704
    %v9861 = vunpack.c.l.b16 %v9705
    %v9862 = vunpack.c.h.b16 %v9705
    %v9863 = vunpack.c.l.b16 %v9706
    %v9864 = vunpack.c.h.b16 %v9706
    %v9865 = vunpack.c.l.b16 %v9707
    %v9866 = vunpack.c.h.b16 %v9707
    %v9867 = vpack.c.b16 %v9771, %v9767
    %v9868 = vpack.c.b16 %v9772, %v9768
    %v9869 = vpack.c.b16 %v9773, %v9769
    %v9870 = vpack.c.b16 %v9774, %v9770
    %v9871 = vpack.c.b16 %v9779, %v9775
    %v9872 = vpack.c.b16 %v9780, %v9776
    %v9873 = vpack.c.b16 %v9781, %v9777
    %v9874 = vpack.c.b16 %v9782, %v9778
    %v9875 = vpack.c.b16 %v9787, %v9783
    %v9876 = vpack.c.b16 %v9788, %v9784
    %v9877 = vpack.c.b16 %v9789, %v9785
    %v9878 = vpack.c.b16 %v9790, %v9786
    %v9879 = vpack.c.b16 %v9795, %v9791
    %v9880 = vpack.c.b16 %v9796, %v9792
    %v9881 = vpack.c.b16 %v9797, %v9793
    %v9882 = vpack.c.b16 %v9798, %v9794
    %v9883 = vpack.c.b16 %v9803, %v9799
    %v9884 = vpack.c.b16 %v9804, %v9800
    %v9885 = vpack.c.b16 %v9805, %v9801
    %v9886 = vpack.c.b16 %v9806, %v9802
    %v9887 = vpack.c.b16 %v9811, %v9807
    %v9888 = vpack.c.b16 %v9812, %v9808
    %v9889 = vpack.c.b16 %v9813, %v9809
    %v9890 = vpack.c.b16 %v9814, %v9810
    %v9891 = vpack.c.b16 %v9819, %v9815
    %v9892 = vpack.c.b16 %v9820, %v9816
    %v9893 = vpack.c.b16 %v9821, %v9817
    %v9894 = vpack.c.b16 %v9822, %v9818
    %v9895 = vpack.c.b16 %v9827, %v9823
    %v9896 = vpack.c.b16 %v9828, %v9824
    %v9897 = vpack.c.b16 %v9829, %v9825
    %v9898 = vpack.c.b16 %v9830, %v9826
    %v9899 = vpack.c.b16 %v9835, %v9831
    %v9900 = vpack.c.b16 %v9836, %v9832
    %v9901 = vpack.c.b16 %v9837, %v9833
    %v9902 = vpack.c.b16 %v9838, %v9834
    %v9903 = vpack.c.b16 %v9843, %v9839
    %v9904 = vpack.c.b16 %v9844, %v9840
    %v9905 = vpack.c.b16 %v9845, %v9841
    %v9906 = vpack.c.b16 %v9846, %v9842
    %v9907 = vpack.c.b16 %v9851, %v9847
    %v9908 = vpack.c.b16 %v9852, %v9848
    %v9909 = vpack.c.b16 %v9853, %v9849
    %v9910 = vpack.c.b16 %v9854, %v9850
    %v9911 = vpack.c.b16 %v9859, %v9855
    %v9912 = vpack.c.b16 %v9860, %v9856
    %v9913 = vpack.c.b16 %v9861, %v9857
    %v9914 = vpack.c.b16 %v9862, %v9858
    %v9915 = vpack.c.b16 %v9863, %v9863
    %v9916 = vpack.c.b16 %v9864, %v9864
    %v9917 = vpack.c.b16 %v9865, %v9865
    %v9918 = vpack.c.b16 %v9866, %v9866
    %v9968 = vsel %vm8697, %v9715, 0
    %v9971 = vsel %vm8701, %v9915, 0
    %v9974 = vsel %vm8701, %v9916, 0
    %v9977 = vsel %vm8701, %v9917, 0
    %v9980 = vsel %vm8701, %v9918, 0
    %9982 = vmatpush.bf16.msra.mxu0 %v9895
    %9983 = vmatpush.bf16.msra.mxu0 %v9891
    %9984 = vmatpush.bf16.msra.mxu0 %v9887
    %9985 = vmatpush.bf16.msra.mxu0 %v9883
    %9986 = vmatpush.bf16.msra.mxu0 %v9879
    %9987 = vmatpush.bf16.msra.mxu0 %v9875
    %9988 = vmatpush.bf16.msra.mxu0 %v9871
    %9989 = vmatpush.bf16.msra.mxu0 %v9867
    %9990 = vmatmul.bf16.gmra.mxu0 %v9714
    %v9991 = vpop.f32.mrf.mxu0
    %v9992 = vadd.f32 0.0, %v9991
    %v9993 = vpop.f32.mrf.mxu0
    %v9994 = vadd.f32 0.0, %v9993
    %9995 = vdwg.mxu0
    %9996 = vmatpush.bf16.msra.mxu0 0
    %9997 = vmatpush.bf16.msra.mxu0 0
    %9998 = vmatpush.bf16.msra.mxu0 0
    %9999 = vmatpush.bf16.msra.mxu0 %v9971
    %10000 = vmatpush.bf16.msra.mxu0 %v9911
    %10001 = vmatpush.bf16.msra.mxu0 %v9907
    %10002 = vmatpush.bf16.msra.mxu0 %v9903
    %10003 = vmatpush.bf16.msra.mxu0 %v9899
    %10004 = vmatmul.bf16.gmra.mxu0 %v9968
    %v10005 = vpop.f32.mrf.mxu0
    %v10006 = vadd.f32 %v9992, %v10005
    %v10007 = vpop.f32.mrf.mxu0
    %v10008 = vadd.f32 %v9994, %v10007
    %10009 = vdwg.mxu0
    %10010 = vmatpush.bf16.msra.mxu0 %v9896
    %10011 = vmatpush.bf16.msra.mxu0 %v9892
    %10012 = vmatpush.bf16.msra.mxu0 %v9888
    %10013 = vmatpush.bf16.msra.mxu0 %v9884
    %10014 = vmatpush.bf16.msra.mxu0 %v9880
    %10015 = vmatpush.bf16.msra.mxu0 %v9876
    %10016 = vmatpush.bf16.msra.mxu0 %v9872
    %10017 = vmatpush.bf16.msra.mxu0 %v9868
    %10018 = vmatmul.bf16.gmra.mxu0 %v9714
    %v10019 = vpop.f32.mrf.mxu0
    %v10020 = vadd.f32 0.0, %v10019
    %v10021 = vpop.f32.mrf.mxu0
    %v10022 = vadd.f32 0.0, %v10021
    %10023 = vdwg.mxu0
    %10024 = vmatpush.bf16.msra.mxu0 0
    %10025 = vmatpush.bf16.msra.mxu0 0
    %10026 = vmatpush.bf16.msra.mxu0 0
    %10027 = vmatpush.bf16.msra.mxu0 %v9974
    %10028 = vmatpush.bf16.msra.mxu0 %v9912
    %10029 = vmatpush.bf16.msra.mxu0 %v9908
    %10030 = vmatpush.bf16.msra.mxu0 %v9904
    %10031 = vmatpush.bf16.msra.mxu0 %v9900
    %10032 = vmatmul.bf16.gmra.mxu0 %v9968
    %v10033 = vpop.f32.mrf.mxu0
    %v10034 = vadd.f32 %v10020, %v10033
    %v10035 = vpop.f32.mrf.mxu0
    %v10036 = vadd.f32 %v10022, %v10035
    %10037 = vdwg.mxu0
    %10038 = vmatpush.bf16.msra.mxu0 %v9897
    %10039 = vmatpush.bf16.msra.mxu0 %v9893
    %10040 = vmatpush.bf16.msra.mxu0 %v9889
    %10041 = vmatpush.bf16.msra.mxu0 %v9885
    %10042 = vmatpush.bf16.msra.mxu0 %v9881
    %10043 = vmatpush.bf16.msra.mxu0 %v9877
    %10044 = vmatpush.bf16.msra.mxu0 %v9873
    %10045 = vmatpush.bf16.msra.mxu0 %v9869
    %10046 = vmatmul.bf16.gmra.mxu0 %v9714
    %v10047 = vpop.f32.mrf.mxu0
    %v10048 = vadd.f32 0.0, %v10047
    %v10049 = vpop.f32.mrf.mxu0
    %v10050 = vadd.f32 0.0, %v10049
    %10051 = vdwg.mxu0
    %10052 = vmatpush.bf16.msra.mxu0 0
    %10053 = vmatpush.bf16.msra.mxu0 0
    %10054 = vmatpush.bf16.msra.mxu0 0
    %10055 = vmatpush.bf16.msra.mxu0 %v9977
    %10056 = vmatpush.bf16.msra.mxu0 %v9913
    %10057 = vmatpush.bf16.msra.mxu0 %v9909
    %10058 = vmatpush.bf16.msra.mxu0 %v9905
    %10059 = vmatpush.bf16.msra.mxu0 %v9901
    %10060 = vmatmul.bf16.gmra.mxu0 %v9968
    %v10061 = vpop.f32.mrf.mxu0
    %v10062 = vadd.f32 %v10048, %v10061
    %v10063 = vpop.f32.mrf.mxu0
    %v10064 = vadd.f32 %v10050, %v10063
    %10065 = vdwg.mxu0
    %10066 = vmatpush.bf16.msra.mxu0 %v9898
    %10067 = vmatpush.bf16.msra.mxu0 %v9894
    %10068 = vmatpush.bf16.msra.mxu0 %v9890
    %10069 = vmatpush.bf16.msra.mxu0 %v9886
    %10070 = vmatpush.bf16.msra.mxu0 %v9882
    %10071 = vmatpush.bf16.msra.mxu0 %v9878
    %10072 = vmatpush.bf16.msra.mxu0 %v9874
    %10073 = vmatpush.bf16.msra.mxu0 %v9870
    %10074 = vmatmul.bf16.gmra.mxu0 %v9714
    %v10075 = vpop.f32.mrf.mxu0
    %v10076 = vadd.f32 0.0, %v10075
    %v10077 = vpop.f32.mrf.mxu0
    %v10078 = vadd.f32 0.0, %v10077
    %10079 = vdwg.mxu0
    %10080 = vmatpush.bf16.msra.mxu0 0
    %10081 = vmatpush.bf16.msra.mxu0 0
    %10082 = vmatpush.bf16.msra.mxu0 0
    %10083 = vmatpush.bf16.msra.mxu0 %v9980
    %10084 = vmatpush.bf16.msra.mxu0 %v9914
    %10085 = vmatpush.bf16.msra.mxu0 %v9910
    %10086 = vmatpush.bf16.msra.mxu0 %v9906
    %10087 = vmatpush.bf16.msra.mxu0 %v9902
    %10088 = vmatmul.bf16.gmra.mxu0 %v9968
    %v10089 = vpop.f32.mrf.mxu0
    %v10090 = vadd.f32 %v10076, %v10089
    %v10091 = vpop.f32.mrf.mxu0
    %v10092 = vadd.f32 %v10078, %v10091
    %10093 = vdwg.mxu0
    %v10094 = vadd.f32 %v9649, %v10006
    %v10095 = vadd.f32 %v9650, %v10034
    %v10096 = vadd.f32 %v9651, %v10062
    %v10097 = vadd.f32 %v9652, %v10090
    %v10098 = vadd.f32 %v9653, %v10008
    %v10099 = vadd.f32 %v9654, %v10036
    %v10100 = vadd.f32 %v9655, %v10064
    %v10101 = vadd.f32 %v9656, %v10092
    %v10102 = vld [vmem:[#allocation10] sm:$0xf]
    %v10104 = vperm.slane %v10102, 0
    %v10105 = vperm.slane %v10102, 1
    %v10106 = vperm.slane %v10102, 2
    %v10107 = vperm.slane %v10102, 3
    %v10112 = vadd.f32 %v10094, %v10104
    %v10113 = vadd.f32 %v10095, %v10105
    %v10114 = vadd.f32 %v10096, %v10106
    %v10115 = vadd.f32 %v10097, %v10107
    %v10116 = vadd.f32 %v10098, %v10104
    %v10117 = vadd.f32 %v10099, %v10105
    %v10118 = vadd.f32 %v10100, %v10106
    %v10119 = vadd.f32 %v10101, %v10107
    %v10120 = vmax.f32 %v10112, 0.0
    %v10121 = vmax.f32 %v10113, 0.0
    %v10122 = vmax.f32 %v10114, 0.0
    %v10123 = vmax.f32 %v10115, 0.0
    %v10124 = vmax.f32 %v10116, 0.0
    %v10125 = vmax.f32 %v10117, 0.0
    %v10126 = vmax.f32 %v10118, 0.0
    %v10127 = vmax.f32 %v10119, 0.0
    %v10128 = vpack.c.bf16 %v10124, %v10120
    %v10129 = vpack.c.bf16 %v10125, %v10121
    %v10130 = vpack.c.bf16 %v10126, %v10122
    %v10131 = vpack.c.bf16 %v10127, %v10123
    %v10132 = vld [vmem:[#allocation12] sm:$0xf]
    %v10133 = vld [vmem:[#allocation12 + $0x4] sm:$0xf]
    %v10134 = vld [vmem:[#allocation12 + $0x8] sm:$0xf]
    %v10135 = vld [vmem:[#allocation12 + $0xc] sm:$0xf]
    %v10136 = vld [vmem:[#allocation12 + $0x10] sm:$0xf]
    %v10137 = vld [vmem:[#allocation12 + $0x14] sm:$0xf]
    %v10138 = vld [vmem:[#allocation12 + $0x18] sm:$0xf]
    %v10139 = vld [vmem:[#allocation12 + $0x1c] sm:$0xf]
    %v10140 = vld [vmem:[#allocation12 + $0x20] sm:$0xf]
    %v10141 = vld [vmem:[#allocation12 + $0x24] sm:$0xf]
    %v10142 = vld [vmem:[#allocation12 + $0x28] sm:$0xf]
    %v10143 = vld [vmem:[#allocation12 + $0x2c] sm:$0xf]
    %v10144 = vld [vmem:[#allocation12 + $0x30] sm:$0xf]
    %v10145 = vld [vmem:[#allocation12 + $0x34] sm:$0xf]
    %v10146 = vld [vmem:[#allocation12 + $0x38] sm:$0xf]
    %v10147 = vld [vmem:[#allocation12 + $0x3c] sm:$0xf]
    %v10148 = vld [vmem:[#allocation12 + $0x40] sm:$0xf]
    %v10149 = vld [vmem:[#allocation12 + $0x44] sm:$0xf]
    %v10150 = vld [vmem:[#allocation12 + $0x48] sm:$0xf]
    %v10151 = vld [vmem:[#allocation12 + $0x4c] sm:$0xf]
    %v10152 = vld [vmem:[#allocation12 + $0x50] sm:$0xf]
    %v10153 = vld [vmem:[#allocation12 + $0x54] sm:$0xf]
    %v10154 = vld [vmem:[#allocation12 + $0x58] sm:$0xf]
    %v10155 = vld [vmem:[#allocation12 + $0x5c] sm:$0xf]
    %v10156 = vld [vmem:[#allocation12 + $0x60] sm:$0xf]
    %v10157 = vld [vmem:[#allocation12 + $0x64] sm:$0xf]
    %v10158 = vld [vmem:[#allocation12 + $0x68] sm:$0xf]
    %v10159 = vld [vmem:[#allocation12 + $0x6c] sm:$0xf]
    %v10160 = vld [vmem:[#allocation12 + $0x70] sm:$0xf]
    %v10161 = vld [vmem:[#allocation12 + $0x74] sm:$0xf]
    %v10162 = vld [vmem:[#allocation12 + $0x78] sm:$0xf]
    %v10163 = vld [vmem:[#allocation12 + $0x7c] sm:$0xf]
    %v10164 = vld [vmem:[#allocation12 + $0x80] sm:$0xf]
    %v10165 = vld [vmem:[#allocation12 + $0x84] sm:$0xf]
    %v10166 = vld [vmem:[#allocation12 + $0x88] sm:$0xf]
    %v10167 = vld [vmem:[#allocation12 + $0x8c] sm:$0xf]
    %v10168 = vld [vmem:[#allocation12 + $0x90] sm:$0xf]
    %v10169 = vld [vmem:[#allocation12 + $0x94] sm:$0xf]
    %v10170 = vld [vmem:[#allocation12 + $0x98] sm:$0xf]
    %v10171 = vld [vmem:[#allocation12 + $0x9c] sm:$0xf]
    %v10172 = vld [vmem:[#allocation12 + $0xa0] sm:$0xf]
    %v10173 = vld [vmem:[#allocation12 + $0xa4] sm:$0xf]
    %v10174 = vld [vmem:[#allocation12 + $0xa8] sm:$0xf]
    %v10175 = vld [vmem:[#allocation12 + $0xac] sm:$0xf]
    %v10176 = vld [vmem:[#allocation12 + $0xb0] sm:$0xf]
    %v10177 = vld [vmem:[#allocation12 + $0xb4] sm:$0xf]
    %v10178 = vld [vmem:[#allocation12 + $0xb8] sm:$0xf]
    %v10179 = vld [vmem:[#allocation12 + $0xbc] sm:$0xf]
    %v10180 = vld [vmem:[#allocation12 + $0xc0] sm:$0xf]
    %v10181 = vld [vmem:[#allocation12 + $0xc4] sm:$0xf]
    %v10182 = vld [vmem:[#allocation12 + $0xc8] sm:$0xf]
    %v10183 = vld [vmem:[#allocation12 + $0xcc] sm:$0xf]
    %v10184 = vld [vmem:[#allocation12 + $0xd0] sm:$0xf]
    %v10185 = vld [vmem:[#allocation12 + $0xd4] sm:$0xf]
    %v10186 = vld [vmem:[#allocation12 + $0xd8] sm:$0xf]
    %v10187 = vld [vmem:[#allocation12 + $0xdc] sm:$0xf]
    %v10188 = vld [vmem:[#allocation12 + $0xe0] sm:$0xf]
    %v10189 = vld [vmem:[#allocation12 + $0xe4] sm:$0xf]
    %v10190 = vld [vmem:[#allocation12 + $0xe8] sm:$0xf]
    %v10191 = vld [vmem:[#allocation12 + $0xec] sm:$0xf]
    %v10192 = vld [vmem:[#allocation12 + $0xf0] sm:$0xf]
    %v10193 = vld [vmem:[#allocation12 + $0xf4] sm:$0xf]
    %v10194 = vld [vmem:[#allocation12 + $0xf8] sm:$0xf]
    %v10195 = vld [vmem:[#allocation12 + $0xfc] sm:$0xf]
    %v10196 = vld [vmem:[#allocation13] sm:$0x1]
    %v10198 = vperm.slane %v10196, 0
    %v10264 = vunpack.c.l.b16 %v10132
    %v10265 = vunpack.c.l.b16 %v10133
    %v10266 = vunpack.c.l.b16 %v10134
    %v10267 = vunpack.c.l.b16 %v10135
    %v10268 = vunpack.c.l.b16 %v10136
    %v10269 = vunpack.c.l.b16 %v10137
    %v10270 = vunpack.c.l.b16 %v10138
    %v10271 = vunpack.c.l.b16 %v10139
    %v10272 = vunpack.c.l.b16 %v10140
    %v10273 = vunpack.c.l.b16 %v10141
    %v10274 = vunpack.c.l.b16 %v10142
    %v10275 = vunpack.c.l.b16 %v10143
    %v10276 = vunpack.c.l.b16 %v10144
    %v10277 = vunpack.c.l.b16 %v10145
    %v10278 = vunpack.c.l.b16 %v10146
    %v10279 = vunpack.c.l.b16 %v10147
    %v10280 = vunpack.c.l.b16 %v10148
    %v10281 = vunpack.c.l.b16 %v10149
    %v10282 = vunpack.c.l.b16 %v10150
    %v10283 = vunpack.c.l.b16 %v10151
    %v10284 = vunpack.c.l.b16 %v10152
    %v10285 = vunpack.c.l.b16 %v10153
    %v10286 = vunpack.c.l.b16 %v10154
    %v10287 = vunpack.c.l.b16 %v10155
    %v10288 = vunpack.c.l.b16 %v10156
    %v10289 = vunpack.c.l.b16 %v10157
    %v10290 = vunpack.c.l.b16 %v10158
    %v10291 = vunpack.c.l.b16 %v10159
    %v10292 = vunpack.c.l.b16 %v10160
    %v10293 = vunpack.c.l.b16 %v10161
    %v10294 = vunpack.c.l.b16 %v10162
    %v10295 = vunpack.c.l.b16 %v10163
    %v10296 = vunpack.c.l.b16 %v10164
    %v10297 = vunpack.c.l.b16 %v10165
    %v10298 = vunpack.c.l.b16 %v10166
    %v10299 = vunpack.c.l.b16 %v10167
    %v10300 = vunpack.c.l.b16 %v10168
    %v10301 = vunpack.c.l.b16 %v10169
    %v10302 = vunpack.c.l.b16 %v10170
    %v10303 = vunpack.c.l.b16 %v10171
    %v10304 = vunpack.c.l.b16 %v10172
    %v10305 = vunpack.c.l.b16 %v10173
    %v10306 = vunpack.c.l.b16 %v10174
    %v10307 = vunpack.c.l.b16 %v10175
    %v10308 = vunpack.c.l.b16 %v10176
    %v10309 = vunpack.c.l.b16 %v10177
    %v10310 = vunpack.c.l.b16 %v10178
    %v10311 = vunpack.c.l.b16 %v10179
    %v10312 = vunpack.c.l.b16 %v10180
    %v10313 = vunpack.c.l.b16 %v10181
    %v10314 = vunpack.c.l.b16 %v10182
    %v10315 = vunpack.c.l.b16 %v10183
    %v10316 = vunpack.c.l.b16 %v10184
    %v10317 = vunpack.c.l.b16 %v10185
    %v10318 = vunpack.c.l.b16 %v10186
    %v10319 = vunpack.c.l.b16 %v10187
    %v10320 = vunpack.c.l.b16 %v10188
    %v10321 = vunpack.c.l.b16 %v10189
    %v10322 = vunpack.c.l.b16 %v10190
    %v10323 = vunpack.c.l.b16 %v10191
    %v10324 = vunpack.c.l.b16 %v10192
    %v10325 = vunpack.c.l.b16 %v10193
    %v10326 = vunpack.c.l.b16 %v10194
    %v10327 = vunpack.c.l.b16 %v10195
    %v10328 = vpack.c.b16 %v10265, %v10264
    %v10329 = vpack.c.b16 %v10267, %v10266
    %v10330 = vpack.c.b16 %v10269, %v10268
    %v10331 = vpack.c.b16 %v10271, %v10270
    %v10332 = vpack.c.b16 %v10273, %v10272
    %v10333 = vpack.c.b16 %v10275, %v10274
    %v10334 = vpack.c.b16 %v10277, %v10276
    %v10335 = vpack.c.b16 %v10279, %v10278
    %v10336 = vpack.c.b16 %v10281, %v10280
    %v10337 = vpack.c.b16 %v10283, %v10282
    %v10338 = vpack.c.b16 %v10285, %v10284
    %v10339 = vpack.c.b16 %v10287, %v10286
    %v10340 = vpack.c.b16 %v10289, %v10288
    %v10341 = vpack.c.b16 %v10291, %v10290
    %v10342 = vpack.c.b16 %v10293, %v10292
    %v10343 = vpack.c.b16 %v10295, %v10294
    %v10344 = vpack.c.b16 %v10297, %v10296
    %v10345 = vpack.c.b16 %v10299, %v10298
    %v10346 = vpack.c.b16 %v10301, %v10300
    %v10347 = vpack.c.b16 %v10303, %v10302
    %v10348 = vpack.c.b16 %v10305, %v10304
    %v10349 = vpack.c.b16 %v10307, %v10306
    %v10350 = vpack.c.b16 %v10309, %v10308
    %v10351 = vpack.c.b16 %v10311, %v10310
    %v10352 = vpack.c.b16 %v10313, %v10312
    %v10353 = vpack.c.b16 %v10315, %v10314
    %v10354 = vpack.c.b16 %v10317, %v10316
    %v10355 = vpack.c.b16 %v10319, %v10318
    %v10356 = vpack.c.b16 %v10321, %v10320
    %v10357 = vpack.c.b16 %v10323, %v10322
    %v10358 = vpack.c.b16 %v10325, %v10324
    %v10359 = vpack.c.b16 %v10327, %v10326
    %10392 = vmatpush.bf16.msra.mxu0 %v10335
    %10393 = vmatpush.bf16.msra.mxu0 %v10334
    %10394 = vmatpush.bf16.msra.mxu0 %v10333
    %10395 = vmatpush.bf16.msra.mxu0 %v10332
    %10396 = vmatpush.bf16.msra.mxu0 %v10331
    %10397 = vmatpush.bf16.msra.mxu0 %v10330
    %10398 = vmatpush.bf16.msra.mxu0 %v10329
    %10399 = vmatpush.bf16.msra.mxu0 %v10328
    %10400 = vmatmul.bf16.gmra.mxu0 %v10128
    %v10401 = vpop.f32.mrf.mxu0
    %v10402 = vadd.f32 %v10198, %v10401
    %v10403 = vpop.f32.mrf.mxu0
    %v10404 = vadd.f32 %v10198, %v10403
    %10405 = vdwg.mxu0
    %10406 = vmatpush.bf16.msra.mxu0 %v10343
    %10407 = vmatpush.bf16.msra.mxu0 %v10342
    %10408 = vmatpush.bf16.msra.mxu0 %v10341
    %10409 = vmatpush.bf16.msra.mxu0 %v10340
    %10410 = vmatpush.bf16.msra.mxu0 %v10339
    %10411 = vmatpush.bf16.msra.mxu0 %v10338
    %10412 = vmatpush.bf16.msra.mxu0 %v10337
    %10413 = vmatpush.bf16.msra.mxu0 %v10336
    %10414 = vmatmul.bf16.gmra.mxu0 %v10129
    %v10415 = vpop.f32.mrf.mxu0
    %v10416 = vadd.f32 %v10402, %v10415
    %v10417 = vpop.f32.mrf.mxu0
    %v10418 = vadd.f32 %v10404, %v10417
    %10419 = vdwg.mxu0
    %10420 = vmatpush.bf16.msra.mxu0 %v10351
    %10421 = vmatpush.bf16.msra.mxu0 %v10350
    %10422 = vmatpush.bf16.msra.mxu0 %v10349
    %10423 = vmatpush.bf16.msra.mxu0 %v10348
    %10424 = vmatpush.bf16.msra.mxu0 %v10347
    %10425 = vmatpush.bf16.msra.mxu0 %v10346
    %10426 = vmatpush.bf16.msra.mxu0 %v10345
    %10427 = vmatpush.bf16.msra.mxu0 %v10344
    %10428 = vmatmul.bf16.gmra.mxu0 %v10130
    %v10429 = vpop.f32.mrf.mxu0
    %v10430 = vadd.f32 %v10416, %v10429
    %v10431 = vpop.f32.mrf.mxu0
    %v10432 = vadd.f32 %v10418, %v10431
    %10433 = vdwg.mxu0
    %10434 = vmatpush.bf16.msra.mxu0 %v10359
    %10435 = vmatpush.bf16.msra.mxu0 %v10358
    %10436 = vmatpush.bf16.msra.mxu0 %v10357
    %10437 = vmatpush.bf16.msra.mxu0 %v10356
    %10438 = vmatpush.bf16.msra.mxu0 %v10355
    %10439 = vmatpush.bf16.msra.mxu0 %v10354
    %10440 = vmatpush.bf16.msra.mxu0 %v10353
    %10441 = vmatpush.bf16.msra.mxu0 %v10352
    %10442 = vmatmul.bf16.gmra.mxu0 %v10131
    %v10443 = vpop.f32.mrf.mxu0
    %v10444 = vadd.f32 %v10430, %v10443
    %v10445 = vpop.f32.mrf.mxu0
    %v10446 = vadd.f32 %v10432, %v10445
    %10447 = vdwg.mxu0
    %10448 = vst [vmem:[%s9] sm:$0xff] %v10444
    %10449 = vst [vmem:[%s9 + $0x8] sm:$0xff] %v10446
    // Predicated region
    $region70: #{embedding_net_forward.1} parent=1 // pred_check
      _
    $region71: #{embedding_net_forward.1} parent=1 // pred_check_branch
      %10451 = sbr.rel (0) target = $region73
    $region72: #{embedding_net_forward.1} parent=1 // pred_region
      _
    $region73: #{embedding_net_forward.1} parent=1 // pred_fallthru
      _
    // Predicated region
    $region74: #{embedding_net_forward.1} parent=1 // pred_check
      _
    $region75: #{embedding_net_forward.1} parent=1 // pred_check_branch
      %10453 = sbr.rel (0) target = $region77
    $region76: #{embedding_net_forward.1} parent=1 // pred_region
      _
    $region77: #{embedding_net_forward.1} parent=1 // pred_fallthru
      _
    %10454 = vsyncpa [#allocation3], 1
    %10455 = vsyncpa [#allocation5], 1
    %10456 = vsyncpa [#allocation8], 1
    %10457 = vsyncpa [#allocation11], 1
    %10458 = vsyncpa [#allocation14], 1

</llo_original>
